<compile_context>
chip_gen: v6e
topology: v6e:2x2x1
jax: 0.10.0
libtpu: 0.0.40
codegen_flags: <defaults>
</compile_context>

<pallas_src>
import functools
import numpy as np
import jax
import jax.numpy as jnp
from jax import lax
from jax.experimental import pallas as pl
from jax.experimental.pallas import tpu as pltpu

# ---------------- configuration (small, consistent with the module) ----------------
BATCH = 2
NUM_QUERIES = 8        # query-stream length
CONTEXT_LEN = 16
HIDDEN = 32            # model_hidden_size == config.hidden_size
NUM_HEADS = 4
HEAD_DIM = HIDDEN // NUM_HEADS
FFN_HIDDEN = 4 * HIDDEN
NUM_BLOCKS = 1
NUM_ITERATIONS = 3
EPS = float(jnp.finfo(jnp.float32).eps)   # nn.RMSNorm(eps=None) -> finfo eps

N_BLOCK_WEIGHTS = 14   # per transformer block, in kernel layout (see to_kernel_layout)


# ---------------- in-kernel helpers ----------------
def _rmsnorm(v):
    ms = jnp.mean(v * v, axis=-1, keepdims=True)
    return v * lax.rsqrt(ms + EPS)


# ---------------- fused kernel: one batch element per grid step ----------------
def make_fused_kernel(num_blocks, num_iterations):
    H, HD, NH = HIDDEN, HEAD_DIM, NUM_HEADS
    n_w = num_blocks * N_BLOCK_WEIGHTS + 2

    def kernel(*refs):
        x_ref, ctx_ref = refs[0], refs[1]
        w_refs = refs[2:2 + n_w]
        states_ref, out_ref = refs[2 + n_w], refs[3 + n_w]
        qkv_s, qx_s, kvctx_s = refs[4 + n_w], refs[5 + n_w], refs[6 + n_w]

        qry = x_ref[0]      # (Q, H) -- stays on-chip for the whole forward
        ctx = ctx_ref[0]    # (C, H)

        def attend(load_q, load_k, load_v, wo3_ref, bo_ref):
            """Per-head softmax attention; heads sliced via narrow ref loads.

            Q is pre-scaled by 1/sqrt(head_dim) (folded into its weights).
            Output projection accumulates per-head (HD, H) slabs of out_proj.T.
            """
            out = None
            for i in range(NH):
                q, k, v = load_q(i), load_k(i), load_v(i)
                s = lax.dot_general(q, k, (((1,), (1,)), ((), ())),
                                    preferred_element_type=jnp.float32)
                s = s - jnp.max(s, axis=-1, keepdims=True)
                p = jnp.exp(s)
                p = p / jnp.sum(p, axis=-1, keepdims=True)        # exact softmax
                ho = jnp.dot(p, v, preferred_element_type=jnp.float32)       # (Q, HD)
                c = jnp.dot(ho, wo3_ref[i], preferred_element_type=jnp.float32)  # (Q, H)
                out = c if out is None else out + c
            return out + bo_ref[...]

        # Hoisted loop-invariant cross-attn K/V projection of ctx (1 fused matmul / block).
        for bi in range(num_blocks):
            base = bi * N_BLOCK_WEIGHTS
            kvctx_s[bi] = (jnp.dot(ctx, w_refs[base + 6][...],
                                   preferred_element_type=jnp.float32)
                           + w_refs[base + 7][...])               # (C, 2H): [K | V]

        # TODO(synk): .detach() between iterations only affects autograd; forward unchanged.
        for it in range(num_iterations):
            for bi in range(num_blocks):
                base = bi * N_BLOCK_WEIGHTS
                w = lambda j, base=base: w_refs[base + j]         # point-of-use reads

                # --- self-attention: fused lane-packed QKV (Wq/bq pre-scaled) ---
                h = _rmsnorm(qry)
                qkv_s[...] = (jnp.dot(h, w(0)[...],
                                      preferred_element_type=jnp.float32) + w(1)[...])
                attn = attend(
                    lambda i: qkv_s[:, pl.ds(i * HD, HD)],
                    lambda i: qkv_s[:, pl.ds(H + i * HD, HD)],
                    lambda i: qkv_s[:, pl.ds(2 * H + i * HD, HD)],
                    w(2), w(3))
                qry = qry + attn

                # --- cross-attention: fresh Q projection, hoisted ctx K/V ---
                h = _rmsnorm(qry)
                qx_s[...] = (jnp.dot(h, w(4)[...],
                                     preferred_element_type=jnp.float32) + w(5)[...])
                attn = attend(
                    lambda i: qx_s[:, pl.ds(i * HD, HD)],
                    lambda i, bi=bi: kvctx_s[bi, :, pl.ds(i * HD, HD)],
                    lambda i, bi=bi: kvctx_s[bi, :, pl.ds(H + i * HD, HD)],
                    w(8), w(9))
                qry = qry + attn

                # --- FFN: Linear -> SiLU -> Linear (ffn2 weight kept lane-dense) ---
                h = _rmsnorm(qry)
                ff = jnp.dot(h, w(10)[...],
                             preferred_element_type=jnp.float32) + w(11)[...]
                ff = ff * (1.0 / (1.0 + jnp.exp(-ff)))            # SiLU
                ff = lax.dot_general(ff, w(12)[...], (((1,), (1,)), ((), ())),
                                     preferred_element_type=jnp.float32) + w(13)[...]
                qry = qry + ff

            states_ref[0, it] = qry

        # Final RMSNorm + output projection; these weights are only read here.
        out_ref[0] = (jnp.dot(_rmsnorm(qry), w_refs[-2][...],
                              preferred_element_type=jnp.float32) + w_refs[-1][...])

    return kernel


# ---------------- wrapper ----------------
def looped_tf_query_generator(num_iterations, context, initial_state, flat_weights):
    """Fused forward pass.

    Returns:
      states_iters: (B, num_iterations, Q, H)
      outputs:      (B, Q, H_model)
    """
    B, Q, H = initial_state.shape
    C = context.shape[1]
    num_blocks = (len(flat_weights) - 2) // N_BLOCK_WEIGHTS
    Hm = flat_weights[-1].shape[-1]

    def const_map(nd):
        return lambda b: (0,) * nd

    in_specs = [
        pl.BlockSpec((1, Q, H), lambda b: (b, 0, 0)),
        pl.BlockSpec((1, C, H), lambda b: (b, 0, 0)),
    ] + [pl.BlockSpec(tuple(w.shape), const_map(w.ndim)) for w in flat_weights]

    out_specs = [
        pl.BlockSpec((1, num_iterations, Q, H), lambda b: (b, 0, 0, 0)),
        pl.BlockSpec((1, Q, Hm), lambda b: (b, 0, 0)),
    ]
    out_shape = (
        jax.ShapeDtypeStruct((B, num_iterations, Q, H), jnp.float32),
        jax.ShapeDtypeStruct((B, Q, Hm), jnp.float32),
    )

    return pl.pallas_call(
        make_fused_kernel(num_blocks, num_iterations),
        out_shape=out_shape,
        grid_spec=pltpu.PrefetchScalarGridSpec(
            num_scalar_prefetch=0,
            grid=(B,),
            in_specs=in_specs,
            out_specs=out_specs,
            scratch_shapes=[
                pltpu.VMEM((Q, 3 * H), jnp.float32),            # fused self-attn QKV
                pltpu.VMEM((Q, H), jnp.float32),                # cross-attn Q
                pltpu.VMEM((num_blocks, C, 2 * H), jnp.float32),  # hoisted ctx K/V
            ],
        ),
        compiler_params=pltpu.CompilerParams(dimension_semantics=("parallel",)),
    )(initial_state, context, *flat_weights)


# ---------------- host-side parameter init (PyTorch layout) ----------------
def init_torch_layout_params(key):
    def nrm(k, shape, scale):
        return jax.random.normal(k, shape, dtype=jnp.float32) * scale

    blocks = []
    keys = jax.random.split(key, NUM_BLOCKS + 1)
    s = 1.0 / np.sqrt(HIDDEN)
    for bi in range(NUM_BLOCKS):
        ks = jax.random.split(keys[bi], 12)
        blocks.append(dict(
            sa_in_w=nrm(ks[0], (3 * HIDDEN, HIDDEN), s),
            sa_in_b=nrm(ks[1], (3 * HIDDEN,), 0.02),
            sa_out_w=nrm(ks[2], (HIDDEN, HIDDEN), s),
            sa_out_b=nrm(ks[3], (HIDDEN,), 0.02),
            ca_in_w=nrm(ks[4], (3 * HIDDEN, HIDDEN), s),
            ca_in_b=nrm(ks[5], (3 * HIDDEN,), 0.02),
            ca_out_w=nrm(ks[6], (HIDDEN, HIDDEN), s),
            ca_out_b=nrm(ks[7], (HIDDEN,), 0.02),
            ffn1_w=nrm(ks[8], (FFN_HIDDEN, HIDDEN), s),
            ffn1_b=nrm(ks[9], (FFN_HIDDEN,), 0.02),
            ffn2_w=nrm(ks[10], (HIDDEN, FFN_HIDDEN), 1.0 / np.sqrt(FFN_HIDDEN)),
            ffn2_b=nrm(ks[11], (HIDDEN,), 0.02),
        ))
    ko = jax.random.split(keys[-1], 2)
    out_w = nrm(ko[0], (HIDDEN, HIDDEN), 1.0 / np.sqrt(HIDDEN))   # (model_hidden, hidden)
    out_b = nrm(ko[1], (HIDDEN,), 0.02)
    return dict(blocks=blocks, out_w=out_w, out_b=out_b)


# ---------------- host-side layout conversion (lane-packing / scale folding) ----------------
def to_kernel_layout(params):
    """PyTorch weights -> kernel layout.

    Per block (14 tensors):
      sa_wqkv (H,3H)  sa_bqkv (1,3H)    [q columns pre-scaled by 1/sqrt(HD)]
      sa_wo3  (NH,HD,H)  sa_bo (1,H)
      ca_wq   (H,H)   ca_bq  (1,H)      [pre-scaled]
      ca_wkv  (H,2H)  ca_bkv (1,2H)
      ca_wo3  (NH,HD,H)  ca_bo (1,H)
      f1w (H,4H) f1b (1,4H) f2w (H,4H as torch, lane-dense) f2b (1,H)
    Then out_w (H,Hm), out_b (1,Hm).
    """
    H = HIDDEN
    scale = 1.0 / float(np.sqrt(HEAD_DIM))
    flat = []
    for bp in params["blocks"]:
        # self-attention: fused lane-packed QKV
        w, b = bp["sa_in_w"], bp["sa_in_b"]
        wq, wk, wv = w[0:H], w[H:2 * H], w[2 * H:3 * H]
        bq, bk, bv = b[0:H], b[H:2 * H], b[2 * H:3 * H]
        flat += [
            jnp.concatenate([wq.T * scale, wk.T, wv.T], axis=1),          # (H, 3H)
            jnp.concatenate([bq * scale, bk, bv]).reshape(1, 3 * H),
            bp["sa_out_w"].T.reshape(NUM_HEADS, HEAD_DIM, H),             # head-major out proj
            bp["sa_out_b"].reshape(1, H),
        ]
        # cross-attention: Q separate (per-iteration), K/V fused (hoisted over ctx)
        w, b = bp["ca_in_w"], bp["ca_in_b"]
        wq, wk, wv = w[0:H], w[H:2 * H], w[2 * H:3 * H]
        bq, bk, bv = b[0:H], b[H:2 * H], b[2 * H:3 * H]
        flat += [
            wq.T * scale, (bq * scale).reshape(1, H),
            jnp.concatenate([wk.T, wv.T], axis=1),                        # (H, 2H)
            jnp.concatenate([bk, bv]).reshape(1, 2 * H),
            bp["ca_out_w"].T.reshape(NUM_HEADS, HEAD_DIM, H),
            bp["ca_out_b"].reshape(1, H),
        ]
        # FFN: ffn1 transposed to (H,4H); ffn2 kept as torch (H,4H) = lane-dense
        flat += [bp["ffn1_w"].T, bp["ffn1_b"].reshape(1, FFN_HIDDEN),
                 bp["ffn2_w"], bp["ffn2_b"].reshape(1, HIDDEN)]
    flat += [params["out_w"].T, params["out_b"].reshape(1, -1)]
    return flat


# ---------------- pure-JAX reference (for tolerance check) ----------------
def ref_forward(num_iterations, context, initial_state, params):
    def rms(v):
        return v * lax.rsqrt(jnp.mean(v * v, axis=-1, keepdims=True) + EPS)

    def mha(q_in, kv_in, in_w, in_b, out_w, out_b):
        H = HIDDEN
        q = q_in @ in_w[0:H].T + in_b[0:H]
        k = kv_in @ in_w[H:2 * H].T + in_b[H:2 * H]
        v = kv_in @ in_w[2 * H:3 * H].T + in_b[2 * H:3 * H]

        def split(t):
            B, L, _ = t.shape
            return t.reshape(B, L, NUM_HEADS, HEAD_DIM).transpose(0, 2, 1, 3)

        qh, kh, vh = split(q), split(k), split(v)
        s = jnp.einsum('bhqd,bhkd->bhqk', qh, kh) / np.sqrt(HEAD_DIM)
        p = jax.nn.softmax(s, axis=-1)
        o = jnp.einsum('bhqk,bhkd->bhqd', p, vh)
        B, _, L, _ = o.shape
        o = o.transpose(0, 2, 1, 3).reshape(B, L, HIDDEN)
        return o @ out_w.T + out_b

    def block(x, ctx, bp):
        h = rms(x)
        x = x + mha(h, h, bp["sa_in_w"], bp["sa_in_b"], bp["sa_out_w"], bp["sa_out_b"])
        h = rms(x)
        x = x + mha(h, ctx, bp["ca_in_w"], bp["ca_in_b"], bp["ca_out_w"], bp["ca_out_b"])
        h = rms(x)
        ff = h @ bp["ffn1_w"].T + bp["ffn1_b"]
        ff = ff * jax.nn.sigmoid(ff)
        ff = ff @ bp["ffn2_w"].T + bp["ffn2_b"]
        return x + ff

    q = initial_state
    states = []
    for _ in range(num_iterations):
        for bp in params["blocks"]:
            q = block(q, context, bp)
        states.append(q)
    states = jnp.stack(states, axis=1)
    out = rms(q) @ params["out_w"].T + params["out_b"]
    return states, out


if __name__ == "__main__":
    key = jax.random.PRNGKey(0)
    k_ctx, k_init, k_par = jax.random.split(key, 3)

    context = jax.random.normal(k_ctx, (BATCH, CONTEXT_LEN, HIDDEN), dtype=jnp.float32)
    # use_learnable_queries=False path with initial_state supplied (queries ~ N(0, 1/sqrt(H)))
    initial_state = jax.random.normal(
        k_init, (BATCH, NUM_QUERIES, HIDDEN), dtype=jnp.float32) / np.sqrt(HIDDEN)
    params = init_torch_layout_params(k_par)
    kernel_params = to_kernel_layout(params)

    fwd = jax.jit(functools.partial(looped_tf_query_generator, NUM_ITERATIONS))
    states_iters, outputs = fwd(context, initial_state, kernel_params)
    jax.block_until_ready((states_iters, outputs))

    assert states_iters.shape == (BATCH, NUM_ITERATIONS, NUM_QUERIES, HIDDEN)
    assert outputs.shape == (BATCH, NUM_QUERIES, HIDDEN)
    assert bool(jnp.all(jnp.isfinite(states_iters))) and bool(jnp.all(jnp.isfinite(outputs)))

    # Tolerance check vs. pure-JAX fp32 reference.  Softmax now uses an exact
    # divide; remaining tolerance only covers MXU f32-pass / accumulation-order
    # differences between Mosaic and XLA default matmul precision.
    ref_states, ref_out = ref_forward(NUM_ITERATIONS, context, initial_state, params)
    np.testing.assert_allclose(np.asarray(states_iters), np.asarray(ref_states),
                               rtol=1e-2, atol=1e-2)
    np.testing.assert_allclose(np.asarray(outputs), np.asarray(ref_out),
                               rtol=1e-2, atol=1e-2)

    print("KERNEL_OK")
</pallas_src>

<mosaic_0001>
module attributes {stable_mosaic.version = 11 : i64} {
  func.func @kernel(%arg0: i32, %arg1: memref<1x8x32xf32, #tpu.memory_space<vmem>>, %arg2: memref<1x16x32xf32, #tpu.memory_space<vmem>>, %arg3: memref<32x96xf32, #tpu.memory_space<vmem>>, %arg4: memref<1x96xf32, #tpu.memory_space<vmem>>, %arg5: memref<4x8x32xf32, #tpu.memory_space<vmem>>, %arg6: memref<1x32xf32, #tpu.memory_space<vmem>>, %arg7: memref<32x32xf32, #tpu.memory_space<vmem>>, %arg8: memref<1x32xf32, #tpu.memory_space<vmem>>, %arg9: memref<32x64xf32, #tpu.memory_space<vmem>>, %arg10: memref<1x64xf32, #tpu.memory_space<vmem>>, %arg11: memref<4x8x32xf32, #tpu.memory_space<vmem>>, %arg12: memref<1x32xf32, #tpu.memory_space<vmem>>, %arg13: memref<32x128xf32, #tpu.memory_space<vmem>>, %arg14: memref<1x128xf32, #tpu.memory_space<vmem>>, %arg15: memref<32x128xf32, #tpu.memory_space<vmem>>, %arg16: memref<1x32xf32, #tpu.memory_space<vmem>>, %arg17: memref<32x32xf32, #tpu.memory_space<vmem>>, %arg18: memref<1x32xf32, #tpu.memory_space<vmem>>, %arg19: memref<1x3x8x32xf32, #tpu.memory_space<vmem>>, %arg20: memref<1x8x32xf32, #tpu.memory_space<vmem>>, %arg21: memref<8x96xf32, #tpu.memory_space<vmem>>, %arg22: memref<8x32xf32, #tpu.memory_space<vmem>>, %arg23: memref<1x16x64xf32, #tpu.memory_space<vmem>>) attributes {dimension_semantics = [#tpu.dimension_semantics<parallel>], iteration_bounds = array<i64: 2>, scalar_prefetch = 0 : i64, scratch_operands = 3 : i64, tpu.core_type = #tpu.core_type<tc>, window_params = [{transform_indices = @transform_0, window_bounds = array<i64: 1, 8, 32>}, {transform_indices = @transform_1, window_bounds = array<i64: 1, 16, 32>}, {pipeline_mode = #tpu.pipeline_mode<synchronous>, transform_indices = @transform_2, window_bounds = array<i64: 32, 96>}, {pipeline_mode = #tpu.pipeline_mode<synchronous>, transform_indices = @transform_3, window_bounds = array<i64: 1, 96>}, {pipeline_mode = #tpu.pipeline_mode<synchronous>, transform_indices = @transform_4, window_bounds = array<i64: 4, 8, 32>}, {pipeline_mode = #tpu.pipeline_mode<synchronous>, transform_indices = @transform_5, window_bounds = array<i64: 1, 32>}, {pipeline_mode = #tpu.pipeline_mode<synchronous>, transform_indices = @transform_6, window_bounds = array<i64: 32, 32>}, {pipeline_mode = #tpu.pipeline_mode<synchronous>, transform_indices = @transform_7, window_bounds = array<i64: 1, 32>}, {pipeline_mode = #tpu.pipeline_mode<synchronous>, transform_indices = @transform_8, window_bounds = array<i64: 32, 64>}, {pipeline_mode = #tpu.pipeline_mode<synchronous>, transform_indices = @transform_9, window_bounds = array<i64: 1, 64>}, {pipeline_mode = #tpu.pipeline_mode<synchronous>, transform_indices = @transform_10, window_bounds = array<i64: 4, 8, 32>}, {pipeline_mode = #tpu.pipeline_mode<synchronous>, transform_indices = @transform_11, window_bounds = array<i64: 1, 32>}, {pipeline_mode = #tpu.pipeline_mode<synchronous>, transform_indices = @transform_12, window_bounds = array<i64: 32, 128>}, {pipeline_mode = #tpu.pipeline_mode<synchronous>, transform_indices = @transform_13, window_bounds = array<i64: 1, 128>}, {pipeline_mode = #tpu.pipeline_mode<synchronous>, transform_indices = @transform_14, window_bounds = array<i64: 32, 128>}, {pipeline_mode = #tpu.pipeline_mode<synchronous>, transform_indices = @transform_15, window_bounds = array<i64: 1, 32>}, {pipeline_mode = #tpu.pipeline_mode<synchronous>, transform_indices = @transform_16, window_bounds = array<i64: 32, 32>}, {pipeline_mode = #tpu.pipeline_mode<synchronous>, transform_indices = @transform_17, window_bounds = array<i64: 1, 32>}, {transform_indices = @transform_18, window_bounds = array<i64: 1, 3, 8, 32>}, {transform_indices = @transform_19, window_bounds = array<i64: 1, 8, 32>}]} {
    %c0 = arith.constant 0 : index
    %c0_0 = arith.constant 0 : index
    %c0_1 = arith.constant 0 : index
    %0 = vector.load %arg1[%c0, %c0_0, %c0_1] : memref<1x8x32xf32, #tpu.memory_space<vmem>>, vector<1x8x32xf32>
    %1 = vector.shape_cast %0 : vector<1x8x32xf32> to vector<8x32xf32>
    %c0_2 = arith.constant 0 : index
    %c0_3 = arith.constant 0 : index
    %c0_4 = arith.constant 0 : index
    %2 = vector.load %arg2[%c0_2, %c0_3, %c0_4] : memref<1x16x32xf32, #tpu.memory_space<vmem>>, vector<1x16x32xf32>
    %3 = vector.shape_cast %2 : vector<1x16x32xf32> to vector<16x32xf32>
    %c0_5 = arith.constant 0 : index
    %c0_6 = arith.constant 0 : index
    %4 = vector.load %arg9[%c0_5, %c0_6] : memref<32x64xf32, #tpu.memory_space<vmem>>, vector<32x64xf32>
    %cst = arith.constant dense<0.000000e+00> : vector<16x64xf32>
    %5 = tpu.matmul %3, %4, %cst {dimension_numbers = #tpu.dot_dimension_numbers<[1], [0], [0], [1], [0, 0, 1, 1], [], []>} : vector<16x32xf32>, vector<32x64xf32>, vector<16x64xf32> -> vector<16x64xf32>
    %c0_7 = arith.constant 0 : index
    %c0_8 = arith.constant 0 : index
    %6 = vector.load %arg10[%c0_7, %c0_8] : memref<1x64xf32, #tpu.memory_space<vmem>>, vector<1x64xf32>
    %7 = vector.broadcast %6 : vector<1x64xf32> to vector<16x64xf32>
    %8 = arith.addf %5, %7 : vector<16x64xf32>
    %c0_9 = arith.constant 0 : index
    %c0_10 = arith.constant 0 : index
    %c0_11 = arith.constant 0 : index
    %9 = vector.load %arg23[%c0_9, %c0_10, %c0_11] : memref<1x16x64xf32, #tpu.memory_space<vmem>>, vector<1x16x64xf32>
    %10 = vector.shape_cast %9 : vector<1x16x64xf32> to vector<16x64xf32>
    %11 = vector.shape_cast %8 : vector<16x64xf32> to vector<1x16x64xf32>
    tpu.vector_store %arg23[%c0_9, %c0_10, %c0_11], %11 {strides = array<i32>} : memref<1x16x64xf32, #tpu.memory_space<vmem>>, vector<1x16x64xf32>,
    %12 = arith.mulf %1, %1 : vector<8x32xf32>
    %cst_12 = arith.constant dense<0.000000e+00> : vector<8xf32>
    %13 = vector.multi_reduction <add>, %12, %cst_12 [1] : vector<8x32xf32> to vector<8xf32>
    %14 = vector.shape_cast %13 : vector<8xf32> to vector<8x1xf32>
    %cst_13 = arith.constant 3.200000e+01 : f32
    %15 = vector.broadcast %cst_13 : f32 to vector<8x1xf32>
    %16 = arith.divf %14, %15 : vector<8x1xf32>
    %cst_14 = arith.constant 1.1920929E-7 : f32
    %17 = vector.broadcast %cst_14 : f32 to vector<8x1xf32>
    %18 = arith.addf %16, %17 : vector<8x1xf32>
    %19 = math.rsqrt %18 : vector<8x1xf32>
    %20 = vector.broadcast %19 : vector<8x1xf32> to vector<8x32xf32>
    %21 = arith.mulf %1, %20 : vector<8x32xf32>
    %c0_15 = arith.constant 0 : index
    %c0_16 = arith.constant 0 : index
    %22 = vector.load %arg3[%c0_15, %c0_16] : memref<32x96xf32, #tpu.memory_space<vmem>>, vector<32x96xf32>
    %cst_17 = arith.constant dense<0.000000e+00> : vector<8x96xf32>
    %23 = tpu.matmul %21, %22, %cst_17 {dimension_numbers = #tpu.dot_dimension_numbers<[1], [0], [0], [1], [0, 0, 1, 1], [], []>} : vector<8x32xf32>, vector<32x96xf32>, vector<8x96xf32> -> vector<8x96xf32>
    %c0_18 = arith.constant 0 : index
    %c0_19 = arith.constant 0 : index
    %24 = vector.load %arg4[%c0_18, %c0_19] : memref<1x96xf32, #tpu.memory_space<vmem>>, vector<1x96xf32>
    %25 = vector.broadcast %24 : vector<1x96xf32> to vector<8x96xf32>
    %26 = arith.addf %23, %25 : vector<8x96xf32>
    %c0_20 = arith.constant 0 : index
    %c0_21 = arith.constant 0 : index
    %27 = vector.load %arg21[%c0_20, %c0_21] : memref<8x96xf32, #tpu.memory_space<vmem>>, vector<8x96xf32>
    tpu.vector_store %arg21[%c0_20, %c0_21], %26 {strides = array<i32>} : memref<8x96xf32, #tpu.memory_space<vmem>>, vector<8x96xf32>,
    %c0_22 = arith.constant 0 : index
    %c0_23 = arith.constant 0 : index
    %28 = vector.load %arg21[%c0_22, %c0_23] : memref<8x96xf32, #tpu.memory_space<vmem>>, vector<8x8xf32>
    %c0_24 = arith.constant 0 : index
    %c32 = arith.constant 32 : index
    %29 = vector.load %arg21[%c0_24, %c32] : memref<8x96xf32, #tpu.memory_space<vmem>>, vector<8x8xf32>
    %c0_25 = arith.constant 0 : index
    %c64 = arith.constant 64 : index
    %30 = vector.load %arg21[%c0_25, %c64] : memref<8x96xf32, #tpu.memory_space<vmem>>, vector<8x8xf32>
    %cst_26 = arith.constant dense<0.000000e+00> : vector<8x8xf32>
    %31 = tpu.matmul %28, %29, %cst_26 {dimension_numbers = #tpu.dot_dimension_numbers<[1], [1], [0], [0], [0, 0, 1, 0], [], []>} : vector<8x8xf32>, vector<8x8xf32>, vector<8x8xf32> -> vector<8x8xf32>
    %cst_27 = arith.constant dense<0xFF800000> : vector<8xf32>
    %32 = vector.multi_reduction <maximumf>, %31, %cst_27 [1] : vector<8x8xf32> to vector<8xf32>
    %33 = vector.shape_cast %32 : vector<8xf32> to vector<8x1xf32>
    %34 = vector.broadcast %33 : vector<8x1xf32> to vector<8x8xf32>
    %35 = arith.subf %31, %34 : vector<8x8xf32>
    %36 = math.exp %35 : vector<8x8xf32>
    %cst_28 = arith.constant dense<0.000000e+00> : vector<8xf32>
    %37 = vector.multi_reduction <add>, %36, %cst_28 [1] : vector<8x8xf32> to vector<8xf32>
    %38 = vector.shape_cast %37 : vector<8xf32> to vector<8x1xf32>
    %39 = vector.broadcast %38 : vector<8x1xf32> to vector<8x8xf32>
    %40 = arith.divf %36, %39 : vector<8x8xf32>
    %cst_29 = arith.constant dense<0.000000e+00> : vector<8x8xf32>
    %41 = tpu.matmul %40, %30, %cst_29 {dimension_numbers = #tpu.dot_dimension_numbers<[1], [0], [0], [1], [0, 0, 1, 1], [], []>} : vector<8x8xf32>, vector<8x8xf32>, vector<8x8xf32> -> vector<8x8xf32>
    %c0_30 = arith.constant 0 : index
    %c0_31 = arith.constant 0 : index
    %c0_32 = arith.constant 0 : index
    %42 = vector.load %arg5[%c0_30, %c0_31, %c0_32] : memref<4x8x32xf32, #tpu.memory_space<vmem>>, vector<1x8x32xf32>
    %43 = vector.shape_cast %42 : vector<1x8x32xf32> to vector<8x32xf32>
    %cst_33 = arith.constant dense<0.000000e+00> : vector<8x32xf32>
    %44 = tpu.matmul %41, %43, %cst_33 {dimension_numbers = #tpu.dot_dimension_numbers<[1], [0], [0], [1], [0, 0, 1, 1], [], []>} : vector<8x8xf32>, vector<8x32xf32>, vector<8x32xf32> -> vector<8x32xf32>
    %c0_34 = arith.constant 0 : index
    %c8 = arith.constant 8 : index
    %45 = vector.load %arg21[%c0_34, %c8] : memref<8x96xf32, #tpu.memory_space<vmem>>, vector<8x8xf32>
    %c0_35 = arith.constant 0 : index
    %c40 = arith.constant 40 : index
    %46 = vector.load %arg21[%c0_35, %c40] : memref<8x96xf32, #tpu.memory_space<vmem>>, vector<8x8xf32>
    %c0_36 = arith.constant 0 : index
    %c72 = arith.constant 72 : index
    %47 = vector.load %arg21[%c0_36, %c72] : memref<8x96xf32, #tpu.memory_space<vmem>>, vector<8x8xf32>
    %cst_37 = arith.constant dense<0.000000e+00> : vector<8x8xf32>
    %48 = tpu.matmul %45, %46, %cst_37 {dimension_numbers = #tpu.dot_dimension_numbers<[1], [1], [0], [0], [0, 0, 1, 0], [], []>} : vector<8x8xf32>, vector<8x8xf32>, vector<8x8xf32> -> vector<8x8xf32>
    %cst_38 = arith.constant dense<0xFF800000> : vector<8xf32>
    %49 = vector.multi_reduction <maximumf>, %48, %cst_38 [1] : vector<8x8xf32> to vector<8xf32>
    %50 = vector.shape_cast %49 : vector<8xf32> to vector<8x1xf32>
    %51 = vector.broadcast %50 : vector<8x1xf32> to vector<8x8xf32>
    %52 = arith.subf %48, %51 : vector<8x8xf32>
    %53 = math.exp %52 : vector<8x8xf32>
    %cst_39 = arith.constant dense<0.000000e+00> : vector<8xf32>
    %54 = vector.multi_reduction <add>, %53, %cst_39 [1] : vector<8x8xf32> to vector<8xf32>
    %55 = vector.shape_cast %54 : vector<8xf32> to vector<8x1xf32>
    %56 = vector.broadcast %55 : vector<8x1xf32> to vector<8x8xf32>
    %57 = arith.divf %53, %56 : vector<8x8xf32>
    %cst_40 = arith.constant dense<0.000000e+00> : vector<8x8xf32>
    %58 = tpu.matmul %57, %47, %cst_40 {dimension_numbers = #tpu.dot_dimension_numbers<[1], [0], [0], [1], [0, 0, 1, 1], [], []>} : vector<8x8xf32>, vector<8x8xf32>, vector<8x8xf32> -> vector<8x8xf32>
    %c1 = arith.constant 1 : index
    %c0_41 = arith.constant 0 : index
    %c0_42 = arith.constant 0 : index
    %59 = vector.load %arg5[%c1, %c0_41, %c0_42] : memref<4x8x32xf32, #tpu.memory_space<vmem>>, vector<1x8x32xf32>
    %60 = vector.shape_cast %59 : vector<1x8x32xf32> to vector<8x32xf32>
    %cst_43 = arith.constant dense<0.000000e+00> : vector<8x32xf32>
    %61 = tpu.matmul %58, %60, %cst_43 {dimension_numbers = #tpu.dot_dimension_numbers<[1], [0], [0], [1], [0, 0, 1, 1], [], []>} : vector<8x8xf32>, vector<8x32xf32>, vector<8x32xf32> -> vector<8x32xf32>
    %62 = arith.addf %44, %61 : vector<8x32xf32>
    %c0_44 = arith.constant 0 : index
    %c16 = arith.constant 16 : index
    %63 = vector.load %arg21[%c0_44, %c16] : memref<8x96xf32, #tpu.memory_space<vmem>>, vector<8x8xf32>
    %c0_45 = arith.constant 0 : index
    %c48 = arith.constant 48 : index
    %64 = vector.load %arg21[%c0_45, %c48] : memref<8x96xf32, #tpu.memory_space<vmem>>, vector<8x8xf32>
    %c0_46 = arith.constant 0 : index
    %c80 = arith.constant 80 : index
    %65 = vector.load %arg21[%c0_46, %c80] : memref<8x96xf32, #tpu.memory_space<vmem>>, vector<8x8xf32>
    %cst_47 = arith.constant dense<0.000000e+00> : vector<8x8xf32>
    %66 = tpu.matmul %63, %64, %cst_47 {dimension_numbers = #tpu.dot_dimension_numbers<[1], [1], [0], [0], [0, 0, 1, 0], [], []>} : vector<8x8xf32>, vector<8x8xf32>, vector<8x8xf32> -> vector<8x8xf32>
    %cst_48 = arith.constant dense<0xFF800000> : vector<8xf32>
    %67 = vector.multi_reduction <maximumf>, %66, %cst_48 [1] : vector<8x8xf32> to vector<8xf32>
    %68 = vector.shape_cast %67 : vector<8xf32> to vector<8x1xf32>
    %69 = vector.broadcast %68 : vector<8x1xf32> to vector<8x8xf32>
    %70 = arith.subf %66, %69 : vector<8x8xf32>
    %71 = math.exp %70 : vector<8x8xf32>
    %cst_49 = arith.constant dense<0.000000e+00> : vector<8xf32>
    %72 = vector.multi_reduction <add>, %71, %cst_49 [1] : vector<8x8xf32> to vector<8xf32>
    %73 = vector.shape_cast %72 : vector<8xf32> to vector<8x1xf32>
    %74 = vector.broadcast %73 : vector<8x1xf32> to vector<8x8xf32>
    %75 = arith.divf %71, %74 : vector<8x8xf32>
    %cst_50 = arith.constant dense<0.000000e+00> : vector<8x8xf32>
    %76 = tpu.matmul %75, %65, %cst_50 {dimension_numbers = #tpu.dot_dimension_numbers<[1], [0], [0], [1], [0, 0, 1, 1], [], []>} : vector<8x8xf32>, vector<8x8xf32>, vector<8x8xf32> -> vector<8x8xf32>
    %c2 = arith.constant 2 : index
    %c0_51 = arith.constant 0 : index
    %c0_52 = arith.constant 0 : index
    %77 = vector.load %arg5[%c2, %c0_51, %c0_52] : memref<4x8x32xf32, #tpu.memory_space<vmem>>, vector<1x8x32xf32>
    %78 = vector.shape_cast %77 : vector<1x8x32xf32> to vector<8x32xf32>
    %cst_53 = arith.constant dense<0.000000e+00> : vector<8x32xf32>
    %79 = tpu.matmul %76, %78, %cst_53 {dimension_numbers = #tpu.dot_dimension_numbers<[1], [0], [0], [1], [0, 0, 1, 1], [], []>} : vector<8x8xf32>, vector<8x32xf32>, vector<8x32xf32> -> vector<8x32xf32>
    %80 = arith.addf %62, %79 : vector<8x32xf32>
    %c0_54 = arith.constant 0 : index
    %c24 = arith.constant 24 : index
    %81 = vector.load %arg21[%c0_54, %c24] : memref<8x96xf32, #tpu.memory_space<vmem>>, vector<8x8xf32>
    %c0_55 = arith.constant 0 : index
    %c56 = arith.constant 56 : index
    %82 = vector.load %arg21[%c0_55, %c56] : memref<8x96xf32, #tpu.memory_space<vmem>>, vector<8x8xf32>
    %c0_56 = arith.constant 0 : index
    %c88 = arith.constant 88 : index
    %83 = vector.load %arg21[%c0_56, %c88] : memref<8x96xf32, #tpu.memory_space<vmem>>, vector<8x8xf32>
    %cst_57 = arith.constant dense<0.000000e+00> : vector<8x8xf32>
    %84 = tpu.matmul %81, %82, %cst_57 {dimension_numbers = #tpu.dot_dimension_numbers<[1], [1], [0], [0], [0, 0, 1, 0], [], []>} : vector<8x8xf32>, vector<8x8xf32>, vector<8x8xf32> -> vector<8x8xf32>
    %cst_58 = arith.constant dense<0xFF800000> : vector<8xf32>
    %85 = vector.multi_reduction <maximumf>, %84, %cst_58 [1] : vector<8x8xf32> to vector<8xf32>
    %86 = vector.shape_cast %85 : vector<8xf32> to vector<8x1xf32>
    %87 = vector.broadcast %86 : vector<8x1xf32> to vector<8x8xf32>
    %88 = arith.subf %84, %87 : vector<8x8xf32>
    %89 = math.exp %88 : vector<8x8xf32>
    %cst_59 = arith.constant dense<0.000000e+00> : vector<8xf32>
    %90 = vector.multi_reduction <add>, %89, %cst_59 [1] : vector<8x8xf32> to vector<8xf32>
    %91 = vector.shape_cast %90 : vector<8xf32> to vector<8x1xf32>
    %92 = vector.broadcast %91 : vector<8x1xf32> to vector<8x8xf32>
    %93 = arith.divf %89, %92 : vector<8x8xf32>
    %cst_60 = arith.constant dense<0.000000e+00> : vector<8x8xf32>
    %94 = tpu.matmul %93, %83, %cst_60 {dimension_numbers = #tpu.dot_dimension_numbers<[1], [0], [0], [1], [0, 0, 1, 1], [], []>} : vector<8x8xf32>, vector<8x8xf32>, vector<8x8xf32> -> vector<8x8xf32>
    %c3 = arith.constant 3 : index
    %c0_61 = arith.constant 0 : index
    %c0_62 = arith.constant 0 : index
    %95 = vector.load %arg5[%c3, %c0_61, %c0_62] : memref<4x8x32xf32, #tpu.memory_space<vmem>>, vector<1x8x32xf32>
    %96 = vector.shape_cast %95 : vector<1x8x32xf32> to vector<8x32xf32>
    %cst_63 = arith.constant dense<0.000000e+00> : vector<8x32xf32>
    %97 = tpu.matmul %94, %96, %cst_63 {dimension_numbers = #tpu.dot_dimension_numbers<[1], [0], [0], [1], [0, 0, 1, 1], [], []>} : vector<8x8xf32>, vector<8x32xf32>, vector<8x32xf32> -> vector<8x32xf32>
    %98 = arith.addf %80, %97 : vector<8x32xf32>
    %c0_64 = arith.constant 0 : index
    %c0_65 = arith.constant 0 : index
    %99 = vector.load %arg6[%c0_64, %c0_65] : memref<1x32xf32, #tpu.memory_space<vmem>>, vector<1x32xf32>
    %100 = vector.broadcast %99 : vector<1x32xf32> to vector<8x32xf32>
    %101 = arith.addf %98, %100 : vector<8x32xf32>
    %102 = arith.addf %1, %101 : vector<8x32xf32>
    %103 = arith.mulf %102, %102 : vector<8x32xf32>
    %cst_66 = arith.constant dense<0.000000e+00> : vector<8xf32>
    %104 = vector.multi_reduction <add>, %103, %cst_66 [1] : vector<8x32xf32> to vector<8xf32>
    %105 = vector.shape_cast %104 : vector<8xf32> to vector<8x1xf32>
    %cst_67 = arith.constant 3.200000e+01 : f32
    %106 = vector.broadcast %cst_67 : f32 to vector<8x1xf32>
    %107 = arith.divf %105, %106 : vector<8x1xf32>
    %cst_68 = arith.constant 1.1920929E-7 : f32
    %108 = vector.broadcast %cst_68 : f32 to vector<8x1xf32>
    %109 = arith.addf %107, %108 : vector<8x1xf32>
    %110 = math.rsqrt %109 : vector<8x1xf32>
    %111 = vector.broadcast %110 : vector<8x1xf32> to vector<8x32xf32>
    %112 = arith.mulf %102, %111 : vector<8x32xf32>
    %c0_69 = arith.constant 0 : index
    %c0_70 = arith.constant 0 : index
    %113 = vector.load %arg7[%c0_69, %c0_70] : memref<32x32xf32, #tpu.memory_space<vmem>>, vector<32x32xf32>
    %cst_71 = arith.constant dense<0.000000e+00> : vector<8x32xf32>
    %114 = tpu.matmul %112, %113, %cst_71 {dimension_numbers = #tpu.dot_dimension_numbers<[1], [0], [0], [1], [0, 0, 1, 1], [], []>} : vector<8x32xf32>, vector<32x32xf32>, vector<8x32xf32> -> vector<8x32xf32>
    %c0_72 = arith.constant 0 : index
    %c0_73 = arith.constant 0 : index
    %115 = vector.load %arg8[%c0_72, %c0_73] : memref<1x32xf32, #tpu.memory_space<vmem>>, vector<1x32xf32>
    %116 = vector.broadcast %115 : vector<1x32xf32> to vector<8x32xf32>
    %117 = arith.addf %114, %116 : vector<8x32xf32>
    %c0_74 = arith.constant 0 : index
    %c0_75 = arith.constant 0 : index
    %118 = vector.load %arg22[%c0_74, %c0_75] : memref<8x32xf32, #tpu.memory_space<vmem>>, vector<8x32xf32>
    tpu.vector_store %arg22[%c0_74, %c0_75], %117 {strides = array<i32>} : memref<8x32xf32, #tpu.memory_space<vmem>>, vector<8x32xf32>,
    %c0_76 = arith.constant 0 : index
    %c0_77 = arith.constant 0 : index
    %119 = vector.load %arg22[%c0_76, %c0_77] : memref<8x32xf32, #tpu.memory_space<vmem>>, vector<8x8xf32>
    %c0_78 = arith.constant 0 : index
    %c0_79 = arith.constant 0 : index
    %c0_80 = arith.constant 0 : index
    %120 = vector.load %arg23[%c0_78, %c0_79, %c0_80] : memref<1x16x64xf32, #tpu.memory_space<vmem>>, vector<1x16x8xf32>
    %121 = vector.shape_cast %120 : vector<1x16x8xf32> to vector<16x8xf32>
    %c0_81 = arith.constant 0 : index
    %c0_82 = arith.constant 0 : index
    %c32_83 = arith.constant 32 : index
    %122 = vector.load %arg23[%c0_81, %c0_82, %c32_83] : memref<1x16x64xf32, #tpu.memory_space<vmem>>, vector<1x16x8xf32>
    %123 = vector.shape_cast %122 : vector<1x16x8xf32> to vector<16x8xf32>
    %cst_84 = arith.constant dense<0.000000e+00> : vector<8x16xf32>
    %124 = tpu.matmul %119, %121, %cst_84 {dimension_numbers = #tpu.dot_dimension_numbers<[1], [1], [0], [0], [0, 0, 1, 0], [], []>} : vector<8x8xf32>, vector<16x8xf32>, vector<8x16xf32> -> vector<8x16xf32>
    %cst_85 = arith.constant dense<0xFF800000> : vector<8xf32>
    %125 = vector.multi_reduction <maximumf>, %124, %cst_85 [1] : vector<8x16xf32> to vector<8xf32>
    %126 = vector.shape_cast %125 : vector<8xf32> to vector<8x1xf32>
    %127 = vector.broadcast %126 : vector<8x1xf32> to vector<8x16xf32>
    %128 = arith.subf %124, %127 : vector<8x16xf32>
    %129 = math.exp %128 : vector<8x16xf32>
    %cst_86 = arith.constant dense<0.000000e+00> : vector<8xf32>
    %130 = vector.multi_reduction <add>, %129, %cst_86 [1] : vector<8x16xf32> to vector<8xf32>
    %131 = vector.shape_cast %130 : vector<8xf32> to vector<8x1xf32>
    %132 = vector.broadcast %131 : vector<8x1xf32> to vector<8x16xf32>
    %133 = arith.divf %129, %132 : vector<8x16xf32>
    %cst_87 = arith.constant dense<0.000000e+00> : vector<8x8xf32>
    %134 = tpu.matmul %133, %123, %cst_87 {dimension_numbers = #tpu.dot_dimension_numbers<[1], [0], [0], [1], [0, 0, 1, 1], [], []>} : vector<8x16xf32>, vector<16x8xf32>, vector<8x8xf32> -> vector<8x8xf32>
    %c0_88 = arith.constant 0 : index
    %c0_89 = arith.constant 0 : index
    %c0_90 = arith.constant 0 : index
    %135 = vector.load %arg11[%c0_88, %c0_89, %c0_90] : memref<4x8x32xf32, #tpu.memory_space<vmem>>, vector<1x8x32xf32>
    %136 = vector.shape_cast %135 : vector<1x8x32xf32> to vector<8x32xf32>
    %cst_91 = arith.constant dense<0.000000e+00> : vector<8x32xf32>
    %137 = tpu.matmul %134, %136, %cst_91 {dimension_numbers = #tpu.dot_dimension_numbers<[1], [0], [0], [1], [0, 0, 1, 1], [], []>} : vector<8x8xf32>, vector<8x32xf32>, vector<8x32xf32> -> vector<8x32xf32>
    %c0_92 = arith.constant 0 : index
    %c8_93 = arith.constant 8 : index
    %138 = vector.load %arg22[%c0_92, %c8_93] : memref<8x32xf32, #tpu.memory_space<vmem>>, vector<8x8xf32>
    %c0_94 = arith.constant 0 : index
    %c0_95 = arith.constant 0 : index
    %c8_96 = arith.constant 8 : index
    %139 = vector.load %arg23[%c0_94, %c0_95, %c8_96] : memref<1x16x64xf32, #tpu.memory_space<vmem>>, vector<1x16x8xf32>
    %140 = vector.shape_cast %139 : vector<1x16x8xf32> to vector<16x8xf32>
    %c0_97 = arith.constant 0 : index
    %c0_98 = arith.constant 0 : index
    %c40_99 = arith.constant 40 : index
    %141 = vector.load %arg23[%c0_97, %c0_98, %c40_99] : memref<1x16x64xf32, #tpu.memory_space<vmem>>, vector<1x16x8xf32>
    %142 = vector.shape_cast %141 : vector<1x16x8xf32> to vector<16x8xf32>
    %cst_100 = arith.constant dense<0.000000e+00> : vector<8x16xf32>
    %143 = tpu.matmul %138, %140, %cst_100 {dimension_numbers = #tpu.dot_dimension_numbers<[1], [1], [0], [0], [0, 0, 1, 0], [], []>} : vector<8x8xf32>, vector<16x8xf32>, vector<8x16xf32> -> vector<8x16xf32>
    %cst_101 = arith.constant dense<0xFF800000> : vector<8xf32>
    %144 = vector.multi_reduction <maximumf>, %143, %cst_101 [1] : vector<8x16xf32> to vector<8xf32>
    %145 = vector.shape_cast %144 : vector<8xf32> to vector<8x1xf32>
    %146 = vector.broadcast %145 : vector<8x1xf32> to vector<8x16xf32>
    %147 = arith.subf %143, %146 : vector<8x16xf32>
    %148 = math.exp %147 : vector<8x16xf32>
    %cst_102 = arith.constant dense<0.000000e+00> : vector<8xf32>
    %149 = vector.multi_reduction <add>, %148, %cst_102 [1] : vector<8x16xf32> to vector<8xf32>
    %150 = vector.shape_cast %149 : vector<8xf32> to vector<8x1xf32>
    %151 = vector.broadcast %150 : vector<8x1xf32> to vector<8x16xf32>
    %152 = arith.divf %148, %151 : vector<8x16xf32>
    %cst_103 = arith.constant dense<0.000000e+00> : vector<8x8xf32>
    %153 = tpu.matmul %152, %142, %cst_103 {dimension_numbers = #tpu.dot_dimension_numbers<[1], [0], [0], [1], [0, 0, 1, 1], [], []>} : vector<8x16xf32>, vector<16x8xf32>, vector<8x8xf32> -> vector<8x8xf32>
    %c1_104 = arith.constant 1 : index
    %c0_105 = arith.constant 0 : index
    %c0_106 = arith.constant 0 : index
    %154 = vector.load %arg11[%c1_104, %c0_105, %c0_106] : memref<4x8x32xf32, #tpu.memory_space<vmem>>, vector<1x8x32xf32>
    %155 = vector.shape_cast %154 : vector<1x8x32xf32> to vector<8x32xf32>
    %cst_107 = arith.constant dense<0.000000e+00> : vector<8x32xf32>
    %156 = tpu.matmul %153, %155, %cst_107 {dimension_numbers = #tpu.dot_dimension_numbers<[1], [0], [0], [1], [0, 0, 1, 1], [], []>} : vector<8x8xf32>, vector<8x32xf32>, vector<8x32xf32> -> vector<8x32xf32>
    %157 = arith.addf %137, %156 : vector<8x32xf32>
    %c0_108 = arith.constant 0 : index
    %c16_109 = arith.constant 16 : index
    %158 = vector.load %arg22[%c0_108, %c16_109] : memref<8x32xf32, #tpu.memory_space<vmem>>, vector<8x8xf32>
    %c0_110 = arith.constant 0 : index
    %c0_111 = arith.constant 0 : index
    %c16_112 = arith.constant 16 : index
    %159 = vector.load %arg23[%c0_110, %c0_111, %c16_112] : memref<1x16x64xf32, #tpu.memory_space<vmem>>, vector<1x16x8xf32>
    %160 = vector.shape_cast %159 : vector<1x16x8xf32> to vector<16x8xf32>
    %c0_113 = arith.constant 0 : index
    %c0_114 = arith.constant 0 : index
    %c48_115 = arith.constant 48 : index
    %161 = vector.load %arg23[%c0_113, %c0_114, %c48_115] : memref<1x16x64xf32, #tpu.memory_space<vmem>>, vector<1x16x8xf32>
    %162 = vector.shape_cast %161 : vector<1x16x8xf32> to vector<16x8xf32>
    %cst_116 = arith.constant dense<0.000000e+00> : vector<8x16xf32>
    %163 = tpu.matmul %158, %160, %cst_116 {dimension_numbers = #tpu.dot_dimension_numbers<[1], [1], [0], [0], [0, 0, 1, 0], [], []>} : vector<8x8xf32>, vector<16x8xf32>, vector<8x16xf32> -> vector<8x16xf32>
    %cst_117 = arith.constant dense<0xFF800000> : vector<8xf32>
    %164 = vector.multi_reduction <maximumf>, %163, %cst_117 [1] : vector<8x16xf32> to vector<8xf32>
    %165 = vector.shape_cast %164 : vector<8xf32> to vector<8x1xf32>
    %166 = vector.broadcast %165 : vector<8x1xf32> to vector<8x16xf32>
    %167 = arith.subf %163, %166 : vector<8x16xf32>
    %168 = math.exp %167 : vector<8x16xf32>
    %cst_118 = arith.constant dense<0.000000e+00> : vector<8xf32>
    %169 = vector.multi_reduction <add>, %168, %cst_118 [1] : vector<8x16xf32> to vector<8xf32>
    %170 = vector.shape_cast %169 : vector<8xf32> to vector<8x1xf32>
    %171 = vector.broadcast %170 : vector<8x1xf32> to vector<8x16xf32>
    %172 = arith.divf %168, %171 : vector<8x16xf32>
    %cst_119 = arith.constant dense<0.000000e+00> : vector<8x8xf32>
    %173 = tpu.matmul %172, %162, %cst_119 {dimension_numbers = #tpu.dot_dimension_numbers<[1], [0], [0], [1], [0, 0, 1, 1], [], []>} : vector<8x16xf32>, vector<16x8xf32>, vector<8x8xf32> -> vector<8x8xf32>
    %c2_120 = arith.constant 2 : index
    %c0_121 = arith.constant 0 : index
    %c0_122 = arith.constant 0 : index
    %174 = vector.load %arg11[%c2_120, %c0_121, %c0_122] : memref<4x8x32xf32, #tpu.memory_space<vmem>>, vector<1x8x32xf32>
    %175 = vector.shape_cast %174 : vector<1x8x32xf32> to vector<8x32xf32>
    %cst_123 = arith.constant dense<0.000000e+00> : vector<8x32xf32>
    %176 = tpu.matmul %173, %175, %cst_123 {dimension_numbers = #tpu.dot_dimension_numbers<[1], [0], [0], [1], [0, 0, 1, 1], [], []>} : vector<8x8xf32>, vector<8x32xf32>, vector<8x32xf32> -> vector<8x32xf32>
    %177 = arith.addf %157, %176 : vector<8x32xf32>
    %c0_124 = arith.constant 0 : index
    %c24_125 = arith.constant 24 : index
    %178 = vector.load %arg22[%c0_124, %c24_125] : memref<8x32xf32, #tpu.memory_space<vmem>>, vector<8x8xf32>
    %c0_126 = arith.constant 0 : index
    %c0_127 = arith.constant 0 : index
    %c24_128 = arith.constant 24 : index
    %179 = vector.load %arg23[%c0_126, %c0_127, %c24_128] : memref<1x16x64xf32, #tpu.memory_space<vmem>>, vector<1x16x8xf32>
    %180 = vector.shape_cast %179 : vector<1x16x8xf32> to vector<16x8xf32>
    %c0_129 = arith.constant 0 : index
    %c0_130 = arith.constant 0 : index
    %c56_131 = arith.constant 56 : index
    %181 = vector.load %arg23[%c0_129, %c0_130, %c56_131] : memref<1x16x64xf32, #tpu.memory_space<vmem>>, vector<1x16x8xf32>
    %182 = vector.shape_cast %181 : vector<1x16x8xf32> to vector<16x8xf32>
    %cst_132 = arith.constant dense<0.000000e+00> : vector<8x16xf32>
    %183 = tpu.matmul %178, %180, %cst_132 {dimension_numbers = #tpu.dot_dimension_numbers<[1], [1], [0], [0], [0, 0, 1, 0], [], []>} : vector<8x8xf32>, vector<16x8xf32>, vector<8x16xf32> -> vector<8x16xf32>
    %cst_133 = arith.constant dense<0xFF800000> : vector<8xf32>
    %184 = vector.multi_reduction <maximumf>, %183, %cst_133 [1] : vector<8x16xf32> to vector<8xf32>
    %185 = vector.shape_cast %184 : vector<8xf32> to vector<8x1xf32>
    %186 = vector.broadcast %185 : vector<8x1xf32> to vector<8x16xf32>
    %187 = arith.subf %183, %186 : vector<8x16xf32>
    %188 = math.exp %187 : vector<8x16xf32>
    %cst_134 = arith.constant dense<0.000000e+00> : vector<8xf32>
    %189 = vector.multi_reduction <add>, %188, %cst_134 [1] : vector<8x16xf32> to vector<8xf32>
    %190 = vector.shape_cast %189 : vector<8xf32> to vector<8x1xf32>
    %191 = vector.broadcast %190 : vector<8x1xf32> to vector<8x16xf32>
    %192 = arith.divf %188, %191 : vector<8x16xf32>
    %cst_135 = arith.constant dense<0.000000e+00> : vector<8x8xf32>
    %193 = tpu.matmul %192, %182, %cst_135 {dimension_numbers = #tpu.dot_dimension_numbers<[1], [0], [0], [1], [0, 0, 1, 1], [], []>} : vector<8x16xf32>, vector<16x8xf32>, vector<8x8xf32> -> vector<8x8xf32>
    %c3_136 = arith.constant 3 : index
    %c0_137 = arith.constant 0 : index
    %c0_138 = arith.constant 0 : index
    %194 = vector.load %arg11[%c3_136, %c0_137, %c0_138] : memref<4x8x32xf32, #tpu.memory_space<vmem>>, vector<1x8x32xf32>
    %195 = vector.shape_cast %194 : vector<1x8x32xf32> to vector<8x32xf32>
    %cst_139 = arith.constant dense<0.000000e+00> : vector<8x32xf32>
    %196 = tpu.matmul %193, %195, %cst_139 {dimension_numbers = #tpu.dot_dimension_numbers<[1], [0], [0], [1], [0, 0, 1, 1], [], []>} : vector<8x8xf32>, vector<8x32xf32>, vector<8x32xf32> -> vector<8x32xf32>
    %197 = arith.addf %177, %196 : vector<8x32xf32>
    %c0_140 = arith.constant 0 : index
    %c0_141 = arith.constant 0 : index
    %198 = vector.load %arg12[%c0_140, %c0_141] : memref<1x32xf32, #tpu.memory_space<vmem>>, vector<1x32xf32>
    %199 = vector.broadcast %198 : vector<1x32xf32> to vector<8x32xf32>
    %200 = arith.addf %197, %199 : vector<8x32xf32>
    %201 = arith.addf %102, %200 : vector<8x32xf32>
    %202 = arith.mulf %201, %201 : vector<8x32xf32>
    %cst_142 = arith.constant dense<0.000000e+00> : vector<8xf32>
    %203 = vector.multi_reduction <add>, %202, %cst_142 [1] : vector<8x32xf32> to vector<8xf32>
    %204 = vector.shape_cast %203 : vector<8xf32> to vector<8x1xf32>
    %cst_143 = arith.constant 3.200000e+01 : f32
    %205 = vector.broadcast %cst_143 : f32 to vector<8x1xf32>
    %206 = arith.divf %204, %205 : vector<8x1xf32>
    %cst_144 = arith.constant 1.1920929E-7 : f32
    %207 = vector.broadcast %cst_144 : f32 to vector<8x1xf32>
    %208 = arith.addf %206, %207 : vector<8x1xf32>
    %209 = math.rsqrt %208 : vector<8x1xf32>
    %210 = vector.broadcast %209 : vector<8x1xf32> to vector<8x32xf32>
    %211 = arith.mulf %201, %210 : vector<8x32xf32>
    %c0_145 = arith.constant 0 : index
    %c0_146 = arith.constant 0 : index
    %212 = vector.load %arg13[%c0_145, %c0_146] : memref<32x128xf32, #tpu.memory_space<vmem>>, vector<32x128xf32>
    %cst_147 = arith.constant dense<0.000000e+00> : vector<8x128xf32>
    %213 = tpu.matmul %211, %212, %cst_147 {dimension_numbers = #tpu.dot_dimension_numbers<[1], [0], [0], [1], [0, 0, 1, 1], [], []>} : vector<8x32xf32>, vector<32x128xf32>, vector<8x128xf32> -> vector<8x128xf32>
    %c0_148 = arith.constant 0 : index
    %c0_149 = arith.constant 0 : index
    %214 = vector.load %arg14[%c0_148, %c0_149] : memref<1x128xf32, #tpu.memory_space<vmem>>, vector<1x128xf32>
    %215 = vector.broadcast %214 : vector<1x128xf32> to vector<8x128xf32>
    %216 = arith.addf %213, %215 : vector<8x128xf32>
    %cst_150 = arith.constant 0.000000e+00 : f32
    %217 = vector.broadcast %cst_150 : f32 to vector<8x128xf32>
    %218 = arith.subf %217, %216 : vector<8x128xf32>
    %219 = math.exp %218 : vector<8x128xf32>
    %cst_151 = arith.constant 1.000000e+00 : f32
    %220 = vector.broadcast %cst_151 : f32 to vector<8x128xf32>
    %221 = arith.addf %220, %219 : vector<8x128xf32>
    %cst_152 = arith.constant 1.000000e+00 : f32
    %222 = vector.broadcast %cst_152 : f32 to vector<8x128xf32>
    %223 = arith.divf %222, %221 : vector<8x128xf32>
    %224 = arith.mulf %216, %223 : vector<8x128xf32>
    %c0_153 = arith.constant 0 : index
    %c0_154 = arith.constant 0 : index
    %225 = vector.load %arg15[%c0_153, %c0_154] : memref<32x128xf32, #tpu.memory_space<vmem>>, vector<32x128xf32>
    %cst_155 = arith.constant dense<0.000000e+00> : vector<8x32xf32>
    %226 = tpu.matmul %224, %225, %cst_155 {dimension_numbers = #tpu.dot_dimension_numbers<[1], [1], [0], [0], [0, 0, 1, 0], [], []>} : vector<8x128xf32>, vector<32x128xf32>, vector<8x32xf32> -> vector<8x32xf32>
    %c0_156 = arith.constant 0 : index
    %c0_157 = arith.constant 0 : index
    %227 = vector.load %arg16[%c0_156, %c0_157] : memref<1x32xf32, #tpu.memory_space<vmem>>, vector<1x32xf32>
    %228 = vector.broadcast %227 : vector<1x32xf32> to vector<8x32xf32>
    %229 = arith.addf %226, %228 : vector<8x32xf32>
    %230 = arith.addf %201, %229 : vector<8x32xf32>
    %c0_158 = arith.constant 0 : index
    %c0_159 = arith.constant 0 : index
    %c0_160 = arith.constant 0 : index
    %c0_161 = arith.constant 0 : index
    %231 = vector.load %arg19[%c0_158, %c0_159, %c0_160, %c0_161] : memref<1x3x8x32xf32, #tpu.memory_space<vmem>>, vector<1x1x8x32xf32>
    %232 = vector.shape_cast %231 : vector<1x1x8x32xf32> to vector<8x32xf32>
    %233 = vector.shape_cast %230 : vector<8x32xf32> to vector<1x1x8x32xf32>
    tpu.vector_store %arg19[%c0_158, %c0_159, %c0_160, %c0_161], %233 {strides = array<i32>} : memref<1x3x8x32xf32, #tpu.memory_space<vmem>>, vector<1x1x8x32xf32>,
    %234 = arith.mulf %230, %230 : vector<8x32xf32>
    %cst_162 = arith.constant dense<0.000000e+00> : vector<8xf32>
    %235 = vector.multi_reduction <add>, %234, %cst_162 [1] : vector<8x32xf32> to vector<8xf32>
    %236 = vector.shape_cast %235 : vector<8xf32> to vector<8x1xf32>
    %cst_163 = arith.constant 3.200000e+01 : f32
    %237 = vector.broadcast %cst_163 : f32 to vector<8x1xf32>
    %238 = arith.divf %236, %237 : vector<8x1xf32>
    %cst_164 = arith.constant 1.1920929E-7 : f32
    %239 = vector.broadcast %cst_164 : f32 to vector<8x1xf32>
    %240 = arith.addf %238, %239 : vector<8x1xf32>
    %241 = math.rsqrt %240 : vector<8x1xf32>
    %242 = vector.broadcast %241 : vector<8x1xf32> to vector<8x32xf32>
    %243 = arith.mulf %230, %242 : vector<8x32xf32>
    %c0_165 = arith.constant 0 : index
    %c0_166 = arith.constant 0 : index
    %244 = vector.load %arg3[%c0_165, %c0_166] : memref<32x96xf32, #tpu.memory_space<vmem>>, vector<32x96xf32>
    %cst_167 = arith.constant dense<0.000000e+00> : vector<8x96xf32>
    %245 = tpu.matmul %243, %244, %cst_167 {dimension_numbers = #tpu.dot_dimension_numbers<[1], [0], [0], [1], [0, 0, 1, 1], [], []>} : vector<8x32xf32>, vector<32x96xf32>, vector<8x96xf32> -> vector<8x96xf32>
    %c0_168 = arith.constant 0 : index
    %c0_169 = arith.constant 0 : index
    %246 = vector.load %arg4[%c0_168, %c0_169] : memref<1x96xf32, #tpu.memory_space<vmem>>, vector<1x96xf32>
    %247 = vector.broadcast %246 : vector<1x96xf32> to vector<8x96xf32>
    %248 = arith.addf %245, %247 : vector<8x96xf32>
    %c0_170 = arith.constant 0 : index
    %c0_171 = arith.constant 0 : index
    %249 = vector.load %arg21[%c0_170, %c0_171] : memref<8x96xf32, #tpu.memory_space<vmem>>, vector<8x96xf32>
    tpu.vector_store %arg21[%c0_170, %c0_171], %248 {strides = array<i32>} : memref<8x96xf32, #tpu.memory_space<vmem>>, vector<8x96xf32>,
    %c0_172 = arith.constant 0 : index
    %c0_173 = arith.constant 0 : index
    %250 = vector.load %arg21[%c0_172, %c0_173] : memref<8x96xf32, #tpu.memory_space<vmem>>, vector<8x8xf32>
    %c0_174 = arith.constant 0 : index
    %c32_175 = arith.constant 32 : index
    %251 = vector.load %arg21[%c0_174, %c32_175] : memref<8x96xf32, #tpu.memory_space<vmem>>, vector<8x8xf32>
    %c0_176 = arith.constant 0 : index
    %c64_177 = arith.constant 64 : index
    %252 = vector.load %arg21[%c0_176, %c64_177] : memref<8x96xf32, #tpu.memory_space<vmem>>, vector<8x8xf32>
    %cst_178 = arith.constant dense<0.000000e+00> : vector<8x8xf32>
    %253 = tpu.matmul %250, %251, %cst_178 {dimension_numbers = #tpu.dot_dimension_numbers<[1], [1], [0], [0], [0, 0, 1, 0], [], []>} : vector<8x8xf32>, vector<8x8xf32>, vector<8x8xf32> -> vector<8x8xf32>
    %cst_179 = arith.constant dense<0xFF800000> : vector<8xf32>
    %254 = vector.multi_reduction <maximumf>, %253, %cst_179 [1] : vector<8x8xf32> to vector<8xf32>
    %255 = vector.shape_cast %254 : vector<8xf32> to vector<8x1xf32>
    %256 = vector.broadcast %255 : vector<8x1xf32> to vector<8x8xf32>
    %257 = arith.subf %253, %256 : vector<8x8xf32>
    %258 = math.exp %257 : vector<8x8xf32>
    %cst_180 = arith.constant dense<0.000000e+00> : vector<8xf32>
    %259 = vector.multi_reduction <add>, %258, %cst_180 [1] : vector<8x8xf32> to vector<8xf32>
    %260 = vector.shape_cast %259 : vector<8xf32> to vector<8x1xf32>
    %261 = vector.broadcast %260 : vector<8x1xf32> to vector<8x8xf32>
    %262 = arith.divf %258, %261 : vector<8x8xf32>
    %cst_181 = arith.constant dense<0.000000e+00> : vector<8x8xf32>
    %263 = tpu.matmul %262, %252, %cst_181 {dimension_numbers = #tpu.dot_dimension_numbers<[1], [0], [0], [1], [0, 0, 1, 1], [], []>} : vector<8x8xf32>, vector<8x8xf32>, vector<8x8xf32> -> vector<8x8xf32>
    %c0_182 = arith.constant 0 : index
    %c0_183 = arith.constant 0 : index
    %c0_184 = arith.constant 0 : index
    %264 = vector.load %arg5[%c0_182, %c0_183, %c0_184] : memref<4x8x32xf32, #tpu.memory_space<vmem>>, vector<1x8x32xf32>
    %265 = vector.shape_cast %264 : vector<1x8x32xf32> to vector<8x32xf32>
    %cst_185 = arith.constant dense<0.000000e+00> : vector<8x32xf32>
    %266 = tpu.matmul %263, %265, %cst_185 {dimension_numbers = #tpu.dot_dimension_numbers<[1], [0], [0], [1], [0, 0, 1, 1], [], []>} : vector<8x8xf32>, vector<8x32xf32>, vector<8x32xf32> -> vector<8x32xf32>
    %c0_186 = arith.constant 0 : index
    %c8_187 = arith.constant 8 : index
    %267 = vector.load %arg21[%c0_186, %c8_187] : memref<8x96xf32, #tpu.memory_space<vmem>>, vector<8x8xf32>
    %c0_188 = arith.constant 0 : index
    %c40_189 = arith.constant 40 : index
    %268 = vector.load %arg21[%c0_188, %c40_189] : memref<8x96xf32, #tpu.memory_space<vmem>>, vector<8x8xf32>
    %c0_190 = arith.constant 0 : index
    %c72_191 = arith.constant 72 : index
    %269 = vector.load %arg21[%c0_190, %c72_191] : memref<8x96xf32, #tpu.memory_space<vmem>>, vector<8x8xf32>
    %cst_192 = arith.constant dense<0.000000e+00> : vector<8x8xf32>
    %270 = tpu.matmul %267, %268, %cst_192 {dimension_numbers = #tpu.dot_dimension_numbers<[1], [1], [0], [0], [0, 0, 1, 0], [], []>} : vector<8x8xf32>, vector<8x8xf32>, vector<8x8xf32> -> vector<8x8xf32>
    %cst_193 = arith.constant dense<0xFF800000> : vector<8xf32>
    %271 = vector.multi_reduction <maximumf>, %270, %cst_193 [1] : vector<8x8xf32> to vector<8xf32>
    %272 = vector.shape_cast %271 : vector<8xf32> to vector<8x1xf32>
    %273 = vector.broadcast %272 : vector<8x1xf32> to vector<8x8xf32>
    %274 = arith.subf %270, %273 : vector<8x8xf32>
    %275 = math.exp %274 : vector<8x8xf32>
    %cst_194 = arith.constant dense<0.000000e+00> : vector<8xf32>
    %276 = vector.multi_reduction <add>, %275, %cst_194 [1] : vector<8x8xf32> to vector<8xf32>
    %277 = vector.shape_cast %276 : vector<8xf32> to vector<8x1xf32>
    %278 = vector.broadcast %277 : vector<8x1xf32> to vector<8x8xf32>
    %279 = arith.divf %275, %278 : vector<8x8xf32>
    %cst_195 = arith.constant dense<0.000000e+00> : vector<8x8xf32>
    %280 = tpu.matmul %279, %269, %cst_195 {dimension_numbers = #tpu.dot_dimension_numbers<[1], [0], [0], [1], [0, 0, 1, 1], [], []>} : vector<8x8xf32>, vector<8x8xf32>, vector<8x8xf32> -> vector<8x8xf32>
    %c1_196 = arith.constant 1 : index
    %c0_197 = arith.constant 0 : index
    %c0_198 = arith.constant 0 : index
    %281 = vector.load %arg5[%c1_196, %c0_197, %c0_198] : memref<4x8x32xf32, #tpu.memory_space<vmem>>, vector<1x8x32xf32>
    %282 = vector.shape_cast %281 : vector<1x8x32xf32> to vector<8x32xf32>
    %cst_199 = arith.constant dense<0.000000e+00> : vector<8x32xf32>
    %283 = tpu.matmul %280, %282, %cst_199 {dimension_numbers = #tpu.dot_dimension_numbers<[1], [0], [0], [1], [0, 0, 1, 1], [], []>} : vector<8x8xf32>, vector<8x32xf32>, vector<8x32xf32> -> vector<8x32xf32>
    %284 = arith.addf %266, %283 : vector<8x32xf32>
    %c0_200 = arith.constant 0 : index
    %c16_201 = arith.constant 16 : index
    %285 = vector.load %arg21[%c0_200, %c16_201] : memref<8x96xf32, #tpu.memory_space<vmem>>, vector<8x8xf32>
    %c0_202 = arith.constant 0 : index
    %c48_203 = arith.constant 48 : index
    %286 = vector.load %arg21[%c0_202, %c48_203] : memref<8x96xf32, #tpu.memory_space<vmem>>, vector<8x8xf32>
    %c0_204 = arith.constant 0 : index
    %c80_205 = arith.constant 80 : index
    %287 = vector.load %arg21[%c0_204, %c80_205] : memref<8x96xf32, #tpu.memory_space<vmem>>, vector<8x8xf32>
    %cst_206 = arith.constant dense<0.000000e+00> : vector<8x8xf32>
    %288 = tpu.matmul %285, %286, %cst_206 {dimension_numbers = #tpu.dot_dimension_numbers<[1], [1], [0], [0], [0, 0, 1, 0], [], []>} : vector<8x8xf32>, vector<8x8xf32>, vector<8x8xf32> -> vector<8x8xf32>
    %cst_207 = arith.constant dense<0xFF800000> : vector<8xf32>
    %289 = vector.multi_reduction <maximumf>, %288, %cst_207 [1] : vector<8x8xf32> to vector<8xf32>
    %290 = vector.shape_cast %289 : vector<8xf32> to vector<8x1xf32>
    %291 = vector.broadcast %290 : vector<8x1xf32> to vector<8x8xf32>
    %292 = arith.subf %288, %291 : vector<8x8xf32>
    %293 = math.exp %292 : vector<8x8xf32>
    %cst_208 = arith.constant dense<0.000000e+00> : vector<8xf32>
    %294 = vector.multi_reduction <add>, %293, %cst_208 [1] : vector<8x8xf32> to vector<8xf32>
    %295 = vector.shape_cast %294 : vector<8xf32> to vector<8x1xf32>
    %296 = vector.broadcast %295 : vector<8x1xf32> to vector<8x8xf32>
    %297 = arith.divf %293, %296 : vector<8x8xf32>
    %cst_209 = arith.constant dense<0.000000e+00> : vector<8x8xf32>
    %298 = tpu.matmul %297, %287, %cst_209 {dimension_numbers = #tpu.dot_dimension_numbers<[1], [0], [0], [1], [0, 0, 1, 1], [], []>} : vector<8x8xf32>, vector<8x8xf32>, vector<8x8xf32> -> vector<8x8xf32>
    %c2_210 = arith.constant 2 : index
    %c0_211 = arith.constant 0 : index
    %c0_212 = arith.constant 0 : index
    %299 = vector.load %arg5[%c2_210, %c0_211, %c0_212] : memref<4x8x32xf32, #tpu.memory_space<vmem>>, vector<1x8x32xf32>
    %300 = vector.shape_cast %299 : vector<1x8x32xf32> to vector<8x32xf32>
    %cst_213 = arith.constant dense<0.000000e+00> : vector<8x32xf32>
    %301 = tpu.matmul %298, %300, %cst_213 {dimension_numbers = #tpu.dot_dimension_numbers<[1], [0], [0], [1], [0, 0, 1, 1], [], []>} : vector<8x8xf32>, vector<8x32xf32>, vector<8x32xf32> -> vector<8x32xf32>
    %302 = arith.addf %284, %301 : vector<8x32xf32>
    %c0_214 = arith.constant 0 : index
    %c24_215 = arith.constant 24 : index
    %303 = vector.load %arg21[%c0_214, %c24_215] : memref<8x96xf32, #tpu.memory_space<vmem>>, vector<8x8xf32>
    %c0_216 = arith.constant 0 : index
    %c56_217 = arith.constant 56 : index
    %304 = vector.load %arg21[%c0_216, %c56_217] : memref<8x96xf32, #tpu.memory_space<vmem>>, vector<8x8xf32>
    %c0_218 = arith.constant 0 : index
    %c88_219 = arith.constant 88 : index
    %305 = vector.load %arg21[%c0_218, %c88_219] : memref<8x96xf32, #tpu.memory_space<vmem>>, vector<8x8xf32>
    %cst_220 = arith.constant dense<0.000000e+00> : vector<8x8xf32>
    %306 = tpu.matmul %303, %304, %cst_220 {dimension_numbers = #tpu.dot_dimension_numbers<[1], [1], [0], [0], [0, 0, 1, 0], [], []>} : vector<8x8xf32>, vector<8x8xf32>, vector<8x8xf32> -> vector<8x8xf32>
    %cst_221 = arith.constant dense<0xFF800000> : vector<8xf32>
    %307 = vector.multi_reduction <maximumf>, %306, %cst_221 [1] : vector<8x8xf32> to vector<8xf32>
    %308 = vector.shape_cast %307 : vector<8xf32> to vector<8x1xf32>
    %309 = vector.broadcast %308 : vector<8x1xf32> to vector<8x8xf32>
    %310 = arith.subf %306, %309 : vector<8x8xf32>
    %311 = math.exp %310 : vector<8x8xf32>
    %cst_222 = arith.constant dense<0.000000e+00> : vector<8xf32>
    %312 = vector.multi_reduction <add>, %311, %cst_222 [1] : vector<8x8xf32> to vector<8xf32>
    %313 = vector.shape_cast %312 : vector<8xf32> to vector<8x1xf32>
    %314 = vector.broadcast %313 : vector<8x1xf32> to vector<8x8xf32>
    %315 = arith.divf %311, %314 : vector<8x8xf32>
    %cst_223 = arith.constant dense<0.000000e+00> : vector<8x8xf32>
    %316 = tpu.matmul %315, %305, %cst_223 {dimension_numbers = #tpu.dot_dimension_numbers<[1], [0], [0], [1], [0, 0, 1, 1], [], []>} : vector<8x8xf32>, vector<8x8xf32>, vector<8x8xf32> -> vector<8x8xf32>
    %c3_224 = arith.constant 3 : index
    %c0_225 = arith.constant 0 : index
    %c0_226 = arith.constant 0 : index
    %317 = vector.load %arg5[%c3_224, %c0_225, %c0_226] : memref<4x8x32xf32, #tpu.memory_space<vmem>>, vector<1x8x32xf32>
    %318 = vector.shape_cast %317 : vector<1x8x32xf32> to vector<8x32xf32>
    %cst_227 = arith.constant dense<0.000000e+00> : vector<8x32xf32>
    %319 = tpu.matmul %316, %318, %cst_227 {dimension_numbers = #tpu.dot_dimension_numbers<[1], [0], [0], [1], [0, 0, 1, 1], [], []>} : vector<8x8xf32>, vector<8x32xf32>, vector<8x32xf32> -> vector<8x32xf32>
    %320 = arith.addf %302, %319 : vector<8x32xf32>
    %c0_228 = arith.constant 0 : index
    %c0_229 = arith.constant 0 : index
    %321 = vector.load %arg6[%c0_228, %c0_229] : memref<1x32xf32, #tpu.memory_space<vmem>>, vector<1x32xf32>
    %322 = vector.broadcast %321 : vector<1x32xf32> to vector<8x32xf32>
    %323 = arith.addf %320, %322 : vector<8x32xf32>
    %324 = arith.addf %230, %323 : vector<8x32xf32>
    %325 = arith.mulf %324, %324 : vector<8x32xf32>
    %cst_230 = arith.constant dense<0.000000e+00> : vector<8xf32>
    %326 = vector.multi_reduction <add>, %325, %cst_230 [1] : vector<8x32xf32> to vector<8xf32>
    %327 = vector.shape_cast %326 : vector<8xf32> to vector<8x1xf32>
    %cst_231 = arith.constant 3.200000e+01 : f32
    %328 = vector.broadcast %cst_231 : f32 to vector<8x1xf32>
    %329 = arith.divf %327, %328 : vector<8x1xf32>
    %cst_232 = arith.constant 1.1920929E-7 : f32
    %330 = vector.broadcast %cst_232 : f32 to vector<8x1xf32>
    %331 = arith.addf %329, %330 : vector<8x1xf32>
    %332 = math.rsqrt %331 : vector<8x1xf32>
    %333 = vector.broadcast %332 : vector<8x1xf32> to vector<8x32xf32>
    %334 = arith.mulf %324, %333 : vector<8x32xf32>
    %c0_233 = arith.constant 0 : index
    %c0_234 = arith.constant 0 : index
    %335 = vector.load %arg7[%c0_233, %c0_234] : memref<32x32xf32, #tpu.memory_space<vmem>>, vector<32x32xf32>
    %cst_235 = arith.constant dense<0.000000e+00> : vector<8x32xf32>
    %336 = tpu.matmul %334, %335, %cst_235 {dimension_numbers = #tpu.dot_dimension_numbers<[1], [0], [0], [1], [0, 0, 1, 1], [], []>} : vector<8x32xf32>, vector<32x32xf32>, vector<8x32xf32> -> vector<8x32xf32>
    %c0_236 = arith.constant 0 : index
    %c0_237 = arith.constant 0 : index
    %337 = vector.load %arg8[%c0_236, %c0_237] : memref<1x32xf32, #tpu.memory_space<vmem>>, vector<1x32xf32>
    %338 = vector.broadcast %337 : vector<1x32xf32> to vector<8x32xf32>
    %339 = arith.addf %336, %338 : vector<8x32xf32>
    %c0_238 = arith.constant 0 : index
    %c0_239 = arith.constant 0 : index
    %340 = vector.load %arg22[%c0_238, %c0_239] : memref<8x32xf32, #tpu.memory_space<vmem>>, vector<8x32xf32>
    tpu.vector_store %arg22[%c0_238, %c0_239], %339 {strides = array<i32>} : memref<8x32xf32, #tpu.memory_space<vmem>>, vector<8x32xf32>,
    %c0_240 = arith.constant 0 : index
    %c0_241 = arith.constant 0 : index
    %341 = vector.load %arg22[%c0_240, %c0_241] : memref<8x32xf32, #tpu.memory_space<vmem>>, vector<8x8xf32>
    %c0_242 = arith.constant 0 : index
    %c0_243 = arith.constant 0 : index
    %c0_244 = arith.constant 0 : index
    %342 = vector.load %arg23[%c0_242, %c0_243, %c0_244] : memref<1x16x64xf32, #tpu.memory_space<vmem>>, vector<1x16x8xf32>
    %343 = vector.shape_cast %342 : vector<1x16x8xf32> to vector<16x8xf32>
    %c0_245 = arith.constant 0 : index
    %c0_246 = arith.constant 0 : index
    %c32_247 = arith.constant 32 : index
    %344 = vector.load %arg23[%c0_245, %c0_246, %c32_247] : memref<1x16x64xf32, #tpu.memory_space<vmem>>, vector<1x16x8xf32>
    %345 = vector.shape_cast %344 : vector<1x16x8xf32> to vector<16x8xf32>
    %cst_248 = arith.constant dense<0.000000e+00> : vector<8x16xf32>
    %346 = tpu.matmul %341, %343, %cst_248 {dimension_numbers = #tpu.dot_dimension_numbers<[1], [1], [0], [0], [0, 0, 1, 0], [], []>} : vector<8x8xf32>, vector<16x8xf32>, vector<8x16xf32> -> vector<8x16xf32>
    %cst_249 = arith.constant dense<0xFF800000> : vector<8xf32>
    %347 = vector.multi_reduction <maximumf>, %346, %cst_249 [1] : vector<8x16xf32> to vector<8xf32>
    %348 = vector.shape_cast %347 : vector<8xf32> to vector<8x1xf32>
    %349 = vector.broadcast %348 : vector<8x1xf32> to vector<8x16xf32>
    %350 = arith.subf %346, %349 : vector<8x16xf32>
    %351 = math.exp %350 : vector<8x16xf32>
    %cst_250 = arith.constant dense<0.000000e+00> : vector<8xf32>
    %352 = vector.multi_reduction <add>, %351, %cst_250 [1] : vector<8x16xf32> to vector<8xf32>
    %353 = vector.shape_cast %352 : vector<8xf32> to vector<8x1xf32>
    %354 = vector.broadcast %353 : vector<8x1xf32> to vector<8x16xf32>
    %355 = arith.divf %351, %354 : vector<8x16xf32>
    %cst_251 = arith.constant dense<0.000000e+00> : vector<8x8xf32>
    %356 = tpu.matmul %355, %345, %cst_251 {dimension_numbers = #tpu.dot_dimension_numbers<[1], [0], [0], [1], [0, 0, 1, 1], [], []>} : vector<8x16xf32>, vector<16x8xf32>, vector<8x8xf32> -> vector<8x8xf32>
    %c0_252 = arith.constant 0 : index
    %c0_253 = arith.constant 0 : index
    %c0_254 = arith.constant 0 : index
    %357 = vector.load %arg11[%c0_252, %c0_253, %c0_254] : memref<4x8x32xf32, #tpu.memory_space<vmem>>, vector<1x8x32xf32>
    %358 = vector.shape_cast %357 : vector<1x8x32xf32> to vector<8x32xf32>
    %cst_255 = arith.constant dense<0.000000e+00> : vector<8x32xf32>
    %359 = tpu.matmul %356, %358, %cst_255 {dimension_numbers = #tpu.dot_dimension_numbers<[1], [0], [0], [1], [0, 0, 1, 1], [], []>} : vector<8x8xf32>, vector<8x32xf32>, vector<8x32xf32> -> vector<8x32xf32>
    %c0_256 = arith.constant 0 : index
    %c8_257 = arith.constant 8 : index
    %360 = vector.load %arg22[%c0_256, %c8_257] : memref<8x32xf32, #tpu.memory_space<vmem>>, vector<8x8xf32>
    %c0_258 = arith.constant 0 : index
    %c0_259 = arith.constant 0 : index
    %c8_260 = arith.constant 8 : index
    %361 = vector.load %arg23[%c0_258, %c0_259, %c8_260] : memref<1x16x64xf32, #tpu.memory_space<vmem>>, vector<1x16x8xf32>
    %362 = vector.shape_cast %361 : vector<1x16x8xf32> to vector<16x8xf32>
    %c0_261 = arith.constant 0 : index
    %c0_262 = arith.constant 0 : index
    %c40_263 = arith.constant 40 : index
    %363 = vector.load %arg23[%c0_261, %c0_262, %c40_263] : memref<1x16x64xf32, #tpu.memory_space<vmem>>, vector<1x16x8xf32>
    %364 = vector.shape_cast %363 : vector<1x16x8xf32> to vector<16x8xf32>
    %cst_264 = arith.constant dense<0.000000e+00> : vector<8x16xf32>
    %365 = tpu.matmul %360, %362, %cst_264 {dimension_numbers = #tpu.dot_dimension_numbers<[1], [1], [0], [0], [0, 0, 1, 0], [], []>} : vector<8x8xf32>, vector<16x8xf32>, vector<8x16xf32> -> vector<8x16xf32>
    %cst_265 = arith.constant dense<0xFF800000> : vector<8xf32>
    %366 = vector.multi_reduction <maximumf>, %365, %cst_265 [1] : vector<8x16xf32> to vector<8xf32>
    %367 = vector.shape_cast %366 : vector<8xf32> to vector<8x1xf32>
    %368 = vector.broadcast %367 : vector<8x1xf32> to vector<8x16xf32>
    %369 = arith.subf %365, %368 : vector<8x16xf32>
    %370 = math.exp %369 : vector<8x16xf32>
    %cst_266 = arith.constant dense<0.000000e+00> : vector<8xf32>
    %371 = vector.multi_reduction <add>, %370, %cst_266 [1] : vector<8x16xf32> to vector<8xf32>
    %372 = vector.shape_cast %371 : vector<8xf32> to vector<8x1xf32>
    %373 = vector.broadcast %372 : vector<8x1xf32> to vector<8x16xf32>
    %374 = arith.divf %370, %373 : vector<8x16xf32>
    %cst_267 = arith.constant dense<0.000000e+00> : vector<8x8xf32>
    %375 = tpu.matmul %374, %364, %cst_267 {dimension_numbers = #tpu.dot_dimension_numbers<[1], [0], [0], [1], [0, 0, 1, 1], [], []>} : vector<8x16xf32>, vector<16x8xf32>, vector<8x8xf32> -> vector<8x8xf32>
    %c1_268 = arith.constant 1 : index
    %c0_269 = arith.constant 0 : index
    %c0_270 = arith.constant 0 : index
    %376 = vector.load %arg11[%c1_268, %c0_269, %c0_270] : memref<4x8x32xf32, #tpu.memory_space<vmem>>, vector<1x8x32xf32>
    %377 = vector.shape_cast %376 : vector<1x8x32xf32> to vector<8x32xf32>
    %cst_271 = arith.constant dense<0.000000e+00> : vector<8x32xf32>
    %378 = tpu.matmul %375, %377, %cst_271 {dimension_numbers = #tpu.dot_dimension_numbers<[1], [0], [0], [1], [0, 0, 1, 1], [], []>} : vector<8x8xf32>, vector<8x32xf32>, vector<8x32xf32> -> vector<8x32xf32>
    %379 = arith.addf %359, %378 : vector<8x32xf32>
    %c0_272 = arith.constant 0 : index
    %c16_273 = arith.constant 16 : index
    %380 = vector.load %arg22[%c0_272, %c16_273] : memref<8x32xf32, #tpu.memory_space<vmem>>, vector<8x8xf32>
    %c0_274 = arith.constant 0 : index
    %c0_275 = arith.constant 0 : index
    %c16_276 = arith.constant 16 : index
    %381 = vector.load %arg23[%c0_274, %c0_275, %c16_276] : memref<1x16x64xf32, #tpu.memory_space<vmem>>, vector<1x16x8xf32>
    %382 = vector.shape_cast %381 : vector<1x16x8xf32> to vector<16x8xf32>
    %c0_277 = arith.constant 0 : index
    %c0_278 = arith.constant 0 : index
    %c48_279 = arith.constant 48 : index
    %383 = vector.load %arg23[%c0_277, %c0_278, %c48_279] : memref<1x16x64xf32, #tpu.memory_space<vmem>>, vector<1x16x8xf32>
    %384 = vector.shape_cast %383 : vector<1x16x8xf32> to vector<16x8xf32>
    %cst_280 = arith.constant dense<0.000000e+00> : vector<8x16xf32>
    %385 = tpu.matmul %380, %382, %cst_280 {dimension_numbers = #tpu.dot_dimension_numbers<[1], [1], [0], [0], [0, 0, 1, 0], [], []>} : vector<8x8xf32>, vector<16x8xf32>, vector<8x16xf32> -> vector<8x16xf32>
    %cst_281 = arith.constant dense<0xFF800000> : vector<8xf32>
    %386 = vector.multi_reduction <maximumf>, %385, %cst_281 [1] : vector<8x16xf32> to vector<8xf32>
    %387 = vector.shape_cast %386 : vector<8xf32> to vector<8x1xf32>
    %388 = vector.broadcast %387 : vector<8x1xf32> to vector<8x16xf32>
    %389 = arith.subf %385, %388 : vector<8x16xf32>
    %390 = math.exp %389 : vector<8x16xf32>
    %cst_282 = arith.constant dense<0.000000e+00> : vector<8xf32>
    %391 = vector.multi_reduction <add>, %390, %cst_282 [1] : vector<8x16xf32> to vector<8xf32>
    %392 = vector.shape_cast %391 : vector<8xf32> to vector<8x1xf32>
    %393 = vector.broadcast %392 : vector<8x1xf32> to vector<8x16xf32>
    %394 = arith.divf %390, %393 : vector<8x16xf32>
    %cst_283 = arith.constant dense<0.000000e+00> : vector<8x8xf32>
    %395 = tpu.matmul %394, %384, %cst_283 {dimension_numbers = #tpu.dot_dimension_numbers<[1], [0], [0], [1], [0, 0, 1, 1], [], []>} : vector<8x16xf32>, vector<16x8xf32>, vector<8x8xf32> -> vector<8x8xf32>
    %c2_284 = arith.constant 2 : index
    %c0_285 = arith.constant 0 : index
    %c0_286 = arith.constant 0 : index
    %396 = vector.load %arg11[%c2_284, %c0_285, %c0_286] : memref<4x8x32xf32, #tpu.memory_space<vmem>>, vector<1x8x32xf32>
    %397 = vector.shape_cast %396 : vector<1x8x32xf32> to vector<8x32xf32>
    %cst_287 = arith.constant dense<0.000000e+00> : vector<8x32xf32>
    %398 = tpu.matmul %395, %397, %cst_287 {dimension_numbers = #tpu.dot_dimension_numbers<[1], [0], [0], [1], [0, 0, 1, 1], [], []>} : vector<8x8xf32>, vector<8x32xf32>, vector<8x32xf32> -> vector<8x32xf32>
    %399 = arith.addf %379, %398 : vector<8x32xf32>
    %c0_288 = arith.constant 0 : index
    %c24_289 = arith.constant 24 : index
    %400 = vector.load %arg22[%c0_288, %c24_289] : memref<8x32xf32, #tpu.memory_space<vmem>>, vector<8x8xf32>
    %c0_290 = arith.constant 0 : index
    %c0_291 = arith.constant 0 : index
    %c24_292 = arith.constant 24 : index
    %401 = vector.load %arg23[%c0_290, %c0_291, %c24_292] : memref<1x16x64xf32, #tpu.memory_space<vmem>>, vector<1x16x8xf32>
    %402 = vector.shape_cast %401 : vector<1x16x8xf32> to vector<16x8xf32>
    %c0_293 = arith.constant 0 : index
    %c0_294 = arith.constant 0 : index
    %c56_295 = arith.constant 56 : index
    %403 = vector.load %arg23[%c0_293, %c0_294, %c56_295] : memref<1x16x64xf32, #tpu.memory_space<vmem>>, vector<1x16x8xf32>
    %404 = vector.shape_cast %403 : vector<1x16x8xf32> to vector<16x8xf32>
    %cst_296 = arith.constant dense<0.000000e+00> : vector<8x16xf32>
    %405 = tpu.matmul %400, %402, %cst_296 {dimension_numbers = #tpu.dot_dimension_numbers<[1], [1], [0], [0], [0, 0, 1, 0], [], []>} : vector<8x8xf32>, vector<16x8xf32>, vector<8x16xf32> -> vector<8x16xf32>
    %cst_297 = arith.constant dense<0xFF800000> : vector<8xf32>
    %406 = vector.multi_reduction <maximumf>, %405, %cst_297 [1] : vector<8x16xf32> to vector<8xf32>
    %407 = vector.shape_cast %406 : vector<8xf32> to vector<8x1xf32>
    %408 = vector.broadcast %407 : vector<8x1xf32> to vector<8x16xf32>
    %409 = arith.subf %405, %408 : vector<8x16xf32>
    %410 = math.exp %409 : vector<8x16xf32>
    %cst_298 = arith.constant dense<0.000000e+00> : vector<8xf32>
    %411 = vector.multi_reduction <add>, %410, %cst_298 [1] : vector<8x16xf32> to vector<8xf32>
    %412 = vector.shape_cast %411 : vector<8xf32> to vector<8x1xf32>
    %413 = vector.broadcast %412 : vector<8x1xf32> to vector<8x16xf32>
    %414 = arith.divf %410, %413 : vector<8x16xf32>
    %cst_299 = arith.constant dense<0.000000e+00> : vector<8x8xf32>
    %415 = tpu.matmul %414, %404, %cst_299 {dimension_numbers = #tpu.dot_dimension_numbers<[1], [0], [0], [1], [0, 0, 1, 1], [], []>} : vector<8x16xf32>, vector<16x8xf32>, vector<8x8xf32> -> vector<8x8xf32>
    %c3_300 = arith.constant 3 : index
    %c0_301 = arith.constant 0 : index
    %c0_302 = arith.constant 0 : index
    %416 = vector.load %arg11[%c3_300, %c0_301, %c0_302] : memref<4x8x32xf32, #tpu.memory_space<vmem>>, vector<1x8x32xf32>
    %417 = vector.shape_cast %416 : vector<1x8x32xf32> to vector<8x32xf32>
    %cst_303 = arith.constant dense<0.000000e+00> : vector<8x32xf32>
    %418 = tpu.matmul %415, %417, %cst_303 {dimension_numbers = #tpu.dot_dimension_numbers<[1], [0], [0], [1], [0, 0, 1, 1], [], []>} : vector<8x8xf32>, vector<8x32xf32>, vector<8x32xf32> -> vector<8x32xf32>
    %419 = arith.addf %399, %418 : vector<8x32xf32>
    %c0_304 = arith.constant 0 : index
    %c0_305 = arith.constant 0 : index
    %420 = vector.load %arg12[%c0_304, %c0_305] : memref<1x32xf32, #tpu.memory_space<vmem>>, vector<1x32xf32>
    %421 = vector.broadcast %420 : vector<1x32xf32> to vector<8x32xf32>
    %422 = arith.addf %419, %421 : vector<8x32xf32>
    %423 = arith.addf %324, %422 : vector<8x32xf32>
    %424 = arith.mulf %423, %423 : vector<8x32xf32>
    %cst_306 = arith.constant dense<0.000000e+00> : vector<8xf32>
    %425 = vector.multi_reduction <add>, %424, %cst_306 [1] : vector<8x32xf32> to vector<8xf32>
    %426 = vector.shape_cast %425 : vector<8xf32> to vector<8x1xf32>
    %cst_307 = arith.constant 3.200000e+01 : f32
    %427 = vector.broadcast %cst_307 : f32 to vector<8x1xf32>
    %428 = arith.divf %426, %427 : vector<8x1xf32>
    %cst_308 = arith.constant 1.1920929E-7 : f32
    %429 = vector.broadcast %cst_308 : f32 to vector<8x1xf32>
    %430 = arith.addf %428, %429 : vector<8x1xf32>
    %431 = math.rsqrt %430 : vector<8x1xf32>
    %432 = vector.broadcast %431 : vector<8x1xf32> to vector<8x32xf32>
    %433 = arith.mulf %423, %432 : vector<8x32xf32>
    %c0_309 = arith.constant 0 : index
    %c0_310 = arith.constant 0 : index
    %434 = vector.load %arg13[%c0_309, %c0_310] : memref<32x128xf32, #tpu.memory_space<vmem>>, vector<32x128xf32>
    %cst_311 = arith.constant dense<0.000000e+00> : vector<8x128xf32>
    %435 = tpu.matmul %433, %434, %cst_311 {dimension_numbers = #tpu.dot_dimension_numbers<[1], [0], [0], [1], [0, 0, 1, 1], [], []>} : vector<8x32xf32>, vector<32x128xf32>, vector<8x128xf32> -> vector<8x128xf32>
    %c0_312 = arith.constant 0 : index
    %c0_313 = arith.constant 0 : index
    %436 = vector.load %arg14[%c0_312, %c0_313] : memref<1x128xf32, #tpu.memory_space<vmem>>, vector<1x128xf32>
    %437 = vector.broadcast %436 : vector<1x128xf32> to vector<8x128xf32>
    %438 = arith.addf %435, %437 : vector<8x128xf32>
    %cst_314 = arith.constant 0.000000e+00 : f32
    %439 = vector.broadcast %cst_314 : f32 to vector<8x128xf32>
    %440 = arith.subf %439, %438 : vector<8x128xf32>
    %441 = math.exp %440 : vector<8x128xf32>
    %cst_315 = arith.constant 1.000000e+00 : f32
    %442 = vector.broadcast %cst_315 : f32 to vector<8x128xf32>
    %443 = arith.addf %442, %441 : vector<8x128xf32>
    %cst_316 = arith.constant 1.000000e+00 : f32
    %444 = vector.broadcast %cst_316 : f32 to vector<8x128xf32>
    %445 = arith.divf %444, %443 : vector<8x128xf32>
    %446 = arith.mulf %438, %445 : vector<8x128xf32>
    %c0_317 = arith.constant 0 : index
    %c0_318 = arith.constant 0 : index
    %447 = vector.load %arg15[%c0_317, %c0_318] : memref<32x128xf32, #tpu.memory_space<vmem>>, vector<32x128xf32>
    %cst_319 = arith.constant dense<0.000000e+00> : vector<8x32xf32>
    %448 = tpu.matmul %446, %447, %cst_319 {dimension_numbers = #tpu.dot_dimension_numbers<[1], [1], [0], [0], [0, 0, 1, 0], [], []>} : vector<8x128xf32>, vector<32x128xf32>, vector<8x32xf32> -> vector<8x32xf32>
    %c0_320 = arith.constant 0 : index
    %c0_321 = arith.constant 0 : index
    %449 = vector.load %arg16[%c0_320, %c0_321] : memref<1x32xf32, #tpu.memory_space<vmem>>, vector<1x32xf32>
    %450 = vector.broadcast %449 : vector<1x32xf32> to vector<8x32xf32>
    %451 = arith.addf %448, %450 : vector<8x32xf32>
    %452 = arith.addf %423, %451 : vector<8x32xf32>
    %c0_322 = arith.constant 0 : index
    %c1_323 = arith.constant 1 : index
    %c0_324 = arith.constant 0 : index
    %c0_325 = arith.constant 0 : index
    %453 = vector.load %arg19[%c0_322, %c1_323, %c0_324, %c0_325] : memref<1x3x8x32xf32, #tpu.memory_space<vmem>>, vector<1x1x8x32xf32>
    %454 = vector.shape_cast %453 : vector<1x1x8x32xf32> to vector<8x32xf32>
    %455 = vector.shape_cast %452 : vector<8x32xf32> to vector<1x1x8x32xf32>
    tpu.vector_store %arg19[%c0_322, %c1_323, %c0_324, %c0_325], %455 {strides = array<i32>} : memref<1x3x8x32xf32, #tpu.memory_space<vmem>>, vector<1x1x8x32xf32>,
    %456 = arith.mulf %452, %452 : vector<8x32xf32>
    %cst_326 = arith.constant dense<0.000000e+00> : vector<8xf32>
    %457 = vector.multi_reduction <add>, %456, %cst_326 [1] : vector<8x32xf32> to vector<8xf32>
    %458 = vector.shape_cast %457 : vector<8xf32> to vector<8x1xf32>
    %cst_327 = arith.constant 3.200000e+01 : f32
    %459 = vector.broadcast %cst_327 : f32 to vector<8x1xf32>
    %460 = arith.divf %458, %459 : vector<8x1xf32>
    %cst_328 = arith.constant 1.1920929E-7 : f32
    %461 = vector.broadcast %cst_328 : f32 to vector<8x1xf32>
    %462 = arith.addf %460, %461 : vector<8x1xf32>
    %463 = math.rsqrt %462 : vector<8x1xf32>
    %464 = vector.broadcast %463 : vector<8x1xf32> to vector<8x32xf32>
    %465 = arith.mulf %452, %464 : vector<8x32xf32>
    %c0_329 = arith.constant 0 : index
    %c0_330 = arith.constant 0 : index
    %466 = vector.load %arg3[%c0_329, %c0_330] : memref<32x96xf32, #tpu.memory_space<vmem>>, vector<32x96xf32>
    %cst_331 = arith.constant dense<0.000000e+00> : vector<8x96xf32>
    %467 = tpu.matmul %465, %466, %cst_331 {dimension_numbers = #tpu.dot_dimension_numbers<[1], [0], [0], [1], [0, 0, 1, 1], [], []>} : vector<8x32xf32>, vector<32x96xf32>, vector<8x96xf32> -> vector<8x96xf32>
    %c0_332 = arith.constant 0 : index
    %c0_333 = arith.constant 0 : index
    %468 = vector.load %arg4[%c0_332, %c0_333] : memref<1x96xf32, #tpu.memory_space<vmem>>, vector<1x96xf32>
    %469 = vector.broadcast %468 : vector<1x96xf32> to vector<8x96xf32>
    %470 = arith.addf %467, %469 : vector<8x96xf32>
    %c0_334 = arith.constant 0 : index
    %c0_335 = arith.constant 0 : index
    %471 = vector.load %arg21[%c0_334, %c0_335] : memref<8x96xf32, #tpu.memory_space<vmem>>, vector<8x96xf32>
    tpu.vector_store %arg21[%c0_334, %c0_335], %470 {strides = array<i32>} : memref<8x96xf32, #tpu.memory_space<vmem>>, vector<8x96xf32>,
    %c0_336 = arith.constant 0 : index
    %c0_337 = arith.constant 0 : index
    %472 = vector.load %arg21[%c0_336, %c0_337] : memref<8x96xf32, #tpu.memory_space<vmem>>, vector<8x8xf32>
    %c0_338 = arith.constant 0 : index
    %c32_339 = arith.constant 32 : index
    %473 = vector.load %arg21[%c0_338, %c32_339] : memref<8x96xf32, #tpu.memory_space<vmem>>, vector<8x8xf32>
    %c0_340 = arith.constant 0 : index
    %c64_341 = arith.constant 64 : index
    %474 = vector.load %arg21[%c0_340, %c64_341] : memref<8x96xf32, #tpu.memory_space<vmem>>, vector<8x8xf32>
    %cst_342 = arith.constant dense<0.000000e+00> : vector<8x8xf32>
    %475 = tpu.matmul %472, %473, %cst_342 {dimension_numbers = #tpu.dot_dimension_numbers<[1], [1], [0], [0], [0, 0, 1, 0], [], []>} : vector<8x8xf32>, vector<8x8xf32>, vector<8x8xf32> -> vector<8x8xf32>
    %cst_343 = arith.constant dense<0xFF800000> : vector<8xf32>
    %476 = vector.multi_reduction <maximumf>, %475, %cst_343 [1] : vector<8x8xf32> to vector<8xf32>
    %477 = vector.shape_cast %476 : vector<8xf32> to vector<8x1xf32>
    %478 = vector.broadcast %477 : vector<8x1xf32> to vector<8x8xf32>
    %479 = arith.subf %475, %478 : vector<8x8xf32>
    %480 = math.exp %479 : vector<8x8xf32>
    %cst_344 = arith.constant dense<0.000000e+00> : vector<8xf32>
    %481 = vector.multi_reduction <add>, %480, %cst_344 [1] : vector<8x8xf32> to vector<8xf32>
    %482 = vector.shape_cast %481 : vector<8xf32> to vector<8x1xf32>
    %483 = vector.broadcast %482 : vector<8x1xf32> to vector<8x8xf32>
    %484 = arith.divf %480, %483 : vector<8x8xf32>
    %cst_345 = arith.constant dense<0.000000e+00> : vector<8x8xf32>
    %485 = tpu.matmul %484, %474, %cst_345 {dimension_numbers = #tpu.dot_dimension_numbers<[1], [0], [0], [1], [0, 0, 1, 1], [], []>} : vector<8x8xf32>, vector<8x8xf32>, vector<8x8xf32> -> vector<8x8xf32>
    %c0_346 = arith.constant 0 : index
    %c0_347 = arith.constant 0 : index
    %c0_348 = arith.constant 0 : index
    %486 = vector.load %arg5[%c0_346, %c0_347, %c0_348] : memref<4x8x32xf32, #tpu.memory_space<vmem>>, vector<1x8x32xf32>
    %487 = vector.shape_cast %486 : vector<1x8x32xf32> to vector<8x32xf32>
    %cst_349 = arith.constant dense<0.000000e+00> : vector<8x32xf32>
    %488 = tpu.matmul %485, %487, %cst_349 {dimension_numbers = #tpu.dot_dimension_numbers<[1], [0], [0], [1], [0, 0, 1, 1], [], []>} : vector<8x8xf32>, vector<8x32xf32>, vector<8x32xf32> -> vector<8x32xf32>
    %c0_350 = arith.constant 0 : index
    %c8_351 = arith.constant 8 : index
    %489 = vector.load %arg21[%c0_350, %c8_351] : memref<8x96xf32, #tpu.memory_space<vmem>>, vector<8x8xf32>
    %c0_352 = arith.constant 0 : index
    %c40_353 = arith.constant 40 : index
    %490 = vector.load %arg21[%c0_352, %c40_353] : memref<8x96xf32, #tpu.memory_space<vmem>>, vector<8x8xf32>
    %c0_354 = arith.constant 0 : index
    %c72_355 = arith.constant 72 : index
    %491 = vector.load %arg21[%c0_354, %c72_355] : memref<8x96xf32, #tpu.memory_space<vmem>>, vector<8x8xf32>
    %cst_356 = arith.constant dense<0.000000e+00> : vector<8x8xf32>
    %492 = tpu.matmul %489, %490, %cst_356 {dimension_numbers = #tpu.dot_dimension_numbers<[1], [1], [0], [0], [0, 0, 1, 0], [], []>} : vector<8x8xf32>, vector<8x8xf32>, vector<8x8xf32> -> vector<8x8xf32>
    %cst_357 = arith.constant dense<0xFF800000> : vector<8xf32>
    %493 = vector.multi_reduction <maximumf>, %492, %cst_357 [1] : vector<8x8xf32> to vector<8xf32>
    %494 = vector.shape_cast %493 : vector<8xf32> to vector<8x1xf32>
    %495 = vector.broadcast %494 : vector<8x1xf32> to vector<8x8xf32>
    %496 = arith.subf %492, %495 : vector<8x8xf32>
    %497 = math.exp %496 : vector<8x8xf32>
    %cst_358 = arith.constant dense<0.000000e+00> : vector<8xf32>
    %498 = vector.multi_reduction <add>, %497, %cst_358 [1] : vector<8x8xf32> to vector<8xf32>
    %499 = vector.shape_cast %498 : vector<8xf32> to vector<8x1xf32>
    %500 = vector.broadcast %499 : vector<8x1xf32> to vector<8x8xf32>
    %501 = arith.divf %497, %500 : vector<8x8xf32>
    %cst_359 = arith.constant dense<0.000000e+00> : vector<8x8xf32>
    %502 = tpu.matmul %501, %491, %cst_359 {dimension_numbers = #tpu.dot_dimension_numbers<[1], [0], [0], [1], [0, 0, 1, 1], [], []>} : vector<8x8xf32>, vector<8x8xf32>, vector<8x8xf32> -> vector<8x8xf32>
    %c1_360 = arith.constant 1 : index
    %c0_361 = arith.constant 0 : index
    %c0_362 = arith.constant 0 : index
    %503 = vector.load %arg5[%c1_360, %c0_361, %c0_362] : memref<4x8x32xf32, #tpu.memory_space<vmem>>, vector<1x8x32xf32>
    %504 = vector.shape_cast %503 : vector<1x8x32xf32> to vector<8x32xf32>
    %cst_363 = arith.constant dense<0.000000e+00> : vector<8x32xf32>
    %505 = tpu.matmul %502, %504, %cst_363 {dimension_numbers = #tpu.dot_dimension_numbers<[1], [0], [0], [1], [0, 0, 1, 1], [], []>} : vector<8x8xf32>, vector<8x32xf32>, vector<8x32xf32> -> vector<8x32xf32>
    %506 = arith.addf %488, %505 : vector<8x32xf32>
    %c0_364 = arith.constant 0 : index
    %c16_365 = arith.constant 16 : index
    %507 = vector.load %arg21[%c0_364, %c16_365] : memref<8x96xf32, #tpu.memory_space<vmem>>, vector<8x8xf32>
    %c0_366 = arith.constant 0 : index
    %c48_367 = arith.constant 48 : index
    %508 = vector.load %arg21[%c0_366, %c48_367] : memref<8x96xf32, #tpu.memory_space<vmem>>, vector<8x8xf32>
    %c0_368 = arith.constant 0 : index
    %c80_369 = arith.constant 80 : index
    %509 = vector.load %arg21[%c0_368, %c80_369] : memref<8x96xf32, #tpu.memory_space<vmem>>, vector<8x8xf32>
    %cst_370 = arith.constant dense<0.000000e+00> : vector<8x8xf32>
    %510 = tpu.matmul %507, %508, %cst_370 {dimension_numbers = #tpu.dot_dimension_numbers<[1], [1], [0], [0], [0, 0, 1, 0], [], []>} : vector<8x8xf32>, vector<8x8xf32>, vector<8x8xf32> -> vector<8x8xf32>
    %cst_371 = arith.constant dense<0xFF800000> : vector<8xf32>
    %511 = vector.multi_reduction <maximumf>, %510, %cst_371 [1] : vector<8x8xf32> to vector<8xf32>
    %512 = vector.shape_cast %511 : vector<8xf32> to vector<8x1xf32>
    %513 = vector.broadcast %512 : vector<8x1xf32> to vector<8x8xf32>
    %514 = arith.subf %510, %513 : vector<8x8xf32>
    %515 = math.exp %514 : vector<8x8xf32>
    %cst_372 = arith.constant dense<0.000000e+00> : vector<8xf32>
    %516 = vector.multi_reduction <add>, %515, %cst_372 [1] : vector<8x8xf32> to vector<8xf32>
    %517 = vector.shape_cast %516 : vector<8xf32> to vector<8x1xf32>
    %518 = vector.broadcast %517 : vector<8x1xf32> to vector<8x8xf32>
    %519 = arith.divf %515, %518 : vector<8x8xf32>
    %cst_373 = arith.constant dense<0.000000e+00> : vector<8x8xf32>
    %520 = tpu.matmul %519, %509, %cst_373 {dimension_numbers = #tpu.dot_dimension_numbers<[1], [0], [0], [1], [0, 0, 1, 1], [], []>} : vector<8x8xf32>, vector<8x8xf32>, vector<8x8xf32> -> vector<8x8xf32>
    %c2_374 = arith.constant 2 : index
    %c0_375 = arith.constant 0 : index
    %c0_376 = arith.constant 0 : index
    %521 = vector.load %arg5[%c2_374, %c0_375, %c0_376] : memref<4x8x32xf32, #tpu.memory_space<vmem>>, vector<1x8x32xf32>
    %522 = vector.shape_cast %521 : vector<1x8x32xf32> to vector<8x32xf32>
    %cst_377 = arith.constant dense<0.000000e+00> : vector<8x32xf32>
    %523 = tpu.matmul %520, %522, %cst_377 {dimension_numbers = #tpu.dot_dimension_numbers<[1], [0], [0], [1], [0, 0, 1, 1], [], []>} : vector<8x8xf32>, vector<8x32xf32>, vector<8x32xf32> -> vector<8x32xf32>
    %524 = arith.addf %506, %523 : vector<8x32xf32>
    %c0_378 = arith.constant 0 : index
    %c24_379 = arith.constant 24 : index
    %525 = vector.load %arg21[%c0_378, %c24_379] : memref<8x96xf32, #tpu.memory_space<vmem>>, vector<8x8xf32>
    %c0_380 = arith.constant 0 : index
    %c56_381 = arith.constant 56 : index
    %526 = vector.load %arg21[%c0_380, %c56_381] : memref<8x96xf32, #tpu.memory_space<vmem>>, vector<8x8xf32>
    %c0_382 = arith.constant 0 : index
    %c88_383 = arith.constant 88 : index
    %527 = vector.load %arg21[%c0_382, %c88_383] : memref<8x96xf32, #tpu.memory_space<vmem>>, vector<8x8xf32>
    %cst_384 = arith.constant dense<0.000000e+00> : vector<8x8xf32>
    %528 = tpu.matmul %525, %526, %cst_384 {dimension_numbers = #tpu.dot_dimension_numbers<[1], [1], [0], [0], [0, 0, 1, 0], [], []>} : vector<8x8xf32>, vector<8x8xf32>, vector<8x8xf32> -> vector<8x8xf32>
    %cst_385 = arith.constant dense<0xFF800000> : vector<8xf32>
    %529 = vector.multi_reduction <maximumf>, %528, %cst_385 [1] : vector<8x8xf32> to vector<8xf32>
    %530 = vector.shape_cast %529 : vector<8xf32> to vector<8x1xf32>
    %531 = vector.broadcast %530 : vector<8x1xf32> to vector<8x8xf32>
    %532 = arith.subf %528, %531 : vector<8x8xf32>
    %533 = math.exp %532 : vector<8x8xf32>
    %cst_386 = arith.constant dense<0.000000e+00> : vector<8xf32>
    %534 = vector.multi_reduction <add>, %533, %cst_386 [1] : vector<8x8xf32> to vector<8xf32>
    %535 = vector.shape_cast %534 : vector<8xf32> to vector<8x1xf32>
    %536 = vector.broadcast %535 : vector<8x1xf32> to vector<8x8xf32>
    %537 = arith.divf %533, %536 : vector<8x8xf32>
    %cst_387 = arith.constant dense<0.000000e+00> : vector<8x8xf32>
    %538 = tpu.matmul %537, %527, %cst_387 {dimension_numbers = #tpu.dot_dimension_numbers<[1], [0], [0], [1], [0, 0, 1, 1], [], []>} : vector<8x8xf32>, vector<8x8xf32>, vector<8x8xf32> -> vector<8x8xf32>
    %c3_388 = arith.constant 3 : index
    %c0_389 = arith.constant 0 : index
    %c0_390 = arith.constant 0 : index
    %539 = vector.load %arg5[%c3_388, %c0_389, %c0_390] : memref<4x8x32xf32, #tpu.memory_space<vmem>>, vector<1x8x32xf32>
    %540 = vector.shape_cast %539 : vector<1x8x32xf32> to vector<8x32xf32>
    %cst_391 = arith.constant dense<0.000000e+00> : vector<8x32xf32>
    %541 = tpu.matmul %538, %540, %cst_391 {dimension_numbers = #tpu.dot_dimension_numbers<[1], [0], [0], [1], [0, 0, 1, 1], [], []>} : vector<8x8xf32>, vector<8x32xf32>, vector<8x32xf32> -> vector<8x32xf32>
    %542 = arith.addf %524, %541 : vector<8x32xf32>
    %c0_392 = arith.constant 0 : index
    %c0_393 = arith.constant 0 : index
    %543 = vector.load %arg6[%c0_392, %c0_393] : memref<1x32xf32, #tpu.memory_space<vmem>>, vector<1x32xf32>
    %544 = vector.broadcast %543 : vector<1x32xf32> to vector<8x32xf32>
    %545 = arith.addf %542, %544 : vector<8x32xf32>
    %546 = arith.addf %452, %545 : vector<8x32xf32>
    %547 = arith.mulf %546, %546 : vector<8x32xf32>
    %cst_394 = arith.constant dense<0.000000e+00> : vector<8xf32>
    %548 = vector.multi_reduction <add>, %547, %cst_394 [1] : vector<8x32xf32> to vector<8xf32>
    %549 = vector.shape_cast %548 : vector<8xf32> to vector<8x1xf32>
    %cst_395 = arith.constant 3.200000e+01 : f32
    %550 = vector.broadcast %cst_395 : f32 to vector<8x1xf32>
    %551 = arith.divf %549, %550 : vector<8x1xf32>
    %cst_396 = arith.constant 1.1920929E-7 : f32
    %552 = vector.broadcast %cst_396 : f32 to vector<8x1xf32>
    %553 = arith.addf %551, %552 : vector<8x1xf32>
    %554 = math.rsqrt %553 : vector<8x1xf32>
    %555 = vector.broadcast %554 : vector<8x1xf32> to vector<8x32xf32>
    %556 = arith.mulf %546, %555 : vector<8x32xf32>
    %c0_397 = arith.constant 0 : index
    %c0_398 = arith.constant 0 : index
    %557 = vector.load %arg7[%c0_397, %c0_398] : memref<32x32xf32, #tpu.memory_space<vmem>>, vector<32x32xf32>
    %cst_399 = arith.constant dense<0.000000e+00> : vector<8x32xf32>
    %558 = tpu.matmul %556, %557, %cst_399 {dimension_numbers = #tpu.dot_dimension_numbers<[1], [0], [0], [1], [0, 0, 1, 1], [], []>} : vector<8x32xf32>, vector<32x32xf32>, vector<8x32xf32> -> vector<8x32xf32>
    %c0_400 = arith.constant 0 : index
    %c0_401 = arith.constant 0 : index
    %559 = vector.load %arg8[%c0_400, %c0_401] : memref<1x32xf32, #tpu.memory_space<vmem>>, vector<1x32xf32>
    %560 = vector.broadcast %559 : vector<1x32xf32> to vector<8x32xf32>
    %561 = arith.addf %558, %560 : vector<8x32xf32>
    %c0_402 = arith.constant 0 : index
    %c0_403 = arith.constant 0 : index
    %562 = vector.load %arg22[%c0_402, %c0_403] : memref<8x32xf32, #tpu.memory_space<vmem>>, vector<8x32xf32>
    tpu.vector_store %arg22[%c0_402, %c0_403], %561 {strides = array<i32>} : memref<8x32xf32, #tpu.memory_space<vmem>>, vector<8x32xf32>,
    %c0_404 = arith.constant 0 : index
    %c0_405 = arith.constant 0 : index
    %563 = vector.load %arg22[%c0_404, %c0_405] : memref<8x32xf32, #tpu.memory_space<vmem>>, vector<8x8xf32>
    %c0_406 = arith.constant 0 : index
    %c0_407 = arith.constant 0 : index
    %c0_408 = arith.constant 0 : index
    %564 = vector.load %arg23[%c0_406, %c0_407, %c0_408] : memref<1x16x64xf32, #tpu.memory_space<vmem>>, vector<1x16x8xf32>
    %565 = vector.shape_cast %564 : vector<1x16x8xf32> to vector<16x8xf32>
    %c0_409 = arith.constant 0 : index
    %c0_410 = arith.constant 0 : index
    %c32_411 = arith.constant 32 : index
    %566 = vector.load %arg23[%c0_409, %c0_410, %c32_411] : memref<1x16x64xf32, #tpu.memory_space<vmem>>, vector<1x16x8xf32>
    %567 = vector.shape_cast %566 : vector<1x16x8xf32> to vector<16x8xf32>
    %cst_412 = arith.constant dense<0.000000e+00> : vector<8x16xf32>
    %568 = tpu.matmul %563, %565, %cst_412 {dimension_numbers = #tpu.dot_dimension_numbers<[1], [1], [0], [0], [0, 0, 1, 0], [], []>} : vector<8x8xf32>, vector<16x8xf32>, vector<8x16xf32> -> vector<8x16xf32>
    %cst_413 = arith.constant dense<0xFF800000> : vector<8xf32>
    %569 = vector.multi_reduction <maximumf>, %568, %cst_413 [1] : vector<8x16xf32> to vector<8xf32>
    %570 = vector.shape_cast %569 : vector<8xf32> to vector<8x1xf32>
    %571 = vector.broadcast %570 : vector<8x1xf32> to vector<8x16xf32>
    %572 = arith.subf %568, %571 : vector<8x16xf32>
    %573 = math.exp %572 : vector<8x16xf32>
    %cst_414 = arith.constant dense<0.000000e+00> : vector<8xf32>
    %574 = vector.multi_reduction <add>, %573, %cst_414 [1] : vector<8x16xf32> to vector<8xf32>
    %575 = vector.shape_cast %574 : vector<8xf32> to vector<8x1xf32>
    %576 = vector.broadcast %575 : vector<8x1xf32> to vector<8x16xf32>
    %577 = arith.divf %573, %576 : vector<8x16xf32>
    %cst_415 = arith.constant dense<0.000000e+00> : vector<8x8xf32>
    %578 = tpu.matmul %577, %567, %cst_415 {dimension_numbers = #tpu.dot_dimension_numbers<[1], [0], [0], [1], [0, 0, 1, 1], [], []>} : vector<8x16xf32>, vector<16x8xf32>, vector<8x8xf32> -> vector<8x8xf32>
    %c0_416 = arith.constant 0 : index
    %c0_417 = arith.constant 0 : index
    %c0_418 = arith.constant 0 : index
    %579 = vector.load %arg11[%c0_416, %c0_417, %c0_418] : memref<4x8x32xf32, #tpu.memory_space<vmem>>, vector<1x8x32xf32>
    %580 = vector.shape_cast %579 : vector<1x8x32xf32> to vector<8x32xf32>
    %cst_419 = arith.constant dense<0.000000e+00> : vector<8x32xf32>
    %581 = tpu.matmul %578, %580, %cst_419 {dimension_numbers = #tpu.dot_dimension_numbers<[1], [0], [0], [1], [0, 0, 1, 1], [], []>} : vector<8x8xf32>, vector<8x32xf32>, vector<8x32xf32> -> vector<8x32xf32>
    %c0_420 = arith.constant 0 : index
    %c8_421 = arith.constant 8 : index
    %582 = vector.load %arg22[%c0_420, %c8_421] : memref<8x32xf32, #tpu.memory_space<vmem>>, vector<8x8xf32>
    %c0_422 = arith.constant 0 : index
    %c0_423 = arith.constant 0 : index
    %c8_424 = arith.constant 8 : index
    %583 = vector.load %arg23[%c0_422, %c0_423, %c8_424] : memref<1x16x64xf32, #tpu.memory_space<vmem>>, vector<1x16x8xf32>
    %584 = vector.shape_cast %583 : vector<1x16x8xf32> to vector<16x8xf32>
    %c0_425 = arith.constant 0 : index
    %c0_426 = arith.constant 0 : index
    %c40_427 = arith.constant 40 : index
    %585 = vector.load %arg23[%c0_425, %c0_426, %c40_427] : memref<1x16x64xf32, #tpu.memory_space<vmem>>, vector<1x16x8xf32>
    %586 = vector.shape_cast %585 : vector<1x16x8xf32> to vector<16x8xf32>
    %cst_428 = arith.constant dense<0.000000e+00> : vector<8x16xf32>
    %587 = tpu.matmul %582, %584, %cst_428 {dimension_numbers = #tpu.dot_dimension_numbers<[1], [1], [0], [0], [0, 0, 1, 0], [], []>} : vector<8x8xf32>, vector<16x8xf32>, vector<8x16xf32> -> vector<8x16xf32>
    %cst_429 = arith.constant dense<0xFF800000> : vector<8xf32>
    %588 = vector.multi_reduction <maximumf>, %587, %cst_429 [1] : vector<8x16xf32> to vector<8xf32>
    %589 = vector.shape_cast %588 : vector<8xf32> to vector<8x1xf32>
    %590 = vector.broadcast %589 : vector<8x1xf32> to vector<8x16xf32>
    %591 = arith.subf %587, %590 : vector<8x16xf32>
    %592 = math.exp %591 : vector<8x16xf32>
    %cst_430 = arith.constant dense<0.000000e+00> : vector<8xf32>
    %593 = vector.multi_reduction <add>, %592, %cst_430 [1] : vector<8x16xf32> to vector<8xf32>
    %594 = vector.shape_cast %593 : vector<8xf32> to vector<8x1xf32>
    %595 = vector.broadcast %594 : vector<8x1xf32> to vector<8x16xf32>
    %596 = arith.divf %592, %595 : vector<8x16xf32>
    %cst_431 = arith.constant dense<0.000000e+00> : vector<8x8xf32>
    %597 = tpu.matmul %596, %586, %cst_431 {dimension_numbers = #tpu.dot_dimension_numbers<[1], [0], [0], [1], [0, 0, 1, 1], [], []>} : vector<8x16xf32>, vector<16x8xf32>, vector<8x8xf32> -> vector<8x8xf32>
    %c1_432 = arith.constant 1 : index
    %c0_433 = arith.constant 0 : index
    %c0_434 = arith.constant 0 : index
    %598 = vector.load %arg11[%c1_432, %c0_433, %c0_434] : memref<4x8x32xf32, #tpu.memory_space<vmem>>, vector<1x8x32xf32>
    %599 = vector.shape_cast %598 : vector<1x8x32xf32> to vector<8x32xf32>
    %cst_435 = arith.constant dense<0.000000e+00> : vector<8x32xf32>
    %600 = tpu.matmul %597, %599, %cst_435 {dimension_numbers = #tpu.dot_dimension_numbers<[1], [0], [0], [1], [0, 0, 1, 1], [], []>} : vector<8x8xf32>, vector<8x32xf32>, vector<8x32xf32> -> vector<8x32xf32>
    %601 = arith.addf %581, %600 : vector<8x32xf32>
    %c0_436 = arith.constant 0 : index
    %c16_437 = arith.constant 16 : index
    %602 = vector.load %arg22[%c0_436, %c16_437] : memref<8x32xf32, #tpu.memory_space<vmem>>, vector<8x8xf32>
    %c0_438 = arith.constant 0 : index
    %c0_439 = arith.constant 0 : index
    %c16_440 = arith.constant 16 : index
    %603 = vector.load %arg23[%c0_438, %c0_439, %c16_440] : memref<1x16x64xf32, #tpu.memory_space<vmem>>, vector<1x16x8xf32>
    %604 = vector.shape_cast %603 : vector<1x16x8xf32> to vector<16x8xf32>
    %c0_441 = arith.constant 0 : index
    %c0_442 = arith.constant 0 : index
    %c48_443 = arith.constant 48 : index
    %605 = vector.load %arg23[%c0_441, %c0_442, %c48_443] : memref<1x16x64xf32, #tpu.memory_space<vmem>>, vector<1x16x8xf32>
    %606 = vector.shape_cast %605 : vector<1x16x8xf32> to vector<16x8xf32>
    %cst_444 = arith.constant dense<0.000000e+00> : vector<8x16xf32>
    %607 = tpu.matmul %602, %604, %cst_444 {dimension_numbers = #tpu.dot_dimension_numbers<[1], [1], [0], [0], [0, 0, 1, 0], [], []>} : vector<8x8xf32>, vector<16x8xf32>, vector<8x16xf32> -> vector<8x16xf32>
    %cst_445 = arith.constant dense<0xFF800000> : vector<8xf32>
    %608 = vector.multi_reduction <maximumf>, %607, %cst_445 [1] : vector<8x16xf32> to vector<8xf32>
    %609 = vector.shape_cast %608 : vector<8xf32> to vector<8x1xf32>
    %610 = vector.broadcast %609 : vector<8x1xf32> to vector<8x16xf32>
    %611 = arith.subf %607, %610 : vector<8x16xf32>
    %612 = math.exp %611 : vector<8x16xf32>
    %cst_446 = arith.constant dense<0.000000e+00> : vector<8xf32>
    %613 = vector.multi_reduction <add>, %612, %cst_446 [1] : vector<8x16xf32> to vector<8xf32>
    %614 = vector.shape_cast %613 : vector<8xf32> to vector<8x1xf32>
    %615 = vector.broadcast %614 : vector<8x1xf32> to vector<8x16xf32>
    %616 = arith.divf %612, %615 : vector<8x16xf32>
    %cst_447 = arith.constant dense<0.000000e+00> : vector<8x8xf32>
    %617 = tpu.matmul %616, %606, %cst_447 {dimension_numbers = #tpu.dot_dimension_numbers<[1], [0], [0], [1], [0, 0, 1, 1], [], []>} : vector<8x16xf32>, vector<16x8xf32>, vector<8x8xf32> -> vector<8x8xf32>
    %c2_448 = arith.constant 2 : index
    %c0_449 = arith.constant 0 : index
    %c0_450 = arith.constant 0 : index
    %618 = vector.load %arg11[%c2_448, %c0_449, %c0_450] : memref<4x8x32xf32, #tpu.memory_space<vmem>>, vector<1x8x32xf32>
    %619 = vector.shape_cast %618 : vector<1x8x32xf32> to vector<8x32xf32>
    %cst_451 = arith.constant dense<0.000000e+00> : vector<8x32xf32>
    %620 = tpu.matmul %617, %619, %cst_451 {dimension_numbers = #tpu.dot_dimension_numbers<[1], [0], [0], [1], [0, 0, 1, 1], [], []>} : vector<8x8xf32>, vector<8x32xf32>, vector<8x32xf32> -> vector<8x32xf32>
    %621 = arith.addf %601, %620 : vector<8x32xf32>
    %c0_452 = arith.constant 0 : index
    %c24_453 = arith.constant 24 : index
    %622 = vector.load %arg22[%c0_452, %c24_453] : memref<8x32xf32, #tpu.memory_space<vmem>>, vector<8x8xf32>
    %c0_454 = arith.constant 0 : index
    %c0_455 = arith.constant 0 : index
    %c24_456 = arith.constant 24 : index
    %623 = vector.load %arg23[%c0_454, %c0_455, %c24_456] : memref<1x16x64xf32, #tpu.memory_space<vmem>>, vector<1x16x8xf32>
    %624 = vector.shape_cast %623 : vector<1x16x8xf32> to vector<16x8xf32>
    %c0_457 = arith.constant 0 : index
    %c0_458 = arith.constant 0 : index
    %c56_459 = arith.constant 56 : index
    %625 = vector.load %arg23[%c0_457, %c0_458, %c56_459] : memref<1x16x64xf32, #tpu.memory_space<vmem>>, vector<1x16x8xf32>
    %626 = vector.shape_cast %625 : vector<1x16x8xf32> to vector<16x8xf32>
    %cst_460 = arith.constant dense<0.000000e+00> : vector<8x16xf32>
    %627 = tpu.matmul %622, %624, %cst_460 {dimension_numbers = #tpu.dot_dimension_numbers<[1], [1], [0], [0], [0, 0, 1, 0], [], []>} : vector<8x8xf32>, vector<16x8xf32>, vector<8x16xf32> -> vector<8x16xf32>
    %cst_461 = arith.constant dense<0xFF800000> : vector<8xf32>
    %628 = vector.multi_reduction <maximumf>, %627, %cst_461 [1] : vector<8x16xf32> to vector<8xf32>
    %629 = vector.shape_cast %628 : vector<8xf32> to vector<8x1xf32>
    %630 = vector.broadcast %629 : vector<8x1xf32> to vector<8x16xf32>
    %631 = arith.subf %627, %630 : vector<8x16xf32>
    %632 = math.exp %631 : vector<8x16xf32>
    %cst_462 = arith.constant dense<0.000000e+00> : vector<8xf32>
    %633 = vector.multi_reduction <add>, %632, %cst_462 [1] : vector<8x16xf32> to vector<8xf32>
    %634 = vector.shape_cast %633 : vector<8xf32> to vector<8x1xf32>
    %635 = vector.broadcast %634 : vector<8x1xf32> to vector<8x16xf32>
    %636 = arith.divf %632, %635 : vector<8x16xf32>
    %cst_463 = arith.constant dense<0.000000e+00> : vector<8x8xf32>
    %637 = tpu.matmul %636, %626, %cst_463 {dimension_numbers = #tpu.dot_dimension_numbers<[1], [0], [0], [1], [0, 0, 1, 1], [], []>} : vector<8x16xf32>, vector<16x8xf32>, vector<8x8xf32> -> vector<8x8xf32>
    %c3_464 = arith.constant 3 : index
    %c0_465 = arith.constant 0 : index
    %c0_466 = arith.constant 0 : index
    %638 = vector.load %arg11[%c3_464, %c0_465, %c0_466] : memref<4x8x32xf32, #tpu.memory_space<vmem>>, vector<1x8x32xf32>
    %639 = vector.shape_cast %638 : vector<1x8x32xf32> to vector<8x32xf32>
    %cst_467 = arith.constant dense<0.000000e+00> : vector<8x32xf32>
    %640 = tpu.matmul %637, %639, %cst_467 {dimension_numbers = #tpu.dot_dimension_numbers<[1], [0], [0], [1], [0, 0, 1, 1], [], []>} : vector<8x8xf32>, vector<8x32xf32>, vector<8x32xf32> -> vector<8x32xf32>
    %641 = arith.addf %621, %640 : vector<8x32xf32>
    %c0_468 = arith.constant 0 : index
    %c0_469 = arith.constant 0 : index
    %642 = vector.load %arg12[%c0_468, %c0_469] : memref<1x32xf32, #tpu.memory_space<vmem>>, vector<1x32xf32>
    %643 = vector.broadcast %642 : vector<1x32xf32> to vector<8x32xf32>
    %644 = arith.addf %641, %643 : vector<8x32xf32>
    %645 = arith.addf %546, %644 : vector<8x32xf32>
    %646 = arith.mulf %645, %645 : vector<8x32xf32>
    %cst_470 = arith.constant dense<0.000000e+00> : vector<8xf32>
    %647 = vector.multi_reduction <add>, %646, %cst_470 [1] : vector<8x32xf32> to vector<8xf32>
    %648 = vector.shape_cast %647 : vector<8xf32> to vector<8x1xf32>
    %cst_471 = arith.constant 3.200000e+01 : f32
    %649 = vector.broadcast %cst_471 : f32 to vector<8x1xf32>
    %650 = arith.divf %648, %649 : vector<8x1xf32>
    %cst_472 = arith.constant 1.1920929E-7 : f32
    %651 = vector.broadcast %cst_472 : f32 to vector<8x1xf32>
    %652 = arith.addf %650, %651 : vector<8x1xf32>
    %653 = math.rsqrt %652 : vector<8x1xf32>
    %654 = vector.broadcast %653 : vector<8x1xf32> to vector<8x32xf32>
    %655 = arith.mulf %645, %654 : vector<8x32xf32>
    %c0_473 = arith.constant 0 : index
    %c0_474 = arith.constant 0 : index
    %656 = vector.load %arg13[%c0_473, %c0_474] : memref<32x128xf32, #tpu.memory_space<vmem>>, vector<32x128xf32>
    %cst_475 = arith.constant dense<0.000000e+00> : vector<8x128xf32>
    %657 = tpu.matmul %655, %656, %cst_475 {dimension_numbers = #tpu.dot_dimension_numbers<[1], [0], [0], [1], [0, 0, 1, 1], [], []>} : vector<8x32xf32>, vector<32x128xf32>, vector<8x128xf32> -> vector<8x128xf32>
    %c0_476 = arith.constant 0 : index
    %c0_477 = arith.constant 0 : index
    %658 = vector.load %arg14[%c0_476, %c0_477] : memref<1x128xf32, #tpu.memory_space<vmem>>, vector<1x128xf32>
    %659 = vector.broadcast %658 : vector<1x128xf32> to vector<8x128xf32>
    %660 = arith.addf %657, %659 : vector<8x128xf32>
    %cst_478 = arith.constant 0.000000e+00 : f32
    %661 = vector.broadcast %cst_478 : f32 to vector<8x128xf32>
    %662 = arith.subf %661, %660 : vector<8x128xf32>
    %663 = math.exp %662 : vector<8x128xf32>
    %cst_479 = arith.constant 1.000000e+00 : f32
    %664 = vector.broadcast %cst_479 : f32 to vector<8x128xf32>
    %665 = arith.addf %664, %663 : vector<8x128xf32>
    %cst_480 = arith.constant 1.000000e+00 : f32
    %666 = vector.broadcast %cst_480 : f32 to vector<8x128xf32>
    %667 = arith.divf %666, %665 : vector<8x128xf32>
    %668 = arith.mulf %660, %667 : vector<8x128xf32>
    %c0_481 = arith.constant 0 : index
    %c0_482 = arith.constant 0 : index
    %669 = vector.load %arg15[%c0_481, %c0_482] : memref<32x128xf32, #tpu.memory_space<vmem>>, vector<32x128xf32>
    %cst_483 = arith.constant dense<0.000000e+00> : vector<8x32xf32>
    %670 = tpu.matmul %668, %669, %cst_483 {dimension_numbers = #tpu.dot_dimension_numbers<[1], [1], [0], [0], [0, 0, 1, 0], [], []>} : vector<8x128xf32>, vector<32x128xf32>, vector<8x32xf32> -> vector<8x32xf32>
    %c0_484 = arith.constant 0 : index
    %c0_485 = arith.constant 0 : index
    %671 = vector.load %arg16[%c0_484, %c0_485] : memref<1x32xf32, #tpu.memory_space<vmem>>, vector<1x32xf32>
    %672 = vector.broadcast %671 : vector<1x32xf32> to vector<8x32xf32>
    %673 = arith.addf %670, %672 : vector<8x32xf32>
    %674 = arith.addf %645, %673 : vector<8x32xf32>
    %c0_486 = arith.constant 0 : index
    %c2_487 = arith.constant 2 : index
    %c0_488 = arith.constant 0 : index
    %c0_489 = arith.constant 0 : index
    %675 = vector.load %arg19[%c0_486, %c2_487, %c0_488, %c0_489] : memref<1x3x8x32xf32, #tpu.memory_space<vmem>>, vector<1x1x8x32xf32>
    %676 = vector.shape_cast %675 : vector<1x1x8x32xf32> to vector<8x32xf32>
    %677 = vector.shape_cast %674 : vector<8x32xf32> to vector<1x1x8x32xf32>
    tpu.vector_store %arg19[%c0_486, %c2_487, %c0_488, %c0_489], %677 {strides = array<i32>} : memref<1x3x8x32xf32, #tpu.memory_space<vmem>>, vector<1x1x8x32xf32>,
    %678 = arith.mulf %674, %674 : vector<8x32xf32>
    %cst_490 = arith.constant dense<0.000000e+00> : vector<8xf32>
    %679 = vector.multi_reduction <add>, %678, %cst_490 [1] : vector<8x32xf32> to vector<8xf32>
    %680 = vector.shape_cast %679 : vector<8xf32> to vector<8x1xf32>
    %cst_491 = arith.constant 3.200000e+01 : f32
    %681 = vector.broadcast %cst_491 : f32 to vector<8x1xf32>
    %682 = arith.divf %680, %681 : vector<8x1xf32>
    %cst_492 = arith.constant 1.1920929E-7 : f32
    %683 = vector.broadcast %cst_492 : f32 to vector<8x1xf32>
    %684 = arith.addf %682, %683 : vector<8x1xf32>
    %685 = math.rsqrt %684 : vector<8x1xf32>
    %686 = vector.broadcast %685 : vector<8x1xf32> to vector<8x32xf32>
    %687 = arith.mulf %674, %686 : vector<8x32xf32>
    %c0_493 = arith.constant 0 : index
    %c0_494 = arith.constant 0 : index
    %688 = vector.load %arg17[%c0_493, %c0_494] : memref<32x32xf32, #tpu.memory_space<vmem>>, vector<32x32xf32>
    %cst_495 = arith.constant dense<0.000000e+00> : vector<8x32xf32>
    %689 = tpu.matmul %687, %688, %cst_495 {dimension_numbers = #tpu.dot_dimension_numbers<[1], [0], [0], [1], [0, 0, 1, 1], [], []>} : vector<8x32xf32>, vector<32x32xf32>, vector<8x32xf32> -> vector<8x32xf32>
    %c0_496 = arith.constant 0 : index
    %c0_497 = arith.constant 0 : index
    %690 = vector.load %arg18[%c0_496, %c0_497] : memref<1x32xf32, #tpu.memory_space<vmem>>, vector<1x32xf32>
    %691 = vector.broadcast %690 : vector<1x32xf32> to vector<8x32xf32>
    %692 = arith.addf %689, %691 : vector<8x32xf32>
    %c0_498 = arith.constant 0 : index
    %c0_499 = arith.constant 0 : index
    %c0_500 = arith.constant 0 : index
    %693 = vector.load %arg20[%c0_498, %c0_499, %c0_500] : memref<1x8x32xf32, #tpu.memory_space<vmem>>, vector<1x8x32xf32>
    %694 = vector.shape_cast %693 : vector<1x8x32xf32> to vector<8x32xf32>
    %695 = vector.shape_cast %692 : vector<8x32xf32> to vector<1x8x32xf32>
    tpu.vector_store %arg20[%c0_498, %c0_499, %c0_500], %695 {strides = array<i32>} : memref<1x8x32xf32, #tpu.memory_space<vmem>>, vector<1x8x32xf32>,
    return
  }
  func.func @transform_0(%arg0: i32) -> (i32, i32, i32) {
    %c0_i32 = arith.constant 0 : i32
    %c0_i32_0 = arith.constant 0 : i32
    %c0_i32_1 = arith.constant 0 : i32
    return %arg0, %c0_i32, %c0_i32_0 : i32, i32, i32
  }
  func.func @transform_1(%arg0: i32) -> (i32, i32, i32) {
    %c0_i32 = arith.constant 0 : i32
    %c0_i32_0 = arith.constant 0 : i32
    %c0_i32_1 = arith.constant 0 : i32
    return %arg0, %c0_i32, %c0_i32_0 : i32, i32, i32
  }
  func.func @transform_2(%arg0: i32) -> (i32, i32) {
    %c0_i32 = arith.constant 0 : i32
    %c0_i32_0 = arith.constant 0 : i32
    %c0_i32_1 = arith.constant 0 : i32
    return %c0_i32, %c0_i32_0 : i32, i32
  }
  func.func @transform_3(%arg0: i32) -> (i32, i32) {
    %c0_i32 = arith.constant 0 : i32
    %c0_i32_0 = arith.constant 0 : i32
    %c0_i32_1 = arith.constant 0 : i32
    return %c0_i32, %c0_i32_0 : i32, i32
  }
  func.func @transform_4(%arg0: i32) -> (i32, i32, i32) {
    %c0_i32 = arith.constant 0 : i32
    %c0_i32_0 = arith.constant 0 : i32
    %c0_i32_1 = arith.constant 0 : i32
    %c0_i32_2 = arith.constant 0 : i32
    return %c0_i32, %c0_i32_0, %c0_i32_1 : i32, i32, i32
  }
  func.func @transform_5(%arg0: i32) -> (i32, i32) {
    %c0_i32 = arith.constant 0 : i32
    %c0_i32_0 = arith.constant 0 : i32
    %c0_i32_1 = arith.constant 0 : i32
    return %c0_i32, %c0_i32_0 : i32, i32
  }
  func.func @transform_6(%arg0: i32) -> (i32, i32) {
    %c0_i32 = arith.constant 0 : i32
    %c0_i32_0 = arith.constant 0 : i32
    %c0_i32_1 = arith.constant 0 : i32
    return %c0_i32, %c0_i32_0 : i32, i32
  }
  func.func @transform_7(%arg0: i32) -> (i32, i32) {
    %c0_i32 = arith.constant 0 : i32
    %c0_i32_0 = arith.constant 0 : i32
    %c0_i32_1 = arith.constant 0 : i32
    return %c0_i32, %c0_i32_0 : i32, i32
  }
  func.func @transform_8(%arg0: i32) -> (i32, i32) {
    %c0_i32 = arith.constant 0 : i32
    %c0_i32_0 = arith.constant 0 : i32
    %c0_i32_1 = arith.constant 0 : i32
    return %c0_i32, %c0_i32_0 : i32, i32
  }
  func.func @transform_9(%arg0: i32) -> (i32, i32) {
    %c0_i32 = arith.constant 0 : i32
    %c0_i32_0 = arith.constant 0 : i32
    %c0_i32_1 = arith.constant 0 : i32
    return %c0_i32, %c0_i32_0 : i32, i32
  }
  func.func @transform_10(%arg0: i32) -> (i32, i32, i32) {
    %c0_i32 = arith.constant 0 : i32
    %c0_i32_0 = arith.constant 0 : i32
    %c0_i32_1 = arith.constant 0 : i32
    %c0_i32_2 = arith.constant 0 : i32
    return %c0_i32, %c0_i32_0, %c0_i32_1 : i32, i32, i32
  }
  func.func @transform_11(%arg0: i32) -> (i32, i32) {
    %c0_i32 = arith.constant 0 : i32
    %c0_i32_0 = arith.constant 0 : i32
    %c0_i32_1 = arith.constant 0 : i32
    return %c0_i32, %c0_i32_0 : i32, i32
  }
  func.func @transform_12(%arg0: i32) -> (i32, i32) {
    %c0_i32 = arith.constant 0 : i32
    %c0_i32_0 = arith.constant 0 : i32
    %c0_i32_1 = arith.constant 0 : i32
    return %c0_i32, %c0_i32_0 : i32, i32
  }
  func.func @transform_13(%arg0: i32) -> (i32, i32) {
    %c0_i32 = arith.constant 0 : i32
    %c0_i32_0 = arith.constant 0 : i32
    %c0_i32_1 = arith.constant 0 : i32
    return %c0_i32, %c0_i32_0 : i32, i32
  }
  func.func @transform_14(%arg0: i32) -> (i32, i32) {
    %c0_i32 = arith.constant 0 : i32
    %c0_i32_0 = arith.constant 0 : i32
    %c0_i32_1 = arith.constant 0 : i32
    return %c0_i32, %c0_i32_0 : i32, i32
  }
  func.func @transform_15(%arg0: i32) -> (i32, i32) {
    %c0_i32 = arith.constant 0 : i32
    %c0_i32_0 = arith.constant 0 : i32
    %c0_i32_1 = arith.constant 0 : i32
    return %c0_i32, %c0_i32_0 : i32, i32
  }
  func.func @transform_16(%arg0: i32) -> (i32, i32) {
    %c0_i32 = arith.constant 0 : i32
    %c0_i32_0 = arith.constant 0 : i32
    %c0_i32_1 = arith.constant 0 : i32
    return %c0_i32, %c0_i32_0 : i32, i32
  }
  func.func @transform_17(%arg0: i32) -> (i32, i32) {
    %c0_i32 = arith.constant 0 : i32
    %c0_i32_0 = arith.constant 0 : i32
    %c0_i32_1 = arith.constant 0 : i32
    return %c0_i32, %c0_i32_0 : i32, i32
  }
  func.func @transform_18(%arg0: i32) -> (i32, i32, i32, i32) {
    %c0_i32 = arith.constant 0 : i32
    %c0_i32_0 = arith.constant 0 : i32
    %c0_i32_1 = arith.constant 0 : i32
    %c0_i32_2 = arith.constant 0 : i32
    return %arg0, %c0_i32, %c0_i32_0, %c0_i32_1 : i32, i32, i32, i32
  }
  func.func @transform_19(%arg0: i32) -> (i32, i32, i32) {
    %c0_i32 = arith.constant 0 : i32
    %c0_i32_0 = arith.constant 0 : i32
    %c0_i32_1 = arith.constant 0 : i32
    return %arg0, %c0_i32, %c0_i32_0 : i32, i32, i32
  }
}

</mosaic_0001>

<llo_original>
// kernel: looped_tf_query_generator.1
$region0: #{looped_tf_query_generator.1}
  #allocation0 [shape = 'u32[]', space=smem, size = 0x4, offset = 0x4, fixed_abs, tag = 'smem constant byte address 0x4 - core index']
  #allocation1 [shape = 'u32[144,128]{1,0:T(1,128)}', space=vmem, size = 0x12000, scoped, tag = 'internal scratch']
  #allocation2 [shape = 'f32[8,96]{1,0:T(8,128)}', space=vmem, size = 0x1000, scoped, tag = 'scratch operand']
  #allocation3 [shape = 'f32[8,32]{1,0:T(8,128)}', space=vmem, size = 0x1000, scoped, tag = 'scratch operand']
  #allocation4 [shape = 'f32[1,16,64]{2,1,0:T(8,128)}', space=vmem, size = 0x2000, scoped, tag = 'scratch operand']
  %s0 = inlined_call_operand.hbm [shape: f32[2,8,32], index: 0, kind: input, shape index: {}]
  %s1 = inlined_call_operand.hbm [shape: f32[2,16,32], index: 1, kind: input, shape index: {}]
  %s2 = inlined_call_operand.hbm [shape: f32[32,96], index: 2, kind: input, shape index: {}]
  %s3 = inlined_call_operand.vmem [shape: f32[1,96], index: 3, kind: input, shape index: {}]
  %s4 = inlined_call_operand.hbm [shape: f32[4,8,32], index: 4, kind: input, shape index: {}]
  %s5 = inlined_call_operand.vmem [shape: f32[1,32], index: 5, kind: input, shape index: {}]
  %s6 = inlined_call_operand.hbm [shape: f32[32,32], index: 6, kind: input, shape index: {}]
  %s7 = inlined_call_operand.vmem [shape: f32[1,32], index: 7, kind: input, shape index: {}]
  %s8 = inlined_call_operand.hbm [shape: f32[32,64], index: 8, kind: input, shape index: {}]
  %s9 = inlined_call_operand.vmem [shape: f32[1,64], index: 9, kind: input, shape index: {}]
  %s10 = inlined_call_operand.hbm [shape: f32[4,8,32], index: 10, kind: input, shape index: {}]
  %s11 = inlined_call_operand.vmem [shape: f32[1,32], index: 11, kind: input, shape index: {}]
  %s12 = inlined_call_operand.hbm [shape: f32[32,128], index: 12, kind: input, shape index: {}]
  %s13 = inlined_call_operand.vmem [shape: f32[1,128], index: 13, kind: input, shape index: {}]
  %s14 = inlined_call_operand.hbm [shape: f32[32,128], index: 14, kind: input, shape index: {}]
  %s15 = inlined_call_operand.vmem [shape: f32[1,32], index: 15, kind: input, shape index: {}]
  %s16 = inlined_call_operand.hbm [shape: f32[32,32], index: 16, kind: input, shape index: {}]
  %s17 = inlined_call_operand.vmem [shape: f32[1,32], index: 17, kind: input, shape index: {}]
  %s18 = inlined_call_operand.hbm [shape: f32[2,3,8,32], index: 18, kind: output, shape index: {0}]
  %s19 = inlined_call_operand.hbm [shape: f32[2,8,32], index: 19, kind: output, shape index: {1}]
  %20 = xla_tuple %s18, %s19
  %s21 = sld [smem:[#allocation0]]
  $region153: #{looped_tf_query_generator.1} parent=0
    _
  %s23 = ssub.s32 1, %s21
  %s24 = scalar_select 0, %s23, %s21
  $region1: #{looped_tf_query_generator.1} parent=0
    #allocation5 [shape = 'u8[8192]{0}', space=vmem, size = 0x2000, scoped, tag = 'input window, operand 0']
    #allocation6 [shape = 's32[2]{0}', space=sflag, size = 0x8, scoped, tag = 'scoped memory for looped_tf_query_generator.1']
    #allocation7 [shape = 's32[2]{0}', space=sflag, size = 0x8, scoped, tag = 'scoped memory for looped_tf_query_generator.1']
    #allocation8 [shape = 'u8[16384]{0}', space=vmem, size = 0x4000, scoped, tag = 'input window, operand 1']
    #allocation9 [shape = 's32[2]{0}', space=sflag, size = 0x8, scoped, tag = 'scoped memory for looped_tf_query_generator.1']
    #allocation10 [shape = 'u8[16384]{0}', space=vmem, size = 0x4000, scoped, tag = 'input window, operand 2, single buffered']
    #allocation11 [shape = 'u8[16384]{0}', space=vmem, size = 0x4000, scoped, tag = 'input window, operand 4, single buffered']
    #allocation12 [shape = 's32[1]{0}', space=sflag, size = 0x4, scoped, tag = 'scoped memory for looped_tf_query_generator.1']
    #allocation13 [shape = 'u8[16384]{0}', space=vmem, size = 0x4000, scoped, tag = 'input window, operand 6, single buffered']
    #allocation14 [shape = 'u8[16384]{0}', space=vmem, size = 0x4000, scoped, tag = 'input window, operand 8, single buffered']
    #allocation15 [shape = 's32[1]{0}', space=sflag, size = 0x4, scoped, tag = 'scoped memory for looped_tf_query_generator.1']
    #allocation16 [shape = 'u8[16384]{0}', space=vmem, size = 0x4000, scoped, tag = 'input window, operand 10, single buffered']
    #allocation17 [shape = 'u8[16384]{0}', space=vmem, size = 0x4000, scoped, tag = 'input window, operand 12, single buffered']
    #allocation18 [shape = 's32[1]{0}', space=sflag, size = 0x4, scoped, tag = 'scoped memory for looped_tf_query_generator.1']
    #allocation19 [shape = 'u8[16384]{0}', space=vmem, size = 0x4000, scoped, tag = 'input window, operand 14, single buffered']
    #allocation20 [shape = 'u8[16384]{0}', space=vmem, size = 0x4000, scoped, tag = 'input window, operand 16, single buffered']
    #allocation21 [shape = 's32[1]{0}', space=sflag, size = 0x4, scoped, tag = 'scoped memory for looped_tf_query_generator.1']
    #allocation22 [shape = 'u8[24576]{0}', space=vmem, size = 0x6000, scoped, tag = 'output window, operand 0']
    #allocation23 [shape = 'u8[8192]{0}', space=vmem, size = 0x2000, scoped, tag = 'output window, operand 1']
    #allocation24 [shape = 's32[2]{0}', space=sflag, size = 0x8, scoped, tag = 'scoped memory for looped_tf_query_generator.1']
    %25 = vsyncpa [#allocation6], 0
    %s26 = scalar_lea.sflag [#allocation6], 1
    %27 = vsyncpa %s26, 0
    %28 = vsyncpa [#allocation9], 0
    %s29 = scalar_lea.sflag [#allocation9], 1
    %30 = vsyncpa %s29, 0
    %31 = vsyncpa [#allocation12], 0
    %32 = vsyncpa [#allocation15], 0
    %33 = vsyncpa [#allocation18], 0
    %34 = vsyncpa [#allocation21], 0
    %35 = vsyncpa [#allocation7], 0
    %s36 = scalar_lea.sflag [#allocation7], 1
    %37 = vsyncpa %s36, 0
    %38 = vsyncpa [#allocation24], 0
    %s39 = scalar_lea.sflag [#allocation24], 1
    %40 = vsyncpa %s39, 0
    loop: start=0, step=1, limit=4
    $region2: #{looped_tf_query_generator.1} parent=1 // loop_pre_header
      _
    $region3: #{looped_tf_query_generator.1} parent=1 // loop_header
      %s42 = sphi 0, %s46
      %p43 = scmp.ge.s32.totalorder %s42, 4
      %s52 = sphi 0, %s54
      %s55 = sphi 0, %s52
      %s56 = sphi 0, %s55
      %s72 = sphi 0, %s56
      %s78 = sphi 0, %s80
      %s81 = sphi 0, %s78
      %s82 = sphi 0, %s81
      %s98 = sphi 0, %s82
      %s102 = sphi 0, %s102
      %s104 = sphi 0, %s102
      %s105 = sphi 0, %s104
      %s119 = sphi 0, %s105
      %s123 = sphi 0, %s123
      %s125 = sphi 0, %s123
      %s126 = sphi 0, %s125
      %s140 = sphi 0, %s126
      %s144 = sphi 0, %s144
      %s146 = sphi 0, %s144
      %s147 = sphi 0, %s146
      %s161 = sphi 0, %s147
      %s165 = sphi 0, %s165
      %s167 = sphi 0, %s165
      %s168 = sphi 0, %s167
      %s182 = sphi 0, %s168
      %s186 = sphi 0, %s186
      %s188 = sphi 0, %s186
      %s189 = sphi 0, %s188
      %s203 = sphi 0, %s189
      %s207 = sphi 0, %s207
      %s209 = sphi 0, %s207
      %s210 = sphi 0, %s209
      %s224 = sphi 0, %s210
      %s228 = sphi 0, %s228
      %s230 = sphi 0, %s228
      %s231 = sphi 0, %s230
      %s245 = sphi 0, %s231
      %s249 = sphi 0, %s249
      %s251 = sphi 0, %s249
      %s252 = sphi 0, %s251
      %s266 = sphi 0, %s252
      %s270 = sphi 0, %s270
      %s272 = sphi 0, %s270
      %s273 = sphi 0, %s272
      %s287 = sphi 0, %s273
      %s291 = sphi 0, %s291
      %s293 = sphi 0, %s291
      %s294 = sphi 0, %s293
      %s308 = sphi 0, %s294
      %s312 = sphi 0, %s312
      %s314 = sphi 0, %s312
      %s315 = sphi 0, %s314
      %s329 = sphi 0, %s315
      %s333 = sphi 0, %s333
      %s335 = sphi 0, %s333
      %s336 = sphi 0, %s335
      %s350 = sphi 0, %s336
      %s354 = sphi 0, %s354
      %s356 = sphi 0, %s354
      %s357 = sphi 0, %s356
      %s371 = sphi 0, %s357
      %s375 = sphi 0, %s375
      %s377 = sphi 0, %s375
      %s378 = sphi 0, %s377
      %s392 = sphi 0, %s378
      %s396 = sphi 0, %s396
      %s398 = sphi 0, %s396
      %s399 = sphi 0, %s398
      %s413 = sphi 0, %s399
      %s417 = sphi 0, %s417
      %s419 = sphi 0, %s417
      %s420 = sphi 0, %s419
      %s434 = sphi 0, %s420
      %s440 = sphi 0, %s442
      %s443 = sphi 0, %s440
      %s444 = sphi 0, %s443
      %s460 = sphi 0, %s444
      %s466 = sphi 0, %s468
      %s469 = sphi 0, %s466
      %s470 = sphi 0, %s469
      %s486 = sphi 0, %s470
    $region4: #{looped_tf_query_generator.1} parent=1 // loop_header_branch
      %45 = sbr.rel (%p43) target = $region8
    $region5: #{looped_tf_query_generator.1} parent=1 // loop_body
      %s47 = ssub.s32 %s42, 1
      %s48 = ssub.s32 %s42, 2
      %s49 = sadd.s32 %s42, 1
      %s50 = ssub.s32 %s42, %s49
      %p51 = scmp.eq.s32.totalorder %s50, 0
      %s53 = sadd.s32 %s52, 1
      %s54 = scalar_select %p51, %s52, %s53
      %p57 = pneg %p51
      %p58 = scmp.eq.s32.totalorder %s42, 1
      %p59 = por %p57, %p58
      %p60 = scmp.ne.s32.totalorder %s52, %s55
      %p61 = scmp.eq.s32.totalorder %s42, 0
      %p62 = por %p60, %p61
      %p63 = scmp.ne.s32.totalorder %s52, %s55
      %p64 = scmp.eq.s32.totalorder %s47, 1
      %p65 = por %p63, %p64
      %p66 = scmp.ne.s32.totalorder %s55, %s56
      %p67 = scmp.eq.s32.totalorder %s47, 0
      %p68 = por %p66, %p67
      %p69 = scmp.ne.s32.totalorder %s55, %s56
      %p70 = scmp.eq.s32.totalorder %s48, 1
      %p71 = por %p69, %p70
      %p73 = scmp.ne.s32.totalorder %s56, %s72
      %p74 = scmp.eq.s32.totalorder %s48, 0
      %p75 = por %p73, %p74
      %s76 = ssub.s32 %s42, %s49
      %p77 = scmp.eq.s32.totalorder %s76, 0
      %s79 = sadd.s32 %s78, 1
      %s80 = scalar_select %p77, %s78, %s79
      %p83 = pneg %p77
      %p84 = scmp.eq.s32.totalorder %s42, 1
      %p85 = por %p83, %p84
      %p86 = scmp.ne.s32.totalorder %s78, %s81
      %p87 = scmp.eq.s32.totalorder %s42, 0
      %p88 = por %p86, %p87
      %p89 = scmp.ne.s32.totalorder %s78, %s81
      %p90 = scmp.eq.s32.totalorder %s47, 1
      %p91 = por %p89, %p90
      %p92 = scmp.ne.s32.totalorder %s81, %s82
      %p93 = scmp.eq.s32.totalorder %s47, 0
      %p94 = por %p92, %p93
      %p95 = scmp.ne.s32.totalorder %s81, %s82
      %p96 = scmp.eq.s32.totalorder %s48, 1
      %p97 = por %p95, %p96
      %p99 = scmp.ne.s32.totalorder %s82, %s98
      %p100 = scmp.eq.s32.totalorder %s48, 0
      %p101 = por %p99, %p100
      %s103 = sadd.s32 %s102, 1
      %p106 = scmp.eq.s32.totalorder %s42, 1
      %p107 = scmp.ne.s32.totalorder %s102, %s104
      %p108 = scmp.eq.s32.totalorder %s42, 0
      %p109 = por %p107, %p108
      %p110 = scmp.ne.s32.totalorder %s102, %s104
      %p111 = scmp.eq.s32.totalorder %s47, 1
      %p112 = por %p110, %p111
      %p113 = scmp.ne.s32.totalorder %s104, %s105
      %p114 = scmp.eq.s32.totalorder %s47, 0
      %p115 = por %p113, %p114
      %p116 = scmp.ne.s32.totalorder %s104, %s105
      %p117 = scmp.eq.s32.totalorder %s48, 1
      %p118 = por %p116, %p117
      %p120 = scmp.ne.s32.totalorder %s105, %s119
      %p121 = scmp.eq.s32.totalorder %s48, 0
      %p122 = por %p120, %p121
      %s124 = sadd.s32 %s123, 1
      %p127 = scmp.eq.s32.totalorder %s42, 1
      %p128 = scmp.ne.s32.totalorder %s123, %s125
      %p129 = scmp.eq.s32.totalorder %s42, 0
      %p130 = por %p128, %p129
      %p131 = scmp.ne.s32.totalorder %s123, %s125
      %p132 = scmp.eq.s32.totalorder %s47, 1
      %p133 = por %p131, %p132
      %p134 = scmp.ne.s32.totalorder %s125, %s126
      %p135 = scmp.eq.s32.totalorder %s47, 0
      %p136 = por %p134, %p135
      %p137 = scmp.ne.s32.totalorder %s125, %s126
      %p138 = scmp.eq.s32.totalorder %s48, 1
      %p139 = por %p137, %p138
      %p141 = scmp.ne.s32.totalorder %s126, %s140
      %p142 = scmp.eq.s32.totalorder %s48, 0
      %p143 = por %p141, %p142
      %s145 = sadd.s32 %s144, 1
      %p148 = scmp.eq.s32.totalorder %s42, 1
      %p149 = scmp.ne.s32.totalorder %s144, %s146
      %p150 = scmp.eq.s32.totalorder %s42, 0
      %p151 = por %p149, %p150
      %p152 = scmp.ne.s32.totalorder %s144, %s146
      %p153 = scmp.eq.s32.totalorder %s47, 1
      %p154 = por %p152, %p153
      %p155 = scmp.ne.s32.totalorder %s146, %s147
      %p156 = scmp.eq.s32.totalorder %s47, 0
      %p157 = por %p155, %p156
      %p158 = scmp.ne.s32.totalorder %s146, %s147
      %p159 = scmp.eq.s32.totalorder %s48, 1
      %p160 = por %p158, %p159
      %p162 = scmp.ne.s32.totalorder %s147, %s161
      %p163 = scmp.eq.s32.totalorder %s48, 0
      %p164 = por %p162, %p163
      %s166 = sadd.s32 %s165, 1
      %p169 = scmp.eq.s32.totalorder %s42, 1
      %p170 = scmp.ne.s32.totalorder %s165, %s167
      %p171 = scmp.eq.s32.totalorder %s42, 0
      %p172 = por %p170, %p171
      %p173 = scmp.ne.s32.totalorder %s165, %s167
      %p174 = scmp.eq.s32.totalorder %s47, 1
      %p175 = por %p173, %p174
      %p176 = scmp.ne.s32.totalorder %s167, %s168
      %p177 = scmp.eq.s32.totalorder %s47, 0
      %p178 = por %p176, %p177
      %p179 = scmp.ne.s32.totalorder %s167, %s168
      %p180 = scmp.eq.s32.totalorder %s48, 1
      %p181 = por %p179, %p180
      %p183 = scmp.ne.s32.totalorder %s168, %s182
      %p184 = scmp.eq.s32.totalorder %s48, 0
      %p185 = por %p183, %p184
      %s187 = sadd.s32 %s186, 1
      %p190 = scmp.eq.s32.totalorder %s42, 1
      %p191 = scmp.ne.s32.totalorder %s186, %s188
      %p192 = scmp.eq.s32.totalorder %s42, 0
      %p193 = por %p191, %p192
      %p194 = scmp.ne.s32.totalorder %s186, %s188
      %p195 = scmp.eq.s32.totalorder %s47, 1
      %p196 = por %p194, %p195
      %p197 = scmp.ne.s32.totalorder %s188, %s189
      %p198 = scmp.eq.s32.totalorder %s47, 0
      %p199 = por %p197, %p198
      %p200 = scmp.ne.s32.totalorder %s188, %s189
      %p201 = scmp.eq.s32.totalorder %s48, 1
      %p202 = por %p200, %p201
      %p204 = scmp.ne.s32.totalorder %s189, %s203
      %p205 = scmp.eq.s32.totalorder %s48, 0
      %p206 = por %p204, %p205
      %s208 = sadd.s32 %s207, 1
      %p211 = scmp.eq.s32.totalorder %s42, 1
      %p212 = scmp.ne.s32.totalorder %s207, %s209
      %p213 = scmp.eq.s32.totalorder %s42, 0
      %p214 = por %p212, %p213
      %p215 = scmp.ne.s32.totalorder %s207, %s209
      %p216 = scmp.eq.s32.totalorder %s47, 1
      %p217 = por %p215, %p216
      %p218 = scmp.ne.s32.totalorder %s209, %s210
      %p219 = scmp.eq.s32.totalorder %s47, 0
      %p220 = por %p218, %p219
      %p221 = scmp.ne.s32.totalorder %s209, %s210
      %p222 = scmp.eq.s32.totalorder %s48, 1
      %p223 = por %p221, %p222
      %p225 = scmp.ne.s32.totalorder %s210, %s224
      %p226 = scmp.eq.s32.totalorder %s48, 0
      %p227 = por %p225, %p226
      %s229 = sadd.s32 %s228, 1
      %p232 = scmp.eq.s32.totalorder %s42, 1
      %p233 = scmp.ne.s32.totalorder %s228, %s230
      %p234 = scmp.eq.s32.totalorder %s42, 0
      %p235 = por %p233, %p234
      %p236 = scmp.ne.s32.totalorder %s228, %s230
      %p237 = scmp.eq.s32.totalorder %s47, 1
      %p238 = por %p236, %p237
      %p239 = scmp.ne.s32.totalorder %s230, %s231
      %p240 = scmp.eq.s32.totalorder %s47, 0
      %p241 = por %p239, %p240
      %p242 = scmp.ne.s32.totalorder %s230, %s231
      %p243 = scmp.eq.s32.totalorder %s48, 1
      %p244 = por %p242, %p243
      %p246 = scmp.ne.s32.totalorder %s231, %s245
      %p247 = scmp.eq.s32.totalorder %s48, 0
      %p248 = por %p246, %p247
      %s250 = sadd.s32 %s249, 1
      %p253 = scmp.eq.s32.totalorder %s42, 1
      %p254 = scmp.ne.s32.totalorder %s249, %s251
      %p255 = scmp.eq.s32.totalorder %s42, 0
      %p256 = por %p254, %p255
      %p257 = scmp.ne.s32.totalorder %s249, %s251
      %p258 = scmp.eq.s32.totalorder %s47, 1
      %p259 = por %p257, %p258
      %p260 = scmp.ne.s32.totalorder %s251, %s252
      %p261 = scmp.eq.s32.totalorder %s47, 0
      %p262 = por %p260, %p261
      %p263 = scmp.ne.s32.totalorder %s251, %s252
      %p264 = scmp.eq.s32.totalorder %s48, 1
      %p265 = por %p263, %p264
      %p267 = scmp.ne.s32.totalorder %s252, %s266
      %p268 = scmp.eq.s32.totalorder %s48, 0
      %p269 = por %p267, %p268
      %s271 = sadd.s32 %s270, 1
      %p274 = scmp.eq.s32.totalorder %s42, 1
      %p275 = scmp.ne.s32.totalorder %s270, %s272
      %p276 = scmp.eq.s32.totalorder %s42, 0
      %p277 = por %p275, %p276
      %p278 = scmp.ne.s32.totalorder %s270, %s272
      %p279 = scmp.eq.s32.totalorder %s47, 1
      %p280 = por %p278, %p279
      %p281 = scmp.ne.s32.totalorder %s272, %s273
      %p282 = scmp.eq.s32.totalorder %s47, 0
      %p283 = por %p281, %p282
      %p284 = scmp.ne.s32.totalorder %s272, %s273
      %p285 = scmp.eq.s32.totalorder %s48, 1
      %p286 = por %p284, %p285
      %p288 = scmp.ne.s32.totalorder %s273, %s287
      %p289 = scmp.eq.s32.totalorder %s48, 0
      %p290 = por %p288, %p289
      %s292 = sadd.s32 %s291, 1
      %p295 = scmp.eq.s32.totalorder %s42, 1
      %p296 = scmp.ne.s32.totalorder %s291, %s293
      %p297 = scmp.eq.s32.totalorder %s42, 0
      %p298 = por %p296, %p297
      %p299 = scmp.ne.s32.totalorder %s291, %s293
      %p300 = scmp.eq.s32.totalorder %s47, 1
      %p301 = por %p299, %p300
      %p302 = scmp.ne.s32.totalorder %s293, %s294
      %p303 = scmp.eq.s32.totalorder %s47, 0
      %p304 = por %p302, %p303
      %p305 = scmp.ne.s32.totalorder %s293, %s294
      %p306 = scmp.eq.s32.totalorder %s48, 1
      %p307 = por %p305, %p306
      %p309 = scmp.ne.s32.totalorder %s294, %s308
      %p310 = scmp.eq.s32.totalorder %s48, 0
      %p311 = por %p309, %p310
      %s313 = sadd.s32 %s312, 1
      %p316 = scmp.eq.s32.totalorder %s42, 1
      %p317 = scmp.ne.s32.totalorder %s312, %s314
      %p318 = scmp.eq.s32.totalorder %s42, 0
      %p319 = por %p317, %p318
      %p320 = scmp.ne.s32.totalorder %s312, %s314
      %p321 = scmp.eq.s32.totalorder %s47, 1
      %p322 = por %p320, %p321
      %p323 = scmp.ne.s32.totalorder %s314, %s315
      %p324 = scmp.eq.s32.totalorder %s47, 0
      %p325 = por %p323, %p324
      %p326 = scmp.ne.s32.totalorder %s314, %s315
      %p327 = scmp.eq.s32.totalorder %s48, 1
      %p328 = por %p326, %p327
      %p330 = scmp.ne.s32.totalorder %s315, %s329
      %p331 = scmp.eq.s32.totalorder %s48, 0
      %p332 = por %p330, %p331
      %s334 = sadd.s32 %s333, 1
      %p337 = scmp.eq.s32.totalorder %s42, 1
      %p338 = scmp.ne.s32.totalorder %s333, %s335
      %p339 = scmp.eq.s32.totalorder %s42, 0
      %p340 = por %p338, %p339
      %p341 = scmp.ne.s32.totalorder %s333, %s335
      %p342 = scmp.eq.s32.totalorder %s47, 1
      %p343 = por %p341, %p342
      %p344 = scmp.ne.s32.totalorder %s335, %s336
      %p345 = scmp.eq.s32.totalorder %s47, 0
      %p346 = por %p344, %p345
      %p347 = scmp.ne.s32.totalorder %s335, %s336
      %p348 = scmp.eq.s32.totalorder %s48, 1
      %p349 = por %p347, %p348
      %p351 = scmp.ne.s32.totalorder %s336, %s350
      %p352 = scmp.eq.s32.totalorder %s48, 0
      %p353 = por %p351, %p352
      %s355 = sadd.s32 %s354, 1
      %p358 = scmp.eq.s32.totalorder %s42, 1
      %p359 = scmp.ne.s32.totalorder %s354, %s356
      %p360 = scmp.eq.s32.totalorder %s42, 0
      %p361 = por %p359, %p360
      %p362 = scmp.ne.s32.totalorder %s354, %s356
      %p363 = scmp.eq.s32.totalorder %s47, 1
      %p364 = por %p362, %p363
      %p365 = scmp.ne.s32.totalorder %s356, %s357
      %p366 = scmp.eq.s32.totalorder %s47, 0
      %p367 = por %p365, %p366
      %p368 = scmp.ne.s32.totalorder %s356, %s357
      %p369 = scmp.eq.s32.totalorder %s48, 1
      %p370 = por %p368, %p369
      %p372 = scmp.ne.s32.totalorder %s357, %s371
      %p373 = scmp.eq.s32.totalorder %s48, 0
      %p374 = por %p372, %p373
      %s376 = sadd.s32 %s375, 1
      %p379 = scmp.eq.s32.totalorder %s42, 1
      %p380 = scmp.ne.s32.totalorder %s375, %s377
      %p381 = scmp.eq.s32.totalorder %s42, 0
      %p382 = por %p380, %p381
      %p383 = scmp.ne.s32.totalorder %s375, %s377
      %p384 = scmp.eq.s32.totalorder %s47, 1
      %p385 = por %p383, %p384
      %p386 = scmp.ne.s32.totalorder %s377, %s378
      %p387 = scmp.eq.s32.totalorder %s47, 0
      %p388 = por %p386, %p387
      %p389 = scmp.ne.s32.totalorder %s377, %s378
      %p390 = scmp.eq.s32.totalorder %s48, 1
      %p391 = por %p389, %p390
      %p393 = scmp.ne.s32.totalorder %s378, %s392
      %p394 = scmp.eq.s32.totalorder %s48, 0
      %p395 = por %p393, %p394
      %s397 = sadd.s32 %s396, 1
      %p400 = scmp.eq.s32.totalorder %s42, 1
      %p401 = scmp.ne.s32.totalorder %s396, %s398
      %p402 = scmp.eq.s32.totalorder %s42, 0
      %p403 = por %p401, %p402
      %p404 = scmp.ne.s32.totalorder %s396, %s398
      %p405 = scmp.eq.s32.totalorder %s47, 1
      %p406 = por %p404, %p405
      %p407 = scmp.ne.s32.totalorder %s398, %s399
      %p408 = scmp.eq.s32.totalorder %s47, 0
      %p409 = por %p407, %p408
      %p410 = scmp.ne.s32.totalorder %s398, %s399
      %p411 = scmp.eq.s32.totalorder %s48, 1
      %p412 = por %p410, %p411
      %p414 = scmp.ne.s32.totalorder %s399, %s413
      %p415 = scmp.eq.s32.totalorder %s48, 0
      %p416 = por %p414, %p415
      %s418 = sadd.s32 %s417, 1
      %p421 = scmp.eq.s32.totalorder %s42, 1
      %p422 = scmp.ne.s32.totalorder %s417, %s419
      %p423 = scmp.eq.s32.totalorder %s42, 0
      %p424 = por %p422, %p423
      %p425 = scmp.ne.s32.totalorder %s417, %s419
      %p426 = scmp.eq.s32.totalorder %s47, 1
      %p427 = por %p425, %p426
      %p428 = scmp.ne.s32.totalorder %s419, %s420
      %p429 = scmp.eq.s32.totalorder %s47, 0
      %p430 = por %p428, %p429
      %p431 = scmp.ne.s32.totalorder %s419, %s420
      %p432 = scmp.eq.s32.totalorder %s48, 1
      %p433 = por %p431, %p432
      %p435 = scmp.ne.s32.totalorder %s420, %s434
      %p436 = scmp.eq.s32.totalorder %s48, 0
      %p437 = por %p435, %p436
      %s438 = ssub.s32 %s42, %s49
      %p439 = scmp.eq.s32.totalorder %s438, 0
      %s441 = sadd.s32 %s440, 1
      %s442 = scalar_select %p439, %s440, %s441
      %p445 = pneg %p439
      %p446 = scmp.eq.s32.totalorder %s42, 1
      %p447 = por %p445, %p446
      %p448 = scmp.ne.s32.totalorder %s440, %s443
      %p449 = scmp.eq.s32.totalorder %s42, 0
      %p450 = por %p448, %p449
      %p451 = scmp.ne.s32.totalorder %s440, %s443
      %p452 = scmp.eq.s32.totalorder %s47, 1
      %p453 = por %p451, %p452
      %p454 = scmp.ne.s32.totalorder %s443, %s444
      %p455 = scmp.eq.s32.totalorder %s47, 0
      %p456 = por %p454, %p455
      %p457 = scmp.ne.s32.totalorder %s443, %s444
      %p458 = scmp.eq.s32.totalorder %s48, 1
      %p459 = por %p457, %p458
      %p461 = scmp.ne.s32.totalorder %s444, %s460
      %p462 = scmp.eq.s32.totalorder %s48, 0
      %p463 = por %p461, %p462
      %s464 = ssub.s32 %s42, %s49
      %p465 = scmp.eq.s32.totalorder %s464, 0
      %s467 = sadd.s32 %s466, 1
      %s468 = scalar_select %p465, %s466, %s467
      %p471 = pneg %p465
      %p472 = scmp.eq.s32.totalorder %s42, 1
      %p473 = por %p471, %p472
      %p474 = scmp.ne.s32.totalorder %s466, %s469
      %p475 = scmp.eq.s32.totalorder %s42, 0
      %p476 = por %p474, %p475
      %p477 = scmp.ne.s32.totalorder %s466, %s469
      %p478 = scmp.eq.s32.totalorder %s47, 1
      %p479 = por %p477, %p478
      %p480 = scmp.ne.s32.totalorder %s469, %s470
      %p481 = scmp.eq.s32.totalorder %s47, 0
      %p482 = por %p480, %p481
      %p483 = scmp.ne.s32.totalorder %s469, %s470
      %p484 = scmp.eq.s32.totalorder %s48, 1
      %p485 = por %p483, %p484
      %p487 = scmp.ne.s32.totalorder %s470, %s486
      %p488 = scmp.eq.s32.totalorder %s48, 0
      %p489 = por %p487, %p488
      %p490 = scmp.le.s32.totalorder 1, %s42
      %p491 = scmp.lt.s32.totalorder %s42, 3
      %p492 = pnand %p490, %p491
      %p493 = pneg %p492
      // Predicated region
      $region9: #{looped_tf_query_generator.1} parent=5 // pred_check
        _
      $region10: #{looped_tf_query_generator.1} parent=5 // pred_check_branch
        %495 = sbr.rel (%p492) target = $region12
      $region11: #{looped_tf_query_generator.1} parent=5 // pred_region
        %s496 = ssub.s32 %s42, 1
        // Predicated region
        $region13: #{looped_tf_query_generator.1} parent=11 // pred_check
          %p497 = pneg %p115
        $region14: #{looped_tf_query_generator.1} parent=11 // pred_check_branch
          %499 = sbr.rel (%p497) target = $region16
        $region15: #{looped_tf_query_generator.1} parent=11 // pred_region
          %s501 = ssub.s32 512, 512
          %502 = vsyncadd [#allocation9], %s501
          %s503 = sshll.u32 [#allocation10], 4
          %s504 = int_to_ptr.vmem [resolvable:$true] %s503
          %509 = dma.hbm_to_vmem [thread:$0]  %s2, 512, %s504, [#allocation9], 128, 128, 8
        $region16: #{looped_tf_query_generator.1} parent=11 // pred_fallthru
          _
        // Predicated region
        $region17: #{looped_tf_query_generator.1} parent=11 // pred_check
          %p510 = pneg %p136
        $region18: #{looped_tf_query_generator.1} parent=11 // pred_check_branch
          %512 = sbr.rel (%p510) target = $region20
        $region19: #{looped_tf_query_generator.1} parent=11 // pred_region
          _
        $region20: #{looped_tf_query_generator.1} parent=11 // pred_fallthru
          _
        // Predicated region
        $region21: #{looped_tf_query_generator.1} parent=11 // pred_check
          %p513 = pneg %p157
        $region22: #{looped_tf_query_generator.1} parent=11 // pred_check_branch
          %515 = sbr.rel (%p513) target = $region24
        $region23: #{looped_tf_query_generator.1} parent=11 // pred_region
          %s517 = ssub.s32 512, 512
          %518 = vsyncadd [#allocation12], %s517
          %s519 = sshll.u32 [#allocation11], 4
          %s520 = int_to_ptr.vmem [resolvable:$true] %s519
          %525 = dma.hbm_to_vmem [thread:$0]  %s4, 512, %s520, [#allocation12], 128, 128, 8
        $region24: #{looped_tf_query_generator.1} parent=11 // pred_fallthru
          _
        // Predicated region
        $region25: #{looped_tf_query_generator.1} parent=11 // pred_check
          %p526 = pneg %p178
        $region26: #{looped_tf_query_generator.1} parent=11 // pred_check_branch
          %528 = sbr.rel (%p526) target = $region28
        $region27: #{looped_tf_query_generator.1} parent=11 // pred_region
          _
        $region28: #{looped_tf_query_generator.1} parent=11 // pred_fallthru
          _
        // Predicated region
        $region29: #{looped_tf_query_generator.1} parent=11 // pred_check
          %p529 = pneg %p199
        $region30: #{looped_tf_query_generator.1} parent=11 // pred_check_branch
          %531 = sbr.rel (%p529) target = $region32
        $region31: #{looped_tf_query_generator.1} parent=11 // pred_region
          %s533 = ssub.s32 512, 512
          %534 = vsyncadd [#allocation12], %s533
          %s535 = sshll.u32 [#allocation13], 4
          %s536 = int_to_ptr.vmem [resolvable:$true] %s535
          %541 = dma.hbm_to_vmem [thread:$0]  %s6, 512, %s536, [#allocation12], 128, 128, 8
        $region32: #{looped_tf_query_generator.1} parent=11 // pred_fallthru
          _
        // Predicated region
        $region33: #{looped_tf_query_generator.1} parent=11 // pred_check
          %p542 = pneg %p220
        $region34: #{looped_tf_query_generator.1} parent=11 // pred_check_branch
          %544 = sbr.rel (%p542) target = $region36
        $region35: #{looped_tf_query_generator.1} parent=11 // pred_region
          _
        $region36: #{looped_tf_query_generator.1} parent=11 // pred_fallthru
          _
        // Predicated region
        $region37: #{looped_tf_query_generator.1} parent=11 // pred_check
          %p545 = pneg %p241
        $region38: #{looped_tf_query_generator.1} parent=11 // pred_check_branch
          %547 = sbr.rel (%p545) target = $region40
        $region39: #{looped_tf_query_generator.1} parent=11 // pred_region
          %s549 = ssub.s32 512, 512
          %550 = vsyncadd [#allocation15], %s549
          %s551 = sshll.u32 [#allocation14], 4
          %s552 = int_to_ptr.vmem [resolvable:$true] %s551
          %557 = dma.hbm_to_vmem [thread:$0]  %s8, 512, %s552, [#allocation15], 128, 128, 8
        $region40: #{looped_tf_query_generator.1} parent=11 // pred_fallthru
          _
        // Predicated region
        $region41: #{looped_tf_query_generator.1} parent=11 // pred_check
          %p558 = pneg %p262
        $region42: #{looped_tf_query_generator.1} parent=11 // pred_check_branch
          %560 = sbr.rel (%p558) target = $region44
        $region43: #{looped_tf_query_generator.1} parent=11 // pred_region
          _
        $region44: #{looped_tf_query_generator.1} parent=11 // pred_fallthru
          _
        // Predicated region
        $region45: #{looped_tf_query_generator.1} parent=11 // pred_check
          %p561 = pneg %p283
        $region46: #{looped_tf_query_generator.1} parent=11 // pred_check_branch
          %563 = sbr.rel (%p561) target = $region48
        $region47: #{looped_tf_query_generator.1} parent=11 // pred_region
          %s565 = ssub.s32 512, 512
          %566 = vsyncadd [#allocation15], %s565
          %s567 = sshll.u32 [#allocation16], 4
          %s568 = int_to_ptr.vmem [resolvable:$true] %s567
          %573 = dma.hbm_to_vmem [thread:$0]  %s10, 512, %s568, [#allocation15], 128, 128, 8
        $region48: #{looped_tf_query_generator.1} parent=11 // pred_fallthru
          _
        // Predicated region
        $region49: #{looped_tf_query_generator.1} parent=11 // pred_check
          %p574 = pneg %p304
        $region50: #{looped_tf_query_generator.1} parent=11 // pred_check_branch
          %576 = sbr.rel (%p574) target = $region52
        $region51: #{looped_tf_query_generator.1} parent=11 // pred_region
          _
        $region52: #{looped_tf_query_generator.1} parent=11 // pred_fallthru
          _
        // Predicated region
        $region53: #{looped_tf_query_generator.1} parent=11 // pred_check
          %p577 = pneg %p325
        $region54: #{looped_tf_query_generator.1} parent=11 // pred_check_branch
          %579 = sbr.rel (%p577) target = $region56
        $region55: #{looped_tf_query_generator.1} parent=11 // pred_region
          %s581 = ssub.s32 512, 512
          %582 = vsyncadd [#allocation18], %s581
          %s583 = sshll.u32 [#allocation17], 4
          %s584 = int_to_ptr.vmem [resolvable:$true] %s583
          %589 = dma.hbm_to_vmem [thread:$0]  %s12, 512, %s584, [#allocation18], 128, 128, 8
        $region56: #{looped_tf_query_generator.1} parent=11 // pred_fallthru
          _
        // Predicated region
        $region57: #{looped_tf_query_generator.1} parent=11 // pred_check
          %p590 = pneg %p346
        $region58: #{looped_tf_query_generator.1} parent=11 // pred_check_branch
          %592 = sbr.rel (%p590) target = $region60
        $region59: #{looped_tf_query_generator.1} parent=11 // pred_region
          _
        $region60: #{looped_tf_query_generator.1} parent=11 // pred_fallthru
          _
        // Predicated region
        $region61: #{looped_tf_query_generator.1} parent=11 // pred_check
          %p593 = pneg %p367
        $region62: #{looped_tf_query_generator.1} parent=11 // pred_check_branch
          %595 = sbr.rel (%p593) target = $region64
        $region63: #{looped_tf_query_generator.1} parent=11 // pred_region
          %s597 = ssub.s32 512, 512
          %598 = vsyncadd [#allocation18], %s597
          %s599 = sshll.u32 [#allocation19], 4
          %s600 = int_to_ptr.vmem [resolvable:$true] %s599
          %605 = dma.hbm_to_vmem [thread:$0]  %s14, 512, %s600, [#allocation18], 128, 128, 8
        $region64: #{looped_tf_query_generator.1} parent=11 // pred_fallthru
          _
        // Predicated region
        $region65: #{looped_tf_query_generator.1} parent=11 // pred_check
          %p606 = pneg %p388
        $region66: #{looped_tf_query_generator.1} parent=11 // pred_check_branch
          %608 = sbr.rel (%p606) target = $region68
        $region67: #{looped_tf_query_generator.1} parent=11 // pred_region
          _
        $region68: #{looped_tf_query_generator.1} parent=11 // pred_fallthru
          _
        // Predicated region
        $region69: #{looped_tf_query_generator.1} parent=11 // pred_check
          %p609 = pneg %p409
        $region70: #{looped_tf_query_generator.1} parent=11 // pred_check_branch
          %611 = sbr.rel (%p609) target = $region72
        $region71: #{looped_tf_query_generator.1} parent=11 // pred_region
          %s613 = ssub.s32 512, 512
          %614 = vsyncadd [#allocation21], %s613
          %s615 = sshll.u32 [#allocation20], 4
          %s616 = int_to_ptr.vmem [resolvable:$true] %s615
          %621 = dma.hbm_to_vmem [thread:$0]  %s16, 512, %s616, [#allocation21], 128, 128, 8
        $region72: #{looped_tf_query_generator.1} parent=11 // pred_fallthru
          _
        // Predicated region
        $region73: #{looped_tf_query_generator.1} parent=11 // pred_check
          %p622 = pneg %p430
        $region74: #{looped_tf_query_generator.1} parent=11 // pred_check_branch
          %624 = sbr.rel (%p622) target = $region76
        $region75: #{looped_tf_query_generator.1} parent=11 // pred_region
          _
        $region76: #{looped_tf_query_generator.1} parent=11 // pred_fallthru
          _
      $region12: #{looped_tf_query_generator.1} parent=5 // pred_fallthru
        _
      %p625 = scmp.lt.s32.totalorder %s42, 2
      // Predicated region
      $region77: #{looped_tf_query_generator.1} parent=5 // pred_check
        %p626 = pneg %p625
      $region78: #{looped_tf_query_generator.1} parent=5 // pred_check_branch
        %628 = sbr.rel (%p626) target = $region80
      $region79: #{looped_tf_query_generator.1} parent=5 // pred_region
        // Predicated region
        $region81: #{looped_tf_query_generator.1} parent=79 // pred_check
          %p629 = pneg %p62
        $region82: #{looped_tf_query_generator.1} parent=79 // pred_check_branch
          %631 = sbr.rel (%p629) target = $region84
        $region83: #{looped_tf_query_generator.1} parent=79 // pred_region
          %s632 = sand.u32 %s52, 1
          %s633 = scalar_lea.sflag [#allocation6], %s632
          %s634 = sand.u32 %s52, 1
          %s635 = smul.addr %s634, 8
          %s636 = scalar_lea.vmem [#allocation5], %s635
          %s638 = ssub.s32 128, 128
          %639 = vsyncadd %s633, %s638
          %s640 = smul.addr %s42, 128
          %s641 = scalar_lea.hbm %s0, %s640
          %s643 = sshll.u32 %s636, 4
          %s644 = int_to_ptr.vmem [resolvable:$true] %s643
          %646 = dma.hbm_to_vmem [thread:$0]  %s641, 128, %s644, %s633
        $region84: #{looped_tf_query_generator.1} parent=79 // pred_fallthru
          _
        // Predicated region
        $region85: #{looped_tf_query_generator.1} parent=79 // pred_check
          %p647 = pneg %p88
        $region86: #{looped_tf_query_generator.1} parent=79 // pred_check_branch
          %649 = sbr.rel (%p647) target = $region88
        $region87: #{looped_tf_query_generator.1} parent=79 // pred_region
          %s650 = sand.u32 %s42, 1
          %s651 = scalar_lea.sflag [#allocation9], %s650
          %s652 = sand.u32 %s78, 1
          %s653 = smul.addr %s652, 16
          %s654 = scalar_lea.vmem [#allocation8], %s653
          %s656 = ssub.s32 256, 256
          %657 = vsyncadd %s651, %s656
          %s658 = smul.addr %s42, 2
          %s659 = smul.addr %s658, 128
          %s660 = scalar_lea.hbm %s1, %s659
          %s661 = sshll.u32 %s654, 4
          %s662 = int_to_ptr.vmem [resolvable:$true] %s661
          %667 = dma.hbm_to_vmem [thread:$0]  %s660, 256, %s662, %s651, 128, 128, 8
        $region88: #{looped_tf_query_generator.1} parent=79 // pred_fallthru
          _
      $region80: #{looped_tf_query_generator.1} parent=5 // pred_fallthru
        _
      %p668 = scmp.le.s32.totalorder 1, %s42
      %p669 = scmp.lt.s32.totalorder %s42, 3
      %p670 = pnand %p668, %p669
      %p671 = pneg %p670
      // Predicated region
      $region89: #{looped_tf_query_generator.1} parent=5 // pred_check
        _
      $region90: #{looped_tf_query_generator.1} parent=5 // pred_check_branch
        %673 = sbr.rel (%p670) target = $region92
      $region91: #{looped_tf_query_generator.1} parent=5 // pred_region
        %s674 = ssub.s32 %s42, 1
        %s675 = sand.u32 %s55, 1
        %s676 = scalar_lea.sflag [#allocation6], %s675
        %s677 = sand.u32 %s55, 1
        %s678 = smul.addr %s677, 8
        %s679 = scalar_lea.vmem [#allocation5], %s678
        // Predicated region
        $region93: #{looped_tf_query_generator.1} parent=91 // pred_check
          %p680 = pneg %p68
        $region94: #{looped_tf_query_generator.1} parent=91 // pred_check_branch
          %682 = sbr.rel (%p680) target = $region96
        $region95: #{looped_tf_query_generator.1} parent=91 // pred_region
          %683 = dma.done %s676, 128
        $region96: #{looped_tf_query_generator.1} parent=91 // pred_fallthru
          _
        %s684 = sand.u32 %s47, 1
        %s685 = scalar_lea.sflag [#allocation9], %s684
        %s686 = sand.u32 %s81, 1
        %s687 = smul.addr %s686, 16
        %s688 = scalar_lea.vmem [#allocation8], %s687
        // Predicated region
        $region97: #{looped_tf_query_generator.1} parent=91 // pred_check
          %p689 = pneg %p94
        $region98: #{looped_tf_query_generator.1} parent=91 // pred_check_branch
          %691 = sbr.rel (%p689) target = $region100
        $region99: #{looped_tf_query_generator.1} parent=91 // pred_region
          %692 = dma.done %s685, 256
        $region100: #{looped_tf_query_generator.1} parent=91 // pred_fallthru
          _
        // Predicated region
        $region101: #{looped_tf_query_generator.1} parent=91 // pred_check
          %p693 = pneg %p115
        $region102: #{looped_tf_query_generator.1} parent=91 // pred_check_branch
          %695 = sbr.rel (%p693) target = $region104
        $region103: #{looped_tf_query_generator.1} parent=91 // pred_region
          %696 = dma.done [#allocation9], 512
        $region104: #{looped_tf_query_generator.1} parent=91 // pred_fallthru
          _
        // Predicated region
        $region105: #{looped_tf_query_generator.1} parent=91 // pred_check
          %p697 = pneg %p157
        $region106: #{looped_tf_query_generator.1} parent=91 // pred_check_branch
          %699 = sbr.rel (%p697) target = $region108
        $region107: #{looped_tf_query_generator.1} parent=91 // pred_region
          %700 = dma.done [#allocation12], 512
        $region108: #{looped_tf_query_generator.1} parent=91 // pred_fallthru
          _
        // Predicated region
        $region109: #{looped_tf_query_generator.1} parent=91 // pred_check
          %p701 = pneg %p199
        $region110: #{looped_tf_query_generator.1} parent=91 // pred_check_branch
          %703 = sbr.rel (%p701) target = $region112
        $region111: #{looped_tf_query_generator.1} parent=91 // pred_region
          %704 = dma.done [#allocation12], 512
        $region112: #{looped_tf_query_generator.1} parent=91 // pred_fallthru
          _
        // Predicated region
        $region113: #{looped_tf_query_generator.1} parent=91 // pred_check
          %p705 = pneg %p241
        $region114: #{looped_tf_query_generator.1} parent=91 // pred_check_branch
          %707 = sbr.rel (%p705) target = $region116
        $region115: #{looped_tf_query_generator.1} parent=91 // pred_region
          %708 = dma.done [#allocation15], 512
        $region116: #{looped_tf_query_generator.1} parent=91 // pred_fallthru
          _
        // Predicated region
        $region117: #{looped_tf_query_generator.1} parent=91 // pred_check
          %p709 = pneg %p283
        $region118: #{looped_tf_query_generator.1} parent=91 // pred_check_branch
          %711 = sbr.rel (%p709) target = $region120
        $region119: #{looped_tf_query_generator.1} parent=91 // pred_region
          %712 = dma.done [#allocation15], 512
        $region120: #{looped_tf_query_generator.1} parent=91 // pred_fallthru
          _
        // Predicated region
        $region121: #{looped_tf_query_generator.1} parent=91 // pred_check
          %p713 = pneg %p325
        $region122: #{looped_tf_query_generator.1} parent=91 // pred_check_branch
          %715 = sbr.rel (%p713) target = $region124
        $region123: #{looped_tf_query_generator.1} parent=91 // pred_region
          %716 = dma.done [#allocation18], 512
        $region124: #{looped_tf_query_generator.1} parent=91 // pred_fallthru
          _
        // Predicated region
        $region125: #{looped_tf_query_generator.1} parent=91 // pred_check
          %p717 = pneg %p367
        $region126: #{looped_tf_query_generator.1} parent=91 // pred_check_branch
          %719 = sbr.rel (%p717) target = $region128
        $region127: #{looped_tf_query_generator.1} parent=91 // pred_region
          %720 = dma.done [#allocation18], 512
        $region128: #{looped_tf_query_generator.1} parent=91 // pred_fallthru
          _
        // Predicated region
        $region129: #{looped_tf_query_generator.1} parent=91 // pred_check
          %p721 = pneg %p409
        $region130: #{looped_tf_query_generator.1} parent=91 // pred_check_branch
          %723 = sbr.rel (%p721) target = $region132
        $region131: #{looped_tf_query_generator.1} parent=91 // pred_region
          %724 = dma.done [#allocation21], 512
        $region132: #{looped_tf_query_generator.1} parent=91 // pred_fallthru
          _
        %s725 = sand.u32 %s55, 1
        %s726 = scalar_lea.sflag [#allocation6], %s725
        %s727 = sand.u32 %s55, 1
        %s728 = smul.addr %s727, 8
        %s729 = scalar_lea.vmem [#allocation5], %s728
        %p730 = pneg %p68
        %p731 = pneg %p65
        %s732 = sand.u32 %s47, 1
        %s733 = scalar_lea.sflag [#allocation9], %s732
        %s734 = sand.u32 %s81, 1
        %s735 = smul.addr %s734, 16
        %s736 = scalar_lea.vmem [#allocation8], %s735
        %p737 = pneg %p94
        %p738 = pneg %p91
        %p739 = pneg %p115
        %p740 = pneg %p112
        %p741 = pneg %p136
        %p742 = pneg %p133
        %p743 = pneg %p157
        %p744 = pneg %p154
        %p745 = pneg %p178
        %p746 = pneg %p175
        %p747 = pneg %p199
        %p748 = pneg %p196
        %p749 = pneg %p220
        %p750 = pneg %p217
        %p751 = pneg %p241
        %p752 = pneg %p238
        %p753 = pneg %p262
        %p754 = pneg %p259
        %p755 = pneg %p283
        %p756 = pneg %p280
        %p757 = pneg %p304
        %p758 = pneg %p301
        %p759 = pneg %p325
        %p760 = pneg %p322
        %p761 = pneg %p346
        %p762 = pneg %p343
        %p763 = pneg %p367
        %p764 = pneg %p364
        %p765 = pneg %p388
        %p766 = pneg %p385
        %p767 = pneg %p409
        %p768 = pneg %p406
        %p769 = pneg %p430
        %p770 = pneg %p427
        %p771 = pneg %p456
        %p772 = pneg %p453
        %s773 = sand.u32 %s443, 1
        %s774 = scalar_lea.sflag [#allocation7], %s773
        %s775 = sand.u32 %s443, 1
        %s776 = smul.addr %s775, 24
        %s777 = scalar_lea.vmem [#allocation22], %s776
        %p778 = pneg %p482
        %p779 = pneg %p479
        %s780 = sand.u32 %s469, 1
        %s781 = scalar_lea.sflag [#allocation24], %s780
        %s782 = sand.u32 %s469, 1
        %s783 = smul.addr %s782, 8
        %s784 = scalar_lea.vmem [#allocation23], %s783
        %v785 = vld [vmem:[%s679] sm:$0xff]
        %v786 = vld [vmem:[%s688] sm:$0xff]
        %v787 = vld [vmem:[%s688 + $0x8] sm:$0xff]
        %v788 = vld [vmem:[#allocation14] sm:$0xff]
        %v789 = vld [vmem:[#allocation14 + $0x8] sm:$0xff]
        %v790 = vld [vmem:[#allocation14 + $0x10] sm:$0xff]
        %v791 = vld [vmem:[#allocation14 + $0x18] sm:$0xff]
        %v792 = vld [vmem:[%s9] sm:$0x1]
        %v794 = vlaneseq
        %v795 = vshrl.u32 %v794, 7
        %v796 = vsub.s32 0, %v795
        %v797 = vrot.slane %v792, %v796
        %vm799 = vcmask 261120
        %v801 = vsel %vm799, %v786, 0
        %v804 = vsel %vm799, %v787, 0
        %806 = vmatprep.subr.mxu0 0.0
        %807 = vmatpush1.msra.mxu0 0.0
        %808 = vmatprep.subr.mxu0 0.0
        %809 = vmatpush1.msra.mxu0 0.0
        %810 = vmatprep.subr.mxu0 0.0
        %811 = vmatpush1.msra.mxu0 0.0
        %812 = vmatprep.subr.mxu0 0.0
        %813 = vmatpush1.msra.mxu0 0.0
        %814 = vmatprep.subr.mxu0 0.0
        %815 = vmatpush1.msra.mxu0 0.0
        %816 = vmatprep.subr.mxu0 0.0
        %817 = vmatpush1.msra.mxu0 0.0
        %818 = vmatprep.subr.mxu0 0.0
        %819 = vmatpush1.msra.mxu0 0.0
        %820 = vmatprep.subr.mxu0 0.0
        %821 = vmatpush1.msra.mxu0 0.0
        %822 = vmatprep.subr.mxu0 0.0
        %823 = vmatpush1.msra.mxu0 0.0
        %824 = vmatprep.subr.mxu0 0.0
        %825 = vmatpush1.msra.mxu0 0.0
        %826 = vmatprep.subr.mxu0 0.0
        %827 = vmatpush1.msra.mxu0 0.0
        %828 = vmatprep.subr.mxu0 0.0
        %829 = vmatpush1.msra.mxu0 0.0
        %830 = vmatprep.subr.mxu0 0.0
        %831 = vmatpush1.msra.mxu0 %v791
        %832 = vmatprep.subr.mxu0 0.0
        %833 = vmatpush1.msra.mxu0 %v790
        %834 = vmatprep.subr.mxu0 0.0
        %835 = vmatpush1.msra.mxu0 %v789
        %836 = vmatprep.subr.mxu0 0.0
        %837 = vmatpush1.msra.mxu0 %v788
        %838 = vmatprep.subr.mxu0 0.0
        %839 = vmatpush2.msra.mxu0 0.0
        %840 = vmatprep.subr.mxu0 0.0
        %841 = vmatpush2.msra.mxu0 0.0
        %842 = vmatprep.subr.mxu0 0.0
        %843 = vmatpush2.msra.mxu0 0.0
        %844 = vmatprep.subr.mxu0 0.0
        %845 = vmatpush2.msra.mxu0 0.0
        %846 = vmatprep.subr.mxu0 0.0
        %847 = vmatpush2.msra.mxu0 0.0
        %848 = vmatprep.subr.mxu0 0.0
        %849 = vmatpush2.msra.mxu0 0.0
        %850 = vmatprep.subr.mxu0 0.0
        %851 = vmatpush2.msra.mxu0 0.0
        %852 = vmatprep.subr.mxu0 0.0
        %853 = vmatpush2.msra.mxu0 0.0
        %854 = vmatprep.subr.mxu0 0.0
        %855 = vmatpush2.msra.mxu0 0.0
        %856 = vmatprep.subr.mxu0 0.0
        %857 = vmatpush2.msra.mxu0 0.0
        %858 = vmatprep.subr.mxu0 0.0
        %859 = vmatpush2.msra.mxu0 0.0
        %860 = vmatprep.subr.mxu0 0.0
        %861 = vmatpush2.msra.mxu0 0.0
        %862 = vmatprep.subr.mxu0 0.0
        %863 = vmatpush2.msra.mxu0 0.0
        %864 = vmatprep.subr.mxu0 0.0
        %865 = vmatpush2.msra.mxu0 0.0
        %866 = vmatprep.subr.mxu0 0.0
        %867 = vmatpush2.msra.mxu0 0.0
        %868 = vmatprep.subr.mxu0 0.0
        %869 = vmatpush2.msra.mxu0 0.0
        %870 = vmatprep.mubr.f32.mxu0 0.0
        %871 = vmatmul.mubr.f32.gmra.mxu0 %v801
        %v872 = vpop.f32.mrf.mxu0
        %v873 = vadd.f32 %v797, %v872
        %v874 = vpop.f32.mrf.mxu0
        %875 = vmatprep.mubr.f32.mxu0 0.0
        %876 = vmatmul.mubr.f32.gmra.mxu0 %v804
        %v877 = vpop.f32.mrf.mxu0
        %v878 = vadd.f32 %v797, %v877
        %v879 = vpop.f32.mrf.mxu0
        %880 = vdwg.mxu0
        %vm881 = vcmask 523264
        %882 = vst.msk [vmem:[#allocation4] sm:$0xff] %vm881, %v873
        %883 = vst.msk [vmem:[#allocation4 + $0x8] sm:$0xff] %vm881, %v878
        %v884 = vmul.f32 %v785, %v785
        %v885 = vsel %vm799, %v884, 0.0
        %886 = vadd.xlane.f32.xlu0 %v885
        %v887 = vpop.xlane.xlu0 %886
        %v888 = vrcp.pop 32.0
        %v889 = vmul.f32 %v887, %v888
        %v890 = vadd.f32 %v889, 1.1920929e-07
        %v891 = vrsqrt.pop %v890
        %v892 = vmul.f32 %v785, %v891
        %v893 = vld [vmem:[#allocation10] sm:$0xff]
        %v894 = vld [vmem:[#allocation10 + $0x8] sm:$0xff]
        %v895 = vld [vmem:[#allocation10 + $0x10] sm:$0xff]
        %v896 = vld [vmem:[#allocation10 + $0x18] sm:$0xff]
        %v897 = vld [vmem:[%s3] sm:$0x1]
        %v899 = vlaneseq
        %v900 = vshrl.u32 %v899, 7
        %v901 = vsub.s32 0, %v900
        %v902 = vrot.slane %v897, %v901
        %v905 = vsel %vm799, %v892, 0
        %907 = vmatprep.subr.mxu0 0.0
        %908 = vmatpush1.msra.mxu0 0.0
        %909 = vmatprep.subr.mxu0 0.0
        %910 = vmatpush1.msra.mxu0 0.0
        %911 = vmatprep.subr.mxu0 0.0
        %912 = vmatpush1.msra.mxu0 0.0
        %913 = vmatprep.subr.mxu0 0.0
        %914 = vmatpush1.msra.mxu0 0.0
        %915 = vmatprep.subr.mxu0 0.0
        %916 = vmatpush1.msra.mxu0 0.0
        %917 = vmatprep.subr.mxu0 0.0
        %918 = vmatpush1.msra.mxu0 0.0
        %919 = vmatprep.subr.mxu0 0.0
        %920 = vmatpush1.msra.mxu0 0.0
        %921 = vmatprep.subr.mxu0 0.0
        %922 = vmatpush1.msra.mxu0 0.0
        %923 = vmatprep.subr.mxu0 0.0
        %924 = vmatpush1.msra.mxu0 0.0
        %925 = vmatprep.subr.mxu0 0.0
        %926 = vmatpush1.msra.mxu0 0.0
        %927 = vmatprep.subr.mxu0 0.0
        %928 = vmatpush1.msra.mxu0 0.0
        %929 = vmatprep.subr.mxu0 0.0
        %930 = vmatpush1.msra.mxu0 0.0
        %931 = vmatprep.subr.mxu0 0.0
        %932 = vmatpush1.msra.mxu0 %v896
        %933 = vmatprep.subr.mxu0 0.0
        %934 = vmatpush1.msra.mxu0 %v895
        %935 = vmatprep.subr.mxu0 0.0
        %936 = vmatpush1.msra.mxu0 %v894
        %937 = vmatprep.subr.mxu0 0.0
        %938 = vmatpush1.msra.mxu0 %v893
        %939 = vmatprep.subr.mxu0 0.0
        %940 = vmatpush2.msra.mxu0 0.0
        %941 = vmatprep.subr.mxu0 0.0
        %942 = vmatpush2.msra.mxu0 0.0
        %943 = vmatprep.subr.mxu0 0.0
        %944 = vmatpush2.msra.mxu0 0.0
        %945 = vmatprep.subr.mxu0 0.0
        %946 = vmatpush2.msra.mxu0 0.0
        %947 = vmatprep.subr.mxu0 0.0
        %948 = vmatpush2.msra.mxu0 0.0
        %949 = vmatprep.subr.mxu0 0.0
        %950 = vmatpush2.msra.mxu0 0.0
        %951 = vmatprep.subr.mxu0 0.0
        %952 = vmatpush2.msra.mxu0 0.0
        %953 = vmatprep.subr.mxu0 0.0
        %954 = vmatpush2.msra.mxu0 0.0
        %955 = vmatprep.subr.mxu0 0.0
        %956 = vmatpush2.msra.mxu0 0.0
        %957 = vmatprep.subr.mxu0 0.0
        %958 = vmatpush2.msra.mxu0 0.0
        %959 = vmatprep.subr.mxu0 0.0
        %960 = vmatpush2.msra.mxu0 0.0
        %961 = vmatprep.subr.mxu0 0.0
        %962 = vmatpush2.msra.mxu0 0.0
        %963 = vmatprep.subr.mxu0 0.0
        %964 = vmatpush2.msra.mxu0 0.0
        %965 = vmatprep.subr.mxu0 0.0
        %966 = vmatpush2.msra.mxu0 0.0
        %967 = vmatprep.subr.mxu0 0.0
        %968 = vmatpush2.msra.mxu0 0.0
        %969 = vmatprep.subr.mxu0 0.0
        %970 = vmatpush2.msra.mxu0 0.0
        %971 = vmatprep.mubr.f32.mxu0 0.0
        %972 = vmatmul.mubr.f32.gmra.mxu0 %v905
        %v973 = vpop.f32.mrf.mxu0
        %v974 = vadd.f32 %v902, %v973
        %v975 = vpop.f32.mrf.mxu0
        %976 = vdwg.mxu0
        %vm977 = vcmask 785408
        %978 = vst.msk [vmem:[#allocation2] sm:$0xff] %vm977, %v974
        %v979 = vld [vmem:[#allocation2] sm:$0xff]
        %981 = vrot.lane.b32.xlu0 %v979, 96
        %v982 = vpop.permute.xlu0 %981
        %vm983 = vcmask 64512
        %v984 = vsel %vm983, %v979, 0
        %v986 = vsel %vm983, %v982, 0
        %988 = vmatprep.subr.mxu0 0.0
        %989 = vmatpush1.xpose.msra.mxu0 0.0
        %990 = vmatprep.subr.mxu0 0.0
        %991 = vmatpush1.xpose.msra.mxu0 0.0
        %992 = vmatprep.subr.mxu0 0.0
        %993 = vmatpush1.xpose.msra.mxu0 0.0
        %994 = vmatprep.subr.mxu0 0.0
        %995 = vmatpush1.xpose.msra.mxu0 0.0
        %996 = vmatprep.subr.mxu0 0.0
        %997 = vmatpush1.xpose.msra.mxu0 0.0
        %998 = vmatprep.subr.mxu0 0.0
        %999 = vmatpush1.xpose.msra.mxu0 0.0
        %1000 = vmatprep.subr.mxu0 0.0
        %1001 = vmatpush1.xpose.msra.mxu0 0.0
        %1002 = vmatprep.subr.mxu0 0.0
        %1003 = vmatpush1.xpose.msra.mxu0 0.0
        %1004 = vmatprep.subr.mxu0 0.0
        %1005 = vmatpush1.xpose.msra.mxu0 0.0
        %1006 = vmatprep.subr.mxu0 0.0
        %1007 = vmatpush1.xpose.msra.mxu0 0.0
        %1008 = vmatprep.subr.mxu0 0.0
        %1009 = vmatpush1.xpose.msra.mxu0 0.0
        %1010 = vmatprep.subr.mxu0 0.0
        %1011 = vmatpush1.xpose.msra.mxu0 0.0
        %1012 = vmatprep.subr.mxu0 0.0
        %1013 = vmatpush1.xpose.msra.mxu0 0.0
        %1014 = vmatprep.subr.mxu0 0.0
        %1015 = vmatpush1.xpose.msra.mxu0 0.0
        %1016 = vmatprep.subr.mxu0 0.0
        %1017 = vmatpush1.xpose.msra.mxu0 0.0
        %1018 = vmatprep.subr.mxu0 0.0
        %1019 = vmatpush1.xpose.msra.mxu0 %v986
        %1020 = vmatprep.subr.mxu0 0.0
        %1021 = vmatpush2.xpose.msra.mxu0 0.0
        %1022 = vmatprep.subr.mxu0 0.0
        %1023 = vmatpush2.xpose.msra.mxu0 0.0
        %1024 = vmatprep.subr.mxu0 0.0
        %1025 = vmatpush2.xpose.msra.mxu0 0.0
        %1026 = vmatprep.subr.mxu0 0.0
        %1027 = vmatpush2.xpose.msra.mxu0 0.0
        %1028 = vmatprep.subr.mxu0 0.0
        %1029 = vmatpush2.xpose.msra.mxu0 0.0
        %1030 = vmatprep.subr.mxu0 0.0
        %1031 = vmatpush2.xpose.msra.mxu0 0.0
        %1032 = vmatprep.subr.mxu0 0.0
        %1033 = vmatpush2.xpose.msra.mxu0 0.0
        %1034 = vmatprep.subr.mxu0 0.0
        %1035 = vmatpush2.xpose.msra.mxu0 0.0
        %1036 = vmatprep.subr.mxu0 0.0
        %1037 = vmatpush2.xpose.msra.mxu0 0.0
        %1038 = vmatprep.subr.mxu0 0.0
        %1039 = vmatpush2.xpose.msra.mxu0 0.0
        %1040 = vmatprep.subr.mxu0 0.0
        %1041 = vmatpush2.xpose.msra.mxu0 0.0
        %1042 = vmatprep.subr.mxu0 0.0
        %1043 = vmatpush2.xpose.msra.mxu0 0.0
        %1044 = vmatprep.subr.mxu0 0.0
        %1045 = vmatpush2.xpose.msra.mxu0 0.0
        %1046 = vmatprep.subr.mxu0 0.0
        %1047 = vmatpush2.xpose.msra.mxu0 0.0
        %1048 = vmatprep.subr.mxu0 0.0
        %1049 = vmatpush2.xpose.msra.mxu0 0.0
        %1050 = vmatprep.subr.mxu0 0.0
        %1051 = vmatpush2.xpose.msra.mxu0 0.0
        %1052 = vmatprep.mubr.f32.mxu0 0.0
        %1053 = vmatmul.mubr.f32.gmra.mxu0 %v984
        %v1054 = vpop.f32.mrf.mxu0
        %v1055 = vadd.f32 0.0, %v1054
        %v1056 = vpop.f32.mrf.mxu0
        %1057 = vdwg.mxu0
        %v1058 = vsel %vm983, %v1055, -inf
        %1059 = vmax.xlane.f32.xlu0 %v1058
        %v1060 = vpop.xlane.xlu0 %1059
        %v1061 = vsub.f32 %v1055, %v1060
        %v1062 = vmul.f32 %v1061, 1.442695
        %v1063 = vpow.pop %v1062
        %v1064 = vsel %vm983, %v1063, 0.0
        %1065 = vadd.xlane.f32.xlu0 %v1064
        %v1066 = vpop.xlane.xlu0 %1065
        %v1067 = vrcp.pop %v1066
        %v1068 = vmul.f32 %v1063, %v1067
        %1069 = vrot.lane.b32.xlu0 %v979, 64
        %v1070 = vpop.permute.xlu0 %1069
        %v1073 = vsel %vm983, %v1068, 0
        %1075 = vmatprep.subr.mxu0 0.0
        %1076 = vmatpush1.msra.mxu0 0.0
        %1077 = vmatprep.subr.mxu0 0.0
        %1078 = vmatpush1.msra.mxu0 0.0
        %1079 = vmatprep.subr.mxu0 0.0
        %1080 = vmatpush1.msra.mxu0 0.0
        %1081 = vmatprep.subr.mxu0 0.0
        %1082 = vmatpush1.msra.mxu0 0.0
        %1083 = vmatprep.subr.mxu0 0.0
        %1084 = vmatpush1.msra.mxu0 0.0
        %1085 = vmatprep.subr.mxu0 0.0
        %1086 = vmatpush1.msra.mxu0 0.0
        %1087 = vmatprep.subr.mxu0 0.0
        %1088 = vmatpush1.msra.mxu0 0.0
        %1089 = vmatprep.subr.mxu0 0.0
        %1090 = vmatpush1.msra.mxu0 0.0
        %1091 = vmatprep.subr.mxu0 0.0
        %1092 = vmatpush1.msra.mxu0 0.0
        %1093 = vmatprep.subr.mxu0 0.0
        %1094 = vmatpush1.msra.mxu0 0.0
        %1095 = vmatprep.subr.mxu0 0.0
        %1096 = vmatpush1.msra.mxu0 0.0
        %1097 = vmatprep.subr.mxu0 0.0
        %1098 = vmatpush1.msra.mxu0 0.0
        %1099 = vmatprep.subr.mxu0 0.0
        %1100 = vmatpush1.msra.mxu0 0.0
        %1101 = vmatprep.subr.mxu0 0.0
        %1102 = vmatpush1.msra.mxu0 0.0
        %1103 = vmatprep.subr.mxu0 0.0
        %1104 = vmatpush1.msra.mxu0 0.0
        %1105 = vmatprep.subr.mxu0 0.0
        %1106 = vmatpush1.msra.mxu0 %v1070
        %1107 = vmatprep.subr.mxu0 0.0
        %1108 = vmatpush2.msra.mxu0 0.0
        %1109 = vmatprep.subr.mxu0 0.0
        %1110 = vmatpush2.msra.mxu0 0.0
        %1111 = vmatprep.subr.mxu0 0.0
        %1112 = vmatpush2.msra.mxu0 0.0
        %1113 = vmatprep.subr.mxu0 0.0
        %1114 = vmatpush2.msra.mxu0 0.0
        %1115 = vmatprep.subr.mxu0 0.0
        %1116 = vmatpush2.msra.mxu0 0.0
        %1117 = vmatprep.subr.mxu0 0.0
        %1118 = vmatpush2.msra.mxu0 0.0
        %1119 = vmatprep.subr.mxu0 0.0
        %1120 = vmatpush2.msra.mxu0 0.0
        %1121 = vmatprep.subr.mxu0 0.0
        %1122 = vmatpush2.msra.mxu0 0.0
        %1123 = vmatprep.subr.mxu0 0.0
        %1124 = vmatpush2.msra.mxu0 0.0
        %1125 = vmatprep.subr.mxu0 0.0
        %1126 = vmatpush2.msra.mxu0 0.0
        %1127 = vmatprep.subr.mxu0 0.0
        %1128 = vmatpush2.msra.mxu0 0.0
        %1129 = vmatprep.subr.mxu0 0.0
        %1130 = vmatpush2.msra.mxu0 0.0
        %1131 = vmatprep.subr.mxu0 0.0
        %1132 = vmatpush2.msra.mxu0 0.0
        %1133 = vmatprep.subr.mxu0 0.0
        %1134 = vmatpush2.msra.mxu0 0.0
        %1135 = vmatprep.subr.mxu0 0.0
        %1136 = vmatpush2.msra.mxu0 0.0
        %1137 = vmatprep.subr.mxu0 0.0
        %1138 = vmatpush2.msra.mxu0 0.0
        %1139 = vmatprep.mubr.f32.mxu0 0.0
        %1140 = vmatmul.mubr.f32.gmra.mxu0 %v1073
        %v1141 = vpop.f32.mrf.mxu0
        %v1142 = vadd.f32 0.0, %v1141
        %v1143 = vpop.f32.mrf.mxu0
        %1144 = vdwg.mxu0
        %v1145 = vld [vmem:[#allocation11] sm:$0xff]
        %1146 = vrot.lane.b32.xlu0 %v979, 120
        %v1147 = vpop.permute.xlu0 %1146
        %1148 = vrot.lane.b32.xlu0 %v979, 88
        %v1149 = vpop.permute.xlu0 %1148
        %v1150 = vsel %vm983, %v1147, 0
        %v1152 = vsel %vm983, %v1149, 0
        %1154 = vmatprep.subr.mxu0 0.0
        %1155 = vmatpush1.xpose.msra.mxu0 0.0
        %1156 = vmatprep.subr.mxu0 0.0
        %1157 = vmatpush1.xpose.msra.mxu0 0.0
        %1158 = vmatprep.subr.mxu0 0.0
        %1159 = vmatpush1.xpose.msra.mxu0 0.0
        %1160 = vmatprep.subr.mxu0 0.0
        %1161 = vmatpush1.xpose.msra.mxu0 0.0
        %1162 = vmatprep.subr.mxu0 0.0
        %1163 = vmatpush1.xpose.msra.mxu0 0.0
        %1164 = vmatprep.subr.mxu0 0.0
        %1165 = vmatpush1.xpose.msra.mxu0 0.0
        %1166 = vmatprep.subr.mxu0 0.0
        %1167 = vmatpush1.xpose.msra.mxu0 0.0
        %1168 = vmatprep.subr.mxu0 0.0
        %1169 = vmatpush1.xpose.msra.mxu0 0.0
        %1170 = vmatprep.subr.mxu0 0.0
        %1171 = vmatpush1.xpose.msra.mxu0 0.0
        %1172 = vmatprep.subr.mxu0 0.0
        %1173 = vmatpush1.xpose.msra.mxu0 0.0
        %1174 = vmatprep.subr.mxu0 0.0
        %1175 = vmatpush1.xpose.msra.mxu0 0.0
        %1176 = vmatprep.subr.mxu0 0.0
        %1177 = vmatpush1.xpose.msra.mxu0 0.0
        %1178 = vmatprep.subr.mxu0 0.0
        %1179 = vmatpush1.xpose.msra.mxu0 0.0
        %1180 = vmatprep.subr.mxu0 0.0
        %1181 = vmatpush1.xpose.msra.mxu0 0.0
        %1182 = vmatprep.subr.mxu0 0.0
        %1183 = vmatpush1.xpose.msra.mxu0 0.0
        %1184 = vmatprep.subr.mxu0 0.0
        %1185 = vmatpush1.xpose.msra.mxu0 %v1152
        %1186 = vmatprep.subr.mxu0 0.0
        %1187 = vmatpush2.xpose.msra.mxu0 0.0
        %1188 = vmatprep.subr.mxu0 0.0
        %1189 = vmatpush2.xpose.msra.mxu0 0.0
        %1190 = vmatprep.subr.mxu0 0.0
        %1191 = vmatpush2.xpose.msra.mxu0 0.0
        %1192 = vmatprep.subr.mxu0 0.0
        %1193 = vmatpush2.xpose.msra.mxu0 0.0
        %1194 = vmatprep.subr.mxu0 0.0
        %1195 = vmatpush2.xpose.msra.mxu0 0.0
        %1196 = vmatprep.subr.mxu0 0.0
        %1197 = vmatpush2.xpose.msra.mxu0 0.0
        %1198 = vmatprep.subr.mxu0 0.0
        %1199 = vmatpush2.xpose.msra.mxu0 0.0
        %1200 = vmatprep.subr.mxu0 0.0
        %1201 = vmatpush2.xpose.msra.mxu0 0.0
        %1202 = vmatprep.subr.mxu0 0.0
        %1203 = vmatpush2.xpose.msra.mxu0 0.0
        %1204 = vmatprep.subr.mxu0 0.0
        %1205 = vmatpush2.xpose.msra.mxu0 0.0
        %1206 = vmatprep.subr.mxu0 0.0
        %1207 = vmatpush2.xpose.msra.mxu0 0.0
        %1208 = vmatprep.subr.mxu0 0.0
        %1209 = vmatpush2.xpose.msra.mxu0 0.0
        %1210 = vmatprep.subr.mxu0 0.0
        %1211 = vmatpush2.xpose.msra.mxu0 0.0
        %1212 = vmatprep.subr.mxu0 0.0
        %1213 = vmatpush2.xpose.msra.mxu0 0.0
        %1214 = vmatprep.subr.mxu0 0.0
        %1215 = vmatpush2.xpose.msra.mxu0 0.0
        %1216 = vmatprep.subr.mxu0 0.0
        %1217 = vmatpush2.xpose.msra.mxu0 0.0
        %1218 = vmatprep.mubr.f32.mxu0 0.0
        %1219 = vmatmul.mubr.f32.gmra.mxu0 %v1150
        %v1220 = vpop.f32.mrf.mxu0
        %v1221 = vadd.f32 0.0, %v1220
        %v1222 = vpop.f32.mrf.mxu0
        %1223 = vdwg.mxu0
        %v1224 = vsel %vm983, %v1221, -inf
        %1225 = vmax.xlane.f32.xlu0 %v1224
        %v1226 = vpop.xlane.xlu0 %1225
        %v1227 = vsub.f32 %v1221, %v1226
        %v1228 = vmul.f32 %v1227, 1.442695
        %v1229 = vpow.pop %v1228
        %v1230 = vsel %vm983, %v1229, 0.0
        %1231 = vadd.xlane.f32.xlu0 %v1230
        %v1232 = vpop.xlane.xlu0 %1231
        %v1233 = vrcp.pop %v1232
        %v1234 = vmul.f32 %v1229, %v1233
        %1235 = vrot.lane.b32.xlu0 %v979, 56
        %v1236 = vpop.permute.xlu0 %1235
        %v1239 = vsel %vm983, %v1234, 0
        %1241 = vmatprep.subr.mxu0 0.0
        %1242 = vmatpush1.msra.mxu0 0.0
        %1243 = vmatprep.subr.mxu0 0.0
        %1244 = vmatpush1.msra.mxu0 0.0
        %1245 = vmatprep.subr.mxu0 0.0
        %1246 = vmatpush1.msra.mxu0 0.0
        %1247 = vmatprep.subr.mxu0 0.0
        %1248 = vmatpush1.msra.mxu0 0.0
        %1249 = vmatprep.subr.mxu0 0.0
        %1250 = vmatpush1.msra.mxu0 0.0
        %1251 = vmatprep.subr.mxu0 0.0
        %1252 = vmatpush1.msra.mxu0 0.0
        %1253 = vmatprep.subr.mxu0 0.0
        %1254 = vmatpush1.msra.mxu0 0.0
        %1255 = vmatprep.subr.mxu0 0.0
        %1256 = vmatpush1.msra.mxu0 0.0
        %1257 = vmatprep.subr.mxu0 0.0
        %1258 = vmatpush1.msra.mxu0 0.0
        %1259 = vmatprep.subr.mxu0 0.0
        %1260 = vmatpush1.msra.mxu0 0.0
        %1261 = vmatprep.subr.mxu0 0.0
        %1262 = vmatpush1.msra.mxu0 0.0
        %1263 = vmatprep.subr.mxu0 0.0
        %1264 = vmatpush1.msra.mxu0 0.0
        %1265 = vmatprep.subr.mxu0 0.0
        %1266 = vmatpush1.msra.mxu0 0.0
        %1267 = vmatprep.subr.mxu0 0.0
        %1268 = vmatpush1.msra.mxu0 0.0
        %1269 = vmatprep.subr.mxu0 0.0
        %1270 = vmatpush1.msra.mxu0 0.0
        %1271 = vmatprep.subr.mxu0 0.0
        %1272 = vmatpush1.msra.mxu0 %v1236
        %1273 = vmatprep.subr.mxu0 0.0
        %1274 = vmatpush2.msra.mxu0 0.0
        %1275 = vmatprep.subr.mxu0 0.0
        %1276 = vmatpush2.msra.mxu0 0.0
        %1277 = vmatprep.subr.mxu0 0.0
        %1278 = vmatpush2.msra.mxu0 0.0
        %1279 = vmatprep.subr.mxu0 0.0
        %1280 = vmatpush2.msra.mxu0 0.0
        %1281 = vmatprep.subr.mxu0 0.0
        %1282 = vmatpush2.msra.mxu0 0.0
        %1283 = vmatprep.subr.mxu0 0.0
        %1284 = vmatpush2.msra.mxu0 0.0
        %1285 = vmatprep.subr.mxu0 0.0
        %1286 = vmatpush2.msra.mxu0 0.0
        %1287 = vmatprep.subr.mxu0 0.0
        %1288 = vmatpush2.msra.mxu0 0.0
        %1289 = vmatprep.subr.mxu0 0.0
        %1290 = vmatpush2.msra.mxu0 0.0
        %1291 = vmatprep.subr.mxu0 0.0
        %1292 = vmatpush2.msra.mxu0 0.0
        %1293 = vmatprep.subr.mxu0 0.0
        %1294 = vmatpush2.msra.mxu0 0.0
        %1295 = vmatprep.subr.mxu0 0.0
        %1296 = vmatpush2.msra.mxu0 0.0
        %1297 = vmatprep.subr.mxu0 0.0
        %1298 = vmatpush2.msra.mxu0 0.0
        %1299 = vmatprep.subr.mxu0 0.0
        %1300 = vmatpush2.msra.mxu0 0.0
        %1301 = vmatprep.subr.mxu0 0.0
        %1302 = vmatpush2.msra.mxu0 0.0
        %1303 = vmatprep.subr.mxu0 0.0
        %1304 = vmatpush2.msra.mxu0 0.0
        %1305 = vmatprep.mubr.f32.mxu0 0.0
        %1306 = vmatmul.mubr.f32.gmra.mxu0 %v1239
        %v1307 = vpop.f32.mrf.mxu0
        %v1308 = vadd.f32 0.0, %v1307
        %v1309 = vpop.f32.mrf.mxu0
        %1310 = vdwg.mxu0
        %s1311 = scalar_lea.vmem [#allocation11], 8
        %v1312 = vld [vmem:[%s1311] sm:$0xff]
        %v1314 = vsel %vm983, %v1308, 0
        %1316 = vmatprep.subr.mxu0 0.0
        %1317 = vmatpush1.msra.mxu0 0.0
        %1318 = vmatprep.subr.mxu0 0.0
        %1319 = vmatpush1.msra.mxu0 0.0
        %1320 = vmatprep.subr.mxu0 0.0
        %1321 = vmatpush1.msra.mxu0 0.0
        %1322 = vmatprep.subr.mxu0 0.0
        %1323 = vmatpush1.msra.mxu0 0.0
        %1324 = vmatprep.subr.mxu0 0.0
        %1325 = vmatpush1.msra.mxu0 0.0
        %1326 = vmatprep.subr.mxu0 0.0
        %1327 = vmatpush1.msra.mxu0 0.0
        %1328 = vmatprep.subr.mxu0 0.0
        %1329 = vmatpush1.msra.mxu0 0.0
        %1330 = vmatprep.subr.mxu0 0.0
        %1331 = vmatpush1.msra.mxu0 0.0
        %1332 = vmatprep.subr.mxu0 0.0
        %1333 = vmatpush1.msra.mxu0 0.0
        %1334 = vmatprep.subr.mxu0 0.0
        %1335 = vmatpush1.msra.mxu0 0.0
        %1336 = vmatprep.subr.mxu0 0.0
        %1337 = vmatpush1.msra.mxu0 0.0
        %1338 = vmatprep.subr.mxu0 0.0
        %1339 = vmatpush1.msra.mxu0 0.0
        %1340 = vmatprep.subr.mxu0 0.0
        %1341 = vmatpush1.msra.mxu0 0.0
        %1342 = vmatprep.subr.mxu0 0.0
        %1343 = vmatpush1.msra.mxu0 0.0
        %1344 = vmatprep.subr.mxu0 0.0
        %1345 = vmatpush1.msra.mxu0 0.0
        %1346 = vmatprep.subr.mxu0 0.0
        %1347 = vmatpush1.msra.mxu0 %v1312
        %1348 = vmatprep.subr.mxu0 0.0
        %1349 = vmatpush2.msra.mxu0 0.0
        %1350 = vmatprep.subr.mxu0 0.0
        %1351 = vmatpush2.msra.mxu0 0.0
        %1352 = vmatprep.subr.mxu0 0.0
        %1353 = vmatpush2.msra.mxu0 0.0
        %1354 = vmatprep.subr.mxu0 0.0
        %1355 = vmatpush2.msra.mxu0 0.0
        %1356 = vmatprep.subr.mxu0 0.0
        %1357 = vmatpush2.msra.mxu0 0.0
        %1358 = vmatprep.subr.mxu0 0.0
        %1359 = vmatpush2.msra.mxu0 0.0
        %1360 = vmatprep.subr.mxu0 0.0
        %1361 = vmatpush2.msra.mxu0 0.0
        %1362 = vmatprep.subr.mxu0 0.0
        %1363 = vmatpush2.msra.mxu0 0.0
        %1364 = vmatprep.subr.mxu0 0.0
        %1365 = vmatpush2.msra.mxu0 0.0
        %1366 = vmatprep.subr.mxu0 0.0
        %1367 = vmatpush2.msra.mxu0 0.0
        %1368 = vmatprep.subr.mxu0 0.0
        %1369 = vmatpush2.msra.mxu0 0.0
        %1370 = vmatprep.subr.mxu0 0.0
        %1371 = vmatpush2.msra.mxu0 0.0
        %1372 = vmatprep.subr.mxu0 0.0
        %1373 = vmatpush2.msra.mxu0 0.0
        %1374 = vmatprep.subr.mxu0 0.0
        %1375 = vmatpush2.msra.mxu0 0.0
        %1376 = vmatprep.subr.mxu0 0.0
        %1377 = vmatpush2.msra.mxu0 0.0
        %1378 = vmatprep.subr.mxu0 0.0
        %1379 = vmatpush2.msra.mxu0 0.0
        %1380 = vmatprep.mubr.f32.mxu0 0.0
        %1381 = vmatmul.mubr.f32.gmra.mxu0 %v1314
        %v1382 = vpop.f32.mrf.mxu0
        %v1383 = vadd.f32 0.0, %v1382
        %v1384 = vpop.f32.mrf.mxu0
        %1385 = vdwg.mxu0
        %v1387 = vsel %vm983, %v1142, 0
        %1389 = vmatprep.subr.mxu0 0.0
        %1390 = vmatpush1.msra.mxu0 0.0
        %1391 = vmatprep.subr.mxu0 0.0
        %1392 = vmatpush1.msra.mxu0 0.0
        %1393 = vmatprep.subr.mxu0 0.0
        %1394 = vmatpush1.msra.mxu0 0.0
        %1395 = vmatprep.subr.mxu0 0.0
        %1396 = vmatpush1.msra.mxu0 0.0
        %1397 = vmatprep.subr.mxu0 0.0
        %1398 = vmatpush1.msra.mxu0 0.0
        %1399 = vmatprep.subr.mxu0 0.0
        %1400 = vmatpush1.msra.mxu0 0.0
        %1401 = vmatprep.subr.mxu0 0.0
        %1402 = vmatpush1.msra.mxu0 0.0
        %1403 = vmatprep.subr.mxu0 0.0
        %1404 = vmatpush1.msra.mxu0 0.0
        %1405 = vmatprep.subr.mxu0 0.0
        %1406 = vmatpush1.msra.mxu0 0.0
        %1407 = vmatprep.subr.mxu0 0.0
        %1408 = vmatpush1.msra.mxu0 0.0
        %1409 = vmatprep.subr.mxu0 0.0
        %1410 = vmatpush1.msra.mxu0 0.0
        %1411 = vmatprep.subr.mxu0 0.0
        %1412 = vmatpush1.msra.mxu0 0.0
        %1413 = vmatprep.subr.mxu0 0.0
        %1414 = vmatpush1.msra.mxu0 0.0
        %1415 = vmatprep.subr.mxu0 0.0
        %1416 = vmatpush1.msra.mxu0 0.0
        %1417 = vmatprep.subr.mxu0 0.0
        %1418 = vmatpush1.msra.mxu0 0.0
        %1419 = vmatprep.subr.mxu0 0.0
        %1420 = vmatpush1.msra.mxu0 %v1145
        %1421 = vmatprep.subr.mxu0 0.0
        %1422 = vmatpush2.msra.mxu0 0.0
        %1423 = vmatprep.subr.mxu0 0.0
        %1424 = vmatpush2.msra.mxu0 0.0
        %1425 = vmatprep.subr.mxu0 0.0
        %1426 = vmatpush2.msra.mxu0 0.0
        %1427 = vmatprep.subr.mxu0 0.0
        %1428 = vmatpush2.msra.mxu0 0.0
        %1429 = vmatprep.subr.mxu0 0.0
        %1430 = vmatpush2.msra.mxu0 0.0
        %1431 = vmatprep.subr.mxu0 0.0
        %1432 = vmatpush2.msra.mxu0 0.0
        %1433 = vmatprep.subr.mxu0 0.0
        %1434 = vmatpush2.msra.mxu0 0.0
        %1435 = vmatprep.subr.mxu0 0.0
        %1436 = vmatpush2.msra.mxu0 0.0
        %1437 = vmatprep.subr.mxu0 0.0
        %1438 = vmatpush2.msra.mxu0 0.0
        %1439 = vmatprep.subr.mxu0 0.0
        %1440 = vmatpush2.msra.mxu0 0.0
        %1441 = vmatprep.subr.mxu0 0.0
        %1442 = vmatpush2.msra.mxu0 0.0
        %1443 = vmatprep.subr.mxu0 0.0
        %1444 = vmatpush2.msra.mxu0 0.0
        %1445 = vmatprep.subr.mxu0 0.0
        %1446 = vmatpush2.msra.mxu0 0.0
        %1447 = vmatprep.subr.mxu0 0.0
        %1448 = vmatpush2.msra.mxu0 0.0
        %1449 = vmatprep.subr.mxu0 0.0
        %1450 = vmatpush2.msra.mxu0 0.0
        %1451 = vmatprep.subr.mxu0 0.0
        %1452 = vmatpush2.msra.mxu0 0.0
        %1453 = vmatprep.mubr.f32.mxu0 0.0
        %1454 = vmatmul.mubr.f32.gmra.mxu0 %v1387
        %v1455 = vpop.f32.mrf.mxu0
        %v1456 = vadd.f32 %v1383, %v1455
        %v1457 = vpop.f32.mrf.mxu0
        %1458 = vdwg.mxu0
        %1459 = vrot.lane.b32.xlu0 %v979, 112
        %v1460 = vpop.permute.xlu0 %1459
        %1461 = vrot.lane.b32.xlu0 %v979, 80
        %v1462 = vpop.permute.xlu0 %1461
        %v1463 = vsel %vm983, %v1460, 0
        %v1465 = vsel %vm983, %v1462, 0
        %1467 = vmatprep.subr.mxu0 0.0
        %1468 = vmatpush1.xpose.msra.mxu0 0.0
        %1469 = vmatprep.subr.mxu0 0.0
        %1470 = vmatpush1.xpose.msra.mxu0 0.0
        %1471 = vmatprep.subr.mxu0 0.0
        %1472 = vmatpush1.xpose.msra.mxu0 0.0
        %1473 = vmatprep.subr.mxu0 0.0
        %1474 = vmatpush1.xpose.msra.mxu0 0.0
        %1475 = vmatprep.subr.mxu0 0.0
        %1476 = vmatpush1.xpose.msra.mxu0 0.0
        %1477 = vmatprep.subr.mxu0 0.0
        %1478 = vmatpush1.xpose.msra.mxu0 0.0
        %1479 = vmatprep.subr.mxu0 0.0
        %1480 = vmatpush1.xpose.msra.mxu0 0.0
        %1481 = vmatprep.subr.mxu0 0.0
        %1482 = vmatpush1.xpose.msra.mxu0 0.0
        %1483 = vmatprep.subr.mxu0 0.0
        %1484 = vmatpush1.xpose.msra.mxu0 0.0
        %1485 = vmatprep.subr.mxu0 0.0
        %1486 = vmatpush1.xpose.msra.mxu0 0.0
        %1487 = vmatprep.subr.mxu0 0.0
        %1488 = vmatpush1.xpose.msra.mxu0 0.0
        %1489 = vmatprep.subr.mxu0 0.0
        %1490 = vmatpush1.xpose.msra.mxu0 0.0
        %1491 = vmatprep.subr.mxu0 0.0
        %1492 = vmatpush1.xpose.msra.mxu0 0.0
        %1493 = vmatprep.subr.mxu0 0.0
        %1494 = vmatpush1.xpose.msra.mxu0 0.0
        %1495 = vmatprep.subr.mxu0 0.0
        %1496 = vmatpush1.xpose.msra.mxu0 0.0
        %1497 = vmatprep.subr.mxu0 0.0
        %1498 = vmatpush1.xpose.msra.mxu0 %v1465
        %1499 = vmatprep.subr.mxu0 0.0
        %1500 = vmatpush2.xpose.msra.mxu0 0.0
        %1501 = vmatprep.subr.mxu0 0.0
        %1502 = vmatpush2.xpose.msra.mxu0 0.0
        %1503 = vmatprep.subr.mxu0 0.0
        %1504 = vmatpush2.xpose.msra.mxu0 0.0
        %1505 = vmatprep.subr.mxu0 0.0
        %1506 = vmatpush2.xpose.msra.mxu0 0.0
        %1507 = vmatprep.subr.mxu0 0.0
        %1508 = vmatpush2.xpose.msra.mxu0 0.0
        %1509 = vmatprep.subr.mxu0 0.0
        %1510 = vmatpush2.xpose.msra.mxu0 0.0
        %1511 = vmatprep.subr.mxu0 0.0
        %1512 = vmatpush2.xpose.msra.mxu0 0.0
        %1513 = vmatprep.subr.mxu0 0.0
        %1514 = vmatpush2.xpose.msra.mxu0 0.0
        %1515 = vmatprep.subr.mxu0 0.0
        %1516 = vmatpush2.xpose.msra.mxu0 0.0
        %1517 = vmatprep.subr.mxu0 0.0
        %1518 = vmatpush2.xpose.msra.mxu0 0.0
        %1519 = vmatprep.subr.mxu0 0.0
        %1520 = vmatpush2.xpose.msra.mxu0 0.0
        %1521 = vmatprep.subr.mxu0 0.0
        %1522 = vmatpush2.xpose.msra.mxu0 0.0
        %1523 = vmatprep.subr.mxu0 0.0
        %1524 = vmatpush2.xpose.msra.mxu0 0.0
        %1525 = vmatprep.subr.mxu0 0.0
        %1526 = vmatpush2.xpose.msra.mxu0 0.0
        %1527 = vmatprep.subr.mxu0 0.0
        %1528 = vmatpush2.xpose.msra.mxu0 0.0
        %1529 = vmatprep.subr.mxu0 0.0
        %1530 = vmatpush2.xpose.msra.mxu0 0.0
        %1531 = vmatprep.mubr.f32.mxu0 0.0
        %1532 = vmatmul.mubr.f32.gmra.mxu0 %v1463
        %v1533 = vpop.f32.mrf.mxu0
        %v1534 = vadd.f32 0.0, %v1533
        %v1535 = vpop.f32.mrf.mxu0
        %1536 = vdwg.mxu0
        %v1537 = vsel %vm983, %v1534, -inf
        %1538 = vmax.xlane.f32.xlu0 %v1537
        %v1539 = vpop.xlane.xlu0 %1538
        %v1540 = vsub.f32 %v1534, %v1539
        %v1541 = vmul.f32 %v1540, 1.442695
        %v1542 = vpow.pop %v1541
        %v1543 = vsel %vm983, %v1542, 0.0
        %1544 = vadd.xlane.f32.xlu0 %v1543
        %v1545 = vpop.xlane.xlu0 %1544
        %v1546 = vrcp.pop %v1545
        %v1547 = vmul.f32 %v1542, %v1546
        %1548 = vrot.lane.b32.xlu0 %v979, 48
        %v1549 = vpop.permute.xlu0 %1548
        %v1552 = vsel %vm983, %v1547, 0
        %1554 = vmatprep.subr.mxu0 0.0
        %1555 = vmatpush1.msra.mxu0 0.0
        %1556 = vmatprep.subr.mxu0 0.0
        %1557 = vmatpush1.msra.mxu0 0.0
        %1558 = vmatprep.subr.mxu0 0.0
        %1559 = vmatpush1.msra.mxu0 0.0
        %1560 = vmatprep.subr.mxu0 0.0
        %1561 = vmatpush1.msra.mxu0 0.0
        %1562 = vmatprep.subr.mxu0 0.0
        %1563 = vmatpush1.msra.mxu0 0.0
        %1564 = vmatprep.subr.mxu0 0.0
        %1565 = vmatpush1.msra.mxu0 0.0
        %1566 = vmatprep.subr.mxu0 0.0
        %1567 = vmatpush1.msra.mxu0 0.0
        %1568 = vmatprep.subr.mxu0 0.0
        %1569 = vmatpush1.msra.mxu0 0.0
        %1570 = vmatprep.subr.mxu0 0.0
        %1571 = vmatpush1.msra.mxu0 0.0
        %1572 = vmatprep.subr.mxu0 0.0
        %1573 = vmatpush1.msra.mxu0 0.0
        %1574 = vmatprep.subr.mxu0 0.0
        %1575 = vmatpush1.msra.mxu0 0.0
        %1576 = vmatprep.subr.mxu0 0.0
        %1577 = vmatpush1.msra.mxu0 0.0
        %1578 = vmatprep.subr.mxu0 0.0
        %1579 = vmatpush1.msra.mxu0 0.0
        %1580 = vmatprep.subr.mxu0 0.0
        %1581 = vmatpush1.msra.mxu0 0.0
        %1582 = vmatprep.subr.mxu0 0.0
        %1583 = vmatpush1.msra.mxu0 0.0
        %1584 = vmatprep.subr.mxu0 0.0
        %1585 = vmatpush1.msra.mxu0 %v1549
        %1586 = vmatprep.subr.mxu0 0.0
        %1587 = vmatpush2.msra.mxu0 0.0
        %1588 = vmatprep.subr.mxu0 0.0
        %1589 = vmatpush2.msra.mxu0 0.0
        %1590 = vmatprep.subr.mxu0 0.0
        %1591 = vmatpush2.msra.mxu0 0.0
        %1592 = vmatprep.subr.mxu0 0.0
        %1593 = vmatpush2.msra.mxu0 0.0
        %1594 = vmatprep.subr.mxu0 0.0
        %1595 = vmatpush2.msra.mxu0 0.0
        %1596 = vmatprep.subr.mxu0 0.0
        %1597 = vmatpush2.msra.mxu0 0.0
        %1598 = vmatprep.subr.mxu0 0.0
        %1599 = vmatpush2.msra.mxu0 0.0
        %1600 = vmatprep.subr.mxu0 0.0
        %1601 = vmatpush2.msra.mxu0 0.0
        %1602 = vmatprep.subr.mxu0 0.0
        %1603 = vmatpush2.msra.mxu0 0.0
        %1604 = vmatprep.subr.mxu0 0.0
        %1605 = vmatpush2.msra.mxu0 0.0
        %1606 = vmatprep.subr.mxu0 0.0
        %1607 = vmatpush2.msra.mxu0 0.0
        %1608 = vmatprep.subr.mxu0 0.0
        %1609 = vmatpush2.msra.mxu0 0.0
        %1610 = vmatprep.subr.mxu0 0.0
        %1611 = vmatpush2.msra.mxu0 0.0
        %1612 = vmatprep.subr.mxu0 0.0
        %1613 = vmatpush2.msra.mxu0 0.0
        %1614 = vmatprep.subr.mxu0 0.0
        %1615 = vmatpush2.msra.mxu0 0.0
        %1616 = vmatprep.subr.mxu0 0.0
        %1617 = vmatpush2.msra.mxu0 0.0
        %1618 = vmatprep.mubr.f32.mxu0 0.0
        %1619 = vmatmul.mubr.f32.gmra.mxu0 %v1552
        %v1620 = vpop.f32.mrf.mxu0
        %v1621 = vadd.f32 0.0, %v1620
        %v1622 = vpop.f32.mrf.mxu0
        %1623 = vdwg.mxu0
        %s1624 = scalar_lea.vmem [#allocation11], 16
        %v1625 = vld [vmem:[%s1624] sm:$0xff]
        %v1627 = vsel %vm983, %v1621, 0
        %1629 = vmatprep.subr.mxu0 0.0
        %1630 = vmatpush1.msra.mxu0 0.0
        %1631 = vmatprep.subr.mxu0 0.0
        %1632 = vmatpush1.msra.mxu0 0.0
        %1633 = vmatprep.subr.mxu0 0.0
        %1634 = vmatpush1.msra.mxu0 0.0
        %1635 = vmatprep.subr.mxu0 0.0
        %1636 = vmatpush1.msra.mxu0 0.0
        %1637 = vmatprep.subr.mxu0 0.0
        %1638 = vmatpush1.msra.mxu0 0.0
        %1639 = vmatprep.subr.mxu0 0.0
        %1640 = vmatpush1.msra.mxu0 0.0
        %1641 = vmatprep.subr.mxu0 0.0
        %1642 = vmatpush1.msra.mxu0 0.0
        %1643 = vmatprep.subr.mxu0 0.0
        %1644 = vmatpush1.msra.mxu0 0.0
        %1645 = vmatprep.subr.mxu0 0.0
        %1646 = vmatpush1.msra.mxu0 0.0
        %1647 = vmatprep.subr.mxu0 0.0
        %1648 = vmatpush1.msra.mxu0 0.0
        %1649 = vmatprep.subr.mxu0 0.0
        %1650 = vmatpush1.msra.mxu0 0.0
        %1651 = vmatprep.subr.mxu0 0.0
        %1652 = vmatpush1.msra.mxu0 0.0
        %1653 = vmatprep.subr.mxu0 0.0
        %1654 = vmatpush1.msra.mxu0 0.0
        %1655 = vmatprep.subr.mxu0 0.0
        %1656 = vmatpush1.msra.mxu0 0.0
        %1657 = vmatprep.subr.mxu0 0.0
        %1658 = vmatpush1.msra.mxu0 0.0
        %1659 = vmatprep.subr.mxu0 0.0
        %1660 = vmatpush1.msra.mxu0 %v1625
        %1661 = vmatprep.subr.mxu0 0.0
        %1662 = vmatpush2.msra.mxu0 0.0
        %1663 = vmatprep.subr.mxu0 0.0
        %1664 = vmatpush2.msra.mxu0 0.0
        %1665 = vmatprep.subr.mxu0 0.0
        %1666 = vmatpush2.msra.mxu0 0.0
        %1667 = vmatprep.subr.mxu0 0.0
        %1668 = vmatpush2.msra.mxu0 0.0
        %1669 = vmatprep.subr.mxu0 0.0
        %1670 = vmatpush2.msra.mxu0 0.0
        %1671 = vmatprep.subr.mxu0 0.0
        %1672 = vmatpush2.msra.mxu0 0.0
        %1673 = vmatprep.subr.mxu0 0.0
        %1674 = vmatpush2.msra.mxu0 0.0
        %1675 = vmatprep.subr.mxu0 0.0
        %1676 = vmatpush2.msra.mxu0 0.0
        %1677 = vmatprep.subr.mxu0 0.0
        %1678 = vmatpush2.msra.mxu0 0.0
        %1679 = vmatprep.subr.mxu0 0.0
        %1680 = vmatpush2.msra.mxu0 0.0
        %1681 = vmatprep.subr.mxu0 0.0
        %1682 = vmatpush2.msra.mxu0 0.0
        %1683 = vmatprep.subr.mxu0 0.0
        %1684 = vmatpush2.msra.mxu0 0.0
        %1685 = vmatprep.subr.mxu0 0.0
        %1686 = vmatpush2.msra.mxu0 0.0
        %1687 = vmatprep.subr.mxu0 0.0
        %1688 = vmatpush2.msra.mxu0 0.0
        %1689 = vmatprep.subr.mxu0 0.0
        %1690 = vmatpush2.msra.mxu0 0.0
        %1691 = vmatprep.subr.mxu0 0.0
        %1692 = vmatpush2.msra.mxu0 0.0
        %1693 = vmatprep.mubr.f32.mxu0 0.0
        %1694 = vmatmul.mubr.f32.gmra.mxu0 %v1627
        %v1695 = vpop.f32.mrf.mxu0
        %v1696 = vadd.f32 0.0, %v1695
        %v1697 = vpop.f32.mrf.mxu0
        %1698 = vdwg.mxu0
        %v1699 = vadd.f32 %v1456, %v1696
        %1700 = vrot.lane.b32.xlu0 %v979, 104
        %v1701 = vpop.permute.xlu0 %1700
        %1702 = vrot.lane.b32.xlu0 %v979, 72
        %v1703 = vpop.permute.xlu0 %1702
        %v1704 = vsel %vm983, %v1701, 0
        %v1706 = vsel %vm983, %v1703, 0
        %1708 = vmatprep.subr.mxu0 0.0
        %1709 = vmatpush1.xpose.msra.mxu0 0.0
        %1710 = vmatprep.subr.mxu0 0.0
        %1711 = vmatpush1.xpose.msra.mxu0 0.0
        %1712 = vmatprep.subr.mxu0 0.0
        %1713 = vmatpush1.xpose.msra.mxu0 0.0
        %1714 = vmatprep.subr.mxu0 0.0
        %1715 = vmatpush1.xpose.msra.mxu0 0.0
        %1716 = vmatprep.subr.mxu0 0.0
        %1717 = vmatpush1.xpose.msra.mxu0 0.0
        %1718 = vmatprep.subr.mxu0 0.0
        %1719 = vmatpush1.xpose.msra.mxu0 0.0
        %1720 = vmatprep.subr.mxu0 0.0
        %1721 = vmatpush1.xpose.msra.mxu0 0.0
        %1722 = vmatprep.subr.mxu0 0.0
        %1723 = vmatpush1.xpose.msra.mxu0 0.0
        %1724 = vmatprep.subr.mxu0 0.0
        %1725 = vmatpush1.xpose.msra.mxu0 0.0
        %1726 = vmatprep.subr.mxu0 0.0
        %1727 = vmatpush1.xpose.msra.mxu0 0.0
        %1728 = vmatprep.subr.mxu0 0.0
        %1729 = vmatpush1.xpose.msra.mxu0 0.0
        %1730 = vmatprep.subr.mxu0 0.0
        %1731 = vmatpush1.xpose.msra.mxu0 0.0
        %1732 = vmatprep.subr.mxu0 0.0
        %1733 = vmatpush1.xpose.msra.mxu0 0.0
        %1734 = vmatprep.subr.mxu0 0.0
        %1735 = vmatpush1.xpose.msra.mxu0 0.0
        %1736 = vmatprep.subr.mxu0 0.0
        %1737 = vmatpush1.xpose.msra.mxu0 0.0
        %1738 = vmatprep.subr.mxu0 0.0
        %1739 = vmatpush1.xpose.msra.mxu0 %v1706
        %1740 = vmatprep.subr.mxu0 0.0
        %1741 = vmatpush2.xpose.msra.mxu0 0.0
        %1742 = vmatprep.subr.mxu0 0.0
        %1743 = vmatpush2.xpose.msra.mxu0 0.0
        %1744 = vmatprep.subr.mxu0 0.0
        %1745 = vmatpush2.xpose.msra.mxu0 0.0
        %1746 = vmatprep.subr.mxu0 0.0
        %1747 = vmatpush2.xpose.msra.mxu0 0.0
        %1748 = vmatprep.subr.mxu0 0.0
        %1749 = vmatpush2.xpose.msra.mxu0 0.0
        %1750 = vmatprep.subr.mxu0 0.0
        %1751 = vmatpush2.xpose.msra.mxu0 0.0
        %1752 = vmatprep.subr.mxu0 0.0
        %1753 = vmatpush2.xpose.msra.mxu0 0.0
        %1754 = vmatprep.subr.mxu0 0.0
        %1755 = vmatpush2.xpose.msra.mxu0 0.0
        %1756 = vmatprep.subr.mxu0 0.0
        %1757 = vmatpush2.xpose.msra.mxu0 0.0
        %1758 = vmatprep.subr.mxu0 0.0
        %1759 = vmatpush2.xpose.msra.mxu0 0.0
        %1760 = vmatprep.subr.mxu0 0.0
        %1761 = vmatpush2.xpose.msra.mxu0 0.0
        %1762 = vmatprep.subr.mxu0 0.0
        %1763 = vmatpush2.xpose.msra.mxu0 0.0
        %1764 = vmatprep.subr.mxu0 0.0
        %1765 = vmatpush2.xpose.msra.mxu0 0.0
        %1766 = vmatprep.subr.mxu0 0.0
        %1767 = vmatpush2.xpose.msra.mxu0 0.0
        %1768 = vmatprep.subr.mxu0 0.0
        %1769 = vmatpush2.xpose.msra.mxu0 0.0
        %1770 = vmatprep.subr.mxu0 0.0
        %1771 = vmatpush2.xpose.msra.mxu0 0.0
        %1772 = vmatprep.mubr.f32.mxu0 0.0
        %1773 = vmatmul.mubr.f32.gmra.mxu0 %v1704
        %v1774 = vpop.f32.mrf.mxu0
        %v1775 = vadd.f32 0.0, %v1774
        %v1776 = vpop.f32.mrf.mxu0
        %1777 = vdwg.mxu0
        %v1778 = vsel %vm983, %v1775, -inf
        %1779 = vmax.xlane.f32.xlu0 %v1778
        %v1780 = vpop.xlane.xlu0 %1779
        %v1781 = vsub.f32 %v1775, %v1780
        %v1782 = vmul.f32 %v1781, 1.442695
        %v1783 = vpow.pop %v1782
        %v1784 = vsel %vm983, %v1783, 0.0
        %1785 = vadd.xlane.f32.xlu0 %v1784
        %v1786 = vpop.xlane.xlu0 %1785
        %v1787 = vrcp.pop %v1786
        %v1788 = vmul.f32 %v1783, %v1787
        %1789 = vrot.lane.b32.xlu0 %v979, 40
        %v1790 = vpop.permute.xlu0 %1789
        %v1793 = vsel %vm983, %v1788, 0
        %1795 = vmatprep.subr.mxu0 0.0
        %1796 = vmatpush1.msra.mxu0 0.0
        %1797 = vmatprep.subr.mxu0 0.0
        %1798 = vmatpush1.msra.mxu0 0.0
        %1799 = vmatprep.subr.mxu0 0.0
        %1800 = vmatpush1.msra.mxu0 0.0
        %1801 = vmatprep.subr.mxu0 0.0
        %1802 = vmatpush1.msra.mxu0 0.0
        %1803 = vmatprep.subr.mxu0 0.0
        %1804 = vmatpush1.msra.mxu0 0.0
        %1805 = vmatprep.subr.mxu0 0.0
        %1806 = vmatpush1.msra.mxu0 0.0
        %1807 = vmatprep.subr.mxu0 0.0
        %1808 = vmatpush1.msra.mxu0 0.0
        %1809 = vmatprep.subr.mxu0 0.0
        %1810 = vmatpush1.msra.mxu0 0.0
        %1811 = vmatprep.subr.mxu0 0.0
        %1812 = vmatpush1.msra.mxu0 0.0
        %1813 = vmatprep.subr.mxu0 0.0
        %1814 = vmatpush1.msra.mxu0 0.0
        %1815 = vmatprep.subr.mxu0 0.0
        %1816 = vmatpush1.msra.mxu0 0.0
        %1817 = vmatprep.subr.mxu0 0.0
        %1818 = vmatpush1.msra.mxu0 0.0
        %1819 = vmatprep.subr.mxu0 0.0
        %1820 = vmatpush1.msra.mxu0 0.0
        %1821 = vmatprep.subr.mxu0 0.0
        %1822 = vmatpush1.msra.mxu0 0.0
        %1823 = vmatprep.subr.mxu0 0.0
        %1824 = vmatpush1.msra.mxu0 0.0
        %1825 = vmatprep.subr.mxu0 0.0
        %1826 = vmatpush1.msra.mxu0 %v1790
        %1827 = vmatprep.subr.mxu0 0.0
        %1828 = vmatpush2.msra.mxu0 0.0
        %1829 = vmatprep.subr.mxu0 0.0
        %1830 = vmatpush2.msra.mxu0 0.0
        %1831 = vmatprep.subr.mxu0 0.0
        %1832 = vmatpush2.msra.mxu0 0.0
        %1833 = vmatprep.subr.mxu0 0.0
        %1834 = vmatpush2.msra.mxu0 0.0
        %1835 = vmatprep.subr.mxu0 0.0
        %1836 = vmatpush2.msra.mxu0 0.0
        %1837 = vmatprep.subr.mxu0 0.0
        %1838 = vmatpush2.msra.mxu0 0.0
        %1839 = vmatprep.subr.mxu0 0.0
        %1840 = vmatpush2.msra.mxu0 0.0
        %1841 = vmatprep.subr.mxu0 0.0
        %1842 = vmatpush2.msra.mxu0 0.0
        %1843 = vmatprep.subr.mxu0 0.0
        %1844 = vmatpush2.msra.mxu0 0.0
        %1845 = vmatprep.subr.mxu0 0.0
        %1846 = vmatpush2.msra.mxu0 0.0
        %1847 = vmatprep.subr.mxu0 0.0
        %1848 = vmatpush2.msra.mxu0 0.0
        %1849 = vmatprep.subr.mxu0 0.0
        %1850 = vmatpush2.msra.mxu0 0.0
        %1851 = vmatprep.subr.mxu0 0.0
        %1852 = vmatpush2.msra.mxu0 0.0
        %1853 = vmatprep.subr.mxu0 0.0
        %1854 = vmatpush2.msra.mxu0 0.0
        %1855 = vmatprep.subr.mxu0 0.0
        %1856 = vmatpush2.msra.mxu0 0.0
        %1857 = vmatprep.subr.mxu0 0.0
        %1858 = vmatpush2.msra.mxu0 0.0
        %1859 = vmatprep.mubr.f32.mxu0 0.0
        %1860 = vmatmul.mubr.f32.gmra.mxu0 %v1793
        %v1861 = vpop.f32.mrf.mxu0
        %v1862 = vadd.f32 0.0, %v1861
        %v1863 = vpop.f32.mrf.mxu0
        %1864 = vdwg.mxu0
        %s1865 = scalar_lea.vmem [#allocation11], 24
        %v1866 = vld [vmem:[%s1865] sm:$0xff]
        %v1868 = vsel %vm983, %v1862, 0
        %1870 = vmatprep.subr.mxu0 0.0
        %1871 = vmatpush1.msra.mxu0 0.0
        %1872 = vmatprep.subr.mxu0 0.0
        %1873 = vmatpush1.msra.mxu0 0.0
        %1874 = vmatprep.subr.mxu0 0.0
        %1875 = vmatpush1.msra.mxu0 0.0
        %1876 = vmatprep.subr.mxu0 0.0
        %1877 = vmatpush1.msra.mxu0 0.0
        %1878 = vmatprep.subr.mxu0 0.0
        %1879 = vmatpush1.msra.mxu0 0.0
        %1880 = vmatprep.subr.mxu0 0.0
        %1881 = vmatpush1.msra.mxu0 0.0
        %1882 = vmatprep.subr.mxu0 0.0
        %1883 = vmatpush1.msra.mxu0 0.0
        %1884 = vmatprep.subr.mxu0 0.0
        %1885 = vmatpush1.msra.mxu0 0.0
        %1886 = vmatprep.subr.mxu0 0.0
        %1887 = vmatpush1.msra.mxu0 0.0
        %1888 = vmatprep.subr.mxu0 0.0
        %1889 = vmatpush1.msra.mxu0 0.0
        %1890 = vmatprep.subr.mxu0 0.0
        %1891 = vmatpush1.msra.mxu0 0.0
        %1892 = vmatprep.subr.mxu0 0.0
        %1893 = vmatpush1.msra.mxu0 0.0
        %1894 = vmatprep.subr.mxu0 0.0
        %1895 = vmatpush1.msra.mxu0 0.0
        %1896 = vmatprep.subr.mxu0 0.0
        %1897 = vmatpush1.msra.mxu0 0.0
        %1898 = vmatprep.subr.mxu0 0.0
        %1899 = vmatpush1.msra.mxu0 0.0
        %1900 = vmatprep.subr.mxu0 0.0
        %1901 = vmatpush1.msra.mxu0 %v1866
        %1902 = vmatprep.subr.mxu0 0.0
        %1903 = vmatpush2.msra.mxu0 0.0
        %1904 = vmatprep.subr.mxu0 0.0
        %1905 = vmatpush2.msra.mxu0 0.0
        %1906 = vmatprep.subr.mxu0 0.0
        %1907 = vmatpush2.msra.mxu0 0.0
        %1908 = vmatprep.subr.mxu0 0.0
        %1909 = vmatpush2.msra.mxu0 0.0
        %1910 = vmatprep.subr.mxu0 0.0
        %1911 = vmatpush2.msra.mxu0 0.0
        %1912 = vmatprep.subr.mxu0 0.0
        %1913 = vmatpush2.msra.mxu0 0.0
        %1914 = vmatprep.subr.mxu0 0.0
        %1915 = vmatpush2.msra.mxu0 0.0
        %1916 = vmatprep.subr.mxu0 0.0
        %1917 = vmatpush2.msra.mxu0 0.0
        %1918 = vmatprep.subr.mxu0 0.0
        %1919 = vmatpush2.msra.mxu0 0.0
        %1920 = vmatprep.subr.mxu0 0.0
        %1921 = vmatpush2.msra.mxu0 0.0
        %1922 = vmatprep.subr.mxu0 0.0
        %1923 = vmatpush2.msra.mxu0 0.0
        %1924 = vmatprep.subr.mxu0 0.0
        %1925 = vmatpush2.msra.mxu0 0.0
        %1926 = vmatprep.subr.mxu0 0.0
        %1927 = vmatpush2.msra.mxu0 0.0
        %1928 = vmatprep.subr.mxu0 0.0
        %1929 = vmatpush2.msra.mxu0 0.0
        %1930 = vmatprep.subr.mxu0 0.0
        %1931 = vmatpush2.msra.mxu0 0.0
        %1932 = vmatprep.subr.mxu0 0.0
        %1933 = vmatpush2.msra.mxu0 0.0
        %1934 = vmatprep.mubr.f32.mxu0 0.0
        %1935 = vmatmul.mubr.f32.gmra.mxu0 %v1868
        %v1936 = vpop.f32.mrf.mxu0
        %v1937 = vadd.f32 0.0, %v1936
        %v1938 = vpop.f32.mrf.mxu0
        %1939 = vdwg.mxu0
        %v1940 = vadd.f32 %v1699, %v1937
        %v1941 = vld [vmem:[%s5] sm:$0x1]
        %v1943 = vlaneseq
        %v1944 = vshrl.u32 %v1943, 7
        %v1945 = vsub.s32 0, %v1944
        %v1946 = vrot.slane %v1941, %v1945
        %v1948 = vadd.f32 %v1940, %v1946
        %v1949 = vadd.f32 %v785, %v1948
        %v1950 = vmul.f32 %v1949, %v1949
        %v1951 = vsel %vm799, %v1950, 0.0
        %1952 = vadd.xlane.f32.xlu0 %v1951
        %v1953 = vpop.xlane.xlu0 %1952
        %v1954 = vmul.f32 %v1953, %v888
        %v1955 = vadd.f32 %v1954, 1.1920929e-07
        %v1956 = vrsqrt.pop %v1955
        %v1957 = vmul.f32 %v1949, %v1956
        %v1958 = vld [vmem:[#allocation13] sm:$0xff]
        %v1959 = vld [vmem:[#allocation13 + $0x8] sm:$0xff]
        %v1960 = vld [vmem:[#allocation13 + $0x10] sm:$0xff]
        %v1961 = vld [vmem:[#allocation13 + $0x18] sm:$0xff]
        %v1962 = vld [vmem:[%s7] sm:$0x1]
        %v1964 = vlaneseq
        %v1965 = vshrl.u32 %v1964, 7
        %v1966 = vsub.s32 0, %v1965
        %v1967 = vrot.slane %v1962, %v1966
        %v1970 = vsel %vm799, %v1957, 0
        %1972 = vmatprep.subr.mxu0 0.0
        %1973 = vmatpush1.msra.mxu0 0.0
        %1974 = vmatprep.subr.mxu0 0.0
        %1975 = vmatpush1.msra.mxu0 0.0
        %1976 = vmatprep.subr.mxu0 0.0
        %1977 = vmatpush1.msra.mxu0 0.0
        %1978 = vmatprep.subr.mxu0 0.0
        %1979 = vmatpush1.msra.mxu0 0.0
        %1980 = vmatprep.subr.mxu0 0.0
        %1981 = vmatpush1.msra.mxu0 0.0
        %1982 = vmatprep.subr.mxu0 0.0
        %1983 = vmatpush1.msra.mxu0 0.0
        %1984 = vmatprep.subr.mxu0 0.0
        %1985 = vmatpush1.msra.mxu0 0.0
        %1986 = vmatprep.subr.mxu0 0.0
        %1987 = vmatpush1.msra.mxu0 0.0
        %1988 = vmatprep.subr.mxu0 0.0
        %1989 = vmatpush1.msra.mxu0 0.0
        %1990 = vmatprep.subr.mxu0 0.0
        %1991 = vmatpush1.msra.mxu0 0.0
        %1992 = vmatprep.subr.mxu0 0.0
        %1993 = vmatpush1.msra.mxu0 0.0
        %1994 = vmatprep.subr.mxu0 0.0
        %1995 = vmatpush1.msra.mxu0 0.0
        %1996 = vmatprep.subr.mxu0 0.0
        %1997 = vmatpush1.msra.mxu0 %v1961
        %1998 = vmatprep.subr.mxu0 0.0
        %1999 = vmatpush1.msra.mxu0 %v1960
        %2000 = vmatprep.subr.mxu0 0.0
        %2001 = vmatpush1.msra.mxu0 %v1959
        %2002 = vmatprep.subr.mxu0 0.0
        %2003 = vmatpush1.msra.mxu0 %v1958
        %2004 = vmatprep.subr.mxu0 0.0
        %2005 = vmatpush2.msra.mxu0 0.0
        %2006 = vmatprep.subr.mxu0 0.0
        %2007 = vmatpush2.msra.mxu0 0.0
        %2008 = vmatprep.subr.mxu0 0.0
        %2009 = vmatpush2.msra.mxu0 0.0
        %2010 = vmatprep.subr.mxu0 0.0
        %2011 = vmatpush2.msra.mxu0 0.0
        %2012 = vmatprep.subr.mxu0 0.0
        %2013 = vmatpush2.msra.mxu0 0.0
        %2014 = vmatprep.subr.mxu0 0.0
        %2015 = vmatpush2.msra.mxu0 0.0
        %2016 = vmatprep.subr.mxu0 0.0
        %2017 = vmatpush2.msra.mxu0 0.0
        %2018 = vmatprep.subr.mxu0 0.0
        %2019 = vmatpush2.msra.mxu0 0.0
        %2020 = vmatprep.subr.mxu0 0.0
        %2021 = vmatpush2.msra.mxu0 0.0
        %2022 = vmatprep.subr.mxu0 0.0
        %2023 = vmatpush2.msra.mxu0 0.0
        %2024 = vmatprep.subr.mxu0 0.0
        %2025 = vmatpush2.msra.mxu0 0.0
        %2026 = vmatprep.subr.mxu0 0.0
        %2027 = vmatpush2.msra.mxu0 0.0
        %2028 = vmatprep.subr.mxu0 0.0
        %2029 = vmatpush2.msra.mxu0 0.0
        %2030 = vmatprep.subr.mxu0 0.0
        %2031 = vmatpush2.msra.mxu0 0.0
        %2032 = vmatprep.subr.mxu0 0.0
        %2033 = vmatpush2.msra.mxu0 0.0
        %2034 = vmatprep.subr.mxu0 0.0
        %2035 = vmatpush2.msra.mxu0 0.0
        %2036 = vmatprep.mubr.f32.mxu0 0.0
        %2037 = vmatmul.mubr.f32.gmra.mxu0 %v1970
        %v2038 = vpop.f32.mrf.mxu0
        %v2039 = vadd.f32 %v1967, %v2038
        %v2040 = vpop.f32.mrf.mxu0
        %2041 = vdwg.mxu0
        %2042 = vst.msk [vmem:[#allocation3] sm:$0xff] %vm799, %v2039
        %v2043 = vld [vmem:[#allocation3] sm:$0xff]
        %v2044 = vld [vmem:[#allocation4] sm:$0xff]
        %v2045 = vld [vmem:[#allocation4 + $0x8] sm:$0xff]
        %v2047 = vsel %vm983, %v2043, 0
        %v2050 = vsel %vm983, %v2044, 0
        %v2053 = vsel %vm983, %v2045, 0
        %2055 = vmatprep.subr.mxu0 0.0
        %2056 = vmatpush1.xpose.msra.mxu0 0.0
        %2057 = vmatprep.subr.mxu0 0.0
        %2058 = vmatpush1.xpose.msra.mxu0 0.0
        %2059 = vmatprep.subr.mxu0 0.0
        %2060 = vmatpush1.xpose.msra.mxu0 0.0
        %2061 = vmatprep.subr.mxu0 0.0
        %2062 = vmatpush1.xpose.msra.mxu0 0.0
        %2063 = vmatprep.subr.mxu0 0.0
        %2064 = vmatpush1.xpose.msra.mxu0 0.0
        %2065 = vmatprep.subr.mxu0 0.0
        %2066 = vmatpush1.xpose.msra.mxu0 0.0
        %2067 = vmatprep.subr.mxu0 0.0
        %2068 = vmatpush1.xpose.msra.mxu0 0.0
        %2069 = vmatprep.subr.mxu0 0.0
        %2070 = vmatpush1.xpose.msra.mxu0 0.0
        %2071 = vmatprep.subr.mxu0 0.0
        %2072 = vmatpush1.xpose.msra.mxu0 0.0
        %2073 = vmatprep.subr.mxu0 0.0
        %2074 = vmatpush1.xpose.msra.mxu0 0.0
        %2075 = vmatprep.subr.mxu0 0.0
        %2076 = vmatpush1.xpose.msra.mxu0 0.0
        %2077 = vmatprep.subr.mxu0 0.0
        %2078 = vmatpush1.xpose.msra.mxu0 0.0
        %2079 = vmatprep.subr.mxu0 0.0
        %2080 = vmatpush1.xpose.msra.mxu0 0.0
        %2081 = vmatprep.subr.mxu0 0.0
        %2082 = vmatpush1.xpose.msra.mxu0 0.0
        %2083 = vmatprep.subr.mxu0 0.0
        %2084 = vmatpush1.xpose.msra.mxu0 %v2053
        %2085 = vmatprep.subr.mxu0 0.0
        %2086 = vmatpush1.xpose.msra.mxu0 %v2050
        %2087 = vmatprep.subr.mxu0 0.0
        %2088 = vmatpush2.xpose.msra.mxu0 0.0
        %2089 = vmatprep.subr.mxu0 0.0
        %2090 = vmatpush2.xpose.msra.mxu0 0.0
        %2091 = vmatprep.subr.mxu0 0.0
        %2092 = vmatpush2.xpose.msra.mxu0 0.0
        %2093 = vmatprep.subr.mxu0 0.0
        %2094 = vmatpush2.xpose.msra.mxu0 0.0
        %2095 = vmatprep.subr.mxu0 0.0
        %2096 = vmatpush2.xpose.msra.mxu0 0.0
        %2097 = vmatprep.subr.mxu0 0.0
        %2098 = vmatpush2.xpose.msra.mxu0 0.0
        %2099 = vmatprep.subr.mxu0 0.0
        %2100 = vmatpush2.xpose.msra.mxu0 0.0
        %2101 = vmatprep.subr.mxu0 0.0
        %2102 = vmatpush2.xpose.msra.mxu0 0.0
        %2103 = vmatprep.subr.mxu0 0.0
        %2104 = vmatpush2.xpose.msra.mxu0 0.0
        %2105 = vmatprep.subr.mxu0 0.0
        %2106 = vmatpush2.xpose.msra.mxu0 0.0
        %2107 = vmatprep.subr.mxu0 0.0
        %2108 = vmatpush2.xpose.msra.mxu0 0.0
        %2109 = vmatprep.subr.mxu0 0.0
        %2110 = vmatpush2.xpose.msra.mxu0 0.0
        %2111 = vmatprep.subr.mxu0 0.0
        %2112 = vmatpush2.xpose.msra.mxu0 0.0
        %2113 = vmatprep.subr.mxu0 0.0
        %2114 = vmatpush2.xpose.msra.mxu0 0.0
        %2115 = vmatprep.subr.mxu0 0.0
        %2116 = vmatpush2.xpose.msra.mxu0 0.0
        %2117 = vmatprep.subr.mxu0 0.0
        %2118 = vmatpush2.xpose.msra.mxu0 0.0
        %2119 = vmatprep.mubr.f32.mxu0 0.0
        %2120 = vmatmul.mubr.f32.gmra.mxu0 %v2047
        %v2121 = vpop.f32.mrf.mxu0
        %v2122 = vadd.f32 0.0, %v2121
        %v2123 = vpop.f32.mrf.mxu0
        %2124 = vdwg.mxu0
        %vm2125 = vcmask 130048
        %v2126 = vsel %vm2125, %v2122, -inf
        %2127 = vmax.xlane.f32.xlu0 %v2126
        %v2128 = vpop.xlane.xlu0 %2127
        %v2129 = vsub.f32 %v2122, %v2128
        %v2130 = vmul.f32 %v2129, 1.442695
        %v2131 = vpow.pop %v2130
        %v2132 = vsel %vm2125, %v2131, 0.0
        %2133 = vadd.xlane.f32.xlu0 %v2132
        %v2134 = vpop.xlane.xlu0 %2133
        %v2135 = vrcp.pop %v2134
        %v2136 = vmul.f32 %v2131, %v2135
        %2137 = vrot.lane.b32.xlu0 %v2044, 96
        %v2138 = vpop.permute.xlu0 %2137
        %2139 = vrot.lane.b32.xlu0 %v2045, 96
        %v2140 = vpop.permute.xlu0 %2139
        %v2144 = vsel %vm2125, %v2136, 0
        %2146 = vmatprep.subr.mxu0 0.0
        %2147 = vmatpush1.msra.mxu0 0.0
        %2148 = vmatprep.subr.mxu0 0.0
        %2149 = vmatpush1.msra.mxu0 0.0
        %2150 = vmatprep.subr.mxu0 0.0
        %2151 = vmatpush1.msra.mxu0 0.0
        %2152 = vmatprep.subr.mxu0 0.0
        %2153 = vmatpush1.msra.mxu0 0.0
        %2154 = vmatprep.subr.mxu0 0.0
        %2155 = vmatpush1.msra.mxu0 0.0
        %2156 = vmatprep.subr.mxu0 0.0
        %2157 = vmatpush1.msra.mxu0 0.0
        %2158 = vmatprep.subr.mxu0 0.0
        %2159 = vmatpush1.msra.mxu0 0.0
        %2160 = vmatprep.subr.mxu0 0.0
        %2161 = vmatpush1.msra.mxu0 0.0
        %2162 = vmatprep.subr.mxu0 0.0
        %2163 = vmatpush1.msra.mxu0 0.0
        %2164 = vmatprep.subr.mxu0 0.0
        %2165 = vmatpush1.msra.mxu0 0.0
        %2166 = vmatprep.subr.mxu0 0.0
        %2167 = vmatpush1.msra.mxu0 0.0
        %2168 = vmatprep.subr.mxu0 0.0
        %2169 = vmatpush1.msra.mxu0 0.0
        %2170 = vmatprep.subr.mxu0 0.0
        %2171 = vmatpush1.msra.mxu0 0.0
        %2172 = vmatprep.subr.mxu0 0.0
        %2173 = vmatpush1.msra.mxu0 0.0
        %2174 = vmatprep.subr.mxu0 0.0
        %2175 = vmatpush1.msra.mxu0 %v2140
        %2176 = vmatprep.subr.mxu0 0.0
        %2177 = vmatpush1.msra.mxu0 %v2138
        %2178 = vmatprep.subr.mxu0 0.0
        %2179 = vmatpush2.msra.mxu0 0.0
        %2180 = vmatprep.subr.mxu0 0.0
        %2181 = vmatpush2.msra.mxu0 0.0
        %2182 = vmatprep.subr.mxu0 0.0
        %2183 = vmatpush2.msra.mxu0 0.0
        %2184 = vmatprep.subr.mxu0 0.0
        %2185 = vmatpush2.msra.mxu0 0.0
        %2186 = vmatprep.subr.mxu0 0.0
        %2187 = vmatpush2.msra.mxu0 0.0
        %2188 = vmatprep.subr.mxu0 0.0
        %2189 = vmatpush2.msra.mxu0 0.0
        %2190 = vmatprep.subr.mxu0 0.0
        %2191 = vmatpush2.msra.mxu0 0.0
        %2192 = vmatprep.subr.mxu0 0.0
        %2193 = vmatpush2.msra.mxu0 0.0
        %2194 = vmatprep.subr.mxu0 0.0
        %2195 = vmatpush2.msra.mxu0 0.0
        %2196 = vmatprep.subr.mxu0 0.0
        %2197 = vmatpush2.msra.mxu0 0.0
        %2198 = vmatprep.subr.mxu0 0.0
        %2199 = vmatpush2.msra.mxu0 0.0
        %2200 = vmatprep.subr.mxu0 0.0
        %2201 = vmatpush2.msra.mxu0 0.0
        %2202 = vmatprep.subr.mxu0 0.0
        %2203 = vmatpush2.msra.mxu0 0.0
        %2204 = vmatprep.subr.mxu0 0.0
        %2205 = vmatpush2.msra.mxu0 0.0
        %2206 = vmatprep.subr.mxu0 0.0
        %2207 = vmatpush2.msra.mxu0 0.0
        %2208 = vmatprep.subr.mxu0 0.0
        %2209 = vmatpush2.msra.mxu0 0.0
        %2210 = vmatprep.mubr.f32.mxu0 0.0
        %2211 = vmatmul.mubr.f32.gmra.mxu0 %v2144
        %v2212 = vpop.f32.mrf.mxu0
        %v2213 = vadd.f32 0.0, %v2212
        %v2214 = vpop.f32.mrf.mxu0
        %2215 = vdwg.mxu0
        %v2216 = vld [vmem:[#allocation16] sm:$0xff]
        %2217 = vrot.lane.b32.xlu0 %v2043, 120
        %v2218 = vpop.permute.xlu0 %2217
        %2219 = vrot.lane.b32.xlu0 %v2044, 120
        %v2220 = vpop.permute.xlu0 %2219
        %2221 = vrot.lane.b32.xlu0 %v2045, 120
        %v2222 = vpop.permute.xlu0 %2221
        %v2223 = vsel %vm983, %v2218, 0
        %v2225 = vsel %vm983, %v2220, 0
        %v2227 = vsel %vm983, %v2222, 0
        %2229 = vmatprep.subr.mxu0 0.0
        %2230 = vmatpush1.xpose.msra.mxu0 0.0
        %2231 = vmatprep.subr.mxu0 0.0
        %2232 = vmatpush1.xpose.msra.mxu0 0.0
        %2233 = vmatprep.subr.mxu0 0.0
        %2234 = vmatpush1.xpose.msra.mxu0 0.0
        %2235 = vmatprep.subr.mxu0 0.0
        %2236 = vmatpush1.xpose.msra.mxu0 0.0
        %2237 = vmatprep.subr.mxu0 0.0
        %2238 = vmatpush1.xpose.msra.mxu0 0.0
        %2239 = vmatprep.subr.mxu0 0.0
        %2240 = vmatpush1.xpose.msra.mxu0 0.0
        %2241 = vmatprep.subr.mxu0 0.0
        %2242 = vmatpush1.xpose.msra.mxu0 0.0
        %2243 = vmatprep.subr.mxu0 0.0
        %2244 = vmatpush1.xpose.msra.mxu0 0.0
        %2245 = vmatprep.subr.mxu0 0.0
        %2246 = vmatpush1.xpose.msra.mxu0 0.0
        %2247 = vmatprep.subr.mxu0 0.0
        %2248 = vmatpush1.xpose.msra.mxu0 0.0
        %2249 = vmatprep.subr.mxu0 0.0
        %2250 = vmatpush1.xpose.msra.mxu0 0.0
        %2251 = vmatprep.subr.mxu0 0.0
        %2252 = vmatpush1.xpose.msra.mxu0 0.0
        %2253 = vmatprep.subr.mxu0 0.0
        %2254 = vmatpush1.xpose.msra.mxu0 0.0
        %2255 = vmatprep.subr.mxu0 0.0
        %2256 = vmatpush1.xpose.msra.mxu0 0.0
        %2257 = vmatprep.subr.mxu0 0.0
        %2258 = vmatpush1.xpose.msra.mxu0 %v2227
        %2259 = vmatprep.subr.mxu0 0.0
        %2260 = vmatpush1.xpose.msra.mxu0 %v2225
        %2261 = vmatprep.subr.mxu0 0.0
        %2262 = vmatpush2.xpose.msra.mxu0 0.0
        %2263 = vmatprep.subr.mxu0 0.0
        %2264 = vmatpush2.xpose.msra.mxu0 0.0
        %2265 = vmatprep.subr.mxu0 0.0
        %2266 = vmatpush2.xpose.msra.mxu0 0.0
        %2267 = vmatprep.subr.mxu0 0.0
        %2268 = vmatpush2.xpose.msra.mxu0 0.0
        %2269 = vmatprep.subr.mxu0 0.0
        %2270 = vmatpush2.xpose.msra.mxu0 0.0
        %2271 = vmatprep.subr.mxu0 0.0
        %2272 = vmatpush2.xpose.msra.mxu0 0.0
        %2273 = vmatprep.subr.mxu0 0.0
        %2274 = vmatpush2.xpose.msra.mxu0 0.0
        %2275 = vmatprep.subr.mxu0 0.0
        %2276 = vmatpush2.xpose.msra.mxu0 0.0
        %2277 = vmatprep.subr.mxu0 0.0
        %2278 = vmatpush2.xpose.msra.mxu0 0.0
        %2279 = vmatprep.subr.mxu0 0.0
        %2280 = vmatpush2.xpose.msra.mxu0 0.0
        %2281 = vmatprep.subr.mxu0 0.0
        %2282 = vmatpush2.xpose.msra.mxu0 0.0
        %2283 = vmatprep.subr.mxu0 0.0
        %2284 = vmatpush2.xpose.msra.mxu0 0.0
        %2285 = vmatprep.subr.mxu0 0.0
        %2286 = vmatpush2.xpose.msra.mxu0 0.0
        %2287 = vmatprep.subr.mxu0 0.0
        %2288 = vmatpush2.xpose.msra.mxu0 0.0
        %2289 = vmatprep.subr.mxu0 0.0
        %2290 = vmatpush2.xpose.msra.mxu0 0.0
        %2291 = vmatprep.subr.mxu0 0.0
        %2292 = vmatpush2.xpose.msra.mxu0 0.0
        %2293 = vmatprep.mubr.f32.mxu0 0.0
        %2294 = vmatmul.mubr.f32.gmra.mxu0 %v2223
        %v2295 = vpop.f32.mrf.mxu0
        %v2296 = vadd.f32 0.0, %v2295
        %v2297 = vpop.f32.mrf.mxu0
        %2298 = vdwg.mxu0
        %v2299 = vsel %vm2125, %v2296, -inf
        %2300 = vmax.xlane.f32.xlu0 %v2299
        %v2301 = vpop.xlane.xlu0 %2300
        %v2302 = vsub.f32 %v2296, %v2301
        %v2303 = vmul.f32 %v2302, 1.442695
        %v2304 = vpow.pop %v2303
        %v2305 = vsel %vm2125, %v2304, 0.0
        %2306 = vadd.xlane.f32.xlu0 %v2305
        %v2307 = vpop.xlane.xlu0 %2306
        %v2308 = vrcp.pop %v2307
        %v2309 = vmul.f32 %v2304, %v2308
        %2310 = vrot.lane.b32.xlu0 %v2044, 88
        %v2311 = vpop.permute.xlu0 %2310
        %2312 = vrot.lane.b32.xlu0 %v2045, 88
        %v2313 = vpop.permute.xlu0 %2312
        %v2317 = vsel %vm2125, %v2309, 0
        %2319 = vmatprep.subr.mxu0 0.0
        %2320 = vmatpush1.msra.mxu0 0.0
        %2321 = vmatprep.subr.mxu0 0.0
        %2322 = vmatpush1.msra.mxu0 0.0
        %2323 = vmatprep.subr.mxu0 0.0
        %2324 = vmatpush1.msra.mxu0 0.0
        %2325 = vmatprep.subr.mxu0 0.0
        %2326 = vmatpush1.msra.mxu0 0.0
        %2327 = vmatprep.subr.mxu0 0.0
        %2328 = vmatpush1.msra.mxu0 0.0
        %2329 = vmatprep.subr.mxu0 0.0
        %2330 = vmatpush1.msra.mxu0 0.0
        %2331 = vmatprep.subr.mxu0 0.0
        %2332 = vmatpush1.msra.mxu0 0.0
        %2333 = vmatprep.subr.mxu0 0.0
        %2334 = vmatpush1.msra.mxu0 0.0
        %2335 = vmatprep.subr.mxu0 0.0
        %2336 = vmatpush1.msra.mxu0 0.0
        %2337 = vmatprep.subr.mxu0 0.0
        %2338 = vmatpush1.msra.mxu0 0.0
        %2339 = vmatprep.subr.mxu0 0.0
        %2340 = vmatpush1.msra.mxu0 0.0
        %2341 = vmatprep.subr.mxu0 0.0
        %2342 = vmatpush1.msra.mxu0 0.0
        %2343 = vmatprep.subr.mxu0 0.0
        %2344 = vmatpush1.msra.mxu0 0.0
        %2345 = vmatprep.subr.mxu0 0.0
        %2346 = vmatpush1.msra.mxu0 0.0
        %2347 = vmatprep.subr.mxu0 0.0
        %2348 = vmatpush1.msra.mxu0 %v2313
        %2349 = vmatprep.subr.mxu0 0.0
        %2350 = vmatpush1.msra.mxu0 %v2311
        %2351 = vmatprep.subr.mxu0 0.0
        %2352 = vmatpush2.msra.mxu0 0.0
        %2353 = vmatprep.subr.mxu0 0.0
        %2354 = vmatpush2.msra.mxu0 0.0
        %2355 = vmatprep.subr.mxu0 0.0
        %2356 = vmatpush2.msra.mxu0 0.0
        %2357 = vmatprep.subr.mxu0 0.0
        %2358 = vmatpush2.msra.mxu0 0.0
        %2359 = vmatprep.subr.mxu0 0.0
        %2360 = vmatpush2.msra.mxu0 0.0
        %2361 = vmatprep.subr.mxu0 0.0
        %2362 = vmatpush2.msra.mxu0 0.0
        %2363 = vmatprep.subr.mxu0 0.0
        %2364 = vmatpush2.msra.mxu0 0.0
        %2365 = vmatprep.subr.mxu0 0.0
        %2366 = vmatpush2.msra.mxu0 0.0
        %2367 = vmatprep.subr.mxu0 0.0
        %2368 = vmatpush2.msra.mxu0 0.0
        %2369 = vmatprep.subr.mxu0 0.0
        %2370 = vmatpush2.msra.mxu0 0.0
        %2371 = vmatprep.subr.mxu0 0.0
        %2372 = vmatpush2.msra.mxu0 0.0
        %2373 = vmatprep.subr.mxu0 0.0
        %2374 = vmatpush2.msra.mxu0 0.0
        %2375 = vmatprep.subr.mxu0 0.0
        %2376 = vmatpush2.msra.mxu0 0.0
        %2377 = vmatprep.subr.mxu0 0.0
        %2378 = vmatpush2.msra.mxu0 0.0
        %2379 = vmatprep.subr.mxu0 0.0
        %2380 = vmatpush2.msra.mxu0 0.0
        %2381 = vmatprep.subr.mxu0 0.0
        %2382 = vmatpush2.msra.mxu0 0.0
        %2383 = vmatprep.mubr.f32.mxu0 0.0
        %2384 = vmatmul.mubr.f32.gmra.mxu0 %v2317
        %v2385 = vpop.f32.mrf.mxu0
        %v2386 = vadd.f32 0.0, %v2385
        %v2387 = vpop.f32.mrf.mxu0
        %2388 = vdwg.mxu0
        %s2389 = scalar_lea.vmem [#allocation16], 8
        %v2390 = vld [vmem:[%s2389] sm:$0xff]
        %v2392 = vsel %vm983, %v2386, 0
        %2394 = vmatprep.subr.mxu0 0.0
        %2395 = vmatpush1.msra.mxu0 0.0
        %2396 = vmatprep.subr.mxu0 0.0
        %2397 = vmatpush1.msra.mxu0 0.0
        %2398 = vmatprep.subr.mxu0 0.0
        %2399 = vmatpush1.msra.mxu0 0.0
        %2400 = vmatprep.subr.mxu0 0.0
        %2401 = vmatpush1.msra.mxu0 0.0
        %2402 = vmatprep.subr.mxu0 0.0
        %2403 = vmatpush1.msra.mxu0 0.0
        %2404 = vmatprep.subr.mxu0 0.0
        %2405 = vmatpush1.msra.mxu0 0.0
        %2406 = vmatprep.subr.mxu0 0.0
        %2407 = vmatpush1.msra.mxu0 0.0
        %2408 = vmatprep.subr.mxu0 0.0
        %2409 = vmatpush1.msra.mxu0 0.0
        %2410 = vmatprep.subr.mxu0 0.0
        %2411 = vmatpush1.msra.mxu0 0.0
        %2412 = vmatprep.subr.mxu0 0.0
        %2413 = vmatpush1.msra.mxu0 0.0
        %2414 = vmatprep.subr.mxu0 0.0
        %2415 = vmatpush1.msra.mxu0 0.0
        %2416 = vmatprep.subr.mxu0 0.0
        %2417 = vmatpush1.msra.mxu0 0.0
        %2418 = vmatprep.subr.mxu0 0.0
        %2419 = vmatpush1.msra.mxu0 0.0
        %2420 = vmatprep.subr.mxu0 0.0
        %2421 = vmatpush1.msra.mxu0 0.0
        %2422 = vmatprep.subr.mxu0 0.0
        %2423 = vmatpush1.msra.mxu0 0.0
        %2424 = vmatprep.subr.mxu0 0.0
        %2425 = vmatpush1.msra.mxu0 %v2390
        %2426 = vmatprep.subr.mxu0 0.0
        %2427 = vmatpush2.msra.mxu0 0.0
        %2428 = vmatprep.subr.mxu0 0.0
        %2429 = vmatpush2.msra.mxu0 0.0
        %2430 = vmatprep.subr.mxu0 0.0
        %2431 = vmatpush2.msra.mxu0 0.0
        %2432 = vmatprep.subr.mxu0 0.0
        %2433 = vmatpush2.msra.mxu0 0.0
        %2434 = vmatprep.subr.mxu0 0.0
        %2435 = vmatpush2.msra.mxu0 0.0
        %2436 = vmatprep.subr.mxu0 0.0
        %2437 = vmatpush2.msra.mxu0 0.0
        %2438 = vmatprep.subr.mxu0 0.0
        %2439 = vmatpush2.msra.mxu0 0.0
        %2440 = vmatprep.subr.mxu0 0.0
        %2441 = vmatpush2.msra.mxu0 0.0
        %2442 = vmatprep.subr.mxu0 0.0
        %2443 = vmatpush2.msra.mxu0 0.0
        %2444 = vmatprep.subr.mxu0 0.0
        %2445 = vmatpush2.msra.mxu0 0.0
        %2446 = vmatprep.subr.mxu0 0.0
        %2447 = vmatpush2.msra.mxu0 0.0
        %2448 = vmatprep.subr.mxu0 0.0
        %2449 = vmatpush2.msra.mxu0 0.0
        %2450 = vmatprep.subr.mxu0 0.0
        %2451 = vmatpush2.msra.mxu0 0.0
        %2452 = vmatprep.subr.mxu0 0.0
        %2453 = vmatpush2.msra.mxu0 0.0
        %2454 = vmatprep.subr.mxu0 0.0
        %2455 = vmatpush2.msra.mxu0 0.0
        %2456 = vmatprep.subr.mxu0 0.0
        %2457 = vmatpush2.msra.mxu0 0.0
        %2458 = vmatprep.mubr.f32.mxu0 0.0
        %2459 = vmatmul.mubr.f32.gmra.mxu0 %v2392
        %v2460 = vpop.f32.mrf.mxu0
        %v2461 = vadd.f32 0.0, %v2460
        %v2462 = vpop.f32.mrf.mxu0
        %2463 = vdwg.mxu0
        %v2465 = vsel %vm983, %v2213, 0
        %2467 = vmatprep.subr.mxu0 0.0
        %2468 = vmatpush1.msra.mxu0 0.0
        %2469 = vmatprep.subr.mxu0 0.0
        %2470 = vmatpush1.msra.mxu0 0.0
        %2471 = vmatprep.subr.mxu0 0.0
        %2472 = vmatpush1.msra.mxu0 0.0
        %2473 = vmatprep.subr.mxu0 0.0
        %2474 = vmatpush1.msra.mxu0 0.0
        %2475 = vmatprep.subr.mxu0 0.0
        %2476 = vmatpush1.msra.mxu0 0.0
        %2477 = vmatprep.subr.mxu0 0.0
        %2478 = vmatpush1.msra.mxu0 0.0
        %2479 = vmatprep.subr.mxu0 0.0
        %2480 = vmatpush1.msra.mxu0 0.0
        %2481 = vmatprep.subr.mxu0 0.0
        %2482 = vmatpush1.msra.mxu0 0.0
        %2483 = vmatprep.subr.mxu0 0.0
        %2484 = vmatpush1.msra.mxu0 0.0
        %2485 = vmatprep.subr.mxu0 0.0
        %2486 = vmatpush1.msra.mxu0 0.0
        %2487 = vmatprep.subr.mxu0 0.0
        %2488 = vmatpush1.msra.mxu0 0.0
        %2489 = vmatprep.subr.mxu0 0.0
        %2490 = vmatpush1.msra.mxu0 0.0
        %2491 = vmatprep.subr.mxu0 0.0
        %2492 = vmatpush1.msra.mxu0 0.0
        %2493 = vmatprep.subr.mxu0 0.0
        %2494 = vmatpush1.msra.mxu0 0.0
        %2495 = vmatprep.subr.mxu0 0.0
        %2496 = vmatpush1.msra.mxu0 0.0
        %2497 = vmatprep.subr.mxu0 0.0
        %2498 = vmatpush1.msra.mxu0 %v2216
        %2499 = vmatprep.subr.mxu0 0.0
        %2500 = vmatpush2.msra.mxu0 0.0
        %2501 = vmatprep.subr.mxu0 0.0
        %2502 = vmatpush2.msra.mxu0 0.0
        %2503 = vmatprep.subr.mxu0 0.0
        %2504 = vmatpush2.msra.mxu0 0.0
        %2505 = vmatprep.subr.mxu0 0.0
        %2506 = vmatpush2.msra.mxu0 0.0
        %2507 = vmatprep.subr.mxu0 0.0
        %2508 = vmatpush2.msra.mxu0 0.0
        %2509 = vmatprep.subr.mxu0 0.0
        %2510 = vmatpush2.msra.mxu0 0.0
        %2511 = vmatprep.subr.mxu0 0.0
        %2512 = vmatpush2.msra.mxu0 0.0
        %2513 = vmatprep.subr.mxu0 0.0
        %2514 = vmatpush2.msra.mxu0 0.0
        %2515 = vmatprep.subr.mxu0 0.0
        %2516 = vmatpush2.msra.mxu0 0.0
        %2517 = vmatprep.subr.mxu0 0.0
        %2518 = vmatpush2.msra.mxu0 0.0
        %2519 = vmatprep.subr.mxu0 0.0
        %2520 = vmatpush2.msra.mxu0 0.0
        %2521 = vmatprep.subr.mxu0 0.0
        %2522 = vmatpush2.msra.mxu0 0.0
        %2523 = vmatprep.subr.mxu0 0.0
        %2524 = vmatpush2.msra.mxu0 0.0
        %2525 = vmatprep.subr.mxu0 0.0
        %2526 = vmatpush2.msra.mxu0 0.0
        %2527 = vmatprep.subr.mxu0 0.0
        %2528 = vmatpush2.msra.mxu0 0.0
        %2529 = vmatprep.subr.mxu0 0.0
        %2530 = vmatpush2.msra.mxu0 0.0
        %2531 = vmatprep.mubr.f32.mxu0 0.0
        %2532 = vmatmul.mubr.f32.gmra.mxu0 %v2465
        %v2533 = vpop.f32.mrf.mxu0
        %v2534 = vadd.f32 %v2461, %v2533
        %v2535 = vpop.f32.mrf.mxu0
        %2536 = vdwg.mxu0
        %2537 = vrot.lane.b32.xlu0 %v2043, 112
        %v2538 = vpop.permute.xlu0 %2537
        %2539 = vrot.lane.b32.xlu0 %v2044, 112
        %v2540 = vpop.permute.xlu0 %2539
        %2541 = vrot.lane.b32.xlu0 %v2045, 112
        %v2542 = vpop.permute.xlu0 %2541
        %v2543 = vsel %vm983, %v2538, 0
        %v2545 = vsel %vm983, %v2540, 0
        %v2547 = vsel %vm983, %v2542, 0
        %2549 = vmatprep.subr.mxu0 0.0
        %2550 = vmatpush1.xpose.msra.mxu0 0.0
        %2551 = vmatprep.subr.mxu0 0.0
        %2552 = vmatpush1.xpose.msra.mxu0 0.0
        %2553 = vmatprep.subr.mxu0 0.0
        %2554 = vmatpush1.xpose.msra.mxu0 0.0
        %2555 = vmatprep.subr.mxu0 0.0
        %2556 = vmatpush1.xpose.msra.mxu0 0.0
        %2557 = vmatprep.subr.mxu0 0.0
        %2558 = vmatpush1.xpose.msra.mxu0 0.0
        %2559 = vmatprep.subr.mxu0 0.0
        %2560 = vmatpush1.xpose.msra.mxu0 0.0
        %2561 = vmatprep.subr.mxu0 0.0
        %2562 = vmatpush1.xpose.msra.mxu0 0.0
        %2563 = vmatprep.subr.mxu0 0.0
        %2564 = vmatpush1.xpose.msra.mxu0 0.0
        %2565 = vmatprep.subr.mxu0 0.0
        %2566 = vmatpush1.xpose.msra.mxu0 0.0
        %2567 = vmatprep.subr.mxu0 0.0
        %2568 = vmatpush1.xpose.msra.mxu0 0.0
        %2569 = vmatprep.subr.mxu0 0.0
        %2570 = vmatpush1.xpose.msra.mxu0 0.0
        %2571 = vmatprep.subr.mxu0 0.0
        %2572 = vmatpush1.xpose.msra.mxu0 0.0
        %2573 = vmatprep.subr.mxu0 0.0
        %2574 = vmatpush1.xpose.msra.mxu0 0.0
        %2575 = vmatprep.subr.mxu0 0.0
        %2576 = vmatpush1.xpose.msra.mxu0 0.0
        %2577 = vmatprep.subr.mxu0 0.0
        %2578 = vmatpush1.xpose.msra.mxu0 %v2547
        %2579 = vmatprep.subr.mxu0 0.0
        %2580 = vmatpush1.xpose.msra.mxu0 %v2545
        %2581 = vmatprep.subr.mxu0 0.0
        %2582 = vmatpush2.xpose.msra.mxu0 0.0
        %2583 = vmatprep.subr.mxu0 0.0
        %2584 = vmatpush2.xpose.msra.mxu0 0.0
        %2585 = vmatprep.subr.mxu0 0.0
        %2586 = vmatpush2.xpose.msra.mxu0 0.0
        %2587 = vmatprep.subr.mxu0 0.0
        %2588 = vmatpush2.xpose.msra.mxu0 0.0
        %2589 = vmatprep.subr.mxu0 0.0
        %2590 = vmatpush2.xpose.msra.mxu0 0.0
        %2591 = vmatprep.subr.mxu0 0.0
        %2592 = vmatpush2.xpose.msra.mxu0 0.0
        %2593 = vmatprep.subr.mxu0 0.0
        %2594 = vmatpush2.xpose.msra.mxu0 0.0
        %2595 = vmatprep.subr.mxu0 0.0
        %2596 = vmatpush2.xpose.msra.mxu0 0.0
        %2597 = vmatprep.subr.mxu0 0.0
        %2598 = vmatpush2.xpose.msra.mxu0 0.0
        %2599 = vmatprep.subr.mxu0 0.0
        %2600 = vmatpush2.xpose.msra.mxu0 0.0
        %2601 = vmatprep.subr.mxu0 0.0
        %2602 = vmatpush2.xpose.msra.mxu0 0.0
        %2603 = vmatprep.subr.mxu0 0.0
        %2604 = vmatpush2.xpose.msra.mxu0 0.0
        %2605 = vmatprep.subr.mxu0 0.0
        %2606 = vmatpush2.xpose.msra.mxu0 0.0
        %2607 = vmatprep.subr.mxu0 0.0
        %2608 = vmatpush2.xpose.msra.mxu0 0.0
        %2609 = vmatprep.subr.mxu0 0.0
        %2610 = vmatpush2.xpose.msra.mxu0 0.0
        %2611 = vmatprep.subr.mxu0 0.0
        %2612 = vmatpush2.xpose.msra.mxu0 0.0
        %2613 = vmatprep.mubr.f32.mxu0 0.0
        %2614 = vmatmul.mubr.f32.gmra.mxu0 %v2543
        %v2615 = vpop.f32.mrf.mxu0
        %v2616 = vadd.f32 0.0, %v2615
        %v2617 = vpop.f32.mrf.mxu0
        %2618 = vdwg.mxu0
        %v2619 = vsel %vm2125, %v2616, -inf
        %2620 = vmax.xlane.f32.xlu0 %v2619
        %v2621 = vpop.xlane.xlu0 %2620
        %v2622 = vsub.f32 %v2616, %v2621
        %v2623 = vmul.f32 %v2622, 1.442695
        %v2624 = vpow.pop %v2623
        %v2625 = vsel %vm2125, %v2624, 0.0
        %2626 = vadd.xlane.f32.xlu0 %v2625
        %v2627 = vpop.xlane.xlu0 %2626
        %v2628 = vrcp.pop %v2627
        %v2629 = vmul.f32 %v2624, %v2628
        %2630 = vrot.lane.b32.xlu0 %v2044, 80
        %v2631 = vpop.permute.xlu0 %2630
        %2632 = vrot.lane.b32.xlu0 %v2045, 80
        %v2633 = vpop.permute.xlu0 %2632
        %v2637 = vsel %vm2125, %v2629, 0
        %2639 = vmatprep.subr.mxu0 0.0
        %2640 = vmatpush1.msra.mxu0 0.0
        %2641 = vmatprep.subr.mxu0 0.0
        %2642 = vmatpush1.msra.mxu0 0.0
        %2643 = vmatprep.subr.mxu0 0.0
        %2644 = vmatpush1.msra.mxu0 0.0
        %2645 = vmatprep.subr.mxu0 0.0
        %2646 = vmatpush1.msra.mxu0 0.0
        %2647 = vmatprep.subr.mxu0 0.0
        %2648 = vmatpush1.msra.mxu0 0.0
        %2649 = vmatprep.subr.mxu0 0.0
        %2650 = vmatpush1.msra.mxu0 0.0
        %2651 = vmatprep.subr.mxu0 0.0
        %2652 = vmatpush1.msra.mxu0 0.0
        %2653 = vmatprep.subr.mxu0 0.0
        %2654 = vmatpush1.msra.mxu0 0.0
        %2655 = vmatprep.subr.mxu0 0.0
        %2656 = vmatpush1.msra.mxu0 0.0
        %2657 = vmatprep.subr.mxu0 0.0
        %2658 = vmatpush1.msra.mxu0 0.0
        %2659 = vmatprep.subr.mxu0 0.0
        %2660 = vmatpush1.msra.mxu0 0.0
        %2661 = vmatprep.subr.mxu0 0.0
        %2662 = vmatpush1.msra.mxu0 0.0
        %2663 = vmatprep.subr.mxu0 0.0
        %2664 = vmatpush1.msra.mxu0 0.0
        %2665 = vmatprep.subr.mxu0 0.0
        %2666 = vmatpush1.msra.mxu0 0.0
        %2667 = vmatprep.subr.mxu0 0.0
        %2668 = vmatpush1.msra.mxu0 %v2633
        %2669 = vmatprep.subr.mxu0 0.0
        %2670 = vmatpush1.msra.mxu0 %v2631
        %2671 = vmatprep.subr.mxu0 0.0
        %2672 = vmatpush2.msra.mxu0 0.0
        %2673 = vmatprep.subr.mxu0 0.0
        %2674 = vmatpush2.msra.mxu0 0.0
        %2675 = vmatprep.subr.mxu0 0.0
        %2676 = vmatpush2.msra.mxu0 0.0
        %2677 = vmatprep.subr.mxu0 0.0
        %2678 = vmatpush2.msra.mxu0 0.0
        %2679 = vmatprep.subr.mxu0 0.0
        %2680 = vmatpush2.msra.mxu0 0.0
        %2681 = vmatprep.subr.mxu0 0.0
        %2682 = vmatpush2.msra.mxu0 0.0
        %2683 = vmatprep.subr.mxu0 0.0
        %2684 = vmatpush2.msra.mxu0 0.0
        %2685 = vmatprep.subr.mxu0 0.0
        %2686 = vmatpush2.msra.mxu0 0.0
        %2687 = vmatprep.subr.mxu0 0.0
        %2688 = vmatpush2.msra.mxu0 0.0
        %2689 = vmatprep.subr.mxu0 0.0
        %2690 = vmatpush2.msra.mxu0 0.0
        %2691 = vmatprep.subr.mxu0 0.0
        %2692 = vmatpush2.msra.mxu0 0.0
        %2693 = vmatprep.subr.mxu0 0.0
        %2694 = vmatpush2.msra.mxu0 0.0
        %2695 = vmatprep.subr.mxu0 0.0
        %2696 = vmatpush2.msra.mxu0 0.0
        %2697 = vmatprep.subr.mxu0 0.0
        %2698 = vmatpush2.msra.mxu0 0.0
        %2699 = vmatprep.subr.mxu0 0.0
        %2700 = vmatpush2.msra.mxu0 0.0
        %2701 = vmatprep.subr.mxu0 0.0
        %2702 = vmatpush2.msra.mxu0 0.0
        %2703 = vmatprep.mubr.f32.mxu0 0.0
        %2704 = vmatmul.mubr.f32.gmra.mxu0 %v2637
        %v2705 = vpop.f32.mrf.mxu0
        %v2706 = vadd.f32 0.0, %v2705
        %v2707 = vpop.f32.mrf.mxu0
        %2708 = vdwg.mxu0
        %s2709 = scalar_lea.vmem [#allocation16], 16
        %v2710 = vld [vmem:[%s2709] sm:$0xff]
        %v2712 = vsel %vm983, %v2706, 0
        %2714 = vmatprep.subr.mxu0 0.0
        %2715 = vmatpush1.msra.mxu0 0.0
        %2716 = vmatprep.subr.mxu0 0.0
        %2717 = vmatpush1.msra.mxu0 0.0
        %2718 = vmatprep.subr.mxu0 0.0
        %2719 = vmatpush1.msra.mxu0 0.0
        %2720 = vmatprep.subr.mxu0 0.0
        %2721 = vmatpush1.msra.mxu0 0.0
        %2722 = vmatprep.subr.mxu0 0.0
        %2723 = vmatpush1.msra.mxu0 0.0
        %2724 = vmatprep.subr.mxu0 0.0
        %2725 = vmatpush1.msra.mxu0 0.0
        %2726 = vmatprep.subr.mxu0 0.0
        %2727 = vmatpush1.msra.mxu0 0.0
        %2728 = vmatprep.subr.mxu0 0.0
        %2729 = vmatpush1.msra.mxu0 0.0
        %2730 = vmatprep.subr.mxu0 0.0
        %2731 = vmatpush1.msra.mxu0 0.0
        %2732 = vmatprep.subr.mxu0 0.0
        %2733 = vmatpush1.msra.mxu0 0.0
        %2734 = vmatprep.subr.mxu0 0.0
        %2735 = vmatpush1.msra.mxu0 0.0
        %2736 = vmatprep.subr.mxu0 0.0
        %2737 = vmatpush1.msra.mxu0 0.0
        %2738 = vmatprep.subr.mxu0 0.0
        %2739 = vmatpush1.msra.mxu0 0.0
        %2740 = vmatprep.subr.mxu0 0.0
        %2741 = vmatpush1.msra.mxu0 0.0
        %2742 = vmatprep.subr.mxu0 0.0
        %2743 = vmatpush1.msra.mxu0 0.0
        %2744 = vmatprep.subr.mxu0 0.0
        %2745 = vmatpush1.msra.mxu0 %v2710
        %2746 = vmatprep.subr.mxu0 0.0
        %2747 = vmatpush2.msra.mxu0 0.0
        %2748 = vmatprep.subr.mxu0 0.0
        %2749 = vmatpush2.msra.mxu0 0.0
        %2750 = vmatprep.subr.mxu0 0.0
        %2751 = vmatpush2.msra.mxu0 0.0
        %2752 = vmatprep.subr.mxu0 0.0
        %2753 = vmatpush2.msra.mxu0 0.0
        %2754 = vmatprep.subr.mxu0 0.0
        %2755 = vmatpush2.msra.mxu0 0.0
        %2756 = vmatprep.subr.mxu0 0.0
        %2757 = vmatpush2.msra.mxu0 0.0
        %2758 = vmatprep.subr.mxu0 0.0
        %2759 = vmatpush2.msra.mxu0 0.0
        %2760 = vmatprep.subr.mxu0 0.0
        %2761 = vmatpush2.msra.mxu0 0.0
        %2762 = vmatprep.subr.mxu0 0.0
        %2763 = vmatpush2.msra.mxu0 0.0
        %2764 = vmatprep.subr.mxu0 0.0
        %2765 = vmatpush2.msra.mxu0 0.0
        %2766 = vmatprep.subr.mxu0 0.0
        %2767 = vmatpush2.msra.mxu0 0.0
        %2768 = vmatprep.subr.mxu0 0.0
        %2769 = vmatpush2.msra.mxu0 0.0
        %2770 = vmatprep.subr.mxu0 0.0
        %2771 = vmatpush2.msra.mxu0 0.0
        %2772 = vmatprep.subr.mxu0 0.0
        %2773 = vmatpush2.msra.mxu0 0.0
        %2774 = vmatprep.subr.mxu0 0.0
        %2775 = vmatpush2.msra.mxu0 0.0
        %2776 = vmatprep.subr.mxu0 0.0
        %2777 = vmatpush2.msra.mxu0 0.0
        %2778 = vmatprep.mubr.f32.mxu0 0.0
        %2779 = vmatmul.mubr.f32.gmra.mxu0 %v2712
        %v2780 = vpop.f32.mrf.mxu0
        %v2781 = vadd.f32 0.0, %v2780
        %v2782 = vpop.f32.mrf.mxu0
        %2783 = vdwg.mxu0
        %v2784 = vadd.f32 %v2534, %v2781
        %2785 = vrot.lane.b32.xlu0 %v2043, 104
        %v2786 = vpop.permute.xlu0 %2785
        %2787 = vrot.lane.b32.xlu0 %v2044, 104
        %v2788 = vpop.permute.xlu0 %2787
        %2789 = vrot.lane.b32.xlu0 %v2045, 104
        %v2790 = vpop.permute.xlu0 %2789
        %v2791 = vsel %vm983, %v2786, 0
        %v2793 = vsel %vm983, %v2788, 0
        %v2795 = vsel %vm983, %v2790, 0
        %2797 = vmatprep.subr.mxu0 0.0
        %2798 = vmatpush1.xpose.msra.mxu0 0.0
        %2799 = vmatprep.subr.mxu0 0.0
        %2800 = vmatpush1.xpose.msra.mxu0 0.0
        %2801 = vmatprep.subr.mxu0 0.0
        %2802 = vmatpush1.xpose.msra.mxu0 0.0
        %2803 = vmatprep.subr.mxu0 0.0
        %2804 = vmatpush1.xpose.msra.mxu0 0.0
        %2805 = vmatprep.subr.mxu0 0.0
        %2806 = vmatpush1.xpose.msra.mxu0 0.0
        %2807 = vmatprep.subr.mxu0 0.0
        %2808 = vmatpush1.xpose.msra.mxu0 0.0
        %2809 = vmatprep.subr.mxu0 0.0
        %2810 = vmatpush1.xpose.msra.mxu0 0.0
        %2811 = vmatprep.subr.mxu0 0.0
        %2812 = vmatpush1.xpose.msra.mxu0 0.0
        %2813 = vmatprep.subr.mxu0 0.0
        %2814 = vmatpush1.xpose.msra.mxu0 0.0
        %2815 = vmatprep.subr.mxu0 0.0
        %2816 = vmatpush1.xpose.msra.mxu0 0.0
        %2817 = vmatprep.subr.mxu0 0.0
        %2818 = vmatpush1.xpose.msra.mxu0 0.0
        %2819 = vmatprep.subr.mxu0 0.0
        %2820 = vmatpush1.xpose.msra.mxu0 0.0
        %2821 = vmatprep.subr.mxu0 0.0
        %2822 = vmatpush1.xpose.msra.mxu0 0.0
        %2823 = vmatprep.subr.mxu0 0.0
        %2824 = vmatpush1.xpose.msra.mxu0 0.0
        %2825 = vmatprep.subr.mxu0 0.0
        %2826 = vmatpush1.xpose.msra.mxu0 %v2795
        %2827 = vmatprep.subr.mxu0 0.0
        %2828 = vmatpush1.xpose.msra.mxu0 %v2793
        %2829 = vmatprep.subr.mxu0 0.0
        %2830 = vmatpush2.xpose.msra.mxu0 0.0
        %2831 = vmatprep.subr.mxu0 0.0
        %2832 = vmatpush2.xpose.msra.mxu0 0.0
        %2833 = vmatprep.subr.mxu0 0.0
        %2834 = vmatpush2.xpose.msra.mxu0 0.0
        %2835 = vmatprep.subr.mxu0 0.0
        %2836 = vmatpush2.xpose.msra.mxu0 0.0
        %2837 = vmatprep.subr.mxu0 0.0
        %2838 = vmatpush2.xpose.msra.mxu0 0.0
        %2839 = vmatprep.subr.mxu0 0.0
        %2840 = vmatpush2.xpose.msra.mxu0 0.0
        %2841 = vmatprep.subr.mxu0 0.0
        %2842 = vmatpush2.xpose.msra.mxu0 0.0
        %2843 = vmatprep.subr.mxu0 0.0
        %2844 = vmatpush2.xpose.msra.mxu0 0.0
        %2845 = vmatprep.subr.mxu0 0.0
        %2846 = vmatpush2.xpose.msra.mxu0 0.0
        %2847 = vmatprep.subr.mxu0 0.0
        %2848 = vmatpush2.xpose.msra.mxu0 0.0
        %2849 = vmatprep.subr.mxu0 0.0
        %2850 = vmatpush2.xpose.msra.mxu0 0.0
        %2851 = vmatprep.subr.mxu0 0.0
        %2852 = vmatpush2.xpose.msra.mxu0 0.0
        %2853 = vmatprep.subr.mxu0 0.0
        %2854 = vmatpush2.xpose.msra.mxu0 0.0
        %2855 = vmatprep.subr.mxu0 0.0
        %2856 = vmatpush2.xpose.msra.mxu0 0.0
        %2857 = vmatprep.subr.mxu0 0.0
        %2858 = vmatpush2.xpose.msra.mxu0 0.0
        %2859 = vmatprep.subr.mxu0 0.0
        %2860 = vmatpush2.xpose.msra.mxu0 0.0
        %2861 = vmatprep.mubr.f32.mxu0 0.0
        %2862 = vmatmul.mubr.f32.gmra.mxu0 %v2791
        %v2863 = vpop.f32.mrf.mxu0
        %v2864 = vadd.f32 0.0, %v2863
        %v2865 = vpop.f32.mrf.mxu0
        %2866 = vdwg.mxu0
        %v2867 = vsel %vm2125, %v2864, -inf
        %2868 = vmax.xlane.f32.xlu0 %v2867
        %v2869 = vpop.xlane.xlu0 %2868
        %v2870 = vsub.f32 %v2864, %v2869
        %v2871 = vmul.f32 %v2870, 1.442695
        %v2872 = vpow.pop %v2871
        %v2873 = vsel %vm2125, %v2872, 0.0
        %2874 = vadd.xlane.f32.xlu0 %v2873
        %v2875 = vpop.xlane.xlu0 %2874
        %v2876 = vrcp.pop %v2875
        %v2877 = vmul.f32 %v2872, %v2876
        %2878 = vrot.lane.b32.xlu0 %v2044, 72
        %v2879 = vpop.permute.xlu0 %2878
        %2880 = vrot.lane.b32.xlu0 %v2045, 72
        %v2881 = vpop.permute.xlu0 %2880
        %v2885 = vsel %vm2125, %v2877, 0
        %2887 = vmatprep.subr.mxu0 0.0
        %2888 = vmatpush1.msra.mxu0 0.0
        %2889 = vmatprep.subr.mxu0 0.0
        %2890 = vmatpush1.msra.mxu0 0.0
        %2891 = vmatprep.subr.mxu0 0.0
        %2892 = vmatpush1.msra.mxu0 0.0
        %2893 = vmatprep.subr.mxu0 0.0
        %2894 = vmatpush1.msra.mxu0 0.0
        %2895 = vmatprep.subr.mxu0 0.0
        %2896 = vmatpush1.msra.mxu0 0.0
        %2897 = vmatprep.subr.mxu0 0.0
        %2898 = vmatpush1.msra.mxu0 0.0
        %2899 = vmatprep.subr.mxu0 0.0
        %2900 = vmatpush1.msra.mxu0 0.0
        %2901 = vmatprep.subr.mxu0 0.0
        %2902 = vmatpush1.msra.mxu0 0.0
        %2903 = vmatprep.subr.mxu0 0.0
        %2904 = vmatpush1.msra.mxu0 0.0
        %2905 = vmatprep.subr.mxu0 0.0
        %2906 = vmatpush1.msra.mxu0 0.0
        %2907 = vmatprep.subr.mxu0 0.0
        %2908 = vmatpush1.msra.mxu0 0.0
        %2909 = vmatprep.subr.mxu0 0.0
        %2910 = vmatpush1.msra.mxu0 0.0
        %2911 = vmatprep.subr.mxu0 0.0
        %2912 = vmatpush1.msra.mxu0 0.0
        %2913 = vmatprep.subr.mxu0 0.0
        %2914 = vmatpush1.msra.mxu0 0.0
        %2915 = vmatprep.subr.mxu0 0.0
        %2916 = vmatpush1.msra.mxu0 %v2881
        %2917 = vmatprep.subr.mxu0 0.0
        %2918 = vmatpush1.msra.mxu0 %v2879
        %2919 = vmatprep.subr.mxu0 0.0
        %2920 = vmatpush2.msra.mxu0 0.0
        %2921 = vmatprep.subr.mxu0 0.0
        %2922 = vmatpush2.msra.mxu0 0.0
        %2923 = vmatprep.subr.mxu0 0.0
        %2924 = vmatpush2.msra.mxu0 0.0
        %2925 = vmatprep.subr.mxu0 0.0
        %2926 = vmatpush2.msra.mxu0 0.0
        %2927 = vmatprep.subr.mxu0 0.0
        %2928 = vmatpush2.msra.mxu0 0.0
        %2929 = vmatprep.subr.mxu0 0.0
        %2930 = vmatpush2.msra.mxu0 0.0
        %2931 = vmatprep.subr.mxu0 0.0
        %2932 = vmatpush2.msra.mxu0 0.0
        %2933 = vmatprep.subr.mxu0 0.0
        %2934 = vmatpush2.msra.mxu0 0.0
        %2935 = vmatprep.subr.mxu0 0.0
        %2936 = vmatpush2.msra.mxu0 0.0
        %2937 = vmatprep.subr.mxu0 0.0
        %2938 = vmatpush2.msra.mxu0 0.0
        %2939 = vmatprep.subr.mxu0 0.0
        %2940 = vmatpush2.msra.mxu0 0.0
        %2941 = vmatprep.subr.mxu0 0.0
        %2942 = vmatpush2.msra.mxu0 0.0
        %2943 = vmatprep.subr.mxu0 0.0
        %2944 = vmatpush2.msra.mxu0 0.0
        %2945 = vmatprep.subr.mxu0 0.0
        %2946 = vmatpush2.msra.mxu0 0.0
        %2947 = vmatprep.subr.mxu0 0.0
        %2948 = vmatpush2.msra.mxu0 0.0
        %2949 = vmatprep.subr.mxu0 0.0
        %2950 = vmatpush2.msra.mxu0 0.0
        %2951 = vmatprep.mubr.f32.mxu0 0.0
        %2952 = vmatmul.mubr.f32.gmra.mxu0 %v2885
        %v2953 = vpop.f32.mrf.mxu0
        %v2954 = vadd.f32 0.0, %v2953
        %v2955 = vpop.f32.mrf.mxu0
        %2956 = vdwg.mxu0
        %s2957 = scalar_lea.vmem [#allocation16], 24
        %v2958 = vld [vmem:[%s2957] sm:$0xff]
        %v2960 = vsel %vm983, %v2954, 0
        %2962 = vmatprep.subr.mxu0 0.0
        %2963 = vmatpush1.msra.mxu0 0.0
        %2964 = vmatprep.subr.mxu0 0.0
        %2965 = vmatpush1.msra.mxu0 0.0
        %2966 = vmatprep.subr.mxu0 0.0
        %2967 = vmatpush1.msra.mxu0 0.0
        %2968 = vmatprep.subr.mxu0 0.0
        %2969 = vmatpush1.msra.mxu0 0.0
        %2970 = vmatprep.subr.mxu0 0.0
        %2971 = vmatpush1.msra.mxu0 0.0
        %2972 = vmatprep.subr.mxu0 0.0
        %2973 = vmatpush1.msra.mxu0 0.0
        %2974 = vmatprep.subr.mxu0 0.0
        %2975 = vmatpush1.msra.mxu0 0.0
        %2976 = vmatprep.subr.mxu0 0.0
        %2977 = vmatpush1.msra.mxu0 0.0
        %2978 = vmatprep.subr.mxu0 0.0
        %2979 = vmatpush1.msra.mxu0 0.0
        %2980 = vmatprep.subr.mxu0 0.0
        %2981 = vmatpush1.msra.mxu0 0.0
        %2982 = vmatprep.subr.mxu0 0.0
        %2983 = vmatpush1.msra.mxu0 0.0
        %2984 = vmatprep.subr.mxu0 0.0
        %2985 = vmatpush1.msra.mxu0 0.0
        %2986 = vmatprep.subr.mxu0 0.0
        %2987 = vmatpush1.msra.mxu0 0.0
        %2988 = vmatprep.subr.mxu0 0.0
        %2989 = vmatpush1.msra.mxu0 0.0
        %2990 = vmatprep.subr.mxu0 0.0
        %2991 = vmatpush1.msra.mxu0 0.0
        %2992 = vmatprep.subr.mxu0 0.0
        %2993 = vmatpush1.msra.mxu0 %v2958
        %2994 = vmatprep.subr.mxu0 0.0
        %2995 = vmatpush2.msra.mxu0 0.0
        %2996 = vmatprep.subr.mxu0 0.0
        %2997 = vmatpush2.msra.mxu0 0.0
        %2998 = vmatprep.subr.mxu0 0.0
        %2999 = vmatpush2.msra.mxu0 0.0
        %3000 = vmatprep.subr.mxu0 0.0
        %3001 = vmatpush2.msra.mxu0 0.0
        %3002 = vmatprep.subr.mxu0 0.0
        %3003 = vmatpush2.msra.mxu0 0.0
        %3004 = vmatprep.subr.mxu0 0.0
        %3005 = vmatpush2.msra.mxu0 0.0
        %3006 = vmatprep.subr.mxu0 0.0
        %3007 = vmatpush2.msra.mxu0 0.0
        %3008 = vmatprep.subr.mxu0 0.0
        %3009 = vmatpush2.msra.mxu0 0.0
        %3010 = vmatprep.subr.mxu0 0.0
        %3011 = vmatpush2.msra.mxu0 0.0
        %3012 = vmatprep.subr.mxu0 0.0
        %3013 = vmatpush2.msra.mxu0 0.0
        %3014 = vmatprep.subr.mxu0 0.0
        %3015 = vmatpush2.msra.mxu0 0.0
        %3016 = vmatprep.subr.mxu0 0.0
        %3017 = vmatpush2.msra.mxu0 0.0
        %3018 = vmatprep.subr.mxu0 0.0
        %3019 = vmatpush2.msra.mxu0 0.0
        %3020 = vmatprep.subr.mxu0 0.0
        %3021 = vmatpush2.msra.mxu0 0.0
        %3022 = vmatprep.subr.mxu0 0.0
        %3023 = vmatpush2.msra.mxu0 0.0
        %3024 = vmatprep.subr.mxu0 0.0
        %3025 = vmatpush2.msra.mxu0 0.0
        %3026 = vmatprep.mubr.f32.mxu0 0.0
        %3027 = vmatmul.mubr.f32.gmra.mxu0 %v2960
        %v3028 = vpop.f32.mrf.mxu0
        %v3029 = vadd.f32 0.0, %v3028
        %v3030 = vpop.f32.mrf.mxu0
        %3031 = vdwg.mxu0
        %v3032 = vadd.f32 %v2784, %v3029
        %v3033 = vld [vmem:[%s11] sm:$0x1]
        %v3035 = vlaneseq
        %v3036 = vshrl.u32 %v3035, 7
        %v3037 = vsub.s32 0, %v3036
        %v3038 = vrot.slane %v3033, %v3037
        %v3040 = vadd.f32 %v3032, %v3038
        %v3041 = vadd.f32 %v1949, %v3040
        %v3042 = vmul.f32 %v3041, %v3041
        %v3043 = vsel %vm799, %v3042, 0.0
        %3044 = vadd.xlane.f32.xlu0 %v3043
        %v3045 = vpop.xlane.xlu0 %3044
        %v3046 = vmul.f32 %v3045, %v888
        %v3047 = vadd.f32 %v3046, 1.1920929e-07
        %v3048 = vrsqrt.pop %v3047
        %v3049 = vmul.f32 %v3041, %v3048
        %v3050 = vld [vmem:[#allocation17] sm:$0xff]
        %v3051 = vld [vmem:[#allocation17 + $0x8] sm:$0xff]
        %v3052 = vld [vmem:[#allocation17 + $0x10] sm:$0xff]
        %v3053 = vld [vmem:[#allocation17 + $0x18] sm:$0xff]
        %v3054 = vld [vmem:[%s13] sm:$0x1]
        %v3056 = vlaneseq
        %v3057 = vshrl.u32 %v3056, 7
        %v3058 = vsub.s32 0, %v3057
        %v3059 = vrot.slane %v3054, %v3058
        %v3062 = vsel %vm799, %v3049, 0
        %3064 = vmatprep.subr.mxu0 0.0
        %3065 = vmatpush1.msra.mxu0 0.0
        %3066 = vmatprep.subr.mxu0 0.0
        %3067 = vmatpush1.msra.mxu0 0.0
        %3068 = vmatprep.subr.mxu0 0.0
        %3069 = vmatpush1.msra.mxu0 0.0
        %3070 = vmatprep.subr.mxu0 0.0
        %3071 = vmatpush1.msra.mxu0 0.0
        %3072 = vmatprep.subr.mxu0 0.0
        %3073 = vmatpush1.msra.mxu0 0.0
        %3074 = vmatprep.subr.mxu0 0.0
        %3075 = vmatpush1.msra.mxu0 0.0
        %3076 = vmatprep.subr.mxu0 0.0
        %3077 = vmatpush1.msra.mxu0 0.0
        %3078 = vmatprep.subr.mxu0 0.0
        %3079 = vmatpush1.msra.mxu0 0.0
        %3080 = vmatprep.subr.mxu0 0.0
        %3081 = vmatpush1.msra.mxu0 0.0
        %3082 = vmatprep.subr.mxu0 0.0
        %3083 = vmatpush1.msra.mxu0 0.0
        %3084 = vmatprep.subr.mxu0 0.0
        %3085 = vmatpush1.msra.mxu0 0.0
        %3086 = vmatprep.subr.mxu0 0.0
        %3087 = vmatpush1.msra.mxu0 0.0
        %3088 = vmatprep.subr.mxu0 0.0
        %3089 = vmatpush1.msra.mxu0 %v3053
        %3090 = vmatprep.subr.mxu0 0.0
        %3091 = vmatpush1.msra.mxu0 %v3052
        %3092 = vmatprep.subr.mxu0 0.0
        %3093 = vmatpush1.msra.mxu0 %v3051
        %3094 = vmatprep.subr.mxu0 0.0
        %3095 = vmatpush1.msra.mxu0 %v3050
        %3096 = vmatprep.subr.mxu0 0.0
        %3097 = vmatpush2.msra.mxu0 0.0
        %3098 = vmatprep.subr.mxu0 0.0
        %3099 = vmatpush2.msra.mxu0 0.0
        %3100 = vmatprep.subr.mxu0 0.0
        %3101 = vmatpush2.msra.mxu0 0.0
        %3102 = vmatprep.subr.mxu0 0.0
        %3103 = vmatpush2.msra.mxu0 0.0
        %3104 = vmatprep.subr.mxu0 0.0
        %3105 = vmatpush2.msra.mxu0 0.0
        %3106 = vmatprep.subr.mxu0 0.0
        %3107 = vmatpush2.msra.mxu0 0.0
        %3108 = vmatprep.subr.mxu0 0.0
        %3109 = vmatpush2.msra.mxu0 0.0
        %3110 = vmatprep.subr.mxu0 0.0
        %3111 = vmatpush2.msra.mxu0 0.0
        %3112 = vmatprep.subr.mxu0 0.0
        %3113 = vmatpush2.msra.mxu0 0.0
        %3114 = vmatprep.subr.mxu0 0.0
        %3115 = vmatpush2.msra.mxu0 0.0
        %3116 = vmatprep.subr.mxu0 0.0
        %3117 = vmatpush2.msra.mxu0 0.0
        %3118 = vmatprep.subr.mxu0 0.0
        %3119 = vmatpush2.msra.mxu0 0.0
        %3120 = vmatprep.subr.mxu0 0.0
        %3121 = vmatpush2.msra.mxu0 0.0
        %3122 = vmatprep.subr.mxu0 0.0
        %3123 = vmatpush2.msra.mxu0 0.0
        %3124 = vmatprep.subr.mxu0 0.0
        %3125 = vmatpush2.msra.mxu0 0.0
        %3126 = vmatprep.subr.mxu0 0.0
        %3127 = vmatpush2.msra.mxu0 0.0
        %3128 = vmatprep.mubr.f32.mxu0 0.0
        %3129 = vmatmul.mubr.f32.gmra.mxu0 %v3062
        %v3130 = vpop.f32.mrf.mxu0
        %v3131 = vadd.f32 %v3059, %v3130
        %v3132 = vpop.f32.mrf.mxu0
        %3133 = vdwg.mxu0
        %v3134 = vsub.f32 0.0, %v3131
        %v3135 = vmul.f32 %v3134, 1.442695
        %v3136 = vpow.pop %v3135
        %v3137 = vadd.f32 %v3136, 1.0
        %v3138 = vrcp.pop %v3137
        %v3139 = vmul.f32 1.0, %v3138
        %v3140 = vmul.f32 %v3131, %v3139
        %v3141 = vld [vmem:[#allocation19] sm:$0xff]
        %v3142 = vld [vmem:[#allocation19 + $0x8] sm:$0xff]
        %v3143 = vld [vmem:[#allocation19 + $0x10] sm:$0xff]
        %v3144 = vld [vmem:[#allocation19 + $0x18] sm:$0xff]
        %v3145 = vld [vmem:[%s15] sm:$0x1]
        %v3147 = vlaneseq
        %v3148 = vshrl.u32 %v3147, 7
        %v3149 = vsub.s32 0, %v3148
        %v3150 = vrot.slane %v3145, %v3149
        %3152 = vmatprep.subr.mxu0 0.0
        %3153 = vmatpush1.xpose.msra.mxu0 0.0
        %3154 = vmatprep.subr.mxu0 0.0
        %3155 = vmatpush1.xpose.msra.mxu0 0.0
        %3156 = vmatprep.subr.mxu0 0.0
        %3157 = vmatpush1.xpose.msra.mxu0 0.0
        %3158 = vmatprep.subr.mxu0 0.0
        %3159 = vmatpush1.xpose.msra.mxu0 0.0
        %3160 = vmatprep.subr.mxu0 0.0
        %3161 = vmatpush1.xpose.msra.mxu0 0.0
        %3162 = vmatprep.subr.mxu0 0.0
        %3163 = vmatpush1.xpose.msra.mxu0 0.0
        %3164 = vmatprep.subr.mxu0 0.0
        %3165 = vmatpush1.xpose.msra.mxu0 0.0
        %3166 = vmatprep.subr.mxu0 0.0
        %3167 = vmatpush1.xpose.msra.mxu0 0.0
        %3168 = vmatprep.subr.mxu0 0.0
        %3169 = vmatpush1.xpose.msra.mxu0 0.0
        %3170 = vmatprep.subr.mxu0 0.0
        %3171 = vmatpush1.xpose.msra.mxu0 0.0
        %3172 = vmatprep.subr.mxu0 0.0
        %3173 = vmatpush1.xpose.msra.mxu0 0.0
        %3174 = vmatprep.subr.mxu0 0.0
        %3175 = vmatpush1.xpose.msra.mxu0 0.0
        %3176 = vmatprep.subr.mxu0 0.0
        %3177 = vmatpush1.xpose.msra.mxu0 %v3144
        %3178 = vmatprep.subr.mxu0 0.0
        %3179 = vmatpush1.xpose.msra.mxu0 %v3143
        %3180 = vmatprep.subr.mxu0 0.0
        %3181 = vmatpush1.xpose.msra.mxu0 %v3142
        %3182 = vmatprep.subr.mxu0 0.0
        %3183 = vmatpush1.xpose.msra.mxu0 %v3141
        %3184 = vmatprep.subr.mxu0 0.0
        %3185 = vmatpush2.xpose.msra.mxu0 0.0
        %3186 = vmatprep.subr.mxu0 0.0
        %3187 = vmatpush2.xpose.msra.mxu0 0.0
        %3188 = vmatprep.subr.mxu0 0.0
        %3189 = vmatpush2.xpose.msra.mxu0 0.0
        %3190 = vmatprep.subr.mxu0 0.0
        %3191 = vmatpush2.xpose.msra.mxu0 0.0
        %3192 = vmatprep.subr.mxu0 0.0
        %3193 = vmatpush2.xpose.msra.mxu0 0.0
        %3194 = vmatprep.subr.mxu0 0.0
        %3195 = vmatpush2.xpose.msra.mxu0 0.0
        %3196 = vmatprep.subr.mxu0 0.0
        %3197 = vmatpush2.xpose.msra.mxu0 0.0
        %3198 = vmatprep.subr.mxu0 0.0
        %3199 = vmatpush2.xpose.msra.mxu0 0.0
        %3200 = vmatprep.subr.mxu0 0.0
        %3201 = vmatpush2.xpose.msra.mxu0 0.0
        %3202 = vmatprep.subr.mxu0 0.0
        %3203 = vmatpush2.xpose.msra.mxu0 0.0
        %3204 = vmatprep.subr.mxu0 0.0
        %3205 = vmatpush2.xpose.msra.mxu0 0.0
        %3206 = vmatprep.subr.mxu0 0.0
        %3207 = vmatpush2.xpose.msra.mxu0 0.0
        %3208 = vmatprep.subr.mxu0 0.0
        %3209 = vmatpush2.xpose.msra.mxu0 0.0
        %3210 = vmatprep.subr.mxu0 0.0
        %3211 = vmatpush2.xpose.msra.mxu0 0.0
        %3212 = vmatprep.subr.mxu0 0.0
        %3213 = vmatpush2.xpose.msra.mxu0 0.0
        %3214 = vmatprep.subr.mxu0 0.0
        %3215 = vmatpush2.xpose.msra.mxu0 0.0
        %3216 = vmatprep.mubr.f32.mxu0 0.0
        %3217 = vmatmul.mubr.f32.gmra.mxu0 %v3140
        %v3218 = vpop.f32.mrf.mxu0
        %v3219 = vadd.f32 %v3150, %v3218
        %v3220 = vpop.f32.mrf.mxu0
        %3221 = vdwg.mxu0
        %v3222 = vadd.f32 %v3041, %v3219
        %3223 = vst.msk [vmem:[%s777] sm:$0xff] %vm799, %v3222
        %v3224 = vmul.f32 %v3222, %v3222
        %v3225 = vsel %vm799, %v3224, 0.0
        %3226 = vadd.xlane.f32.xlu0 %v3225
        %v3227 = vpop.xlane.xlu0 %3226
        %v3228 = vmul.f32 %v3227, %v888
        %v3229 = vadd.f32 %v3228, 1.1920929e-07
        %v3230 = vrsqrt.pop %v3229
        %v3231 = vmul.f32 %v3222, %v3230
        %v3232 = vld [vmem:[#allocation10] sm:$0xff]
        %v3233 = vld [vmem:[#allocation10 + $0x8] sm:$0xff]
        %v3234 = vld [vmem:[#allocation10 + $0x10] sm:$0xff]
        %v3235 = vld [vmem:[#allocation10 + $0x18] sm:$0xff]
        %v3236 = vld [vmem:[%s3] sm:$0x1]
        %v3238 = vlaneseq
        %v3239 = vshrl.u32 %v3238, 7
        %v3240 = vsub.s32 0, %v3239
        %v3241 = vrot.slane %v3236, %v3240
        %v3244 = vsel %vm799, %v3231, 0
        %3246 = vmatprep.subr.mxu0 0.0
        %3247 = vmatpush1.msra.mxu0 0.0
        %3248 = vmatprep.subr.mxu0 0.0
        %3249 = vmatpush1.msra.mxu0 0.0
        %3250 = vmatprep.subr.mxu0 0.0
        %3251 = vmatpush1.msra.mxu0 0.0
        %3252 = vmatprep.subr.mxu0 0.0
        %3253 = vmatpush1.msra.mxu0 0.0
        %3254 = vmatprep.subr.mxu0 0.0
        %3255 = vmatpush1.msra.mxu0 0.0
        %3256 = vmatprep.subr.mxu0 0.0
        %3257 = vmatpush1.msra.mxu0 0.0
        %3258 = vmatprep.subr.mxu0 0.0
        %3259 = vmatpush1.msra.mxu0 0.0
        %3260 = vmatprep.subr.mxu0 0.0
        %3261 = vmatpush1.msra.mxu0 0.0
        %3262 = vmatprep.subr.mxu0 0.0
        %3263 = vmatpush1.msra.mxu0 0.0
        %3264 = vmatprep.subr.mxu0 0.0
        %3265 = vmatpush1.msra.mxu0 0.0
        %3266 = vmatprep.subr.mxu0 0.0
        %3267 = vmatpush1.msra.mxu0 0.0
        %3268 = vmatprep.subr.mxu0 0.0
        %3269 = vmatpush1.msra.mxu0 0.0
        %3270 = vmatprep.subr.mxu0 0.0
        %3271 = vmatpush1.msra.mxu0 %v3235
        %3272 = vmatprep.subr.mxu0 0.0
        %3273 = vmatpush1.msra.mxu0 %v3234
        %3274 = vmatprep.subr.mxu0 0.0
        %3275 = vmatpush1.msra.mxu0 %v3233
        %3276 = vmatprep.subr.mxu0 0.0
        %3277 = vmatpush1.msra.mxu0 %v3232
        %3278 = vmatprep.subr.mxu0 0.0
        %3279 = vmatpush2.msra.mxu0 0.0
        %3280 = vmatprep.subr.mxu0 0.0
        %3281 = vmatpush2.msra.mxu0 0.0
        %3282 = vmatprep.subr.mxu0 0.0
        %3283 = vmatpush2.msra.mxu0 0.0
        %3284 = vmatprep.subr.mxu0 0.0
        %3285 = vmatpush2.msra.mxu0 0.0
        %3286 = vmatprep.subr.mxu0 0.0
        %3287 = vmatpush2.msra.mxu0 0.0
        %3288 = vmatprep.subr.mxu0 0.0
        %3289 = vmatpush2.msra.mxu0 0.0
        %3290 = vmatprep.subr.mxu0 0.0
        %3291 = vmatpush2.msra.mxu0 0.0
        %3292 = vmatprep.subr.mxu0 0.0
        %3293 = vmatpush2.msra.mxu0 0.0
        %3294 = vmatprep.subr.mxu0 0.0
        %3295 = vmatpush2.msra.mxu0 0.0
        %3296 = vmatprep.subr.mxu0 0.0
        %3297 = vmatpush2.msra.mxu0 0.0
        %3298 = vmatprep.subr.mxu0 0.0
        %3299 = vmatpush2.msra.mxu0 0.0
        %3300 = vmatprep.subr.mxu0 0.0
        %3301 = vmatpush2.msra.mxu0 0.0
        %3302 = vmatprep.subr.mxu0 0.0
        %3303 = vmatpush2.msra.mxu0 0.0
        %3304 = vmatprep.subr.mxu0 0.0
        %3305 = vmatpush2.msra.mxu0 0.0
        %3306 = vmatprep.subr.mxu0 0.0
        %3307 = vmatpush2.msra.mxu0 0.0
        %3308 = vmatprep.subr.mxu0 0.0
        %3309 = vmatpush2.msra.mxu0 0.0
        %3310 = vmatprep.mubr.f32.mxu0 0.0
        %3311 = vmatmul.mubr.f32.gmra.mxu0 %v3244
        %v3312 = vpop.f32.mrf.mxu0
        %v3313 = vadd.f32 %v3241, %v3312
        %v3314 = vpop.f32.mrf.mxu0
        %3315 = vdwg.mxu0
        %3316 = vst.msk [vmem:[#allocation2] sm:$0xff] %vm977, %v3313
        %v3317 = vld [vmem:[#allocation2] sm:$0xff]
        %3319 = vrot.lane.b32.xlu0 %v3317, 96
        %v3320 = vpop.permute.xlu0 %3319
        %v3321 = vsel %vm983, %v3317, 0
        %v3323 = vsel %vm983, %v3320, 0
        %3325 = vmatprep.subr.mxu0 0.0
        %3326 = vmatpush1.xpose.msra.mxu0 0.0
        %3327 = vmatprep.subr.mxu0 0.0
        %3328 = vmatpush1.xpose.msra.mxu0 0.0
        %3329 = vmatprep.subr.mxu0 0.0
        %3330 = vmatpush1.xpose.msra.mxu0 0.0
        %3331 = vmatprep.subr.mxu0 0.0
        %3332 = vmatpush1.xpose.msra.mxu0 0.0
        %3333 = vmatprep.subr.mxu0 0.0
        %3334 = vmatpush1.xpose.msra.mxu0 0.0
        %3335 = vmatprep.subr.mxu0 0.0
        %3336 = vmatpush1.xpose.msra.mxu0 0.0
        %3337 = vmatprep.subr.mxu0 0.0
        %3338 = vmatpush1.xpose.msra.mxu0 0.0
        %3339 = vmatprep.subr.mxu0 0.0
        %3340 = vmatpush1.xpose.msra.mxu0 0.0
        %3341 = vmatprep.subr.mxu0 0.0
        %3342 = vmatpush1.xpose.msra.mxu0 0.0
        %3343 = vmatprep.subr.mxu0 0.0
        %3344 = vmatpush1.xpose.msra.mxu0 0.0
        %3345 = vmatprep.subr.mxu0 0.0
        %3346 = vmatpush1.xpose.msra.mxu0 0.0
        %3347 = vmatprep.subr.mxu0 0.0
        %3348 = vmatpush1.xpose.msra.mxu0 0.0
        %3349 = vmatprep.subr.mxu0 0.0
        %3350 = vmatpush1.xpose.msra.mxu0 0.0
        %3351 = vmatprep.subr.mxu0 0.0
        %3352 = vmatpush1.xpose.msra.mxu0 0.0
        %3353 = vmatprep.subr.mxu0 0.0
        %3354 = vmatpush1.xpose.msra.mxu0 0.0
        %3355 = vmatprep.subr.mxu0 0.0
        %3356 = vmatpush1.xpose.msra.mxu0 %v3323
        %3357 = vmatprep.subr.mxu0 0.0
        %3358 = vmatpush2.xpose.msra.mxu0 0.0
        %3359 = vmatprep.subr.mxu0 0.0
        %3360 = vmatpush2.xpose.msra.mxu0 0.0
        %3361 = vmatprep.subr.mxu0 0.0
        %3362 = vmatpush2.xpose.msra.mxu0 0.0
        %3363 = vmatprep.subr.mxu0 0.0
        %3364 = vmatpush2.xpose.msra.mxu0 0.0
        %3365 = vmatprep.subr.mxu0 0.0
        %3366 = vmatpush2.xpose.msra.mxu0 0.0
        %3367 = vmatprep.subr.mxu0 0.0
        %3368 = vmatpush2.xpose.msra.mxu0 0.0
        %3369 = vmatprep.subr.mxu0 0.0
        %3370 = vmatpush2.xpose.msra.mxu0 0.0
        %3371 = vmatprep.subr.mxu0 0.0
        %3372 = vmatpush2.xpose.msra.mxu0 0.0
        %3373 = vmatprep.subr.mxu0 0.0
        %3374 = vmatpush2.xpose.msra.mxu0 0.0
        %3375 = vmatprep.subr.mxu0 0.0
        %3376 = vmatpush2.xpose.msra.mxu0 0.0
        %3377 = vmatprep.subr.mxu0 0.0
        %3378 = vmatpush2.xpose.msra.mxu0 0.0
        %3379 = vmatprep.subr.mxu0 0.0
        %3380 = vmatpush2.xpose.msra.mxu0 0.0
        %3381 = vmatprep.subr.mxu0 0.0
        %3382 = vmatpush2.xpose.msra.mxu0 0.0
        %3383 = vmatprep.subr.mxu0 0.0
        %3384 = vmatpush2.xpose.msra.mxu0 0.0
        %3385 = vmatprep.subr.mxu0 0.0
        %3386 = vmatpush2.xpose.msra.mxu0 0.0
        %3387 = vmatprep.subr.mxu0 0.0
        %3388 = vmatpush2.xpose.msra.mxu0 0.0
        %3389 = vmatprep.mubr.f32.mxu0 0.0
        %3390 = vmatmul.mubr.f32.gmra.mxu0 %v3321
        %v3391 = vpop.f32.mrf.mxu0
        %v3392 = vadd.f32 0.0, %v3391
        %v3393 = vpop.f32.mrf.mxu0
        %3394 = vdwg.mxu0
        %v3395 = vsel %vm983, %v3392, -inf
        %3396 = vmax.xlane.f32.xlu0 %v3395
        %v3397 = vpop.xlane.xlu0 %3396
        %v3398 = vsub.f32 %v3392, %v3397
        %v3399 = vmul.f32 %v3398, 1.442695
        %v3400 = vpow.pop %v3399
        %v3401 = vsel %vm983, %v3400, 0.0
        %3402 = vadd.xlane.f32.xlu0 %v3401
        %v3403 = vpop.xlane.xlu0 %3402
        %v3404 = vrcp.pop %v3403
        %v3405 = vmul.f32 %v3400, %v3404
        %3406 = vrot.lane.b32.xlu0 %v3317, 64
        %v3407 = vpop.permute.xlu0 %3406
        %v3410 = vsel %vm983, %v3405, 0
        %3412 = vmatprep.subr.mxu0 0.0
        %3413 = vmatpush1.msra.mxu0 0.0
        %3414 = vmatprep.subr.mxu0 0.0
        %3415 = vmatpush1.msra.mxu0 0.0
        %3416 = vmatprep.subr.mxu0 0.0
        %3417 = vmatpush1.msra.mxu0 0.0
        %3418 = vmatprep.subr.mxu0 0.0
        %3419 = vmatpush1.msra.mxu0 0.0
        %3420 = vmatprep.subr.mxu0 0.0
        %3421 = vmatpush1.msra.mxu0 0.0
        %3422 = vmatprep.subr.mxu0 0.0
        %3423 = vmatpush1.msra.mxu0 0.0
        %3424 = vmatprep.subr.mxu0 0.0
        %3425 = vmatpush1.msra.mxu0 0.0
        %3426 = vmatprep.subr.mxu0 0.0
        %3427 = vmatpush1.msra.mxu0 0.0
        %3428 = vmatprep.subr.mxu0 0.0
        %3429 = vmatpush1.msra.mxu0 0.0
        %3430 = vmatprep.subr.mxu0 0.0
        %3431 = vmatpush1.msra.mxu0 0.0
        %3432 = vmatprep.subr.mxu0 0.0
        %3433 = vmatpush1.msra.mxu0 0.0
        %3434 = vmatprep.subr.mxu0 0.0
        %3435 = vmatpush1.msra.mxu0 0.0
        %3436 = vmatprep.subr.mxu0 0.0
        %3437 = vmatpush1.msra.mxu0 0.0
        %3438 = vmatprep.subr.mxu0 0.0
        %3439 = vmatpush1.msra.mxu0 0.0
        %3440 = vmatprep.subr.mxu0 0.0
        %3441 = vmatpush1.msra.mxu0 0.0
        %3442 = vmatprep.subr.mxu0 0.0
        %3443 = vmatpush1.msra.mxu0 %v3407
        %3444 = vmatprep.subr.mxu0 0.0
        %3445 = vmatpush2.msra.mxu0 0.0
        %3446 = vmatprep.subr.mxu0 0.0
        %3447 = vmatpush2.msra.mxu0 0.0
        %3448 = vmatprep.subr.mxu0 0.0
        %3449 = vmatpush2.msra.mxu0 0.0
        %3450 = vmatprep.subr.mxu0 0.0
        %3451 = vmatpush2.msra.mxu0 0.0
        %3452 = vmatprep.subr.mxu0 0.0
        %3453 = vmatpush2.msra.mxu0 0.0
        %3454 = vmatprep.subr.mxu0 0.0
        %3455 = vmatpush2.msra.mxu0 0.0
        %3456 = vmatprep.subr.mxu0 0.0
        %3457 = vmatpush2.msra.mxu0 0.0
        %3458 = vmatprep.subr.mxu0 0.0
        %3459 = vmatpush2.msra.mxu0 0.0
        %3460 = vmatprep.subr.mxu0 0.0
        %3461 = vmatpush2.msra.mxu0 0.0
        %3462 = vmatprep.subr.mxu0 0.0
        %3463 = vmatpush2.msra.mxu0 0.0
        %3464 = vmatprep.subr.mxu0 0.0
        %3465 = vmatpush2.msra.mxu0 0.0
        %3466 = vmatprep.subr.mxu0 0.0
        %3467 = vmatpush2.msra.mxu0 0.0
        %3468 = vmatprep.subr.mxu0 0.0
        %3469 = vmatpush2.msra.mxu0 0.0
        %3470 = vmatprep.subr.mxu0 0.0
        %3471 = vmatpush2.msra.mxu0 0.0
        %3472 = vmatprep.subr.mxu0 0.0
        %3473 = vmatpush2.msra.mxu0 0.0
        %3474 = vmatprep.subr.mxu0 0.0
        %3475 = vmatpush2.msra.mxu0 0.0
        %3476 = vmatprep.mubr.f32.mxu0 0.0
        %3477 = vmatmul.mubr.f32.gmra.mxu0 %v3410
        %v3478 = vpop.f32.mrf.mxu0
        %v3479 = vadd.f32 0.0, %v3478
        %v3480 = vpop.f32.mrf.mxu0
        %3481 = vdwg.mxu0
        %v3482 = vld [vmem:[#allocation11] sm:$0xff]
        %3483 = vrot.lane.b32.xlu0 %v3317, 120
        %v3484 = vpop.permute.xlu0 %3483
        %3485 = vrot.lane.b32.xlu0 %v3317, 88
        %v3486 = vpop.permute.xlu0 %3485
        %v3487 = vsel %vm983, %v3484, 0
        %v3489 = vsel %vm983, %v3486, 0
        %3491 = vmatprep.subr.mxu0 0.0
        %3492 = vmatpush1.xpose.msra.mxu0 0.0
        %3493 = vmatprep.subr.mxu0 0.0
        %3494 = vmatpush1.xpose.msra.mxu0 0.0
        %3495 = vmatprep.subr.mxu0 0.0
        %3496 = vmatpush1.xpose.msra.mxu0 0.0
        %3497 = vmatprep.subr.mxu0 0.0
        %3498 = vmatpush1.xpose.msra.mxu0 0.0
        %3499 = vmatprep.subr.mxu0 0.0
        %3500 = vmatpush1.xpose.msra.mxu0 0.0
        %3501 = vmatprep.subr.mxu0 0.0
        %3502 = vmatpush1.xpose.msra.mxu0 0.0
        %3503 = vmatprep.subr.mxu0 0.0
        %3504 = vmatpush1.xpose.msra.mxu0 0.0
        %3505 = vmatprep.subr.mxu0 0.0
        %3506 = vmatpush1.xpose.msra.mxu0 0.0
        %3507 = vmatprep.subr.mxu0 0.0
        %3508 = vmatpush1.xpose.msra.mxu0 0.0
        %3509 = vmatprep.subr.mxu0 0.0
        %3510 = vmatpush1.xpose.msra.mxu0 0.0
        %3511 = vmatprep.subr.mxu0 0.0
        %3512 = vmatpush1.xpose.msra.mxu0 0.0
        %3513 = vmatprep.subr.mxu0 0.0
        %3514 = vmatpush1.xpose.msra.mxu0 0.0
        %3515 = vmatprep.subr.mxu0 0.0
        %3516 = vmatpush1.xpose.msra.mxu0 0.0
        %3517 = vmatprep.subr.mxu0 0.0
        %3518 = vmatpush1.xpose.msra.mxu0 0.0
        %3519 = vmatprep.subr.mxu0 0.0
        %3520 = vmatpush1.xpose.msra.mxu0 0.0
        %3521 = vmatprep.subr.mxu0 0.0
        %3522 = vmatpush1.xpose.msra.mxu0 %v3489
        %3523 = vmatprep.subr.mxu0 0.0
        %3524 = vmatpush2.xpose.msra.mxu0 0.0
        %3525 = vmatprep.subr.mxu0 0.0
        %3526 = vmatpush2.xpose.msra.mxu0 0.0
        %3527 = vmatprep.subr.mxu0 0.0
        %3528 = vmatpush2.xpose.msra.mxu0 0.0
        %3529 = vmatprep.subr.mxu0 0.0
        %3530 = vmatpush2.xpose.msra.mxu0 0.0
        %3531 = vmatprep.subr.mxu0 0.0
        %3532 = vmatpush2.xpose.msra.mxu0 0.0
        %3533 = vmatprep.subr.mxu0 0.0
        %3534 = vmatpush2.xpose.msra.mxu0 0.0
        %3535 = vmatprep.subr.mxu0 0.0
        %3536 = vmatpush2.xpose.msra.mxu0 0.0
        %3537 = vmatprep.subr.mxu0 0.0
        %3538 = vmatpush2.xpose.msra.mxu0 0.0
        %3539 = vmatprep.subr.mxu0 0.0
        %3540 = vmatpush2.xpose.msra.mxu0 0.0
        %3541 = vmatprep.subr.mxu0 0.0
        %3542 = vmatpush2.xpose.msra.mxu0 0.0
        %3543 = vmatprep.subr.mxu0 0.0
        %3544 = vmatpush2.xpose.msra.mxu0 0.0
        %3545 = vmatprep.subr.mxu0 0.0
        %3546 = vmatpush2.xpose.msra.mxu0 0.0
        %3547 = vmatprep.subr.mxu0 0.0
        %3548 = vmatpush2.xpose.msra.mxu0 0.0
        %3549 = vmatprep.subr.mxu0 0.0
        %3550 = vmatpush2.xpose.msra.mxu0 0.0
        %3551 = vmatprep.subr.mxu0 0.0
        %3552 = vmatpush2.xpose.msra.mxu0 0.0
        %3553 = vmatprep.subr.mxu0 0.0
        %3554 = vmatpush2.xpose.msra.mxu0 0.0
        %3555 = vmatprep.mubr.f32.mxu0 0.0
        %3556 = vmatmul.mubr.f32.gmra.mxu0 %v3487
        %v3557 = vpop.f32.mrf.mxu0
        %v3558 = vadd.f32 0.0, %v3557
        %v3559 = vpop.f32.mrf.mxu0
        %3560 = vdwg.mxu0
        %v3561 = vsel %vm983, %v3558, -inf
        %3562 = vmax.xlane.f32.xlu0 %v3561
        %v3563 = vpop.xlane.xlu0 %3562
        %v3564 = vsub.f32 %v3558, %v3563
        %v3565 = vmul.f32 %v3564, 1.442695
        %v3566 = vpow.pop %v3565
        %v3567 = vsel %vm983, %v3566, 0.0
        %3568 = vadd.xlane.f32.xlu0 %v3567
        %v3569 = vpop.xlane.xlu0 %3568
        %v3570 = vrcp.pop %v3569
        %v3571 = vmul.f32 %v3566, %v3570
        %3572 = vrot.lane.b32.xlu0 %v3317, 56
        %v3573 = vpop.permute.xlu0 %3572
        %v3576 = vsel %vm983, %v3571, 0
        %3578 = vmatprep.subr.mxu0 0.0
        %3579 = vmatpush1.msra.mxu0 0.0
        %3580 = vmatprep.subr.mxu0 0.0
        %3581 = vmatpush1.msra.mxu0 0.0
        %3582 = vmatprep.subr.mxu0 0.0
        %3583 = vmatpush1.msra.mxu0 0.0
        %3584 = vmatprep.subr.mxu0 0.0
        %3585 = vmatpush1.msra.mxu0 0.0
        %3586 = vmatprep.subr.mxu0 0.0
        %3587 = vmatpush1.msra.mxu0 0.0
        %3588 = vmatprep.subr.mxu0 0.0
        %3589 = vmatpush1.msra.mxu0 0.0
        %3590 = vmatprep.subr.mxu0 0.0
        %3591 = vmatpush1.msra.mxu0 0.0
        %3592 = vmatprep.subr.mxu0 0.0
        %3593 = vmatpush1.msra.mxu0 0.0
        %3594 = vmatprep.subr.mxu0 0.0
        %3595 = vmatpush1.msra.mxu0 0.0
        %3596 = vmatprep.subr.mxu0 0.0
        %3597 = vmatpush1.msra.mxu0 0.0
        %3598 = vmatprep.subr.mxu0 0.0
        %3599 = vmatpush1.msra.mxu0 0.0
        %3600 = vmatprep.subr.mxu0 0.0
        %3601 = vmatpush1.msra.mxu0 0.0
        %3602 = vmatprep.subr.mxu0 0.0
        %3603 = vmatpush1.msra.mxu0 0.0
        %3604 = vmatprep.subr.mxu0 0.0
        %3605 = vmatpush1.msra.mxu0 0.0
        %3606 = vmatprep.subr.mxu0 0.0
        %3607 = vmatpush1.msra.mxu0 0.0
        %3608 = vmatprep.subr.mxu0 0.0
        %3609 = vmatpush1.msra.mxu0 %v3573
        %3610 = vmatprep.subr.mxu0 0.0
        %3611 = vmatpush2.msra.mxu0 0.0
        %3612 = vmatprep.subr.mxu0 0.0
        %3613 = vmatpush2.msra.mxu0 0.0
        %3614 = vmatprep.subr.mxu0 0.0
        %3615 = vmatpush2.msra.mxu0 0.0
        %3616 = vmatprep.subr.mxu0 0.0
        %3617 = vmatpush2.msra.mxu0 0.0
        %3618 = vmatprep.subr.mxu0 0.0
        %3619 = vmatpush2.msra.mxu0 0.0
        %3620 = vmatprep.subr.mxu0 0.0
        %3621 = vmatpush2.msra.mxu0 0.0
        %3622 = vmatprep.subr.mxu0 0.0
        %3623 = vmatpush2.msra.mxu0 0.0
        %3624 = vmatprep.subr.mxu0 0.0
        %3625 = vmatpush2.msra.mxu0 0.0
        %3626 = vmatprep.subr.mxu0 0.0
        %3627 = vmatpush2.msra.mxu0 0.0
        %3628 = vmatprep.subr.mxu0 0.0
        %3629 = vmatpush2.msra.mxu0 0.0
        %3630 = vmatprep.subr.mxu0 0.0
        %3631 = vmatpush2.msra.mxu0 0.0
        %3632 = vmatprep.subr.mxu0 0.0
        %3633 = vmatpush2.msra.mxu0 0.0
        %3634 = vmatprep.subr.mxu0 0.0
        %3635 = vmatpush2.msra.mxu0 0.0
        %3636 = vmatprep.subr.mxu0 0.0
        %3637 = vmatpush2.msra.mxu0 0.0
        %3638 = vmatprep.subr.mxu0 0.0
        %3639 = vmatpush2.msra.mxu0 0.0
        %3640 = vmatprep.subr.mxu0 0.0
        %3641 = vmatpush2.msra.mxu0 0.0
        %3642 = vmatprep.mubr.f32.mxu0 0.0
        %3643 = vmatmul.mubr.f32.gmra.mxu0 %v3576
        %v3644 = vpop.f32.mrf.mxu0
        %v3645 = vadd.f32 0.0, %v3644
        %v3646 = vpop.f32.mrf.mxu0
        %3647 = vdwg.mxu0
        %v3648 = vld [vmem:[%s1311] sm:$0xff]
        %v3650 = vsel %vm983, %v3645, 0
        %3652 = vmatprep.subr.mxu0 0.0
        %3653 = vmatpush1.msra.mxu0 0.0
        %3654 = vmatprep.subr.mxu0 0.0
        %3655 = vmatpush1.msra.mxu0 0.0
        %3656 = vmatprep.subr.mxu0 0.0
        %3657 = vmatpush1.msra.mxu0 0.0
        %3658 = vmatprep.subr.mxu0 0.0
        %3659 = vmatpush1.msra.mxu0 0.0
        %3660 = vmatprep.subr.mxu0 0.0
        %3661 = vmatpush1.msra.mxu0 0.0
        %3662 = vmatprep.subr.mxu0 0.0
        %3663 = vmatpush1.msra.mxu0 0.0
        %3664 = vmatprep.subr.mxu0 0.0
        %3665 = vmatpush1.msra.mxu0 0.0
        %3666 = vmatprep.subr.mxu0 0.0
        %3667 = vmatpush1.msra.mxu0 0.0
        %3668 = vmatprep.subr.mxu0 0.0
        %3669 = vmatpush1.msra.mxu0 0.0
        %3670 = vmatprep.subr.mxu0 0.0
        %3671 = vmatpush1.msra.mxu0 0.0
        %3672 = vmatprep.subr.mxu0 0.0
        %3673 = vmatpush1.msra.mxu0 0.0
        %3674 = vmatprep.subr.mxu0 0.0
        %3675 = vmatpush1.msra.mxu0 0.0
        %3676 = vmatprep.subr.mxu0 0.0
        %3677 = vmatpush1.msra.mxu0 0.0
        %3678 = vmatprep.subr.mxu0 0.0
        %3679 = vmatpush1.msra.mxu0 0.0
        %3680 = vmatprep.subr.mxu0 0.0
        %3681 = vmatpush1.msra.mxu0 0.0
        %3682 = vmatprep.subr.mxu0 0.0
        %3683 = vmatpush1.msra.mxu0 %v3648
        %3684 = vmatprep.subr.mxu0 0.0
        %3685 = vmatpush2.msra.mxu0 0.0
        %3686 = vmatprep.subr.mxu0 0.0
        %3687 = vmatpush2.msra.mxu0 0.0
        %3688 = vmatprep.subr.mxu0 0.0
        %3689 = vmatpush2.msra.mxu0 0.0
        %3690 = vmatprep.subr.mxu0 0.0
        %3691 = vmatpush2.msra.mxu0 0.0
        %3692 = vmatprep.subr.mxu0 0.0
        %3693 = vmatpush2.msra.mxu0 0.0
        %3694 = vmatprep.subr.mxu0 0.0
        %3695 = vmatpush2.msra.mxu0 0.0
        %3696 = vmatprep.subr.mxu0 0.0
        %3697 = vmatpush2.msra.mxu0 0.0
        %3698 = vmatprep.subr.mxu0 0.0
        %3699 = vmatpush2.msra.mxu0 0.0
        %3700 = vmatprep.subr.mxu0 0.0
        %3701 = vmatpush2.msra.mxu0 0.0
        %3702 = vmatprep.subr.mxu0 0.0
        %3703 = vmatpush2.msra.mxu0 0.0
        %3704 = vmatprep.subr.mxu0 0.0
        %3705 = vmatpush2.msra.mxu0 0.0
        %3706 = vmatprep.subr.mxu0 0.0
        %3707 = vmatpush2.msra.mxu0 0.0
        %3708 = vmatprep.subr.mxu0 0.0
        %3709 = vmatpush2.msra.mxu0 0.0
        %3710 = vmatprep.subr.mxu0 0.0
        %3711 = vmatpush2.msra.mxu0 0.0
        %3712 = vmatprep.subr.mxu0 0.0
        %3713 = vmatpush2.msra.mxu0 0.0
        %3714 = vmatprep.subr.mxu0 0.0
        %3715 = vmatpush2.msra.mxu0 0.0
        %3716 = vmatprep.mubr.f32.mxu0 0.0
        %3717 = vmatmul.mubr.f32.gmra.mxu0 %v3650
        %v3718 = vpop.f32.mrf.mxu0
        %v3719 = vadd.f32 0.0, %v3718
        %v3720 = vpop.f32.mrf.mxu0
        %3721 = vdwg.mxu0
        %v3723 = vsel %vm983, %v3479, 0
        %3725 = vmatprep.subr.mxu0 0.0
        %3726 = vmatpush1.msra.mxu0 0.0
        %3727 = vmatprep.subr.mxu0 0.0
        %3728 = vmatpush1.msra.mxu0 0.0
        %3729 = vmatprep.subr.mxu0 0.0
        %3730 = vmatpush1.msra.mxu0 0.0
        %3731 = vmatprep.subr.mxu0 0.0
        %3732 = vmatpush1.msra.mxu0 0.0
        %3733 = vmatprep.subr.mxu0 0.0
        %3734 = vmatpush1.msra.mxu0 0.0
        %3735 = vmatprep.subr.mxu0 0.0
        %3736 = vmatpush1.msra.mxu0 0.0
        %3737 = vmatprep.subr.mxu0 0.0
        %3738 = vmatpush1.msra.mxu0 0.0
        %3739 = vmatprep.subr.mxu0 0.0
        %3740 = vmatpush1.msra.mxu0 0.0
        %3741 = vmatprep.subr.mxu0 0.0
        %3742 = vmatpush1.msra.mxu0 0.0
        %3743 = vmatprep.subr.mxu0 0.0
        %3744 = vmatpush1.msra.mxu0 0.0
        %3745 = vmatprep.subr.mxu0 0.0
        %3746 = vmatpush1.msra.mxu0 0.0
        %3747 = vmatprep.subr.mxu0 0.0
        %3748 = vmatpush1.msra.mxu0 0.0
        %3749 = vmatprep.subr.mxu0 0.0
        %3750 = vmatpush1.msra.mxu0 0.0
        %3751 = vmatprep.subr.mxu0 0.0
        %3752 = vmatpush1.msra.mxu0 0.0
        %3753 = vmatprep.subr.mxu0 0.0
        %3754 = vmatpush1.msra.mxu0 0.0
        %3755 = vmatprep.subr.mxu0 0.0
        %3756 = vmatpush1.msra.mxu0 %v3482
        %3757 = vmatprep.subr.mxu0 0.0
        %3758 = vmatpush2.msra.mxu0 0.0
        %3759 = vmatprep.subr.mxu0 0.0
        %3760 = vmatpush2.msra.mxu0 0.0
        %3761 = vmatprep.subr.mxu0 0.0
        %3762 = vmatpush2.msra.mxu0 0.0
        %3763 = vmatprep.subr.mxu0 0.0
        %3764 = vmatpush2.msra.mxu0 0.0
        %3765 = vmatprep.subr.mxu0 0.0
        %3766 = vmatpush2.msra.mxu0 0.0
        %3767 = vmatprep.subr.mxu0 0.0
        %3768 = vmatpush2.msra.mxu0 0.0
        %3769 = vmatprep.subr.mxu0 0.0
        %3770 = vmatpush2.msra.mxu0 0.0
        %3771 = vmatprep.subr.mxu0 0.0
        %3772 = vmatpush2.msra.mxu0 0.0
        %3773 = vmatprep.subr.mxu0 0.0
        %3774 = vmatpush2.msra.mxu0 0.0
        %3775 = vmatprep.subr.mxu0 0.0
        %3776 = vmatpush2.msra.mxu0 0.0
        %3777 = vmatprep.subr.mxu0 0.0
        %3778 = vmatpush2.msra.mxu0 0.0
        %3779 = vmatprep.subr.mxu0 0.0
        %3780 = vmatpush2.msra.mxu0 0.0
        %3781 = vmatprep.subr.mxu0 0.0
        %3782 = vmatpush2.msra.mxu0 0.0
        %3783 = vmatprep.subr.mxu0 0.0
        %3784 = vmatpush2.msra.mxu0 0.0
        %3785 = vmatprep.subr.mxu0 0.0
        %3786 = vmatpush2.msra.mxu0 0.0
        %3787 = vmatprep.subr.mxu0 0.0
        %3788 = vmatpush2.msra.mxu0 0.0
        %3789 = vmatprep.mubr.f32.mxu0 0.0
        %3790 = vmatmul.mubr.f32.gmra.mxu0 %v3723
        %v3791 = vpop.f32.mrf.mxu0
        %v3792 = vadd.f32 %v3719, %v3791
        %v3793 = vpop.f32.mrf.mxu0
        %3794 = vdwg.mxu0
        %3795 = vrot.lane.b32.xlu0 %v3317, 112
        %v3796 = vpop.permute.xlu0 %3795
        %3797 = vrot.lane.b32.xlu0 %v3317, 80
        %v3798 = vpop.permute.xlu0 %3797
        %v3799 = vsel %vm983, %v3796, 0
        %v3801 = vsel %vm983, %v3798, 0
        %3803 = vmatprep.subr.mxu0 0.0
        %3804 = vmatpush1.xpose.msra.mxu0 0.0
        %3805 = vmatprep.subr.mxu0 0.0
        %3806 = vmatpush1.xpose.msra.mxu0 0.0
        %3807 = vmatprep.subr.mxu0 0.0
        %3808 = vmatpush1.xpose.msra.mxu0 0.0
        %3809 = vmatprep.subr.mxu0 0.0
        %3810 = vmatpush1.xpose.msra.mxu0 0.0
        %3811 = vmatprep.subr.mxu0 0.0
        %3812 = vmatpush1.xpose.msra.mxu0 0.0
        %3813 = vmatprep.subr.mxu0 0.0
        %3814 = vmatpush1.xpose.msra.mxu0 0.0
        %3815 = vmatprep.subr.mxu0 0.0
        %3816 = vmatpush1.xpose.msra.mxu0 0.0
        %3817 = vmatprep.subr.mxu0 0.0
        %3818 = vmatpush1.xpose.msra.mxu0 0.0
        %3819 = vmatprep.subr.mxu0 0.0
        %3820 = vmatpush1.xpose.msra.mxu0 0.0
        %3821 = vmatprep.subr.mxu0 0.0
        %3822 = vmatpush1.xpose.msra.mxu0 0.0
        %3823 = vmatprep.subr.mxu0 0.0
        %3824 = vmatpush1.xpose.msra.mxu0 0.0
        %3825 = vmatprep.subr.mxu0 0.0
        %3826 = vmatpush1.xpose.msra.mxu0 0.0
        %3827 = vmatprep.subr.mxu0 0.0
        %3828 = vmatpush1.xpose.msra.mxu0 0.0
        %3829 = vmatprep.subr.mxu0 0.0
        %3830 = vmatpush1.xpose.msra.mxu0 0.0
        %3831 = vmatprep.subr.mxu0 0.0
        %3832 = vmatpush1.xpose.msra.mxu0 0.0
        %3833 = vmatprep.subr.mxu0 0.0
        %3834 = vmatpush1.xpose.msra.mxu0 %v3801
        %3835 = vmatprep.subr.mxu0 0.0
        %3836 = vmatpush2.xpose.msra.mxu0 0.0
        %3837 = vmatprep.subr.mxu0 0.0
        %3838 = vmatpush2.xpose.msra.mxu0 0.0
        %3839 = vmatprep.subr.mxu0 0.0
        %3840 = vmatpush2.xpose.msra.mxu0 0.0
        %3841 = vmatprep.subr.mxu0 0.0
        %3842 = vmatpush2.xpose.msra.mxu0 0.0
        %3843 = vmatprep.subr.mxu0 0.0
        %3844 = vmatpush2.xpose.msra.mxu0 0.0
        %3845 = vmatprep.subr.mxu0 0.0
        %3846 = vmatpush2.xpose.msra.mxu0 0.0
        %3847 = vmatprep.subr.mxu0 0.0
        %3848 = vmatpush2.xpose.msra.mxu0 0.0
        %3849 = vmatprep.subr.mxu0 0.0
        %3850 = vmatpush2.xpose.msra.mxu0 0.0
        %3851 = vmatprep.subr.mxu0 0.0
        %3852 = vmatpush2.xpose.msra.mxu0 0.0
        %3853 = vmatprep.subr.mxu0 0.0
        %3854 = vmatpush2.xpose.msra.mxu0 0.0
        %3855 = vmatprep.subr.mxu0 0.0
        %3856 = vmatpush2.xpose.msra.mxu0 0.0
        %3857 = vmatprep.subr.mxu0 0.0
        %3858 = vmatpush2.xpose.msra.mxu0 0.0
        %3859 = vmatprep.subr.mxu0 0.0
        %3860 = vmatpush2.xpose.msra.mxu0 0.0
        %3861 = vmatprep.subr.mxu0 0.0
        %3862 = vmatpush2.xpose.msra.mxu0 0.0
        %3863 = vmatprep.subr.mxu0 0.0
        %3864 = vmatpush2.xpose.msra.mxu0 0.0
        %3865 = vmatprep.subr.mxu0 0.0
        %3866 = vmatpush2.xpose.msra.mxu0 0.0
        %3867 = vmatprep.mubr.f32.mxu0 0.0
        %3868 = vmatmul.mubr.f32.gmra.mxu0 %v3799
        %v3869 = vpop.f32.mrf.mxu0
        %v3870 = vadd.f32 0.0, %v3869
        %v3871 = vpop.f32.mrf.mxu0
        %3872 = vdwg.mxu0
        %v3873 = vsel %vm983, %v3870, -inf
        %3874 = vmax.xlane.f32.xlu0 %v3873
        %v3875 = vpop.xlane.xlu0 %3874
        %v3876 = vsub.f32 %v3870, %v3875
        %v3877 = vmul.f32 %v3876, 1.442695
        %v3878 = vpow.pop %v3877
        %v3879 = vsel %vm983, %v3878, 0.0
        %3880 = vadd.xlane.f32.xlu0 %v3879
        %v3881 = vpop.xlane.xlu0 %3880
        %v3882 = vrcp.pop %v3881
        %v3883 = vmul.f32 %v3878, %v3882
        %3884 = vrot.lane.b32.xlu0 %v3317, 48
        %v3885 = vpop.permute.xlu0 %3884
        %v3888 = vsel %vm983, %v3883, 0
        %3890 = vmatprep.subr.mxu0 0.0
        %3891 = vmatpush1.msra.mxu0 0.0
        %3892 = vmatprep.subr.mxu0 0.0
        %3893 = vmatpush1.msra.mxu0 0.0
        %3894 = vmatprep.subr.mxu0 0.0
        %3895 = vmatpush1.msra.mxu0 0.0
        %3896 = vmatprep.subr.mxu0 0.0
        %3897 = vmatpush1.msra.mxu0 0.0
        %3898 = vmatprep.subr.mxu0 0.0
        %3899 = vmatpush1.msra.mxu0 0.0
        %3900 = vmatprep.subr.mxu0 0.0
        %3901 = vmatpush1.msra.mxu0 0.0
        %3902 = vmatprep.subr.mxu0 0.0
        %3903 = vmatpush1.msra.mxu0 0.0
        %3904 = vmatprep.subr.mxu0 0.0
        %3905 = vmatpush1.msra.mxu0 0.0
        %3906 = vmatprep.subr.mxu0 0.0
        %3907 = vmatpush1.msra.mxu0 0.0
        %3908 = vmatprep.subr.mxu0 0.0
        %3909 = vmatpush1.msra.mxu0 0.0
        %3910 = vmatprep.subr.mxu0 0.0
        %3911 = vmatpush1.msra.mxu0 0.0
        %3912 = vmatprep.subr.mxu0 0.0
        %3913 = vmatpush1.msra.mxu0 0.0
        %3914 = vmatprep.subr.mxu0 0.0
        %3915 = vmatpush1.msra.mxu0 0.0
        %3916 = vmatprep.subr.mxu0 0.0
        %3917 = vmatpush1.msra.mxu0 0.0
        %3918 = vmatprep.subr.mxu0 0.0
        %3919 = vmatpush1.msra.mxu0 0.0
        %3920 = vmatprep.subr.mxu0 0.0
        %3921 = vmatpush1.msra.mxu0 %v3885
        %3922 = vmatprep.subr.mxu0 0.0
        %3923 = vmatpush2.msra.mxu0 0.0
        %3924 = vmatprep.subr.mxu0 0.0
        %3925 = vmatpush2.msra.mxu0 0.0
        %3926 = vmatprep.subr.mxu0 0.0
        %3927 = vmatpush2.msra.mxu0 0.0
        %3928 = vmatprep.subr.mxu0 0.0
        %3929 = vmatpush2.msra.mxu0 0.0
        %3930 = vmatprep.subr.mxu0 0.0
        %3931 = vmatpush2.msra.mxu0 0.0
        %3932 = vmatprep.subr.mxu0 0.0
        %3933 = vmatpush2.msra.mxu0 0.0
        %3934 = vmatprep.subr.mxu0 0.0
        %3935 = vmatpush2.msra.mxu0 0.0
        %3936 = vmatprep.subr.mxu0 0.0
        %3937 = vmatpush2.msra.mxu0 0.0
        %3938 = vmatprep.subr.mxu0 0.0
        %3939 = vmatpush2.msra.mxu0 0.0
        %3940 = vmatprep.subr.mxu0 0.0
        %3941 = vmatpush2.msra.mxu0 0.0
        %3942 = vmatprep.subr.mxu0 0.0
        %3943 = vmatpush2.msra.mxu0 0.0
        %3944 = vmatprep.subr.mxu0 0.0
        %3945 = vmatpush2.msra.mxu0 0.0
        %3946 = vmatprep.subr.mxu0 0.0
        %3947 = vmatpush2.msra.mxu0 0.0
        %3948 = vmatprep.subr.mxu0 0.0
        %3949 = vmatpush2.msra.mxu0 0.0
        %3950 = vmatprep.subr.mxu0 0.0
        %3951 = vmatpush2.msra.mxu0 0.0
        %3952 = vmatprep.subr.mxu0 0.0
        %3953 = vmatpush2.msra.mxu0 0.0
        %3954 = vmatprep.mubr.f32.mxu0 0.0
        %3955 = vmatmul.mubr.f32.gmra.mxu0 %v3888
        %v3956 = vpop.f32.mrf.mxu0
        %v3957 = vadd.f32 0.0, %v3956
        %v3958 = vpop.f32.mrf.mxu0
        %3959 = vdwg.mxu0
        %v3960 = vld [vmem:[%s1624] sm:$0xff]
        %v3962 = vsel %vm983, %v3957, 0
        %3964 = vmatprep.subr.mxu0 0.0
        %3965 = vmatpush1.msra.mxu0 0.0
        %3966 = vmatprep.subr.mxu0 0.0
        %3967 = vmatpush1.msra.mxu0 0.0
        %3968 = vmatprep.subr.mxu0 0.0
        %3969 = vmatpush1.msra.mxu0 0.0
        %3970 = vmatprep.subr.mxu0 0.0
        %3971 = vmatpush1.msra.mxu0 0.0
        %3972 = vmatprep.subr.mxu0 0.0
        %3973 = vmatpush1.msra.mxu0 0.0
        %3974 = vmatprep.subr.mxu0 0.0
        %3975 = vmatpush1.msra.mxu0 0.0
        %3976 = vmatprep.subr.mxu0 0.0
        %3977 = vmatpush1.msra.mxu0 0.0
        %3978 = vmatprep.subr.mxu0 0.0
        %3979 = vmatpush1.msra.mxu0 0.0
        %3980 = vmatprep.subr.mxu0 0.0
        %3981 = vmatpush1.msra.mxu0 0.0
        %3982 = vmatprep.subr.mxu0 0.0
        %3983 = vmatpush1.msra.mxu0 0.0
        %3984 = vmatprep.subr.mxu0 0.0
        %3985 = vmatpush1.msra.mxu0 0.0
        %3986 = vmatprep.subr.mxu0 0.0
        %3987 = vmatpush1.msra.mxu0 0.0
        %3988 = vmatprep.subr.mxu0 0.0
        %3989 = vmatpush1.msra.mxu0 0.0
        %3990 = vmatprep.subr.mxu0 0.0
        %3991 = vmatpush1.msra.mxu0 0.0
        %3992 = vmatprep.subr.mxu0 0.0
        %3993 = vmatpush1.msra.mxu0 0.0
        %3994 = vmatprep.subr.mxu0 0.0
        %3995 = vmatpush1.msra.mxu0 %v3960
        %3996 = vmatprep.subr.mxu0 0.0
        %3997 = vmatpush2.msra.mxu0 0.0
        %3998 = vmatprep.subr.mxu0 0.0
        %3999 = vmatpush2.msra.mxu0 0.0
        %4000 = vmatprep.subr.mxu0 0.0
        %4001 = vmatpush2.msra.mxu0 0.0
        %4002 = vmatprep.subr.mxu0 0.0
        %4003 = vmatpush2.msra.mxu0 0.0
        %4004 = vmatprep.subr.mxu0 0.0
        %4005 = vmatpush2.msra.mxu0 0.0
        %4006 = vmatprep.subr.mxu0 0.0
        %4007 = vmatpush2.msra.mxu0 0.0
        %4008 = vmatprep.subr.mxu0 0.0
        %4009 = vmatpush2.msra.mxu0 0.0
        %4010 = vmatprep.subr.mxu0 0.0
        %4011 = vmatpush2.msra.mxu0 0.0
        %4012 = vmatprep.subr.mxu0 0.0
        %4013 = vmatpush2.msra.mxu0 0.0
        %4014 = vmatprep.subr.mxu0 0.0
        %4015 = vmatpush2.msra.mxu0 0.0
        %4016 = vmatprep.subr.mxu0 0.0
        %4017 = vmatpush2.msra.mxu0 0.0
        %4018 = vmatprep.subr.mxu0 0.0
        %4019 = vmatpush2.msra.mxu0 0.0
        %4020 = vmatprep.subr.mxu0 0.0
        %4021 = vmatpush2.msra.mxu0 0.0
        %4022 = vmatprep.subr.mxu0 0.0
        %4023 = vmatpush2.msra.mxu0 0.0
        %4024 = vmatprep.subr.mxu0 0.0
        %4025 = vmatpush2.msra.mxu0 0.0
        %4026 = vmatprep.subr.mxu0 0.0
        %4027 = vmatpush2.msra.mxu0 0.0
        %4028 = vmatprep.mubr.f32.mxu0 0.0
        %4029 = vmatmul.mubr.f32.gmra.mxu0 %v3962
        %v4030 = vpop.f32.mrf.mxu0
        %v4031 = vadd.f32 0.0, %v4030
        %v4032 = vpop.f32.mrf.mxu0
        %4033 = vdwg.mxu0
        %v4034 = vadd.f32 %v3792, %v4031
        %4035 = vrot.lane.b32.xlu0 %v3317, 104
        %v4036 = vpop.permute.xlu0 %4035
        %4037 = vrot.lane.b32.xlu0 %v3317, 72
        %v4038 = vpop.permute.xlu0 %4037
        %v4039 = vsel %vm983, %v4036, 0
        %v4041 = vsel %vm983, %v4038, 0
        %4043 = vmatprep.subr.mxu0 0.0
        %4044 = vmatpush1.xpose.msra.mxu0 0.0
        %4045 = vmatprep.subr.mxu0 0.0
        %4046 = vmatpush1.xpose.msra.mxu0 0.0
        %4047 = vmatprep.subr.mxu0 0.0
        %4048 = vmatpush1.xpose.msra.mxu0 0.0
        %4049 = vmatprep.subr.mxu0 0.0
        %4050 = vmatpush1.xpose.msra.mxu0 0.0
        %4051 = vmatprep.subr.mxu0 0.0
        %4052 = vmatpush1.xpose.msra.mxu0 0.0
        %4053 = vmatprep.subr.mxu0 0.0
        %4054 = vmatpush1.xpose.msra.mxu0 0.0
        %4055 = vmatprep.subr.mxu0 0.0
        %4056 = vmatpush1.xpose.msra.mxu0 0.0
        %4057 = vmatprep.subr.mxu0 0.0
        %4058 = vmatpush1.xpose.msra.mxu0 0.0
        %4059 = vmatprep.subr.mxu0 0.0
        %4060 = vmatpush1.xpose.msra.mxu0 0.0
        %4061 = vmatprep.subr.mxu0 0.0
        %4062 = vmatpush1.xpose.msra.mxu0 0.0
        %4063 = vmatprep.subr.mxu0 0.0
        %4064 = vmatpush1.xpose.msra.mxu0 0.0
        %4065 = vmatprep.subr.mxu0 0.0
        %4066 = vmatpush1.xpose.msra.mxu0 0.0
        %4067 = vmatprep.subr.mxu0 0.0
        %4068 = vmatpush1.xpose.msra.mxu0 0.0
        %4069 = vmatprep.subr.mxu0 0.0
        %4070 = vmatpush1.xpose.msra.mxu0 0.0
        %4071 = vmatprep.subr.mxu0 0.0
        %4072 = vmatpush1.xpose.msra.mxu0 0.0
        %4073 = vmatprep.subr.mxu0 0.0
        %4074 = vmatpush1.xpose.msra.mxu0 %v4041
        %4075 = vmatprep.subr.mxu0 0.0
        %4076 = vmatpush2.xpose.msra.mxu0 0.0
        %4077 = vmatprep.subr.mxu0 0.0
        %4078 = vmatpush2.xpose.msra.mxu0 0.0
        %4079 = vmatprep.subr.mxu0 0.0
        %4080 = vmatpush2.xpose.msra.mxu0 0.0
        %4081 = vmatprep.subr.mxu0 0.0
        %4082 = vmatpush2.xpose.msra.mxu0 0.0
        %4083 = vmatprep.subr.mxu0 0.0
        %4084 = vmatpush2.xpose.msra.mxu0 0.0
        %4085 = vmatprep.subr.mxu0 0.0
        %4086 = vmatpush2.xpose.msra.mxu0 0.0
        %4087 = vmatprep.subr.mxu0 0.0
        %4088 = vmatpush2.xpose.msra.mxu0 0.0
        %4089 = vmatprep.subr.mxu0 0.0
        %4090 = vmatpush2.xpose.msra.mxu0 0.0
        %4091 = vmatprep.subr.mxu0 0.0
        %4092 = vmatpush2.xpose.msra.mxu0 0.0
        %4093 = vmatprep.subr.mxu0 0.0
        %4094 = vmatpush2.xpose.msra.mxu0 0.0
        %4095 = vmatprep.subr.mxu0 0.0
        %4096 = vmatpush2.xpose.msra.mxu0 0.0
        %4097 = vmatprep.subr.mxu0 0.0
        %4098 = vmatpush2.xpose.msra.mxu0 0.0
        %4099 = vmatprep.subr.mxu0 0.0
        %4100 = vmatpush2.xpose.msra.mxu0 0.0
        %4101 = vmatprep.subr.mxu0 0.0
        %4102 = vmatpush2.xpose.msra.mxu0 0.0
        %4103 = vmatprep.subr.mxu0 0.0
        %4104 = vmatpush2.xpose.msra.mxu0 0.0
        %4105 = vmatprep.subr.mxu0 0.0
        %4106 = vmatpush2.xpose.msra.mxu0 0.0
        %4107 = vmatprep.mubr.f32.mxu0 0.0
        %4108 = vmatmul.mubr.f32.gmra.mxu0 %v4039
        %v4109 = vpop.f32.mrf.mxu0
        %v4110 = vadd.f32 0.0, %v4109
        %v4111 = vpop.f32.mrf.mxu0
        %4112 = vdwg.mxu0
        %v4113 = vsel %vm983, %v4110, -inf
        %4114 = vmax.xlane.f32.xlu0 %v4113
        %v4115 = vpop.xlane.xlu0 %4114
        %v4116 = vsub.f32 %v4110, %v4115
        %v4117 = vmul.f32 %v4116, 1.442695
        %v4118 = vpow.pop %v4117
        %v4119 = vsel %vm983, %v4118, 0.0
        %4120 = vadd.xlane.f32.xlu0 %v4119
        %v4121 = vpop.xlane.xlu0 %4120
        %v4122 = vrcp.pop %v4121
        %v4123 = vmul.f32 %v4118, %v4122
        %4124 = vrot.lane.b32.xlu0 %v3317, 40
        %v4125 = vpop.permute.xlu0 %4124
        %v4128 = vsel %vm983, %v4123, 0
        %4130 = vmatprep.subr.mxu0 0.0
        %4131 = vmatpush1.msra.mxu0 0.0
        %4132 = vmatprep.subr.mxu0 0.0
        %4133 = vmatpush1.msra.mxu0 0.0
        %4134 = vmatprep.subr.mxu0 0.0
        %4135 = vmatpush1.msra.mxu0 0.0
        %4136 = vmatprep.subr.mxu0 0.0
        %4137 = vmatpush1.msra.mxu0 0.0
        %4138 = vmatprep.subr.mxu0 0.0
        %4139 = vmatpush1.msra.mxu0 0.0
        %4140 = vmatprep.subr.mxu0 0.0
        %4141 = vmatpush1.msra.mxu0 0.0
        %4142 = vmatprep.subr.mxu0 0.0
        %4143 = vmatpush1.msra.mxu0 0.0
        %4144 = vmatprep.subr.mxu0 0.0
        %4145 = vmatpush1.msra.mxu0 0.0
        %4146 = vmatprep.subr.mxu0 0.0
        %4147 = vmatpush1.msra.mxu0 0.0
        %4148 = vmatprep.subr.mxu0 0.0
        %4149 = vmatpush1.msra.mxu0 0.0
        %4150 = vmatprep.subr.mxu0 0.0
        %4151 = vmatpush1.msra.mxu0 0.0
        %4152 = vmatprep.subr.mxu0 0.0
        %4153 = vmatpush1.msra.mxu0 0.0
        %4154 = vmatprep.subr.mxu0 0.0
        %4155 = vmatpush1.msra.mxu0 0.0
        %4156 = vmatprep.subr.mxu0 0.0
        %4157 = vmatpush1.msra.mxu0 0.0
        %4158 = vmatprep.subr.mxu0 0.0
        %4159 = vmatpush1.msra.mxu0 0.0
        %4160 = vmatprep.subr.mxu0 0.0
        %4161 = vmatpush1.msra.mxu0 %v4125
        %4162 = vmatprep.subr.mxu0 0.0
        %4163 = vmatpush2.msra.mxu0 0.0
        %4164 = vmatprep.subr.mxu0 0.0
        %4165 = vmatpush2.msra.mxu0 0.0
        %4166 = vmatprep.subr.mxu0 0.0
        %4167 = vmatpush2.msra.mxu0 0.0
        %4168 = vmatprep.subr.mxu0 0.0
        %4169 = vmatpush2.msra.mxu0 0.0
        %4170 = vmatprep.subr.mxu0 0.0
        %4171 = vmatpush2.msra.mxu0 0.0
        %4172 = vmatprep.subr.mxu0 0.0
        %4173 = vmatpush2.msra.mxu0 0.0
        %4174 = vmatprep.subr.mxu0 0.0
        %4175 = vmatpush2.msra.mxu0 0.0
        %4176 = vmatprep.subr.mxu0 0.0
        %4177 = vmatpush2.msra.mxu0 0.0
        %4178 = vmatprep.subr.mxu0 0.0
        %4179 = vmatpush2.msra.mxu0 0.0
        %4180 = vmatprep.subr.mxu0 0.0
        %4181 = vmatpush2.msra.mxu0 0.0
        %4182 = vmatprep.subr.mxu0 0.0
        %4183 = vmatpush2.msra.mxu0 0.0
        %4184 = vmatprep.subr.mxu0 0.0
        %4185 = vmatpush2.msra.mxu0 0.0
        %4186 = vmatprep.subr.mxu0 0.0
        %4187 = vmatpush2.msra.mxu0 0.0
        %4188 = vmatprep.subr.mxu0 0.0
        %4189 = vmatpush2.msra.mxu0 0.0
        %4190 = vmatprep.subr.mxu0 0.0
        %4191 = vmatpush2.msra.mxu0 0.0
        %4192 = vmatprep.subr.mxu0 0.0
        %4193 = vmatpush2.msra.mxu0 0.0
        %4194 = vmatprep.mubr.f32.mxu0 0.0
        %4195 = vmatmul.mubr.f32.gmra.mxu0 %v4128
        %v4196 = vpop.f32.mrf.mxu0
        %v4197 = vadd.f32 0.0, %v4196
        %v4198 = vpop.f32.mrf.mxu0
        %4199 = vdwg.mxu0
        %v4200 = vld [vmem:[%s1865] sm:$0xff]
        %v4202 = vsel %vm983, %v4197, 0
        %4204 = vmatprep.subr.mxu0 0.0
        %4205 = vmatpush1.msra.mxu0 0.0
        %4206 = vmatprep.subr.mxu0 0.0
        %4207 = vmatpush1.msra.mxu0 0.0
        %4208 = vmatprep.subr.mxu0 0.0
        %4209 = vmatpush1.msra.mxu0 0.0
        %4210 = vmatprep.subr.mxu0 0.0
        %4211 = vmatpush1.msra.mxu0 0.0
        %4212 = vmatprep.subr.mxu0 0.0
        %4213 = vmatpush1.msra.mxu0 0.0
        %4214 = vmatprep.subr.mxu0 0.0
        %4215 = vmatpush1.msra.mxu0 0.0
        %4216 = vmatprep.subr.mxu0 0.0
        %4217 = vmatpush1.msra.mxu0 0.0
        %4218 = vmatprep.subr.mxu0 0.0
        %4219 = vmatpush1.msra.mxu0 0.0
        %4220 = vmatprep.subr.mxu0 0.0
        %4221 = vmatpush1.msra.mxu0 0.0
        %4222 = vmatprep.subr.mxu0 0.0
        %4223 = vmatpush1.msra.mxu0 0.0
        %4224 = vmatprep.subr.mxu0 0.0
        %4225 = vmatpush1.msra.mxu0 0.0
        %4226 = vmatprep.subr.mxu0 0.0
        %4227 = vmatpush1.msra.mxu0 0.0
        %4228 = vmatprep.subr.mxu0 0.0
        %4229 = vmatpush1.msra.mxu0 0.0
        %4230 = vmatprep.subr.mxu0 0.0
        %4231 = vmatpush1.msra.mxu0 0.0
        %4232 = vmatprep.subr.mxu0 0.0
        %4233 = vmatpush1.msra.mxu0 0.0
        %4234 = vmatprep.subr.mxu0 0.0
        %4235 = vmatpush1.msra.mxu0 %v4200
        %4236 = vmatprep.subr.mxu0 0.0
        %4237 = vmatpush2.msra.mxu0 0.0
        %4238 = vmatprep.subr.mxu0 0.0
        %4239 = vmatpush2.msra.mxu0 0.0
        %4240 = vmatprep.subr.mxu0 0.0
        %4241 = vmatpush2.msra.mxu0 0.0
        %4242 = vmatprep.subr.mxu0 0.0
        %4243 = vmatpush2.msra.mxu0 0.0
        %4244 = vmatprep.subr.mxu0 0.0
        %4245 = vmatpush2.msra.mxu0 0.0
        %4246 = vmatprep.subr.mxu0 0.0
        %4247 = vmatpush2.msra.mxu0 0.0
        %4248 = vmatprep.subr.mxu0 0.0
        %4249 = vmatpush2.msra.mxu0 0.0
        %4250 = vmatprep.subr.mxu0 0.0
        %4251 = vmatpush2.msra.mxu0 0.0
        %4252 = vmatprep.subr.mxu0 0.0
        %4253 = vmatpush2.msra.mxu0 0.0
        %4254 = vmatprep.subr.mxu0 0.0
        %4255 = vmatpush2.msra.mxu0 0.0
        %4256 = vmatprep.subr.mxu0 0.0
        %4257 = vmatpush2.msra.mxu0 0.0
        %4258 = vmatprep.subr.mxu0 0.0
        %4259 = vmatpush2.msra.mxu0 0.0
        %4260 = vmatprep.subr.mxu0 0.0
        %4261 = vmatpush2.msra.mxu0 0.0
        %4262 = vmatprep.subr.mxu0 0.0
        %4263 = vmatpush2.msra.mxu0 0.0
        %4264 = vmatprep.subr.mxu0 0.0
        %4265 = vmatpush2.msra.mxu0 0.0
        %4266 = vmatprep.subr.mxu0 0.0
        %4267 = vmatpush2.msra.mxu0 0.0
        %4268 = vmatprep.mubr.f32.mxu0 0.0
        %4269 = vmatmul.mubr.f32.gmra.mxu0 %v4202
        %v4270 = vpop.f32.mrf.mxu0
        %v4271 = vadd.f32 0.0, %v4270
        %v4272 = vpop.f32.mrf.mxu0
        %4273 = vdwg.mxu0
        %v4274 = vadd.f32 %v4034, %v4271
        %v4275 = vld [vmem:[%s5] sm:$0x1]
        %v4277 = vlaneseq
        %v4278 = vshrl.u32 %v4277, 7
        %v4279 = vsub.s32 0, %v4278
        %v4280 = vrot.slane %v4275, %v4279
        %v4282 = vadd.f32 %v4274, %v4280
        %v4283 = vadd.f32 %v3222, %v4282
        %v4284 = vmul.f32 %v4283, %v4283
        %v4285 = vsel %vm799, %v4284, 0.0
        %4286 = vadd.xlane.f32.xlu0 %v4285
        %v4287 = vpop.xlane.xlu0 %4286
        %v4288 = vmul.f32 %v4287, %v888
        %v4289 = vadd.f32 %v4288, 1.1920929e-07
        %v4290 = vrsqrt.pop %v4289
        %v4291 = vmul.f32 %v4283, %v4290
        %v4292 = vld [vmem:[#allocation13] sm:$0xff]
        %v4293 = vld [vmem:[#allocation13 + $0x8] sm:$0xff]
        %v4294 = vld [vmem:[#allocation13 + $0x10] sm:$0xff]
        %v4295 = vld [vmem:[#allocation13 + $0x18] sm:$0xff]
        %v4296 = vld [vmem:[%s7] sm:$0x1]
        %v4298 = vlaneseq
        %v4299 = vshrl.u32 %v4298, 7
        %v4300 = vsub.s32 0, %v4299
        %v4301 = vrot.slane %v4296, %v4300
        %v4304 = vsel %vm799, %v4291, 0
        %4306 = vmatprep.subr.mxu0 0.0
        %4307 = vmatpush1.msra.mxu0 0.0
        %4308 = vmatprep.subr.mxu0 0.0
        %4309 = vmatpush1.msra.mxu0 0.0
        %4310 = vmatprep.subr.mxu0 0.0
        %4311 = vmatpush1.msra.mxu0 0.0
        %4312 = vmatprep.subr.mxu0 0.0
        %4313 = vmatpush1.msra.mxu0 0.0
        %4314 = vmatprep.subr.mxu0 0.0
        %4315 = vmatpush1.msra.mxu0 0.0
        %4316 = vmatprep.subr.mxu0 0.0
        %4317 = vmatpush1.msra.mxu0 0.0
        %4318 = vmatprep.subr.mxu0 0.0
        %4319 = vmatpush1.msra.mxu0 0.0
        %4320 = vmatprep.subr.mxu0 0.0
        %4321 = vmatpush1.msra.mxu0 0.0
        %4322 = vmatprep.subr.mxu0 0.0
        %4323 = vmatpush1.msra.mxu0 0.0
        %4324 = vmatprep.subr.mxu0 0.0
        %4325 = vmatpush1.msra.mxu0 0.0
        %4326 = vmatprep.subr.mxu0 0.0
        %4327 = vmatpush1.msra.mxu0 0.0
        %4328 = vmatprep.subr.mxu0 0.0
        %4329 = vmatpush1.msra.mxu0 0.0
        %4330 = vmatprep.subr.mxu0 0.0
        %4331 = vmatpush1.msra.mxu0 %v4295
        %4332 = vmatprep.subr.mxu0 0.0
        %4333 = vmatpush1.msra.mxu0 %v4294
        %4334 = vmatprep.subr.mxu0 0.0
        %4335 = vmatpush1.msra.mxu0 %v4293
        %4336 = vmatprep.subr.mxu0 0.0
        %4337 = vmatpush1.msra.mxu0 %v4292
        %4338 = vmatprep.subr.mxu0 0.0
        %4339 = vmatpush2.msra.mxu0 0.0
        %4340 = vmatprep.subr.mxu0 0.0
        %4341 = vmatpush2.msra.mxu0 0.0
        %4342 = vmatprep.subr.mxu0 0.0
        %4343 = vmatpush2.msra.mxu0 0.0
        %4344 = vmatprep.subr.mxu0 0.0
        %4345 = vmatpush2.msra.mxu0 0.0
        %4346 = vmatprep.subr.mxu0 0.0
        %4347 = vmatpush2.msra.mxu0 0.0
        %4348 = vmatprep.subr.mxu0 0.0
        %4349 = vmatpush2.msra.mxu0 0.0
        %4350 = vmatprep.subr.mxu0 0.0
        %4351 = vmatpush2.msra.mxu0 0.0
        %4352 = vmatprep.subr.mxu0 0.0
        %4353 = vmatpush2.msra.mxu0 0.0
        %4354 = vmatprep.subr.mxu0 0.0
        %4355 = vmatpush2.msra.mxu0 0.0
        %4356 = vmatprep.subr.mxu0 0.0
        %4357 = vmatpush2.msra.mxu0 0.0
        %4358 = vmatprep.subr.mxu0 0.0
        %4359 = vmatpush2.msra.mxu0 0.0
        %4360 = vmatprep.subr.mxu0 0.0
        %4361 = vmatpush2.msra.mxu0 0.0
        %4362 = vmatprep.subr.mxu0 0.0
        %4363 = vmatpush2.msra.mxu0 0.0
        %4364 = vmatprep.subr.mxu0 0.0
        %4365 = vmatpush2.msra.mxu0 0.0
        %4366 = vmatprep.subr.mxu0 0.0
        %4367 = vmatpush2.msra.mxu0 0.0
        %4368 = vmatprep.subr.mxu0 0.0
        %4369 = vmatpush2.msra.mxu0 0.0
        %4370 = vmatprep.mubr.f32.mxu0 0.0
        %4371 = vmatmul.mubr.f32.gmra.mxu0 %v4304
        %v4372 = vpop.f32.mrf.mxu0
        %v4373 = vadd.f32 %v4301, %v4372
        %v4374 = vpop.f32.mrf.mxu0
        %4375 = vdwg.mxu0
        %4376 = vst.msk [vmem:[#allocation3] sm:$0xff] %vm799, %v4373
        %v4377 = vld [vmem:[#allocation3] sm:$0xff]
        %v4378 = vld [vmem:[#allocation4] sm:$0xff]
        %v4379 = vld [vmem:[#allocation4 + $0x8] sm:$0xff]
        %v4381 = vsel %vm983, %v4377, 0
        %v4384 = vsel %vm983, %v4378, 0
        %v4387 = vsel %vm983, %v4379, 0
        %4389 = vmatprep.subr.mxu0 0.0
        %4390 = vmatpush1.xpose.msra.mxu0 0.0
        %4391 = vmatprep.subr.mxu0 0.0
        %4392 = vmatpush1.xpose.msra.mxu0 0.0
        %4393 = vmatprep.subr.mxu0 0.0
        %4394 = vmatpush1.xpose.msra.mxu0 0.0
        %4395 = vmatprep.subr.mxu0 0.0
        %4396 = vmatpush1.xpose.msra.mxu0 0.0
        %4397 = vmatprep.subr.mxu0 0.0
        %4398 = vmatpush1.xpose.msra.mxu0 0.0
        %4399 = vmatprep.subr.mxu0 0.0
        %4400 = vmatpush1.xpose.msra.mxu0 0.0
        %4401 = vmatprep.subr.mxu0 0.0
        %4402 = vmatpush1.xpose.msra.mxu0 0.0
        %4403 = vmatprep.subr.mxu0 0.0
        %4404 = vmatpush1.xpose.msra.mxu0 0.0
        %4405 = vmatprep.subr.mxu0 0.0
        %4406 = vmatpush1.xpose.msra.mxu0 0.0
        %4407 = vmatprep.subr.mxu0 0.0
        %4408 = vmatpush1.xpose.msra.mxu0 0.0
        %4409 = vmatprep.subr.mxu0 0.0
        %4410 = vmatpush1.xpose.msra.mxu0 0.0
        %4411 = vmatprep.subr.mxu0 0.0
        %4412 = vmatpush1.xpose.msra.mxu0 0.0
        %4413 = vmatprep.subr.mxu0 0.0
        %4414 = vmatpush1.xpose.msra.mxu0 0.0
        %4415 = vmatprep.subr.mxu0 0.0
        %4416 = vmatpush1.xpose.msra.mxu0 0.0
        %4417 = vmatprep.subr.mxu0 0.0
        %4418 = vmatpush1.xpose.msra.mxu0 %v4387
        %4419 = vmatprep.subr.mxu0 0.0
        %4420 = vmatpush1.xpose.msra.mxu0 %v4384
        %4421 = vmatprep.subr.mxu0 0.0
        %4422 = vmatpush2.xpose.msra.mxu0 0.0
        %4423 = vmatprep.subr.mxu0 0.0
        %4424 = vmatpush2.xpose.msra.mxu0 0.0
        %4425 = vmatprep.subr.mxu0 0.0
        %4426 = vmatpush2.xpose.msra.mxu0 0.0
        %4427 = vmatprep.subr.mxu0 0.0
        %4428 = vmatpush2.xpose.msra.mxu0 0.0
        %4429 = vmatprep.subr.mxu0 0.0
        %4430 = vmatpush2.xpose.msra.mxu0 0.0
        %4431 = vmatprep.subr.mxu0 0.0
        %4432 = vmatpush2.xpose.msra.mxu0 0.0
        %4433 = vmatprep.subr.mxu0 0.0
        %4434 = vmatpush2.xpose.msra.mxu0 0.0
        %4435 = vmatprep.subr.mxu0 0.0
        %4436 = vmatpush2.xpose.msra.mxu0 0.0
        %4437 = vmatprep.subr.mxu0 0.0
        %4438 = vmatpush2.xpose.msra.mxu0 0.0
        %4439 = vmatprep.subr.mxu0 0.0
        %4440 = vmatpush2.xpose.msra.mxu0 0.0
        %4441 = vmatprep.subr.mxu0 0.0
        %4442 = vmatpush2.xpose.msra.mxu0 0.0
        %4443 = vmatprep.subr.mxu0 0.0
        %4444 = vmatpush2.xpose.msra.mxu0 0.0
        %4445 = vmatprep.subr.mxu0 0.0
        %4446 = vmatpush2.xpose.msra.mxu0 0.0
        %4447 = vmatprep.subr.mxu0 0.0
        %4448 = vmatpush2.xpose.msra.mxu0 0.0
        %4449 = vmatprep.subr.mxu0 0.0
        %4450 = vmatpush2.xpose.msra.mxu0 0.0
        %4451 = vmatprep.subr.mxu0 0.0
        %4452 = vmatpush2.xpose.msra.mxu0 0.0
        %4453 = vmatprep.mubr.f32.mxu0 0.0
        %4454 = vmatmul.mubr.f32.gmra.mxu0 %v4381
        %v4455 = vpop.f32.mrf.mxu0
        %v4456 = vadd.f32 0.0, %v4455
        %v4457 = vpop.f32.mrf.mxu0
        %4458 = vdwg.mxu0
        %v4459 = vsel %vm2125, %v4456, -inf
        %4460 = vmax.xlane.f32.xlu0 %v4459
        %v4461 = vpop.xlane.xlu0 %4460
        %v4462 = vsub.f32 %v4456, %v4461
        %v4463 = vmul.f32 %v4462, 1.442695
        %v4464 = vpow.pop %v4463
        %v4465 = vsel %vm2125, %v4464, 0.0
        %4466 = vadd.xlane.f32.xlu0 %v4465
        %v4467 = vpop.xlane.xlu0 %4466
        %v4468 = vrcp.pop %v4467
        %v4469 = vmul.f32 %v4464, %v4468
        %4470 = vrot.lane.b32.xlu0 %v4378, 96
        %v4471 = vpop.permute.xlu0 %4470
        %4472 = vrot.lane.b32.xlu0 %v4379, 96
        %v4473 = vpop.permute.xlu0 %4472
        %v4477 = vsel %vm2125, %v4469, 0
        %4479 = vmatprep.subr.mxu0 0.0
        %4480 = vmatpush1.msra.mxu0 0.0
        %4481 = vmatprep.subr.mxu0 0.0
        %4482 = vmatpush1.msra.mxu0 0.0
        %4483 = vmatprep.subr.mxu0 0.0
        %4484 = vmatpush1.msra.mxu0 0.0
        %4485 = vmatprep.subr.mxu0 0.0
        %4486 = vmatpush1.msra.mxu0 0.0
        %4487 = vmatprep.subr.mxu0 0.0
        %4488 = vmatpush1.msra.mxu0 0.0
        %4489 = vmatprep.subr.mxu0 0.0
        %4490 = vmatpush1.msra.mxu0 0.0
        %4491 = vmatprep.subr.mxu0 0.0
        %4492 = vmatpush1.msra.mxu0 0.0
        %4493 = vmatprep.subr.mxu0 0.0
        %4494 = vmatpush1.msra.mxu0 0.0
        %4495 = vmatprep.subr.mxu0 0.0
        %4496 = vmatpush1.msra.mxu0 0.0
        %4497 = vmatprep.subr.mxu0 0.0
        %4498 = vmatpush1.msra.mxu0 0.0
        %4499 = vmatprep.subr.mxu0 0.0
        %4500 = vmatpush1.msra.mxu0 0.0
        %4501 = vmatprep.subr.mxu0 0.0
        %4502 = vmatpush1.msra.mxu0 0.0
        %4503 = vmatprep.subr.mxu0 0.0
        %4504 = vmatpush1.msra.mxu0 0.0
        %4505 = vmatprep.subr.mxu0 0.0
        %4506 = vmatpush1.msra.mxu0 0.0
        %4507 = vmatprep.subr.mxu0 0.0
        %4508 = vmatpush1.msra.mxu0 %v4473
        %4509 = vmatprep.subr.mxu0 0.0
        %4510 = vmatpush1.msra.mxu0 %v4471
        %4511 = vmatprep.subr.mxu0 0.0
        %4512 = vmatpush2.msra.mxu0 0.0
        %4513 = vmatprep.subr.mxu0 0.0
        %4514 = vmatpush2.msra.mxu0 0.0
        %4515 = vmatprep.subr.mxu0 0.0
        %4516 = vmatpush2.msra.mxu0 0.0
        %4517 = vmatprep.subr.mxu0 0.0
        %4518 = vmatpush2.msra.mxu0 0.0
        %4519 = vmatprep.subr.mxu0 0.0
        %4520 = vmatpush2.msra.mxu0 0.0
        %4521 = vmatprep.subr.mxu0 0.0
        %4522 = vmatpush2.msra.mxu0 0.0
        %4523 = vmatprep.subr.mxu0 0.0
        %4524 = vmatpush2.msra.mxu0 0.0
        %4525 = vmatprep.subr.mxu0 0.0
        %4526 = vmatpush2.msra.mxu0 0.0
        %4527 = vmatprep.subr.mxu0 0.0
        %4528 = vmatpush2.msra.mxu0 0.0
        %4529 = vmatprep.subr.mxu0 0.0
        %4530 = vmatpush2.msra.mxu0 0.0
        %4531 = vmatprep.subr.mxu0 0.0
        %4532 = vmatpush2.msra.mxu0 0.0
        %4533 = vmatprep.subr.mxu0 0.0
        %4534 = vmatpush2.msra.mxu0 0.0
        %4535 = vmatprep.subr.mxu0 0.0
        %4536 = vmatpush2.msra.mxu0 0.0
        %4537 = vmatprep.subr.mxu0 0.0
        %4538 = vmatpush2.msra.mxu0 0.0
        %4539 = vmatprep.subr.mxu0 0.0
        %4540 = vmatpush2.msra.mxu0 0.0
        %4541 = vmatprep.subr.mxu0 0.0
        %4542 = vmatpush2.msra.mxu0 0.0
        %4543 = vmatprep.mubr.f32.mxu0 0.0
        %4544 = vmatmul.mubr.f32.gmra.mxu0 %v4477
        %v4545 = vpop.f32.mrf.mxu0
        %v4546 = vadd.f32 0.0, %v4545
        %v4547 = vpop.f32.mrf.mxu0
        %4548 = vdwg.mxu0
        %v4549 = vld [vmem:[#allocation16] sm:$0xff]
        %4550 = vrot.lane.b32.xlu0 %v4377, 120
        %v4551 = vpop.permute.xlu0 %4550
        %4552 = vrot.lane.b32.xlu0 %v4378, 120
        %v4553 = vpop.permute.xlu0 %4552
        %4554 = vrot.lane.b32.xlu0 %v4379, 120
        %v4555 = vpop.permute.xlu0 %4554
        %v4556 = vsel %vm983, %v4551, 0
        %v4558 = vsel %vm983, %v4553, 0
        %v4560 = vsel %vm983, %v4555, 0
        %4562 = vmatprep.subr.mxu0 0.0
        %4563 = vmatpush1.xpose.msra.mxu0 0.0
        %4564 = vmatprep.subr.mxu0 0.0
        %4565 = vmatpush1.xpose.msra.mxu0 0.0
        %4566 = vmatprep.subr.mxu0 0.0
        %4567 = vmatpush1.xpose.msra.mxu0 0.0
        %4568 = vmatprep.subr.mxu0 0.0
        %4569 = vmatpush1.xpose.msra.mxu0 0.0
        %4570 = vmatprep.subr.mxu0 0.0
        %4571 = vmatpush1.xpose.msra.mxu0 0.0
        %4572 = vmatprep.subr.mxu0 0.0
        %4573 = vmatpush1.xpose.msra.mxu0 0.0
        %4574 = vmatprep.subr.mxu0 0.0
        %4575 = vmatpush1.xpose.msra.mxu0 0.0
        %4576 = vmatprep.subr.mxu0 0.0
        %4577 = vmatpush1.xpose.msra.mxu0 0.0
        %4578 = vmatprep.subr.mxu0 0.0
        %4579 = vmatpush1.xpose.msra.mxu0 0.0
        %4580 = vmatprep.subr.mxu0 0.0
        %4581 = vmatpush1.xpose.msra.mxu0 0.0
        %4582 = vmatprep.subr.mxu0 0.0
        %4583 = vmatpush1.xpose.msra.mxu0 0.0
        %4584 = vmatprep.subr.mxu0 0.0
        %4585 = vmatpush1.xpose.msra.mxu0 0.0
        %4586 = vmatprep.subr.mxu0 0.0
        %4587 = vmatpush1.xpose.msra.mxu0 0.0
        %4588 = vmatprep.subr.mxu0 0.0
        %4589 = vmatpush1.xpose.msra.mxu0 0.0
        %4590 = vmatprep.subr.mxu0 0.0
        %4591 = vmatpush1.xpose.msra.mxu0 %v4560
        %4592 = vmatprep.subr.mxu0 0.0
        %4593 = vmatpush1.xpose.msra.mxu0 %v4558
        %4594 = vmatprep.subr.mxu0 0.0
        %4595 = vmatpush2.xpose.msra.mxu0 0.0
        %4596 = vmatprep.subr.mxu0 0.0
        %4597 = vmatpush2.xpose.msra.mxu0 0.0
        %4598 = vmatprep.subr.mxu0 0.0
        %4599 = vmatpush2.xpose.msra.mxu0 0.0
        %4600 = vmatprep.subr.mxu0 0.0
        %4601 = vmatpush2.xpose.msra.mxu0 0.0
        %4602 = vmatprep.subr.mxu0 0.0
        %4603 = vmatpush2.xpose.msra.mxu0 0.0
        %4604 = vmatprep.subr.mxu0 0.0
        %4605 = vmatpush2.xpose.msra.mxu0 0.0
        %4606 = vmatprep.subr.mxu0 0.0
        %4607 = vmatpush2.xpose.msra.mxu0 0.0
        %4608 = vmatprep.subr.mxu0 0.0
        %4609 = vmatpush2.xpose.msra.mxu0 0.0
        %4610 = vmatprep.subr.mxu0 0.0
        %4611 = vmatpush2.xpose.msra.mxu0 0.0
        %4612 = vmatprep.subr.mxu0 0.0
        %4613 = vmatpush2.xpose.msra.mxu0 0.0
        %4614 = vmatprep.subr.mxu0 0.0
        %4615 = vmatpush2.xpose.msra.mxu0 0.0
        %4616 = vmatprep.subr.mxu0 0.0
        %4617 = vmatpush2.xpose.msra.mxu0 0.0
        %4618 = vmatprep.subr.mxu0 0.0
        %4619 = vmatpush2.xpose.msra.mxu0 0.0
        %4620 = vmatprep.subr.mxu0 0.0
        %4621 = vmatpush2.xpose.msra.mxu0 0.0
        %4622 = vmatprep.subr.mxu0 0.0
        %4623 = vmatpush2.xpose.msra.mxu0 0.0
        %4624 = vmatprep.subr.mxu0 0.0
        %4625 = vmatpush2.xpose.msra.mxu0 0.0
        %4626 = vmatprep.mubr.f32.mxu0 0.0
        %4627 = vmatmul.mubr.f32.gmra.mxu0 %v4556
        %v4628 = vpop.f32.mrf.mxu0
        %v4629 = vadd.f32 0.0, %v4628
        %v4630 = vpop.f32.mrf.mxu0
        %4631 = vdwg.mxu0
        %v4632 = vsel %vm2125, %v4629, -inf
        %4633 = vmax.xlane.f32.xlu0 %v4632
        %v4634 = vpop.xlane.xlu0 %4633
        %v4635 = vsub.f32 %v4629, %v4634
        %v4636 = vmul.f32 %v4635, 1.442695
        %v4637 = vpow.pop %v4636
        %v4638 = vsel %vm2125, %v4637, 0.0
        %4639 = vadd.xlane.f32.xlu0 %v4638
        %v4640 = vpop.xlane.xlu0 %4639
        %v4641 = vrcp.pop %v4640
        %v4642 = vmul.f32 %v4637, %v4641
        %4643 = vrot.lane.b32.xlu0 %v4378, 88
        %v4644 = vpop.permute.xlu0 %4643
        %4645 = vrot.lane.b32.xlu0 %v4379, 88
        %v4646 = vpop.permute.xlu0 %4645
        %v4650 = vsel %vm2125, %v4642, 0
        %4652 = vmatprep.subr.mxu0 0.0
        %4653 = vmatpush1.msra.mxu0 0.0
        %4654 = vmatprep.subr.mxu0 0.0
        %4655 = vmatpush1.msra.mxu0 0.0
        %4656 = vmatprep.subr.mxu0 0.0
        %4657 = vmatpush1.msra.mxu0 0.0
        %4658 = vmatprep.subr.mxu0 0.0
        %4659 = vmatpush1.msra.mxu0 0.0
        %4660 = vmatprep.subr.mxu0 0.0
        %4661 = vmatpush1.msra.mxu0 0.0
        %4662 = vmatprep.subr.mxu0 0.0
        %4663 = vmatpush1.msra.mxu0 0.0
        %4664 = vmatprep.subr.mxu0 0.0
        %4665 = vmatpush1.msra.mxu0 0.0
        %4666 = vmatprep.subr.mxu0 0.0
        %4667 = vmatpush1.msra.mxu0 0.0
        %4668 = vmatprep.subr.mxu0 0.0
        %4669 = vmatpush1.msra.mxu0 0.0
        %4670 = vmatprep.subr.mxu0 0.0
        %4671 = vmatpush1.msra.mxu0 0.0
        %4672 = vmatprep.subr.mxu0 0.0
        %4673 = vmatpush1.msra.mxu0 0.0
        %4674 = vmatprep.subr.mxu0 0.0
        %4675 = vmatpush1.msra.mxu0 0.0
        %4676 = vmatprep.subr.mxu0 0.0
        %4677 = vmatpush1.msra.mxu0 0.0
        %4678 = vmatprep.subr.mxu0 0.0
        %4679 = vmatpush1.msra.mxu0 0.0
        %4680 = vmatprep.subr.mxu0 0.0
        %4681 = vmatpush1.msra.mxu0 %v4646
        %4682 = vmatprep.subr.mxu0 0.0
        %4683 = vmatpush1.msra.mxu0 %v4644
        %4684 = vmatprep.subr.mxu0 0.0
        %4685 = vmatpush2.msra.mxu0 0.0
        %4686 = vmatprep.subr.mxu0 0.0
        %4687 = vmatpush2.msra.mxu0 0.0
        %4688 = vmatprep.subr.mxu0 0.0
        %4689 = vmatpush2.msra.mxu0 0.0
        %4690 = vmatprep.subr.mxu0 0.0
        %4691 = vmatpush2.msra.mxu0 0.0
        %4692 = vmatprep.subr.mxu0 0.0
        %4693 = vmatpush2.msra.mxu0 0.0
        %4694 = vmatprep.subr.mxu0 0.0
        %4695 = vmatpush2.msra.mxu0 0.0
        %4696 = vmatprep.subr.mxu0 0.0
        %4697 = vmatpush2.msra.mxu0 0.0
        %4698 = vmatprep.subr.mxu0 0.0
        %4699 = vmatpush2.msra.mxu0 0.0
        %4700 = vmatprep.subr.mxu0 0.0
        %4701 = vmatpush2.msra.mxu0 0.0
        %4702 = vmatprep.subr.mxu0 0.0
        %4703 = vmatpush2.msra.mxu0 0.0
        %4704 = vmatprep.subr.mxu0 0.0
        %4705 = vmatpush2.msra.mxu0 0.0
        %4706 = vmatprep.subr.mxu0 0.0
        %4707 = vmatpush2.msra.mxu0 0.0
        %4708 = vmatprep.subr.mxu0 0.0
        %4709 = vmatpush2.msra.mxu0 0.0
        %4710 = vmatprep.subr.mxu0 0.0
        %4711 = vmatpush2.msra.mxu0 0.0
        %4712 = vmatprep.subr.mxu0 0.0
        %4713 = vmatpush2.msra.mxu0 0.0
        %4714 = vmatprep.subr.mxu0 0.0
        %4715 = vmatpush2.msra.mxu0 0.0
        %4716 = vmatprep.mubr.f32.mxu0 0.0
        %4717 = vmatmul.mubr.f32.gmra.mxu0 %v4650
        %v4718 = vpop.f32.mrf.mxu0
        %v4719 = vadd.f32 0.0, %v4718
        %v4720 = vpop.f32.mrf.mxu0
        %4721 = vdwg.mxu0
        %v4722 = vld [vmem:[%s2389] sm:$0xff]
        %v4724 = vsel %vm983, %v4719, 0
        %4726 = vmatprep.subr.mxu0 0.0
        %4727 = vmatpush1.msra.mxu0 0.0
        %4728 = vmatprep.subr.mxu0 0.0
        %4729 = vmatpush1.msra.mxu0 0.0
        %4730 = vmatprep.subr.mxu0 0.0
        %4731 = vmatpush1.msra.mxu0 0.0
        %4732 = vmatprep.subr.mxu0 0.0
        %4733 = vmatpush1.msra.mxu0 0.0
        %4734 = vmatprep.subr.mxu0 0.0
        %4735 = vmatpush1.msra.mxu0 0.0
        %4736 = vmatprep.subr.mxu0 0.0
        %4737 = vmatpush1.msra.mxu0 0.0
        %4738 = vmatprep.subr.mxu0 0.0
        %4739 = vmatpush1.msra.mxu0 0.0
        %4740 = vmatprep.subr.mxu0 0.0
        %4741 = vmatpush1.msra.mxu0 0.0
        %4742 = vmatprep.subr.mxu0 0.0
        %4743 = vmatpush1.msra.mxu0 0.0
        %4744 = vmatprep.subr.mxu0 0.0
        %4745 = vmatpush1.msra.mxu0 0.0
        %4746 = vmatprep.subr.mxu0 0.0
        %4747 = vmatpush1.msra.mxu0 0.0
        %4748 = vmatprep.subr.mxu0 0.0
        %4749 = vmatpush1.msra.mxu0 0.0
        %4750 = vmatprep.subr.mxu0 0.0
        %4751 = vmatpush1.msra.mxu0 0.0
        %4752 = vmatprep.subr.mxu0 0.0
        %4753 = vmatpush1.msra.mxu0 0.0
        %4754 = vmatprep.subr.mxu0 0.0
        %4755 = vmatpush1.msra.mxu0 0.0
        %4756 = vmatprep.subr.mxu0 0.0
        %4757 = vmatpush1.msra.mxu0 %v4722
        %4758 = vmatprep.subr.mxu0 0.0
        %4759 = vmatpush2.msra.mxu0 0.0
        %4760 = vmatprep.subr.mxu0 0.0
        %4761 = vmatpush2.msra.mxu0 0.0
        %4762 = vmatprep.subr.mxu0 0.0
        %4763 = vmatpush2.msra.mxu0 0.0
        %4764 = vmatprep.subr.mxu0 0.0
        %4765 = vmatpush2.msra.mxu0 0.0
        %4766 = vmatprep.subr.mxu0 0.0
        %4767 = vmatpush2.msra.mxu0 0.0
        %4768 = vmatprep.subr.mxu0 0.0
        %4769 = vmatpush2.msra.mxu0 0.0
        %4770 = vmatprep.subr.mxu0 0.0
        %4771 = vmatpush2.msra.mxu0 0.0
        %4772 = vmatprep.subr.mxu0 0.0
        %4773 = vmatpush2.msra.mxu0 0.0
        %4774 = vmatprep.subr.mxu0 0.0
        %4775 = vmatpush2.msra.mxu0 0.0
        %4776 = vmatprep.subr.mxu0 0.0
        %4777 = vmatpush2.msra.mxu0 0.0
        %4778 = vmatprep.subr.mxu0 0.0
        %4779 = vmatpush2.msra.mxu0 0.0
        %4780 = vmatprep.subr.mxu0 0.0
        %4781 = vmatpush2.msra.mxu0 0.0
        %4782 = vmatprep.subr.mxu0 0.0
        %4783 = vmatpush2.msra.mxu0 0.0
        %4784 = vmatprep.subr.mxu0 0.0
        %4785 = vmatpush2.msra.mxu0 0.0
        %4786 = vmatprep.subr.mxu0 0.0
        %4787 = vmatpush2.msra.mxu0 0.0
        %4788 = vmatprep.subr.mxu0 0.0
        %4789 = vmatpush2.msra.mxu0 0.0
        %4790 = vmatprep.mubr.f32.mxu0 0.0
        %4791 = vmatmul.mubr.f32.gmra.mxu0 %v4724
        %v4792 = vpop.f32.mrf.mxu0
        %v4793 = vadd.f32 0.0, %v4792
        %v4794 = vpop.f32.mrf.mxu0
        %4795 = vdwg.mxu0
        %v4797 = vsel %vm983, %v4546, 0
        %4799 = vmatprep.subr.mxu0 0.0
        %4800 = vmatpush1.msra.mxu0 0.0
        %4801 = vmatprep.subr.mxu0 0.0
        %4802 = vmatpush1.msra.mxu0 0.0
        %4803 = vmatprep.subr.mxu0 0.0
        %4804 = vmatpush1.msra.mxu0 0.0
        %4805 = vmatprep.subr.mxu0 0.0
        %4806 = vmatpush1.msra.mxu0 0.0
        %4807 = vmatprep.subr.mxu0 0.0
        %4808 = vmatpush1.msra.mxu0 0.0
        %4809 = vmatprep.subr.mxu0 0.0
        %4810 = vmatpush1.msra.mxu0 0.0
        %4811 = vmatprep.subr.mxu0 0.0
        %4812 = vmatpush1.msra.mxu0 0.0
        %4813 = vmatprep.subr.mxu0 0.0
        %4814 = vmatpush1.msra.mxu0 0.0
        %4815 = vmatprep.subr.mxu0 0.0
        %4816 = vmatpush1.msra.mxu0 0.0
        %4817 = vmatprep.subr.mxu0 0.0
        %4818 = vmatpush1.msra.mxu0 0.0
        %4819 = vmatprep.subr.mxu0 0.0
        %4820 = vmatpush1.msra.mxu0 0.0
        %4821 = vmatprep.subr.mxu0 0.0
        %4822 = vmatpush1.msra.mxu0 0.0
        %4823 = vmatprep.subr.mxu0 0.0
        %4824 = vmatpush1.msra.mxu0 0.0
        %4825 = vmatprep.subr.mxu0 0.0
        %4826 = vmatpush1.msra.mxu0 0.0
        %4827 = vmatprep.subr.mxu0 0.0
        %4828 = vmatpush1.msra.mxu0 0.0
        %4829 = vmatprep.subr.mxu0 0.0
        %4830 = vmatpush1.msra.mxu0 %v4549
        %4831 = vmatprep.subr.mxu0 0.0
        %4832 = vmatpush2.msra.mxu0 0.0
        %4833 = vmatprep.subr.mxu0 0.0
        %4834 = vmatpush2.msra.mxu0 0.0
        %4835 = vmatprep.subr.mxu0 0.0
        %4836 = vmatpush2.msra.mxu0 0.0
        %4837 = vmatprep.subr.mxu0 0.0
        %4838 = vmatpush2.msra.mxu0 0.0
        %4839 = vmatprep.subr.mxu0 0.0
        %4840 = vmatpush2.msra.mxu0 0.0
        %4841 = vmatprep.subr.mxu0 0.0
        %4842 = vmatpush2.msra.mxu0 0.0
        %4843 = vmatprep.subr.mxu0 0.0
        %4844 = vmatpush2.msra.mxu0 0.0
        %4845 = vmatprep.subr.mxu0 0.0
        %4846 = vmatpush2.msra.mxu0 0.0
        %4847 = vmatprep.subr.mxu0 0.0
        %4848 = vmatpush2.msra.mxu0 0.0
        %4849 = vmatprep.subr.mxu0 0.0
        %4850 = vmatpush2.msra.mxu0 0.0
        %4851 = vmatprep.subr.mxu0 0.0
        %4852 = vmatpush2.msra.mxu0 0.0
        %4853 = vmatprep.subr.mxu0 0.0
        %4854 = vmatpush2.msra.mxu0 0.0
        %4855 = vmatprep.subr.mxu0 0.0
        %4856 = vmatpush2.msra.mxu0 0.0
        %4857 = vmatprep.subr.mxu0 0.0
        %4858 = vmatpush2.msra.mxu0 0.0
        %4859 = vmatprep.subr.mxu0 0.0
        %4860 = vmatpush2.msra.mxu0 0.0
        %4861 = vmatprep.subr.mxu0 0.0
        %4862 = vmatpush2.msra.mxu0 0.0
        %4863 = vmatprep.mubr.f32.mxu0 0.0
        %4864 = vmatmul.mubr.f32.gmra.mxu0 %v4797
        %v4865 = vpop.f32.mrf.mxu0
        %v4866 = vadd.f32 %v4793, %v4865
        %v4867 = vpop.f32.mrf.mxu0
        %4868 = vdwg.mxu0
        %4869 = vrot.lane.b32.xlu0 %v4377, 112
        %v4870 = vpop.permute.xlu0 %4869
        %4871 = vrot.lane.b32.xlu0 %v4378, 112
        %v4872 = vpop.permute.xlu0 %4871
        %4873 = vrot.lane.b32.xlu0 %v4379, 112
        %v4874 = vpop.permute.xlu0 %4873
        %v4875 = vsel %vm983, %v4870, 0
        %v4877 = vsel %vm983, %v4872, 0
        %v4879 = vsel %vm983, %v4874, 0
        %4881 = vmatprep.subr.mxu0 0.0
        %4882 = vmatpush1.xpose.msra.mxu0 0.0
        %4883 = vmatprep.subr.mxu0 0.0
        %4884 = vmatpush1.xpose.msra.mxu0 0.0
        %4885 = vmatprep.subr.mxu0 0.0
        %4886 = vmatpush1.xpose.msra.mxu0 0.0
        %4887 = vmatprep.subr.mxu0 0.0
        %4888 = vmatpush1.xpose.msra.mxu0 0.0
        %4889 = vmatprep.subr.mxu0 0.0
        %4890 = vmatpush1.xpose.msra.mxu0 0.0
        %4891 = vmatprep.subr.mxu0 0.0
        %4892 = vmatpush1.xpose.msra.mxu0 0.0
        %4893 = vmatprep.subr.mxu0 0.0
        %4894 = vmatpush1.xpose.msra.mxu0 0.0
        %4895 = vmatprep.subr.mxu0 0.0
        %4896 = vmatpush1.xpose.msra.mxu0 0.0
        %4897 = vmatprep.subr.mxu0 0.0
        %4898 = vmatpush1.xpose.msra.mxu0 0.0
        %4899 = vmatprep.subr.mxu0 0.0
        %4900 = vmatpush1.xpose.msra.mxu0 0.0
        %4901 = vmatprep.subr.mxu0 0.0
        %4902 = vmatpush1.xpose.msra.mxu0 0.0
        %4903 = vmatprep.subr.mxu0 0.0
        %4904 = vmatpush1.xpose.msra.mxu0 0.0
        %4905 = vmatprep.subr.mxu0 0.0
        %4906 = vmatpush1.xpose.msra.mxu0 0.0
        %4907 = vmatprep.subr.mxu0 0.0
        %4908 = vmatpush1.xpose.msra.mxu0 0.0
        %4909 = vmatprep.subr.mxu0 0.0
        %4910 = vmatpush1.xpose.msra.mxu0 %v4879
        %4911 = vmatprep.subr.mxu0 0.0
        %4912 = vmatpush1.xpose.msra.mxu0 %v4877
        %4913 = vmatprep.subr.mxu0 0.0
        %4914 = vmatpush2.xpose.msra.mxu0 0.0
        %4915 = vmatprep.subr.mxu0 0.0
        %4916 = vmatpush2.xpose.msra.mxu0 0.0
        %4917 = vmatprep.subr.mxu0 0.0
        %4918 = vmatpush2.xpose.msra.mxu0 0.0
        %4919 = vmatprep.subr.mxu0 0.0
        %4920 = vmatpush2.xpose.msra.mxu0 0.0
        %4921 = vmatprep.subr.mxu0 0.0
        %4922 = vmatpush2.xpose.msra.mxu0 0.0
        %4923 = vmatprep.subr.mxu0 0.0
        %4924 = vmatpush2.xpose.msra.mxu0 0.0
        %4925 = vmatprep.subr.mxu0 0.0
        %4926 = vmatpush2.xpose.msra.mxu0 0.0
        %4927 = vmatprep.subr.mxu0 0.0
        %4928 = vmatpush2.xpose.msra.mxu0 0.0
        %4929 = vmatprep.subr.mxu0 0.0
        %4930 = vmatpush2.xpose.msra.mxu0 0.0
        %4931 = vmatprep.subr.mxu0 0.0
        %4932 = vmatpush2.xpose.msra.mxu0 0.0
        %4933 = vmatprep.subr.mxu0 0.0
        %4934 = vmatpush2.xpose.msra.mxu0 0.0
        %4935 = vmatprep.subr.mxu0 0.0
        %4936 = vmatpush2.xpose.msra.mxu0 0.0
        %4937 = vmatprep.subr.mxu0 0.0
        %4938 = vmatpush2.xpose.msra.mxu0 0.0
        %4939 = vmatprep.subr.mxu0 0.0
        %4940 = vmatpush2.xpose.msra.mxu0 0.0
        %4941 = vmatprep.subr.mxu0 0.0
        %4942 = vmatpush2.xpose.msra.mxu0 0.0
        %4943 = vmatprep.subr.mxu0 0.0
        %4944 = vmatpush2.xpose.msra.mxu0 0.0
        %4945 = vmatprep.mubr.f32.mxu0 0.0
        %4946 = vmatmul.mubr.f32.gmra.mxu0 %v4875
        %v4947 = vpop.f32.mrf.mxu0
        %v4948 = vadd.f32 0.0, %v4947
        %v4949 = vpop.f32.mrf.mxu0
        %4950 = vdwg.mxu0
        %v4951 = vsel %vm2125, %v4948, -inf
        %4952 = vmax.xlane.f32.xlu0 %v4951
        %v4953 = vpop.xlane.xlu0 %4952
        %v4954 = vsub.f32 %v4948, %v4953
        %v4955 = vmul.f32 %v4954, 1.442695
        %v4956 = vpow.pop %v4955
        %v4957 = vsel %vm2125, %v4956, 0.0
        %4958 = vadd.xlane.f32.xlu0 %v4957
        %v4959 = vpop.xlane.xlu0 %4958
        %v4960 = vrcp.pop %v4959
        %v4961 = vmul.f32 %v4956, %v4960
        %4962 = vrot.lane.b32.xlu0 %v4378, 80
        %v4963 = vpop.permute.xlu0 %4962
        %4964 = vrot.lane.b32.xlu0 %v4379, 80
        %v4965 = vpop.permute.xlu0 %4964
        %v4969 = vsel %vm2125, %v4961, 0
        %4971 = vmatprep.subr.mxu0 0.0
        %4972 = vmatpush1.msra.mxu0 0.0
        %4973 = vmatprep.subr.mxu0 0.0
        %4974 = vmatpush1.msra.mxu0 0.0
        %4975 = vmatprep.subr.mxu0 0.0
        %4976 = vmatpush1.msra.mxu0 0.0
        %4977 = vmatprep.subr.mxu0 0.0
        %4978 = vmatpush1.msra.mxu0 0.0
        %4979 = vmatprep.subr.mxu0 0.0
        %4980 = vmatpush1.msra.mxu0 0.0
        %4981 = vmatprep.subr.mxu0 0.0
        %4982 = vmatpush1.msra.mxu0 0.0
        %4983 = vmatprep.subr.mxu0 0.0
        %4984 = vmatpush1.msra.mxu0 0.0
        %4985 = vmatprep.subr.mxu0 0.0
        %4986 = vmatpush1.msra.mxu0 0.0
        %4987 = vmatprep.subr.mxu0 0.0
        %4988 = vmatpush1.msra.mxu0 0.0
        %4989 = vmatprep.subr.mxu0 0.0
        %4990 = vmatpush1.msra.mxu0 0.0
        %4991 = vmatprep.subr.mxu0 0.0
        %4992 = vmatpush1.msra.mxu0 0.0
        %4993 = vmatprep.subr.mxu0 0.0
        %4994 = vmatpush1.msra.mxu0 0.0
        %4995 = vmatprep.subr.mxu0 0.0
        %4996 = vmatpush1.msra.mxu0 0.0
        %4997 = vmatprep.subr.mxu0 0.0
        %4998 = vmatpush1.msra.mxu0 0.0
        %4999 = vmatprep.subr.mxu0 0.0
        %5000 = vmatpush1.msra.mxu0 %v4965
        %5001 = vmatprep.subr.mxu0 0.0
        %5002 = vmatpush1.msra.mxu0 %v4963
        %5003 = vmatprep.subr.mxu0 0.0
        %5004 = vmatpush2.msra.mxu0 0.0
        %5005 = vmatprep.subr.mxu0 0.0
        %5006 = vmatpush2.msra.mxu0 0.0
        %5007 = vmatprep.subr.mxu0 0.0
        %5008 = vmatpush2.msra.mxu0 0.0
        %5009 = vmatprep.subr.mxu0 0.0
        %5010 = vmatpush2.msra.mxu0 0.0
        %5011 = vmatprep.subr.mxu0 0.0
        %5012 = vmatpush2.msra.mxu0 0.0
        %5013 = vmatprep.subr.mxu0 0.0
        %5014 = vmatpush2.msra.mxu0 0.0
        %5015 = vmatprep.subr.mxu0 0.0
        %5016 = vmatpush2.msra.mxu0 0.0
        %5017 = vmatprep.subr.mxu0 0.0
        %5018 = vmatpush2.msra.mxu0 0.0
        %5019 = vmatprep.subr.mxu0 0.0
        %5020 = vmatpush2.msra.mxu0 0.0
        %5021 = vmatprep.subr.mxu0 0.0
        %5022 = vmatpush2.msra.mxu0 0.0
        %5023 = vmatprep.subr.mxu0 0.0
        %5024 = vmatpush2.msra.mxu0 0.0
        %5025 = vmatprep.subr.mxu0 0.0
        %5026 = vmatpush2.msra.mxu0 0.0
        %5027 = vmatprep.subr.mxu0 0.0
        %5028 = vmatpush2.msra.mxu0 0.0
        %5029 = vmatprep.subr.mxu0 0.0
        %5030 = vmatpush2.msra.mxu0 0.0
        %5031 = vmatprep.subr.mxu0 0.0
        %5032 = vmatpush2.msra.mxu0 0.0
        %5033 = vmatprep.subr.mxu0 0.0
        %5034 = vmatpush2.msra.mxu0 0.0
        %5035 = vmatprep.mubr.f32.mxu0 0.0
        %5036 = vmatmul.mubr.f32.gmra.mxu0 %v4969
        %v5037 = vpop.f32.mrf.mxu0
        %v5038 = vadd.f32 0.0, %v5037
        %v5039 = vpop.f32.mrf.mxu0
        %5040 = vdwg.mxu0
        %v5041 = vld [vmem:[%s2709] sm:$0xff]
        %v5043 = vsel %vm983, %v5038, 0
        %5045 = vmatprep.subr.mxu0 0.0
        %5046 = vmatpush1.msra.mxu0 0.0
        %5047 = vmatprep.subr.mxu0 0.0
        %5048 = vmatpush1.msra.mxu0 0.0
        %5049 = vmatprep.subr.mxu0 0.0
        %5050 = vmatpush1.msra.mxu0 0.0
        %5051 = vmatprep.subr.mxu0 0.0
        %5052 = vmatpush1.msra.mxu0 0.0
        %5053 = vmatprep.subr.mxu0 0.0
        %5054 = vmatpush1.msra.mxu0 0.0
        %5055 = vmatprep.subr.mxu0 0.0
        %5056 = vmatpush1.msra.mxu0 0.0
        %5057 = vmatprep.subr.mxu0 0.0
        %5058 = vmatpush1.msra.mxu0 0.0
        %5059 = vmatprep.subr.mxu0 0.0
        %5060 = vmatpush1.msra.mxu0 0.0
        %5061 = vmatprep.subr.mxu0 0.0
        %5062 = vmatpush1.msra.mxu0 0.0
        %5063 = vmatprep.subr.mxu0 0.0
        %5064 = vmatpush1.msra.mxu0 0.0
        %5065 = vmatprep.subr.mxu0 0.0
        %5066 = vmatpush1.msra.mxu0 0.0
        %5067 = vmatprep.subr.mxu0 0.0
        %5068 = vmatpush1.msra.mxu0 0.0
        %5069 = vmatprep.subr.mxu0 0.0
        %5070 = vmatpush1.msra.mxu0 0.0
        %5071 = vmatprep.subr.mxu0 0.0
        %5072 = vmatpush1.msra.mxu0 0.0
        %5073 = vmatprep.subr.mxu0 0.0
        %5074 = vmatpush1.msra.mxu0 0.0
        %5075 = vmatprep.subr.mxu0 0.0
        %5076 = vmatpush1.msra.mxu0 %v5041
        %5077 = vmatprep.subr.mxu0 0.0
        %5078 = vmatpush2.msra.mxu0 0.0
        %5079 = vmatprep.subr.mxu0 0.0
        %5080 = vmatpush2.msra.mxu0 0.0
        %5081 = vmatprep.subr.mxu0 0.0
        %5082 = vmatpush2.msra.mxu0 0.0
        %5083 = vmatprep.subr.mxu0 0.0
        %5084 = vmatpush2.msra.mxu0 0.0
        %5085 = vmatprep.subr.mxu0 0.0
        %5086 = vmatpush2.msra.mxu0 0.0
        %5087 = vmatprep.subr.mxu0 0.0
        %5088 = vmatpush2.msra.mxu0 0.0
        %5089 = vmatprep.subr.mxu0 0.0
        %5090 = vmatpush2.msra.mxu0 0.0
        %5091 = vmatprep.subr.mxu0 0.0
        %5092 = vmatpush2.msra.mxu0 0.0
        %5093 = vmatprep.subr.mxu0 0.0
        %5094 = vmatpush2.msra.mxu0 0.0
        %5095 = vmatprep.subr.mxu0 0.0
        %5096 = vmatpush2.msra.mxu0 0.0
        %5097 = vmatprep.subr.mxu0 0.0
        %5098 = vmatpush2.msra.mxu0 0.0
        %5099 = vmatprep.subr.mxu0 0.0
        %5100 = vmatpush2.msra.mxu0 0.0
        %5101 = vmatprep.subr.mxu0 0.0
        %5102 = vmatpush2.msra.mxu0 0.0
        %5103 = vmatprep.subr.mxu0 0.0
        %5104 = vmatpush2.msra.mxu0 0.0
        %5105 = vmatprep.subr.mxu0 0.0
        %5106 = vmatpush2.msra.mxu0 0.0
        %5107 = vmatprep.subr.mxu0 0.0
        %5108 = vmatpush2.msra.mxu0 0.0
        %5109 = vmatprep.mubr.f32.mxu0 0.0
        %5110 = vmatmul.mubr.f32.gmra.mxu0 %v5043
        %v5111 = vpop.f32.mrf.mxu0
        %v5112 = vadd.f32 0.0, %v5111
        %v5113 = vpop.f32.mrf.mxu0
        %5114 = vdwg.mxu0
        %v5115 = vadd.f32 %v4866, %v5112
        %5116 = vrot.lane.b32.xlu0 %v4377, 104
        %v5117 = vpop.permute.xlu0 %5116
        %5118 = vrot.lane.b32.xlu0 %v4378, 104
        %v5119 = vpop.permute.xlu0 %5118
        %5120 = vrot.lane.b32.xlu0 %v4379, 104
        %v5121 = vpop.permute.xlu0 %5120
        %v5122 = vsel %vm983, %v5117, 0
        %v5124 = vsel %vm983, %v5119, 0
        %v5126 = vsel %vm983, %v5121, 0
        %5128 = vmatprep.subr.mxu0 0.0
        %5129 = vmatpush1.xpose.msra.mxu0 0.0
        %5130 = vmatprep.subr.mxu0 0.0
        %5131 = vmatpush1.xpose.msra.mxu0 0.0
        %5132 = vmatprep.subr.mxu0 0.0
        %5133 = vmatpush1.xpose.msra.mxu0 0.0
        %5134 = vmatprep.subr.mxu0 0.0
        %5135 = vmatpush1.xpose.msra.mxu0 0.0
        %5136 = vmatprep.subr.mxu0 0.0
        %5137 = vmatpush1.xpose.msra.mxu0 0.0
        %5138 = vmatprep.subr.mxu0 0.0
        %5139 = vmatpush1.xpose.msra.mxu0 0.0
        %5140 = vmatprep.subr.mxu0 0.0
        %5141 = vmatpush1.xpose.msra.mxu0 0.0
        %5142 = vmatprep.subr.mxu0 0.0
        %5143 = vmatpush1.xpose.msra.mxu0 0.0
        %5144 = vmatprep.subr.mxu0 0.0
        %5145 = vmatpush1.xpose.msra.mxu0 0.0
        %5146 = vmatprep.subr.mxu0 0.0
        %5147 = vmatpush1.xpose.msra.mxu0 0.0
        %5148 = vmatprep.subr.mxu0 0.0
        %5149 = vmatpush1.xpose.msra.mxu0 0.0
        %5150 = vmatprep.subr.mxu0 0.0
        %5151 = vmatpush1.xpose.msra.mxu0 0.0
        %5152 = vmatprep.subr.mxu0 0.0
        %5153 = vmatpush1.xpose.msra.mxu0 0.0
        %5154 = vmatprep.subr.mxu0 0.0
        %5155 = vmatpush1.xpose.msra.mxu0 0.0
        %5156 = vmatprep.subr.mxu0 0.0
        %5157 = vmatpush1.xpose.msra.mxu0 %v5126
        %5158 = vmatprep.subr.mxu0 0.0
        %5159 = vmatpush1.xpose.msra.mxu0 %v5124
        %5160 = vmatprep.subr.mxu0 0.0
        %5161 = vmatpush2.xpose.msra.mxu0 0.0
        %5162 = vmatprep.subr.mxu0 0.0
        %5163 = vmatpush2.xpose.msra.mxu0 0.0
        %5164 = vmatprep.subr.mxu0 0.0
        %5165 = vmatpush2.xpose.msra.mxu0 0.0
        %5166 = vmatprep.subr.mxu0 0.0
        %5167 = vmatpush2.xpose.msra.mxu0 0.0
        %5168 = vmatprep.subr.mxu0 0.0
        %5169 = vmatpush2.xpose.msra.mxu0 0.0
        %5170 = vmatprep.subr.mxu0 0.0
        %5171 = vmatpush2.xpose.msra.mxu0 0.0
        %5172 = vmatprep.subr.mxu0 0.0
        %5173 = vmatpush2.xpose.msra.mxu0 0.0
        %5174 = vmatprep.subr.mxu0 0.0
        %5175 = vmatpush2.xpose.msra.mxu0 0.0
        %5176 = vmatprep.subr.mxu0 0.0
        %5177 = vmatpush2.xpose.msra.mxu0 0.0
        %5178 = vmatprep.subr.mxu0 0.0
        %5179 = vmatpush2.xpose.msra.mxu0 0.0
        %5180 = vmatprep.subr.mxu0 0.0
        %5181 = vmatpush2.xpose.msra.mxu0 0.0
        %5182 = vmatprep.subr.mxu0 0.0
        %5183 = vmatpush2.xpose.msra.mxu0 0.0
        %5184 = vmatprep.subr.mxu0 0.0
        %5185 = vmatpush2.xpose.msra.mxu0 0.0
        %5186 = vmatprep.subr.mxu0 0.0
        %5187 = vmatpush2.xpose.msra.mxu0 0.0
        %5188 = vmatprep.subr.mxu0 0.0
        %5189 = vmatpush2.xpose.msra.mxu0 0.0
        %5190 = vmatprep.subr.mxu0 0.0
        %5191 = vmatpush2.xpose.msra.mxu0 0.0
        %5192 = vmatprep.mubr.f32.mxu0 0.0
        %5193 = vmatmul.mubr.f32.gmra.mxu0 %v5122
        %v5194 = vpop.f32.mrf.mxu0
        %v5195 = vadd.f32 0.0, %v5194
        %v5196 = vpop.f32.mrf.mxu0
        %5197 = vdwg.mxu0
        %v5198 = vsel %vm2125, %v5195, -inf
        %5199 = vmax.xlane.f32.xlu0 %v5198
        %v5200 = vpop.xlane.xlu0 %5199
        %v5201 = vsub.f32 %v5195, %v5200
        %v5202 = vmul.f32 %v5201, 1.442695
        %v5203 = vpow.pop %v5202
        %v5204 = vsel %vm2125, %v5203, 0.0
        %5205 = vadd.xlane.f32.xlu0 %v5204
        %v5206 = vpop.xlane.xlu0 %5205
        %v5207 = vrcp.pop %v5206
        %v5208 = vmul.f32 %v5203, %v5207
        %5209 = vrot.lane.b32.xlu0 %v4378, 72
        %v5210 = vpop.permute.xlu0 %5209
        %5211 = vrot.lane.b32.xlu0 %v4379, 72
        %v5212 = vpop.permute.xlu0 %5211
        %v5216 = vsel %vm2125, %v5208, 0
        %5218 = vmatprep.subr.mxu0 0.0
        %5219 = vmatpush1.msra.mxu0 0.0
        %5220 = vmatprep.subr.mxu0 0.0
        %5221 = vmatpush1.msra.mxu0 0.0
        %5222 = vmatprep.subr.mxu0 0.0
        %5223 = vmatpush1.msra.mxu0 0.0
        %5224 = vmatprep.subr.mxu0 0.0
        %5225 = vmatpush1.msra.mxu0 0.0
        %5226 = vmatprep.subr.mxu0 0.0
        %5227 = vmatpush1.msra.mxu0 0.0
        %5228 = vmatprep.subr.mxu0 0.0
        %5229 = vmatpush1.msra.mxu0 0.0
        %5230 = vmatprep.subr.mxu0 0.0
        %5231 = vmatpush1.msra.mxu0 0.0
        %5232 = vmatprep.subr.mxu0 0.0
        %5233 = vmatpush1.msra.mxu0 0.0
        %5234 = vmatprep.subr.mxu0 0.0
        %5235 = vmatpush1.msra.mxu0 0.0
        %5236 = vmatprep.subr.mxu0 0.0
        %5237 = vmatpush1.msra.mxu0 0.0
        %5238 = vmatprep.subr.mxu0 0.0
        %5239 = vmatpush1.msra.mxu0 0.0
        %5240 = vmatprep.subr.mxu0 0.0
        %5241 = vmatpush1.msra.mxu0 0.0
        %5242 = vmatprep.subr.mxu0 0.0
        %5243 = vmatpush1.msra.mxu0 0.0
        %5244 = vmatprep.subr.mxu0 0.0
        %5245 = vmatpush1.msra.mxu0 0.0
        %5246 = vmatprep.subr.mxu0 0.0
        %5247 = vmatpush1.msra.mxu0 %v5212
        %5248 = vmatprep.subr.mxu0 0.0
        %5249 = vmatpush1.msra.mxu0 %v5210
        %5250 = vmatprep.subr.mxu0 0.0
        %5251 = vmatpush2.msra.mxu0 0.0
        %5252 = vmatprep.subr.mxu0 0.0
        %5253 = vmatpush2.msra.mxu0 0.0
        %5254 = vmatprep.subr.mxu0 0.0
        %5255 = vmatpush2.msra.mxu0 0.0
        %5256 = vmatprep.subr.mxu0 0.0
        %5257 = vmatpush2.msra.mxu0 0.0
        %5258 = vmatprep.subr.mxu0 0.0
        %5259 = vmatpush2.msra.mxu0 0.0
        %5260 = vmatprep.subr.mxu0 0.0
        %5261 = vmatpush2.msra.mxu0 0.0
        %5262 = vmatprep.subr.mxu0 0.0
        %5263 = vmatpush2.msra.mxu0 0.0
        %5264 = vmatprep.subr.mxu0 0.0
        %5265 = vmatpush2.msra.mxu0 0.0
        %5266 = vmatprep.subr.mxu0 0.0
        %5267 = vmatpush2.msra.mxu0 0.0
        %5268 = vmatprep.subr.mxu0 0.0
        %5269 = vmatpush2.msra.mxu0 0.0
        %5270 = vmatprep.subr.mxu0 0.0
        %5271 = vmatpush2.msra.mxu0 0.0
        %5272 = vmatprep.subr.mxu0 0.0
        %5273 = vmatpush2.msra.mxu0 0.0
        %5274 = vmatprep.subr.mxu0 0.0
        %5275 = vmatpush2.msra.mxu0 0.0
        %5276 = vmatprep.subr.mxu0 0.0
        %5277 = vmatpush2.msra.mxu0 0.0
        %5278 = vmatprep.subr.mxu0 0.0
        %5279 = vmatpush2.msra.mxu0 0.0
        %5280 = vmatprep.subr.mxu0 0.0
        %5281 = vmatpush2.msra.mxu0 0.0
        %5282 = vmatprep.mubr.f32.mxu0 0.0
        %5283 = vmatmul.mubr.f32.gmra.mxu0 %v5216
        %v5284 = vpop.f32.mrf.mxu0
        %v5285 = vadd.f32 0.0, %v5284
        %v5286 = vpop.f32.mrf.mxu0
        %5287 = vdwg.mxu0
        %v5288 = vld [vmem:[%s2957] sm:$0xff]
        %v5290 = vsel %vm983, %v5285, 0
        %5292 = vmatprep.subr.mxu0 0.0
        %5293 = vmatpush1.msra.mxu0 0.0
        %5294 = vmatprep.subr.mxu0 0.0
        %5295 = vmatpush1.msra.mxu0 0.0
        %5296 = vmatprep.subr.mxu0 0.0
        %5297 = vmatpush1.msra.mxu0 0.0
        %5298 = vmatprep.subr.mxu0 0.0
        %5299 = vmatpush1.msra.mxu0 0.0
        %5300 = vmatprep.subr.mxu0 0.0
        %5301 = vmatpush1.msra.mxu0 0.0
        %5302 = vmatprep.subr.mxu0 0.0
        %5303 = vmatpush1.msra.mxu0 0.0
        %5304 = vmatprep.subr.mxu0 0.0
        %5305 = vmatpush1.msra.mxu0 0.0
        %5306 = vmatprep.subr.mxu0 0.0
        %5307 = vmatpush1.msra.mxu0 0.0
        %5308 = vmatprep.subr.mxu0 0.0
        %5309 = vmatpush1.msra.mxu0 0.0
        %5310 = vmatprep.subr.mxu0 0.0
        %5311 = vmatpush1.msra.mxu0 0.0
        %5312 = vmatprep.subr.mxu0 0.0
        %5313 = vmatpush1.msra.mxu0 0.0
        %5314 = vmatprep.subr.mxu0 0.0
        %5315 = vmatpush1.msra.mxu0 0.0
        %5316 = vmatprep.subr.mxu0 0.0
        %5317 = vmatpush1.msra.mxu0 0.0
        %5318 = vmatprep.subr.mxu0 0.0
        %5319 = vmatpush1.msra.mxu0 0.0
        %5320 = vmatprep.subr.mxu0 0.0
        %5321 = vmatpush1.msra.mxu0 0.0
        %5322 = vmatprep.subr.mxu0 0.0
        %5323 = vmatpush1.msra.mxu0 %v5288
        %5324 = vmatprep.subr.mxu0 0.0
        %5325 = vmatpush2.msra.mxu0 0.0
        %5326 = vmatprep.subr.mxu0 0.0
        %5327 = vmatpush2.msra.mxu0 0.0
        %5328 = vmatprep.subr.mxu0 0.0
        %5329 = vmatpush2.msra.mxu0 0.0
        %5330 = vmatprep.subr.mxu0 0.0
        %5331 = vmatpush2.msra.mxu0 0.0
        %5332 = vmatprep.subr.mxu0 0.0
        %5333 = vmatpush2.msra.mxu0 0.0
        %5334 = vmatprep.subr.mxu0 0.0
        %5335 = vmatpush2.msra.mxu0 0.0
        %5336 = vmatprep.subr.mxu0 0.0
        %5337 = vmatpush2.msra.mxu0 0.0
        %5338 = vmatprep.subr.mxu0 0.0
        %5339 = vmatpush2.msra.mxu0 0.0
        %5340 = vmatprep.subr.mxu0 0.0
        %5341 = vmatpush2.msra.mxu0 0.0
        %5342 = vmatprep.subr.mxu0 0.0
        %5343 = vmatpush2.msra.mxu0 0.0
        %5344 = vmatprep.subr.mxu0 0.0
        %5345 = vmatpush2.msra.mxu0 0.0
        %5346 = vmatprep.subr.mxu0 0.0
        %5347 = vmatpush2.msra.mxu0 0.0
        %5348 = vmatprep.subr.mxu0 0.0
        %5349 = vmatpush2.msra.mxu0 0.0
        %5350 = vmatprep.subr.mxu0 0.0
        %5351 = vmatpush2.msra.mxu0 0.0
        %5352 = vmatprep.subr.mxu0 0.0
        %5353 = vmatpush2.msra.mxu0 0.0
        %5354 = vmatprep.subr.mxu0 0.0
        %5355 = vmatpush2.msra.mxu0 0.0
        %5356 = vmatprep.mubr.f32.mxu0 0.0
        %5357 = vmatmul.mubr.f32.gmra.mxu0 %v5290
        %v5358 = vpop.f32.mrf.mxu0
        %v5359 = vadd.f32 0.0, %v5358
        %v5360 = vpop.f32.mrf.mxu0
        %5361 = vdwg.mxu0
        %v5362 = vadd.f32 %v5115, %v5359
        %v5363 = vld [vmem:[%s11] sm:$0x1]
        %v5365 = vlaneseq
        %v5366 = vshrl.u32 %v5365, 7
        %v5367 = vsub.s32 0, %v5366
        %v5368 = vrot.slane %v5363, %v5367
        %v5370 = vadd.f32 %v5362, %v5368
        %v5371 = vadd.f32 %v4283, %v5370
        %v5372 = vmul.f32 %v5371, %v5371
        %v5373 = vsel %vm799, %v5372, 0.0
        %5374 = vadd.xlane.f32.xlu0 %v5373
        %v5375 = vpop.xlane.xlu0 %5374
        %v5376 = vmul.f32 %v5375, %v888
        %v5377 = vadd.f32 %v5376, 1.1920929e-07
        %v5378 = vrsqrt.pop %v5377
        %v5379 = vmul.f32 %v5371, %v5378
        %v5380 = vld [vmem:[#allocation17] sm:$0xff]
        %v5381 = vld [vmem:[#allocation17 + $0x8] sm:$0xff]
        %v5382 = vld [vmem:[#allocation17 + $0x10] sm:$0xff]
        %v5383 = vld [vmem:[#allocation17 + $0x18] sm:$0xff]
        %v5384 = vld [vmem:[%s13] sm:$0x1]
        %v5386 = vlaneseq
        %v5387 = vshrl.u32 %v5386, 7
        %v5388 = vsub.s32 0, %v5387
        %v5389 = vrot.slane %v5384, %v5388
        %v5392 = vsel %vm799, %v5379, 0
        %5394 = vmatprep.subr.mxu0 0.0
        %5395 = vmatpush1.msra.mxu0 0.0
        %5396 = vmatprep.subr.mxu0 0.0
        %5397 = vmatpush1.msra.mxu0 0.0
        %5398 = vmatprep.subr.mxu0 0.0
        %5399 = vmatpush1.msra.mxu0 0.0
        %5400 = vmatprep.subr.mxu0 0.0
        %5401 = vmatpush1.msra.mxu0 0.0
        %5402 = vmatprep.subr.mxu0 0.0
        %5403 = vmatpush1.msra.mxu0 0.0
        %5404 = vmatprep.subr.mxu0 0.0
        %5405 = vmatpush1.msra.mxu0 0.0
        %5406 = vmatprep.subr.mxu0 0.0
        %5407 = vmatpush1.msra.mxu0 0.0
        %5408 = vmatprep.subr.mxu0 0.0
        %5409 = vmatpush1.msra.mxu0 0.0
        %5410 = vmatprep.subr.mxu0 0.0
        %5411 = vmatpush1.msra.mxu0 0.0
        %5412 = vmatprep.subr.mxu0 0.0
        %5413 = vmatpush1.msra.mxu0 0.0
        %5414 = vmatprep.subr.mxu0 0.0
        %5415 = vmatpush1.msra.mxu0 0.0
        %5416 = vmatprep.subr.mxu0 0.0
        %5417 = vmatpush1.msra.mxu0 0.0
        %5418 = vmatprep.subr.mxu0 0.0
        %5419 = vmatpush1.msra.mxu0 %v5383
        %5420 = vmatprep.subr.mxu0 0.0
        %5421 = vmatpush1.msra.mxu0 %v5382
        %5422 = vmatprep.subr.mxu0 0.0
        %5423 = vmatpush1.msra.mxu0 %v5381
        %5424 = vmatprep.subr.mxu0 0.0
        %5425 = vmatpush1.msra.mxu0 %v5380
        %5426 = vmatprep.subr.mxu0 0.0
        %5427 = vmatpush2.msra.mxu0 0.0
        %5428 = vmatprep.subr.mxu0 0.0
        %5429 = vmatpush2.msra.mxu0 0.0
        %5430 = vmatprep.subr.mxu0 0.0
        %5431 = vmatpush2.msra.mxu0 0.0
        %5432 = vmatprep.subr.mxu0 0.0
        %5433 = vmatpush2.msra.mxu0 0.0
        %5434 = vmatprep.subr.mxu0 0.0
        %5435 = vmatpush2.msra.mxu0 0.0
        %5436 = vmatprep.subr.mxu0 0.0
        %5437 = vmatpush2.msra.mxu0 0.0
        %5438 = vmatprep.subr.mxu0 0.0
        %5439 = vmatpush2.msra.mxu0 0.0
        %5440 = vmatprep.subr.mxu0 0.0
        %5441 = vmatpush2.msra.mxu0 0.0
        %5442 = vmatprep.subr.mxu0 0.0
        %5443 = vmatpush2.msra.mxu0 0.0
        %5444 = vmatprep.subr.mxu0 0.0
        %5445 = vmatpush2.msra.mxu0 0.0
        %5446 = vmatprep.subr.mxu0 0.0
        %5447 = vmatpush2.msra.mxu0 0.0
        %5448 = vmatprep.subr.mxu0 0.0
        %5449 = vmatpush2.msra.mxu0 0.0
        %5450 = vmatprep.subr.mxu0 0.0
        %5451 = vmatpush2.msra.mxu0 0.0
        %5452 = vmatprep.subr.mxu0 0.0
        %5453 = vmatpush2.msra.mxu0 0.0
        %5454 = vmatprep.subr.mxu0 0.0
        %5455 = vmatpush2.msra.mxu0 0.0
        %5456 = vmatprep.subr.mxu0 0.0
        %5457 = vmatpush2.msra.mxu0 0.0
        %5458 = vmatprep.mubr.f32.mxu0 0.0
        %5459 = vmatmul.mubr.f32.gmra.mxu0 %v5392
        %v5460 = vpop.f32.mrf.mxu0
        %v5461 = vadd.f32 %v5389, %v5460
        %v5462 = vpop.f32.mrf.mxu0
        %5463 = vdwg.mxu0
        %v5464 = vsub.f32 0.0, %v5461
        %v5465 = vmul.f32 %v5464, 1.442695
        %v5466 = vpow.pop %v5465
        %v5467 = vadd.f32 %v5466, 1.0
        %v5468 = vrcp.pop %v5467
        %v5469 = vmul.f32 1.0, %v5468
        %v5470 = vmul.f32 %v5461, %v5469
        %v5471 = vld [vmem:[#allocation19] sm:$0xff]
        %v5472 = vld [vmem:[#allocation19 + $0x8] sm:$0xff]
        %v5473 = vld [vmem:[#allocation19 + $0x10] sm:$0xff]
        %v5474 = vld [vmem:[#allocation19 + $0x18] sm:$0xff]
        %v5475 = vld [vmem:[%s15] sm:$0x1]
        %v5477 = vlaneseq
        %v5478 = vshrl.u32 %v5477, 7
        %v5479 = vsub.s32 0, %v5478
        %v5480 = vrot.slane %v5475, %v5479
        %5482 = vmatprep.subr.mxu0 0.0
        %5483 = vmatpush1.xpose.msra.mxu0 0.0
        %5484 = vmatprep.subr.mxu0 0.0
        %5485 = vmatpush1.xpose.msra.mxu0 0.0
        %5486 = vmatprep.subr.mxu0 0.0
        %5487 = vmatpush1.xpose.msra.mxu0 0.0
        %5488 = vmatprep.subr.mxu0 0.0
        %5489 = vmatpush1.xpose.msra.mxu0 0.0
        %5490 = vmatprep.subr.mxu0 0.0
        %5491 = vmatpush1.xpose.msra.mxu0 0.0
        %5492 = vmatprep.subr.mxu0 0.0
        %5493 = vmatpush1.xpose.msra.mxu0 0.0
        %5494 = vmatprep.subr.mxu0 0.0
        %5495 = vmatpush1.xpose.msra.mxu0 0.0
        %5496 = vmatprep.subr.mxu0 0.0
        %5497 = vmatpush1.xpose.msra.mxu0 0.0
        %5498 = vmatprep.subr.mxu0 0.0
        %5499 = vmatpush1.xpose.msra.mxu0 0.0
        %5500 = vmatprep.subr.mxu0 0.0
        %5501 = vmatpush1.xpose.msra.mxu0 0.0
        %5502 = vmatprep.subr.mxu0 0.0
        %5503 = vmatpush1.xpose.msra.mxu0 0.0
        %5504 = vmatprep.subr.mxu0 0.0
        %5505 = vmatpush1.xpose.msra.mxu0 0.0
        %5506 = vmatprep.subr.mxu0 0.0
        %5507 = vmatpush1.xpose.msra.mxu0 %v5474
        %5508 = vmatprep.subr.mxu0 0.0
        %5509 = vmatpush1.xpose.msra.mxu0 %v5473
        %5510 = vmatprep.subr.mxu0 0.0
        %5511 = vmatpush1.xpose.msra.mxu0 %v5472
        %5512 = vmatprep.subr.mxu0 0.0
        %5513 = vmatpush1.xpose.msra.mxu0 %v5471
        %5514 = vmatprep.subr.mxu0 0.0
        %5515 = vmatpush2.xpose.msra.mxu0 0.0
        %5516 = vmatprep.subr.mxu0 0.0
        %5517 = vmatpush2.xpose.msra.mxu0 0.0
        %5518 = vmatprep.subr.mxu0 0.0
        %5519 = vmatpush2.xpose.msra.mxu0 0.0
        %5520 = vmatprep.subr.mxu0 0.0
        %5521 = vmatpush2.xpose.msra.mxu0 0.0
        %5522 = vmatprep.subr.mxu0 0.0
        %5523 = vmatpush2.xpose.msra.mxu0 0.0
        %5524 = vmatprep.subr.mxu0 0.0
        %5525 = vmatpush2.xpose.msra.mxu0 0.0
        %5526 = vmatprep.subr.mxu0 0.0
        %5527 = vmatpush2.xpose.msra.mxu0 0.0
        %5528 = vmatprep.subr.mxu0 0.0
        %5529 = vmatpush2.xpose.msra.mxu0 0.0
        %5530 = vmatprep.subr.mxu0 0.0
        %5531 = vmatpush2.xpose.msra.mxu0 0.0
        %5532 = vmatprep.subr.mxu0 0.0
        %5533 = vmatpush2.xpose.msra.mxu0 0.0
        %5534 = vmatprep.subr.mxu0 0.0
        %5535 = vmatpush2.xpose.msra.mxu0 0.0
        %5536 = vmatprep.subr.mxu0 0.0
        %5537 = vmatpush2.xpose.msra.mxu0 0.0
        %5538 = vmatprep.subr.mxu0 0.0
        %5539 = vmatpush2.xpose.msra.mxu0 0.0
        %5540 = vmatprep.subr.mxu0 0.0
        %5541 = vmatpush2.xpose.msra.mxu0 0.0
        %5542 = vmatprep.subr.mxu0 0.0
        %5543 = vmatpush2.xpose.msra.mxu0 0.0
        %5544 = vmatprep.subr.mxu0 0.0
        %5545 = vmatpush2.xpose.msra.mxu0 0.0
        %5546 = vmatprep.mubr.f32.mxu0 0.0
        %5547 = vmatmul.mubr.f32.gmra.mxu0 %v5470
        %v5548 = vpop.f32.mrf.mxu0
        %v5549 = vadd.f32 %v5480, %v5548
        %v5550 = vpop.f32.mrf.mxu0
        %5551 = vdwg.mxu0
        %v5552 = vadd.f32 %v5371, %v5549
        %s5553 = scalar_lea.vmem %s777, 8 [#allocation22]
        %5554 = vst.msk [vmem:[%s5553] sm:$0xff] %vm799, %v5552
        %v5555 = vmul.f32 %v5552, %v5552
        %v5556 = vsel %vm799, %v5555, 0.0
        %5557 = vadd.xlane.f32.xlu0 %v5556
        %v5558 = vpop.xlane.xlu0 %5557
        %v5559 = vmul.f32 %v5558, %v888
        %v5560 = vadd.f32 %v5559, 1.1920929e-07
        %v5561 = vrsqrt.pop %v5560
        %v5562 = vmul.f32 %v5552, %v5561
        %v5563 = vld [vmem:[#allocation10] sm:$0xff]
        %v5564 = vld [vmem:[#allocation10 + $0x8] sm:$0xff]
        %v5565 = vld [vmem:[#allocation10 + $0x10] sm:$0xff]
        %v5566 = vld [vmem:[#allocation10 + $0x18] sm:$0xff]
        %v5567 = vld [vmem:[%s3] sm:$0x1]
        %v5569 = vlaneseq
        %v5570 = vshrl.u32 %v5569, 7
        %v5571 = vsub.s32 0, %v5570
        %v5572 = vrot.slane %v5567, %v5571
        %v5575 = vsel %vm799, %v5562, 0
        %5577 = vmatprep.subr.mxu0 0.0
        %5578 = vmatpush1.msra.mxu0 0.0
        %5579 = vmatprep.subr.mxu0 0.0
        %5580 = vmatpush1.msra.mxu0 0.0
        %5581 = vmatprep.subr.mxu0 0.0
        %5582 = vmatpush1.msra.mxu0 0.0
        %5583 = vmatprep.subr.mxu0 0.0
        %5584 = vmatpush1.msra.mxu0 0.0
        %5585 = vmatprep.subr.mxu0 0.0
        %5586 = vmatpush1.msra.mxu0 0.0
        %5587 = vmatprep.subr.mxu0 0.0
        %5588 = vmatpush1.msra.mxu0 0.0
        %5589 = vmatprep.subr.mxu0 0.0
        %5590 = vmatpush1.msra.mxu0 0.0
        %5591 = vmatprep.subr.mxu0 0.0
        %5592 = vmatpush1.msra.mxu0 0.0
        %5593 = vmatprep.subr.mxu0 0.0
        %5594 = vmatpush1.msra.mxu0 0.0
        %5595 = vmatprep.subr.mxu0 0.0
        %5596 = vmatpush1.msra.mxu0 0.0
        %5597 = vmatprep.subr.mxu0 0.0
        %5598 = vmatpush1.msra.mxu0 0.0
        %5599 = vmatprep.subr.mxu0 0.0
        %5600 = vmatpush1.msra.mxu0 0.0
        %5601 = vmatprep.subr.mxu0 0.0
        %5602 = vmatpush1.msra.mxu0 %v5566
        %5603 = vmatprep.subr.mxu0 0.0
        %5604 = vmatpush1.msra.mxu0 %v5565
        %5605 = vmatprep.subr.mxu0 0.0
        %5606 = vmatpush1.msra.mxu0 %v5564
        %5607 = vmatprep.subr.mxu0 0.0
        %5608 = vmatpush1.msra.mxu0 %v5563
        %5609 = vmatprep.subr.mxu0 0.0
        %5610 = vmatpush2.msra.mxu0 0.0
        %5611 = vmatprep.subr.mxu0 0.0
        %5612 = vmatpush2.msra.mxu0 0.0
        %5613 = vmatprep.subr.mxu0 0.0
        %5614 = vmatpush2.msra.mxu0 0.0
        %5615 = vmatprep.subr.mxu0 0.0
        %5616 = vmatpush2.msra.mxu0 0.0
        %5617 = vmatprep.subr.mxu0 0.0
        %5618 = vmatpush2.msra.mxu0 0.0
        %5619 = vmatprep.subr.mxu0 0.0
        %5620 = vmatpush2.msra.mxu0 0.0
        %5621 = vmatprep.subr.mxu0 0.0
        %5622 = vmatpush2.msra.mxu0 0.0
        %5623 = vmatprep.subr.mxu0 0.0
        %5624 = vmatpush2.msra.mxu0 0.0
        %5625 = vmatprep.subr.mxu0 0.0
        %5626 = vmatpush2.msra.mxu0 0.0
        %5627 = vmatprep.subr.mxu0 0.0
        %5628 = vmatpush2.msra.mxu0 0.0
        %5629 = vmatprep.subr.mxu0 0.0
        %5630 = vmatpush2.msra.mxu0 0.0
        %5631 = vmatprep.subr.mxu0 0.0
        %5632 = vmatpush2.msra.mxu0 0.0
        %5633 = vmatprep.subr.mxu0 0.0
        %5634 = vmatpush2.msra.mxu0 0.0
        %5635 = vmatprep.subr.mxu0 0.0
        %5636 = vmatpush2.msra.mxu0 0.0
        %5637 = vmatprep.subr.mxu0 0.0
        %5638 = vmatpush2.msra.mxu0 0.0
        %5639 = vmatprep.subr.mxu0 0.0
        %5640 = vmatpush2.msra.mxu0 0.0
        %5641 = vmatprep.mubr.f32.mxu0 0.0
        %5642 = vmatmul.mubr.f32.gmra.mxu0 %v5575
        %v5643 = vpop.f32.mrf.mxu0
        %v5644 = vadd.f32 %v5572, %v5643
        %v5645 = vpop.f32.mrf.mxu0
        %5646 = vdwg.mxu0
        %5647 = vst.msk [vmem:[#allocation2] sm:$0xff] %vm977, %v5644
        %v5648 = vld [vmem:[#allocation2] sm:$0xff]
        %5650 = vrot.lane.b32.xlu0 %v5648, 96
        %v5651 = vpop.permute.xlu0 %5650
        %v5652 = vsel %vm983, %v5648, 0
        %v5654 = vsel %vm983, %v5651, 0
        %5656 = vmatprep.subr.mxu0 0.0
        %5657 = vmatpush1.xpose.msra.mxu0 0.0
        %5658 = vmatprep.subr.mxu0 0.0
        %5659 = vmatpush1.xpose.msra.mxu0 0.0
        %5660 = vmatprep.subr.mxu0 0.0
        %5661 = vmatpush1.xpose.msra.mxu0 0.0
        %5662 = vmatprep.subr.mxu0 0.0
        %5663 = vmatpush1.xpose.msra.mxu0 0.0
        %5664 = vmatprep.subr.mxu0 0.0
        %5665 = vmatpush1.xpose.msra.mxu0 0.0
        %5666 = vmatprep.subr.mxu0 0.0
        %5667 = vmatpush1.xpose.msra.mxu0 0.0
        %5668 = vmatprep.subr.mxu0 0.0
        %5669 = vmatpush1.xpose.msra.mxu0 0.0
        %5670 = vmatprep.subr.mxu0 0.0
        %5671 = vmatpush1.xpose.msra.mxu0 0.0
        %5672 = vmatprep.subr.mxu0 0.0
        %5673 = vmatpush1.xpose.msra.mxu0 0.0
        %5674 = vmatprep.subr.mxu0 0.0
        %5675 = vmatpush1.xpose.msra.mxu0 0.0
        %5676 = vmatprep.subr.mxu0 0.0
        %5677 = vmatpush1.xpose.msra.mxu0 0.0
        %5678 = vmatprep.subr.mxu0 0.0
        %5679 = vmatpush1.xpose.msra.mxu0 0.0
        %5680 = vmatprep.subr.mxu0 0.0
        %5681 = vmatpush1.xpose.msra.mxu0 0.0
        %5682 = vmatprep.subr.mxu0 0.0
        %5683 = vmatpush1.xpose.msra.mxu0 0.0
        %5684 = vmatprep.subr.mxu0 0.0
        %5685 = vmatpush1.xpose.msra.mxu0 0.0
        %5686 = vmatprep.subr.mxu0 0.0
        %5687 = vmatpush1.xpose.msra.mxu0 %v5654
        %5688 = vmatprep.subr.mxu0 0.0
        %5689 = vmatpush2.xpose.msra.mxu0 0.0
        %5690 = vmatprep.subr.mxu0 0.0
        %5691 = vmatpush2.xpose.msra.mxu0 0.0
        %5692 = vmatprep.subr.mxu0 0.0
        %5693 = vmatpush2.xpose.msra.mxu0 0.0
        %5694 = vmatprep.subr.mxu0 0.0
        %5695 = vmatpush2.xpose.msra.mxu0 0.0
        %5696 = vmatprep.subr.mxu0 0.0
        %5697 = vmatpush2.xpose.msra.mxu0 0.0
        %5698 = vmatprep.subr.mxu0 0.0
        %5699 = vmatpush2.xpose.msra.mxu0 0.0
        %5700 = vmatprep.subr.mxu0 0.0
        %5701 = vmatpush2.xpose.msra.mxu0 0.0
        %5702 = vmatprep.subr.mxu0 0.0
        %5703 = vmatpush2.xpose.msra.mxu0 0.0
        %5704 = vmatprep.subr.mxu0 0.0
        %5705 = vmatpush2.xpose.msra.mxu0 0.0
        %5706 = vmatprep.subr.mxu0 0.0
        %5707 = vmatpush2.xpose.msra.mxu0 0.0
        %5708 = vmatprep.subr.mxu0 0.0
        %5709 = vmatpush2.xpose.msra.mxu0 0.0
        %5710 = vmatprep.subr.mxu0 0.0
        %5711 = vmatpush2.xpose.msra.mxu0 0.0
        %5712 = vmatprep.subr.mxu0 0.0
        %5713 = vmatpush2.xpose.msra.mxu0 0.0
        %5714 = vmatprep.subr.mxu0 0.0
        %5715 = vmatpush2.xpose.msra.mxu0 0.0
        %5716 = vmatprep.subr.mxu0 0.0
        %5717 = vmatpush2.xpose.msra.mxu0 0.0
        %5718 = vmatprep.subr.mxu0 0.0
        %5719 = vmatpush2.xpose.msra.mxu0 0.0
        %5720 = vmatprep.mubr.f32.mxu0 0.0
        %5721 = vmatmul.mubr.f32.gmra.mxu0 %v5652
        %v5722 = vpop.f32.mrf.mxu0
        %v5723 = vadd.f32 0.0, %v5722
        %v5724 = vpop.f32.mrf.mxu0
        %5725 = vdwg.mxu0
        %v5726 = vsel %vm983, %v5723, -inf
        %5727 = vmax.xlane.f32.xlu0 %v5726
        %v5728 = vpop.xlane.xlu0 %5727
        %v5729 = vsub.f32 %v5723, %v5728
        %v5730 = vmul.f32 %v5729, 1.442695
        %v5731 = vpow.pop %v5730
        %v5732 = vsel %vm983, %v5731, 0.0
        %5733 = vadd.xlane.f32.xlu0 %v5732
        %v5734 = vpop.xlane.xlu0 %5733
        %v5735 = vrcp.pop %v5734
        %v5736 = vmul.f32 %v5731, %v5735
        %5737 = vrot.lane.b32.xlu0 %v5648, 64
        %v5738 = vpop.permute.xlu0 %5737
        %v5741 = vsel %vm983, %v5736, 0
        %5743 = vmatprep.subr.mxu0 0.0
        %5744 = vmatpush1.msra.mxu0 0.0
        %5745 = vmatprep.subr.mxu0 0.0
        %5746 = vmatpush1.msra.mxu0 0.0
        %5747 = vmatprep.subr.mxu0 0.0
        %5748 = vmatpush1.msra.mxu0 0.0
        %5749 = vmatprep.subr.mxu0 0.0
        %5750 = vmatpush1.msra.mxu0 0.0
        %5751 = vmatprep.subr.mxu0 0.0
        %5752 = vmatpush1.msra.mxu0 0.0
        %5753 = vmatprep.subr.mxu0 0.0
        %5754 = vmatpush1.msra.mxu0 0.0
        %5755 = vmatprep.subr.mxu0 0.0
        %5756 = vmatpush1.msra.mxu0 0.0
        %5757 = vmatprep.subr.mxu0 0.0
        %5758 = vmatpush1.msra.mxu0 0.0
        %5759 = vmatprep.subr.mxu0 0.0
        %5760 = vmatpush1.msra.mxu0 0.0
        %5761 = vmatprep.subr.mxu0 0.0
        %5762 = vmatpush1.msra.mxu0 0.0
        %5763 = vmatprep.subr.mxu0 0.0
        %5764 = vmatpush1.msra.mxu0 0.0
        %5765 = vmatprep.subr.mxu0 0.0
        %5766 = vmatpush1.msra.mxu0 0.0
        %5767 = vmatprep.subr.mxu0 0.0
        %5768 = vmatpush1.msra.mxu0 0.0
        %5769 = vmatprep.subr.mxu0 0.0
        %5770 = vmatpush1.msra.mxu0 0.0
        %5771 = vmatprep.subr.mxu0 0.0
        %5772 = vmatpush1.msra.mxu0 0.0
        %5773 = vmatprep.subr.mxu0 0.0
        %5774 = vmatpush1.msra.mxu0 %v5738
        %5775 = vmatprep.subr.mxu0 0.0
        %5776 = vmatpush2.msra.mxu0 0.0
        %5777 = vmatprep.subr.mxu0 0.0
        %5778 = vmatpush2.msra.mxu0 0.0
        %5779 = vmatprep.subr.mxu0 0.0
        %5780 = vmatpush2.msra.mxu0 0.0
        %5781 = vmatprep.subr.mxu0 0.0
        %5782 = vmatpush2.msra.mxu0 0.0
        %5783 = vmatprep.subr.mxu0 0.0
        %5784 = vmatpush2.msra.mxu0 0.0
        %5785 = vmatprep.subr.mxu0 0.0
        %5786 = vmatpush2.msra.mxu0 0.0
        %5787 = vmatprep.subr.mxu0 0.0
        %5788 = vmatpush2.msra.mxu0 0.0
        %5789 = vmatprep.subr.mxu0 0.0
        %5790 = vmatpush2.msra.mxu0 0.0
        %5791 = vmatprep.subr.mxu0 0.0
        %5792 = vmatpush2.msra.mxu0 0.0
        %5793 = vmatprep.subr.mxu0 0.0
        %5794 = vmatpush2.msra.mxu0 0.0
        %5795 = vmatprep.subr.mxu0 0.0
        %5796 = vmatpush2.msra.mxu0 0.0
        %5797 = vmatprep.subr.mxu0 0.0
        %5798 = vmatpush2.msra.mxu0 0.0
        %5799 = vmatprep.subr.mxu0 0.0
        %5800 = vmatpush2.msra.mxu0 0.0
        %5801 = vmatprep.subr.mxu0 0.0
        %5802 = vmatpush2.msra.mxu0 0.0
        %5803 = vmatprep.subr.mxu0 0.0
        %5804 = vmatpush2.msra.mxu0 0.0
        %5805 = vmatprep.subr.mxu0 0.0
        %5806 = vmatpush2.msra.mxu0 0.0
        %5807 = vmatprep.mubr.f32.mxu0 0.0
        %5808 = vmatmul.mubr.f32.gmra.mxu0 %v5741
        %v5809 = vpop.f32.mrf.mxu0
        %v5810 = vadd.f32 0.0, %v5809
        %v5811 = vpop.f32.mrf.mxu0
        %5812 = vdwg.mxu0
        %v5813 = vld [vmem:[#allocation11] sm:$0xff]
        %5814 = vrot.lane.b32.xlu0 %v5648, 120
        %v5815 = vpop.permute.xlu0 %5814
        %5816 = vrot.lane.b32.xlu0 %v5648, 88
        %v5817 = vpop.permute.xlu0 %5816
        %v5818 = vsel %vm983, %v5815, 0
        %v5820 = vsel %vm983, %v5817, 0
        %5822 = vmatprep.subr.mxu0 0.0
        %5823 = vmatpush1.xpose.msra.mxu0 0.0
        %5824 = vmatprep.subr.mxu0 0.0
        %5825 = vmatpush1.xpose.msra.mxu0 0.0
        %5826 = vmatprep.subr.mxu0 0.0
        %5827 = vmatpush1.xpose.msra.mxu0 0.0
        %5828 = vmatprep.subr.mxu0 0.0
        %5829 = vmatpush1.xpose.msra.mxu0 0.0
        %5830 = vmatprep.subr.mxu0 0.0
        %5831 = vmatpush1.xpose.msra.mxu0 0.0
        %5832 = vmatprep.subr.mxu0 0.0
        %5833 = vmatpush1.xpose.msra.mxu0 0.0
        %5834 = vmatprep.subr.mxu0 0.0
        %5835 = vmatpush1.xpose.msra.mxu0 0.0
        %5836 = vmatprep.subr.mxu0 0.0
        %5837 = vmatpush1.xpose.msra.mxu0 0.0
        %5838 = vmatprep.subr.mxu0 0.0
        %5839 = vmatpush1.xpose.msra.mxu0 0.0
        %5840 = vmatprep.subr.mxu0 0.0
        %5841 = vmatpush1.xpose.msra.mxu0 0.0
        %5842 = vmatprep.subr.mxu0 0.0
        %5843 = vmatpush1.xpose.msra.mxu0 0.0
        %5844 = vmatprep.subr.mxu0 0.0
        %5845 = vmatpush1.xpose.msra.mxu0 0.0
        %5846 = vmatprep.subr.mxu0 0.0
        %5847 = vmatpush1.xpose.msra.mxu0 0.0
        %5848 = vmatprep.subr.mxu0 0.0
        %5849 = vmatpush1.xpose.msra.mxu0 0.0
        %5850 = vmatprep.subr.mxu0 0.0
        %5851 = vmatpush1.xpose.msra.mxu0 0.0
        %5852 = vmatprep.subr.mxu0 0.0
        %5853 = vmatpush1.xpose.msra.mxu0 %v5820
        %5854 = vmatprep.subr.mxu0 0.0
        %5855 = vmatpush2.xpose.msra.mxu0 0.0
        %5856 = vmatprep.subr.mxu0 0.0
        %5857 = vmatpush2.xpose.msra.mxu0 0.0
        %5858 = vmatprep.subr.mxu0 0.0
        %5859 = vmatpush2.xpose.msra.mxu0 0.0
        %5860 = vmatprep.subr.mxu0 0.0
        %5861 = vmatpush2.xpose.msra.mxu0 0.0
        %5862 = vmatprep.subr.mxu0 0.0
        %5863 = vmatpush2.xpose.msra.mxu0 0.0
        %5864 = vmatprep.subr.mxu0 0.0
        %5865 = vmatpush2.xpose.msra.mxu0 0.0
        %5866 = vmatprep.subr.mxu0 0.0
        %5867 = vmatpush2.xpose.msra.mxu0 0.0
        %5868 = vmatprep.subr.mxu0 0.0
        %5869 = vmatpush2.xpose.msra.mxu0 0.0
        %5870 = vmatprep.subr.mxu0 0.0
        %5871 = vmatpush2.xpose.msra.mxu0 0.0
        %5872 = vmatprep.subr.mxu0 0.0
        %5873 = vmatpush2.xpose.msra.mxu0 0.0
        %5874 = vmatprep.subr.mxu0 0.0
        %5875 = vmatpush2.xpose.msra.mxu0 0.0
        %5876 = vmatprep.subr.mxu0 0.0
        %5877 = vmatpush2.xpose.msra.mxu0 0.0
        %5878 = vmatprep.subr.mxu0 0.0
        %5879 = vmatpush2.xpose.msra.mxu0 0.0
        %5880 = vmatprep.subr.mxu0 0.0
        %5881 = vmatpush2.xpose.msra.mxu0 0.0
        %5882 = vmatprep.subr.mxu0 0.0
        %5883 = vmatpush2.xpose.msra.mxu0 0.0
        %5884 = vmatprep.subr.mxu0 0.0
        %5885 = vmatpush2.xpose.msra.mxu0 0.0
        %5886 = vmatprep.mubr.f32.mxu0 0.0
        %5887 = vmatmul.mubr.f32.gmra.mxu0 %v5818
        %v5888 = vpop.f32.mrf.mxu0
        %v5889 = vadd.f32 0.0, %v5888
        %v5890 = vpop.f32.mrf.mxu0
        %5891 = vdwg.mxu0
        %v5892 = vsel %vm983, %v5889, -inf
        %5893 = vmax.xlane.f32.xlu0 %v5892
        %v5894 = vpop.xlane.xlu0 %5893
        %v5895 = vsub.f32 %v5889, %v5894
        %v5896 = vmul.f32 %v5895, 1.442695
        %v5897 = vpow.pop %v5896
        %v5898 = vsel %vm983, %v5897, 0.0
        %5899 = vadd.xlane.f32.xlu0 %v5898
        %v5900 = vpop.xlane.xlu0 %5899
        %v5901 = vrcp.pop %v5900
        %v5902 = vmul.f32 %v5897, %v5901
        %5903 = vrot.lane.b32.xlu0 %v5648, 56
        %v5904 = vpop.permute.xlu0 %5903
        %v5907 = vsel %vm983, %v5902, 0
        %5909 = vmatprep.subr.mxu0 0.0
        %5910 = vmatpush1.msra.mxu0 0.0
        %5911 = vmatprep.subr.mxu0 0.0
        %5912 = vmatpush1.msra.mxu0 0.0
        %5913 = vmatprep.subr.mxu0 0.0
        %5914 = vmatpush1.msra.mxu0 0.0
        %5915 = vmatprep.subr.mxu0 0.0
        %5916 = vmatpush1.msra.mxu0 0.0
        %5917 = vmatprep.subr.mxu0 0.0
        %5918 = vmatpush1.msra.mxu0 0.0
        %5919 = vmatprep.subr.mxu0 0.0
        %5920 = vmatpush1.msra.mxu0 0.0
        %5921 = vmatprep.subr.mxu0 0.0
        %5922 = vmatpush1.msra.mxu0 0.0
        %5923 = vmatprep.subr.mxu0 0.0
        %5924 = vmatpush1.msra.mxu0 0.0
        %5925 = vmatprep.subr.mxu0 0.0
        %5926 = vmatpush1.msra.mxu0 0.0
        %5927 = vmatprep.subr.mxu0 0.0
        %5928 = vmatpush1.msra.mxu0 0.0
        %5929 = vmatprep.subr.mxu0 0.0
        %5930 = vmatpush1.msra.mxu0 0.0
        %5931 = vmatprep.subr.mxu0 0.0
        %5932 = vmatpush1.msra.mxu0 0.0
        %5933 = vmatprep.subr.mxu0 0.0
        %5934 = vmatpush1.msra.mxu0 0.0
        %5935 = vmatprep.subr.mxu0 0.0
        %5936 = vmatpush1.msra.mxu0 0.0
        %5937 = vmatprep.subr.mxu0 0.0
        %5938 = vmatpush1.msra.mxu0 0.0
        %5939 = vmatprep.subr.mxu0 0.0
        %5940 = vmatpush1.msra.mxu0 %v5904
        %5941 = vmatprep.subr.mxu0 0.0
        %5942 = vmatpush2.msra.mxu0 0.0
        %5943 = vmatprep.subr.mxu0 0.0
        %5944 = vmatpush2.msra.mxu0 0.0
        %5945 = vmatprep.subr.mxu0 0.0
        %5946 = vmatpush2.msra.mxu0 0.0
        %5947 = vmatprep.subr.mxu0 0.0
        %5948 = vmatpush2.msra.mxu0 0.0
        %5949 = vmatprep.subr.mxu0 0.0
        %5950 = vmatpush2.msra.mxu0 0.0
        %5951 = vmatprep.subr.mxu0 0.0
        %5952 = vmatpush2.msra.mxu0 0.0
        %5953 = vmatprep.subr.mxu0 0.0
        %5954 = vmatpush2.msra.mxu0 0.0
        %5955 = vmatprep.subr.mxu0 0.0
        %5956 = vmatpush2.msra.mxu0 0.0
        %5957 = vmatprep.subr.mxu0 0.0
        %5958 = vmatpush2.msra.mxu0 0.0
        %5959 = vmatprep.subr.mxu0 0.0
        %5960 = vmatpush2.msra.mxu0 0.0
        %5961 = vmatprep.subr.mxu0 0.0
        %5962 = vmatpush2.msra.mxu0 0.0
        %5963 = vmatprep.subr.mxu0 0.0
        %5964 = vmatpush2.msra.mxu0 0.0
        %5965 = vmatprep.subr.mxu0 0.0
        %5966 = vmatpush2.msra.mxu0 0.0
        %5967 = vmatprep.subr.mxu0 0.0
        %5968 = vmatpush2.msra.mxu0 0.0
        %5969 = vmatprep.subr.mxu0 0.0
        %5970 = vmatpush2.msra.mxu0 0.0
        %5971 = vmatprep.subr.mxu0 0.0
        %5972 = vmatpush2.msra.mxu0 0.0
        %5973 = vmatprep.mubr.f32.mxu0 0.0
        %5974 = vmatmul.mubr.f32.gmra.mxu0 %v5907
        %v5975 = vpop.f32.mrf.mxu0
        %v5976 = vadd.f32 0.0, %v5975
        %v5977 = vpop.f32.mrf.mxu0
        %5978 = vdwg.mxu0
        %v5979 = vld [vmem:[%s1311] sm:$0xff]
        %v5981 = vsel %vm983, %v5976, 0
        %5983 = vmatprep.subr.mxu0 0.0
        %5984 = vmatpush1.msra.mxu0 0.0
        %5985 = vmatprep.subr.mxu0 0.0
        %5986 = vmatpush1.msra.mxu0 0.0
        %5987 = vmatprep.subr.mxu0 0.0
        %5988 = vmatpush1.msra.mxu0 0.0
        %5989 = vmatprep.subr.mxu0 0.0
        %5990 = vmatpush1.msra.mxu0 0.0
        %5991 = vmatprep.subr.mxu0 0.0
        %5992 = vmatpush1.msra.mxu0 0.0
        %5993 = vmatprep.subr.mxu0 0.0
        %5994 = vmatpush1.msra.mxu0 0.0
        %5995 = vmatprep.subr.mxu0 0.0
        %5996 = vmatpush1.msra.mxu0 0.0
        %5997 = vmatprep.subr.mxu0 0.0
        %5998 = vmatpush1.msra.mxu0 0.0
        %5999 = vmatprep.subr.mxu0 0.0
        %6000 = vmatpush1.msra.mxu0 0.0
        %6001 = vmatprep.subr.mxu0 0.0
        %6002 = vmatpush1.msra.mxu0 0.0
        %6003 = vmatprep.subr.mxu0 0.0
        %6004 = vmatpush1.msra.mxu0 0.0
        %6005 = vmatprep.subr.mxu0 0.0
        %6006 = vmatpush1.msra.mxu0 0.0
        %6007 = vmatprep.subr.mxu0 0.0
        %6008 = vmatpush1.msra.mxu0 0.0
        %6009 = vmatprep.subr.mxu0 0.0
        %6010 = vmatpush1.msra.mxu0 0.0
        %6011 = vmatprep.subr.mxu0 0.0
        %6012 = vmatpush1.msra.mxu0 0.0
        %6013 = vmatprep.subr.mxu0 0.0
        %6014 = vmatpush1.msra.mxu0 %v5979
        %6015 = vmatprep.subr.mxu0 0.0
        %6016 = vmatpush2.msra.mxu0 0.0
        %6017 = vmatprep.subr.mxu0 0.0
        %6018 = vmatpush2.msra.mxu0 0.0
        %6019 = vmatprep.subr.mxu0 0.0
        %6020 = vmatpush2.msra.mxu0 0.0
        %6021 = vmatprep.subr.mxu0 0.0
        %6022 = vmatpush2.msra.mxu0 0.0
        %6023 = vmatprep.subr.mxu0 0.0
        %6024 = vmatpush2.msra.mxu0 0.0
        %6025 = vmatprep.subr.mxu0 0.0
        %6026 = vmatpush2.msra.mxu0 0.0
        %6027 = vmatprep.subr.mxu0 0.0
        %6028 = vmatpush2.msra.mxu0 0.0
        %6029 = vmatprep.subr.mxu0 0.0
        %6030 = vmatpush2.msra.mxu0 0.0
        %6031 = vmatprep.subr.mxu0 0.0
        %6032 = vmatpush2.msra.mxu0 0.0
        %6033 = vmatprep.subr.mxu0 0.0
        %6034 = vmatpush2.msra.mxu0 0.0
        %6035 = vmatprep.subr.mxu0 0.0
        %6036 = vmatpush2.msra.mxu0 0.0
        %6037 = vmatprep.subr.mxu0 0.0
        %6038 = vmatpush2.msra.mxu0 0.0
        %6039 = vmatprep.subr.mxu0 0.0
        %6040 = vmatpush2.msra.mxu0 0.0
        %6041 = vmatprep.subr.mxu0 0.0
        %6042 = vmatpush2.msra.mxu0 0.0
        %6043 = vmatprep.subr.mxu0 0.0
        %6044 = vmatpush2.msra.mxu0 0.0
        %6045 = vmatprep.subr.mxu0 0.0
        %6046 = vmatpush2.msra.mxu0 0.0
        %6047 = vmatprep.mubr.f32.mxu0 0.0
        %6048 = vmatmul.mubr.f32.gmra.mxu0 %v5981
        %v6049 = vpop.f32.mrf.mxu0
        %v6050 = vadd.f32 0.0, %v6049
        %v6051 = vpop.f32.mrf.mxu0
        %6052 = vdwg.mxu0
        %v6054 = vsel %vm983, %v5810, 0
        %6056 = vmatprep.subr.mxu0 0.0
        %6057 = vmatpush1.msra.mxu0 0.0
        %6058 = vmatprep.subr.mxu0 0.0
        %6059 = vmatpush1.msra.mxu0 0.0
        %6060 = vmatprep.subr.mxu0 0.0
        %6061 = vmatpush1.msra.mxu0 0.0
        %6062 = vmatprep.subr.mxu0 0.0
        %6063 = vmatpush1.msra.mxu0 0.0
        %6064 = vmatprep.subr.mxu0 0.0
        %6065 = vmatpush1.msra.mxu0 0.0
        %6066 = vmatprep.subr.mxu0 0.0
        %6067 = vmatpush1.msra.mxu0 0.0
        %6068 = vmatprep.subr.mxu0 0.0
        %6069 = vmatpush1.msra.mxu0 0.0
        %6070 = vmatprep.subr.mxu0 0.0
        %6071 = vmatpush1.msra.mxu0 0.0
        %6072 = vmatprep.subr.mxu0 0.0
        %6073 = vmatpush1.msra.mxu0 0.0
        %6074 = vmatprep.subr.mxu0 0.0
        %6075 = vmatpush1.msra.mxu0 0.0
        %6076 = vmatprep.subr.mxu0 0.0
        %6077 = vmatpush1.msra.mxu0 0.0
        %6078 = vmatprep.subr.mxu0 0.0
        %6079 = vmatpush1.msra.mxu0 0.0
        %6080 = vmatprep.subr.mxu0 0.0
        %6081 = vmatpush1.msra.mxu0 0.0
        %6082 = vmatprep.subr.mxu0 0.0
        %6083 = vmatpush1.msra.mxu0 0.0
        %6084 = vmatprep.subr.mxu0 0.0
        %6085 = vmatpush1.msra.mxu0 0.0
        %6086 = vmatprep.subr.mxu0 0.0
        %6087 = vmatpush1.msra.mxu0 %v5813
        %6088 = vmatprep.subr.mxu0 0.0
        %6089 = vmatpush2.msra.mxu0 0.0
        %6090 = vmatprep.subr.mxu0 0.0
        %6091 = vmatpush2.msra.mxu0 0.0
        %6092 = vmatprep.subr.mxu0 0.0
        %6093 = vmatpush2.msra.mxu0 0.0
        %6094 = vmatprep.subr.mxu0 0.0
        %6095 = vmatpush2.msra.mxu0 0.0
        %6096 = vmatprep.subr.mxu0 0.0
        %6097 = vmatpush2.msra.mxu0 0.0
        %6098 = vmatprep.subr.mxu0 0.0
        %6099 = vmatpush2.msra.mxu0 0.0
        %6100 = vmatprep.subr.mxu0 0.0
        %6101 = vmatpush2.msra.mxu0 0.0
        %6102 = vmatprep.subr.mxu0 0.0
        %6103 = vmatpush2.msra.mxu0 0.0
        %6104 = vmatprep.subr.mxu0 0.0
        %6105 = vmatpush2.msra.mxu0 0.0
        %6106 = vmatprep.subr.mxu0 0.0
        %6107 = vmatpush2.msra.mxu0 0.0
        %6108 = vmatprep.subr.mxu0 0.0
        %6109 = vmatpush2.msra.mxu0 0.0
        %6110 = vmatprep.subr.mxu0 0.0
        %6111 = vmatpush2.msra.mxu0 0.0
        %6112 = vmatprep.subr.mxu0 0.0
        %6113 = vmatpush2.msra.mxu0 0.0
        %6114 = vmatprep.subr.mxu0 0.0
        %6115 = vmatpush2.msra.mxu0 0.0
        %6116 = vmatprep.subr.mxu0 0.0
        %6117 = vmatpush2.msra.mxu0 0.0
        %6118 = vmatprep.subr.mxu0 0.0
        %6119 = vmatpush2.msra.mxu0 0.0
        %6120 = vmatprep.mubr.f32.mxu0 0.0
        %6121 = vmatmul.mubr.f32.gmra.mxu0 %v6054
        %v6122 = vpop.f32.mrf.mxu0
        %v6123 = vadd.f32 %v6050, %v6122
        %v6124 = vpop.f32.mrf.mxu0
        %6125 = vdwg.mxu0
        %6126 = vrot.lane.b32.xlu0 %v5648, 112
        %v6127 = vpop.permute.xlu0 %6126
        %6128 = vrot.lane.b32.xlu0 %v5648, 80
        %v6129 = vpop.permute.xlu0 %6128
        %v6130 = vsel %vm983, %v6127, 0
        %v6132 = vsel %vm983, %v6129, 0
        %6134 = vmatprep.subr.mxu0 0.0
        %6135 = vmatpush1.xpose.msra.mxu0 0.0
        %6136 = vmatprep.subr.mxu0 0.0
        %6137 = vmatpush1.xpose.msra.mxu0 0.0
        %6138 = vmatprep.subr.mxu0 0.0
        %6139 = vmatpush1.xpose.msra.mxu0 0.0
        %6140 = vmatprep.subr.mxu0 0.0
        %6141 = vmatpush1.xpose.msra.mxu0 0.0
        %6142 = vmatprep.subr.mxu0 0.0
        %6143 = vmatpush1.xpose.msra.mxu0 0.0
        %6144 = vmatprep.subr.mxu0 0.0
        %6145 = vmatpush1.xpose.msra.mxu0 0.0
        %6146 = vmatprep.subr.mxu0 0.0
        %6147 = vmatpush1.xpose.msra.mxu0 0.0
        %6148 = vmatprep.subr.mxu0 0.0
        %6149 = vmatpush1.xpose.msra.mxu0 0.0
        %6150 = vmatprep.subr.mxu0 0.0
        %6151 = vmatpush1.xpose.msra.mxu0 0.0
        %6152 = vmatprep.subr.mxu0 0.0
        %6153 = vmatpush1.xpose.msra.mxu0 0.0
        %6154 = vmatprep.subr.mxu0 0.0
        %6155 = vmatpush1.xpose.msra.mxu0 0.0
        %6156 = vmatprep.subr.mxu0 0.0
        %6157 = vmatpush1.xpose.msra.mxu0 0.0
        %6158 = vmatprep.subr.mxu0 0.0
        %6159 = vmatpush1.xpose.msra.mxu0 0.0
        %6160 = vmatprep.subr.mxu0 0.0
        %6161 = vmatpush1.xpose.msra.mxu0 0.0
        %6162 = vmatprep.subr.mxu0 0.0
        %6163 = vmatpush1.xpose.msra.mxu0 0.0
        %6164 = vmatprep.subr.mxu0 0.0
        %6165 = vmatpush1.xpose.msra.mxu0 %v6132
        %6166 = vmatprep.subr.mxu0 0.0
        %6167 = vmatpush2.xpose.msra.mxu0 0.0
        %6168 = vmatprep.subr.mxu0 0.0
        %6169 = vmatpush2.xpose.msra.mxu0 0.0
        %6170 = vmatprep.subr.mxu0 0.0
        %6171 = vmatpush2.xpose.msra.mxu0 0.0
        %6172 = vmatprep.subr.mxu0 0.0
        %6173 = vmatpush2.xpose.msra.mxu0 0.0
        %6174 = vmatprep.subr.mxu0 0.0
        %6175 = vmatpush2.xpose.msra.mxu0 0.0
        %6176 = vmatprep.subr.mxu0 0.0
        %6177 = vmatpush2.xpose.msra.mxu0 0.0
        %6178 = vmatprep.subr.mxu0 0.0
        %6179 = vmatpush2.xpose.msra.mxu0 0.0
        %6180 = vmatprep.subr.mxu0 0.0
        %6181 = vmatpush2.xpose.msra.mxu0 0.0
        %6182 = vmatprep.subr.mxu0 0.0
        %6183 = vmatpush2.xpose.msra.mxu0 0.0
        %6184 = vmatprep.subr.mxu0 0.0
        %6185 = vmatpush2.xpose.msra.mxu0 0.0
        %6186 = vmatprep.subr.mxu0 0.0
        %6187 = vmatpush2.xpose.msra.mxu0 0.0
        %6188 = vmatprep.subr.mxu0 0.0
        %6189 = vmatpush2.xpose.msra.mxu0 0.0
        %6190 = vmatprep.subr.mxu0 0.0
        %6191 = vmatpush2.xpose.msra.mxu0 0.0
        %6192 = vmatprep.subr.mxu0 0.0
        %6193 = vmatpush2.xpose.msra.mxu0 0.0
        %6194 = vmatprep.subr.mxu0 0.0
        %6195 = vmatpush2.xpose.msra.mxu0 0.0
        %6196 = vmatprep.subr.mxu0 0.0
        %6197 = vmatpush2.xpose.msra.mxu0 0.0
        %6198 = vmatprep.mubr.f32.mxu0 0.0
        %6199 = vmatmul.mubr.f32.gmra.mxu0 %v6130
        %v6200 = vpop.f32.mrf.mxu0
        %v6201 = vadd.f32 0.0, %v6200
        %v6202 = vpop.f32.mrf.mxu0
        %6203 = vdwg.mxu0
        %v6204 = vsel %vm983, %v6201, -inf
        %6205 = vmax.xlane.f32.xlu0 %v6204
        %v6206 = vpop.xlane.xlu0 %6205
        %v6207 = vsub.f32 %v6201, %v6206
        %v6208 = vmul.f32 %v6207, 1.442695
        %v6209 = vpow.pop %v6208
        %v6210 = vsel %vm983, %v6209, 0.0
        %6211 = vadd.xlane.f32.xlu0 %v6210
        %v6212 = vpop.xlane.xlu0 %6211
        %v6213 = vrcp.pop %v6212
        %v6214 = vmul.f32 %v6209, %v6213
        %6215 = vrot.lane.b32.xlu0 %v5648, 48
        %v6216 = vpop.permute.xlu0 %6215
        %v6219 = vsel %vm983, %v6214, 0
        %6221 = vmatprep.subr.mxu0 0.0
        %6222 = vmatpush1.msra.mxu0 0.0
        %6223 = vmatprep.subr.mxu0 0.0
        %6224 = vmatpush1.msra.mxu0 0.0
        %6225 = vmatprep.subr.mxu0 0.0
        %6226 = vmatpush1.msra.mxu0 0.0
        %6227 = vmatprep.subr.mxu0 0.0
        %6228 = vmatpush1.msra.mxu0 0.0
        %6229 = vmatprep.subr.mxu0 0.0
        %6230 = vmatpush1.msra.mxu0 0.0
        %6231 = vmatprep.subr.mxu0 0.0
        %6232 = vmatpush1.msra.mxu0 0.0
        %6233 = vmatprep.subr.mxu0 0.0
        %6234 = vmatpush1.msra.mxu0 0.0
        %6235 = vmatprep.subr.mxu0 0.0
        %6236 = vmatpush1.msra.mxu0 0.0
        %6237 = vmatprep.subr.mxu0 0.0
        %6238 = vmatpush1.msra.mxu0 0.0
        %6239 = vmatprep.subr.mxu0 0.0
        %6240 = vmatpush1.msra.mxu0 0.0
        %6241 = vmatprep.subr.mxu0 0.0
        %6242 = vmatpush1.msra.mxu0 0.0
        %6243 = vmatprep.subr.mxu0 0.0
        %6244 = vmatpush1.msra.mxu0 0.0
        %6245 = vmatprep.subr.mxu0 0.0
        %6246 = vmatpush1.msra.mxu0 0.0
        %6247 = vmatprep.subr.mxu0 0.0
        %6248 = vmatpush1.msra.mxu0 0.0
        %6249 = vmatprep.subr.mxu0 0.0
        %6250 = vmatpush1.msra.mxu0 0.0
        %6251 = vmatprep.subr.mxu0 0.0
        %6252 = vmatpush1.msra.mxu0 %v6216
        %6253 = vmatprep.subr.mxu0 0.0
        %6254 = vmatpush2.msra.mxu0 0.0
        %6255 = vmatprep.subr.mxu0 0.0
        %6256 = vmatpush2.msra.mxu0 0.0
        %6257 = vmatprep.subr.mxu0 0.0
        %6258 = vmatpush2.msra.mxu0 0.0
        %6259 = vmatprep.subr.mxu0 0.0
        %6260 = vmatpush2.msra.mxu0 0.0
        %6261 = vmatprep.subr.mxu0 0.0
        %6262 = vmatpush2.msra.mxu0 0.0
        %6263 = vmatprep.subr.mxu0 0.0
        %6264 = vmatpush2.msra.mxu0 0.0
        %6265 = vmatprep.subr.mxu0 0.0
        %6266 = vmatpush2.msra.mxu0 0.0
        %6267 = vmatprep.subr.mxu0 0.0
        %6268 = vmatpush2.msra.mxu0 0.0
        %6269 = vmatprep.subr.mxu0 0.0
        %6270 = vmatpush2.msra.mxu0 0.0
        %6271 = vmatprep.subr.mxu0 0.0
        %6272 = vmatpush2.msra.mxu0 0.0
        %6273 = vmatprep.subr.mxu0 0.0
        %6274 = vmatpush2.msra.mxu0 0.0
        %6275 = vmatprep.subr.mxu0 0.0
        %6276 = vmatpush2.msra.mxu0 0.0
        %6277 = vmatprep.subr.mxu0 0.0
        %6278 = vmatpush2.msra.mxu0 0.0
        %6279 = vmatprep.subr.mxu0 0.0
        %6280 = vmatpush2.msra.mxu0 0.0
        %6281 = vmatprep.subr.mxu0 0.0
        %6282 = vmatpush2.msra.mxu0 0.0
        %6283 = vmatprep.subr.mxu0 0.0
        %6284 = vmatpush2.msra.mxu0 0.0
        %6285 = vmatprep.mubr.f32.mxu0 0.0
        %6286 = vmatmul.mubr.f32.gmra.mxu0 %v6219
        %v6287 = vpop.f32.mrf.mxu0
        %v6288 = vadd.f32 0.0, %v6287
        %v6289 = vpop.f32.mrf.mxu0
        %6290 = vdwg.mxu0
        %v6291 = vld [vmem:[%s1624] sm:$0xff]
        %v6293 = vsel %vm983, %v6288, 0
        %6295 = vmatprep.subr.mxu0 0.0
        %6296 = vmatpush1.msra.mxu0 0.0
        %6297 = vmatprep.subr.mxu0 0.0
        %6298 = vmatpush1.msra.mxu0 0.0
        %6299 = vmatprep.subr.mxu0 0.0
        %6300 = vmatpush1.msra.mxu0 0.0
        %6301 = vmatprep.subr.mxu0 0.0
        %6302 = vmatpush1.msra.mxu0 0.0
        %6303 = vmatprep.subr.mxu0 0.0
        %6304 = vmatpush1.msra.mxu0 0.0
        %6305 = vmatprep.subr.mxu0 0.0
        %6306 = vmatpush1.msra.mxu0 0.0
        %6307 = vmatprep.subr.mxu0 0.0
        %6308 = vmatpush1.msra.mxu0 0.0
        %6309 = vmatprep.subr.mxu0 0.0
        %6310 = vmatpush1.msra.mxu0 0.0
        %6311 = vmatprep.subr.mxu0 0.0
        %6312 = vmatpush1.msra.mxu0 0.0
        %6313 = vmatprep.subr.mxu0 0.0
        %6314 = vmatpush1.msra.mxu0 0.0
        %6315 = vmatprep.subr.mxu0 0.0
        %6316 = vmatpush1.msra.mxu0 0.0
        %6317 = vmatprep.subr.mxu0 0.0
        %6318 = vmatpush1.msra.mxu0 0.0
        %6319 = vmatprep.subr.mxu0 0.0
        %6320 = vmatpush1.msra.mxu0 0.0
        %6321 = vmatprep.subr.mxu0 0.0
        %6322 = vmatpush1.msra.mxu0 0.0
        %6323 = vmatprep.subr.mxu0 0.0
        %6324 = vmatpush1.msra.mxu0 0.0
        %6325 = vmatprep.subr.mxu0 0.0
        %6326 = vmatpush1.msra.mxu0 %v6291
        %6327 = vmatprep.subr.mxu0 0.0
        %6328 = vmatpush2.msra.mxu0 0.0
        %6329 = vmatprep.subr.mxu0 0.0
        %6330 = vmatpush2.msra.mxu0 0.0
        %6331 = vmatprep.subr.mxu0 0.0
        %6332 = vmatpush2.msra.mxu0 0.0
        %6333 = vmatprep.subr.mxu0 0.0
        %6334 = vmatpush2.msra.mxu0 0.0
        %6335 = vmatprep.subr.mxu0 0.0
        %6336 = vmatpush2.msra.mxu0 0.0
        %6337 = vmatprep.subr.mxu0 0.0
        %6338 = vmatpush2.msra.mxu0 0.0
        %6339 = vmatprep.subr.mxu0 0.0
        %6340 = vmatpush2.msra.mxu0 0.0
        %6341 = vmatprep.subr.mxu0 0.0
        %6342 = vmatpush2.msra.mxu0 0.0
        %6343 = vmatprep.subr.mxu0 0.0
        %6344 = vmatpush2.msra.mxu0 0.0
        %6345 = vmatprep.subr.mxu0 0.0
        %6346 = vmatpush2.msra.mxu0 0.0
        %6347 = vmatprep.subr.mxu0 0.0
        %6348 = vmatpush2.msra.mxu0 0.0
        %6349 = vmatprep.subr.mxu0 0.0
        %6350 = vmatpush2.msra.mxu0 0.0
        %6351 = vmatprep.subr.mxu0 0.0
        %6352 = vmatpush2.msra.mxu0 0.0
        %6353 = vmatprep.subr.mxu0 0.0
        %6354 = vmatpush2.msra.mxu0 0.0
        %6355 = vmatprep.subr.mxu0 0.0
        %6356 = vmatpush2.msra.mxu0 0.0
        %6357 = vmatprep.subr.mxu0 0.0
        %6358 = vmatpush2.msra.mxu0 0.0
        %6359 = vmatprep.mubr.f32.mxu0 0.0
        %6360 = vmatmul.mubr.f32.gmra.mxu0 %v6293
        %v6361 = vpop.f32.mrf.mxu0
        %v6362 = vadd.f32 0.0, %v6361
        %v6363 = vpop.f32.mrf.mxu0
        %6364 = vdwg.mxu0
        %v6365 = vadd.f32 %v6123, %v6362
        %6366 = vrot.lane.b32.xlu0 %v5648, 104
        %v6367 = vpop.permute.xlu0 %6366
        %6368 = vrot.lane.b32.xlu0 %v5648, 72
        %v6369 = vpop.permute.xlu0 %6368
        %v6370 = vsel %vm983, %v6367, 0
        %v6372 = vsel %vm983, %v6369, 0
        %6374 = vmatprep.subr.mxu0 0.0
        %6375 = vmatpush1.xpose.msra.mxu0 0.0
        %6376 = vmatprep.subr.mxu0 0.0
        %6377 = vmatpush1.xpose.msra.mxu0 0.0
        %6378 = vmatprep.subr.mxu0 0.0
        %6379 = vmatpush1.xpose.msra.mxu0 0.0
        %6380 = vmatprep.subr.mxu0 0.0
        %6381 = vmatpush1.xpose.msra.mxu0 0.0
        %6382 = vmatprep.subr.mxu0 0.0
        %6383 = vmatpush1.xpose.msra.mxu0 0.0
        %6384 = vmatprep.subr.mxu0 0.0
        %6385 = vmatpush1.xpose.msra.mxu0 0.0
        %6386 = vmatprep.subr.mxu0 0.0
        %6387 = vmatpush1.xpose.msra.mxu0 0.0
        %6388 = vmatprep.subr.mxu0 0.0
        %6389 = vmatpush1.xpose.msra.mxu0 0.0
        %6390 = vmatprep.subr.mxu0 0.0
        %6391 = vmatpush1.xpose.msra.mxu0 0.0
        %6392 = vmatprep.subr.mxu0 0.0
        %6393 = vmatpush1.xpose.msra.mxu0 0.0
        %6394 = vmatprep.subr.mxu0 0.0
        %6395 = vmatpush1.xpose.msra.mxu0 0.0
        %6396 = vmatprep.subr.mxu0 0.0
        %6397 = vmatpush1.xpose.msra.mxu0 0.0
        %6398 = vmatprep.subr.mxu0 0.0
        %6399 = vmatpush1.xpose.msra.mxu0 0.0
        %6400 = vmatprep.subr.mxu0 0.0
        %6401 = vmatpush1.xpose.msra.mxu0 0.0
        %6402 = vmatprep.subr.mxu0 0.0
        %6403 = vmatpush1.xpose.msra.mxu0 0.0
        %6404 = vmatprep.subr.mxu0 0.0
        %6405 = vmatpush1.xpose.msra.mxu0 %v6372
        %6406 = vmatprep.subr.mxu0 0.0
        %6407 = vmatpush2.xpose.msra.mxu0 0.0
        %6408 = vmatprep.subr.mxu0 0.0
        %6409 = vmatpush2.xpose.msra.mxu0 0.0
        %6410 = vmatprep.subr.mxu0 0.0
        %6411 = vmatpush2.xpose.msra.mxu0 0.0
        %6412 = vmatprep.subr.mxu0 0.0
        %6413 = vmatpush2.xpose.msra.mxu0 0.0
        %6414 = vmatprep.subr.mxu0 0.0
        %6415 = vmatpush2.xpose.msra.mxu0 0.0
        %6416 = vmatprep.subr.mxu0 0.0
        %6417 = vmatpush2.xpose.msra.mxu0 0.0
        %6418 = vmatprep.subr.mxu0 0.0
        %6419 = vmatpush2.xpose.msra.mxu0 0.0
        %6420 = vmatprep.subr.mxu0 0.0
        %6421 = vmatpush2.xpose.msra.mxu0 0.0
        %6422 = vmatprep.subr.mxu0 0.0
        %6423 = vmatpush2.xpose.msra.mxu0 0.0
        %6424 = vmatprep.subr.mxu0 0.0
        %6425 = vmatpush2.xpose.msra.mxu0 0.0
        %6426 = vmatprep.subr.mxu0 0.0
        %6427 = vmatpush2.xpose.msra.mxu0 0.0
        %6428 = vmatprep.subr.mxu0 0.0
        %6429 = vmatpush2.xpose.msra.mxu0 0.0
        %6430 = vmatprep.subr.mxu0 0.0
        %6431 = vmatpush2.xpose.msra.mxu0 0.0
        %6432 = vmatprep.subr.mxu0 0.0
        %6433 = vmatpush2.xpose.msra.mxu0 0.0
        %6434 = vmatprep.subr.mxu0 0.0
        %6435 = vmatpush2.xpose.msra.mxu0 0.0
        %6436 = vmatprep.subr.mxu0 0.0
        %6437 = vmatpush2.xpose.msra.mxu0 0.0
        %6438 = vmatprep.mubr.f32.mxu0 0.0
        %6439 = vmatmul.mubr.f32.gmra.mxu0 %v6370
        %v6440 = vpop.f32.mrf.mxu0
        %v6441 = vadd.f32 0.0, %v6440
        %v6442 = vpop.f32.mrf.mxu0
        %6443 = vdwg.mxu0
        %v6444 = vsel %vm983, %v6441, -inf
        %6445 = vmax.xlane.f32.xlu0 %v6444
        %v6446 = vpop.xlane.xlu0 %6445
        %v6447 = vsub.f32 %v6441, %v6446
        %v6448 = vmul.f32 %v6447, 1.442695
        %v6449 = vpow.pop %v6448
        %v6450 = vsel %vm983, %v6449, 0.0
        %6451 = vadd.xlane.f32.xlu0 %v6450
        %v6452 = vpop.xlane.xlu0 %6451
        %v6453 = vrcp.pop %v6452
        %v6454 = vmul.f32 %v6449, %v6453
        %6455 = vrot.lane.b32.xlu0 %v5648, 40
        %v6456 = vpop.permute.xlu0 %6455
        %v6459 = vsel %vm983, %v6454, 0
        %6461 = vmatprep.subr.mxu0 0.0
        %6462 = vmatpush1.msra.mxu0 0.0
        %6463 = vmatprep.subr.mxu0 0.0
        %6464 = vmatpush1.msra.mxu0 0.0
        %6465 = vmatprep.subr.mxu0 0.0
        %6466 = vmatpush1.msra.mxu0 0.0
        %6467 = vmatprep.subr.mxu0 0.0
        %6468 = vmatpush1.msra.mxu0 0.0
        %6469 = vmatprep.subr.mxu0 0.0
        %6470 = vmatpush1.msra.mxu0 0.0
        %6471 = vmatprep.subr.mxu0 0.0
        %6472 = vmatpush1.msra.mxu0 0.0
        %6473 = vmatprep.subr.mxu0 0.0
        %6474 = vmatpush1.msra.mxu0 0.0
        %6475 = vmatprep.subr.mxu0 0.0
        %6476 = vmatpush1.msra.mxu0 0.0
        %6477 = vmatprep.subr.mxu0 0.0
        %6478 = vmatpush1.msra.mxu0 0.0
        %6479 = vmatprep.subr.mxu0 0.0
        %6480 = vmatpush1.msra.mxu0 0.0
        %6481 = vmatprep.subr.mxu0 0.0
        %6482 = vmatpush1.msra.mxu0 0.0
        %6483 = vmatprep.subr.mxu0 0.0
        %6484 = vmatpush1.msra.mxu0 0.0
        %6485 = vmatprep.subr.mxu0 0.0
        %6486 = vmatpush1.msra.mxu0 0.0
        %6487 = vmatprep.subr.mxu0 0.0
        %6488 = vmatpush1.msra.mxu0 0.0
        %6489 = vmatprep.subr.mxu0 0.0
        %6490 = vmatpush1.msra.mxu0 0.0
        %6491 = vmatprep.subr.mxu0 0.0
        %6492 = vmatpush1.msra.mxu0 %v6456
        %6493 = vmatprep.subr.mxu0 0.0
        %6494 = vmatpush2.msra.mxu0 0.0
        %6495 = vmatprep.subr.mxu0 0.0
        %6496 = vmatpush2.msra.mxu0 0.0
        %6497 = vmatprep.subr.mxu0 0.0
        %6498 = vmatpush2.msra.mxu0 0.0
        %6499 = vmatprep.subr.mxu0 0.0
        %6500 = vmatpush2.msra.mxu0 0.0
        %6501 = vmatprep.subr.mxu0 0.0
        %6502 = vmatpush2.msra.mxu0 0.0
        %6503 = vmatprep.subr.mxu0 0.0
        %6504 = vmatpush2.msra.mxu0 0.0
        %6505 = vmatprep.subr.mxu0 0.0
        %6506 = vmatpush2.msra.mxu0 0.0
        %6507 = vmatprep.subr.mxu0 0.0
        %6508 = vmatpush2.msra.mxu0 0.0
        %6509 = vmatprep.subr.mxu0 0.0
        %6510 = vmatpush2.msra.mxu0 0.0
        %6511 = vmatprep.subr.mxu0 0.0
        %6512 = vmatpush2.msra.mxu0 0.0
        %6513 = vmatprep.subr.mxu0 0.0
        %6514 = vmatpush2.msra.mxu0 0.0
        %6515 = vmatprep.subr.mxu0 0.0
        %6516 = vmatpush2.msra.mxu0 0.0
        %6517 = vmatprep.subr.mxu0 0.0
        %6518 = vmatpush2.msra.mxu0 0.0
        %6519 = vmatprep.subr.mxu0 0.0
        %6520 = vmatpush2.msra.mxu0 0.0
        %6521 = vmatprep.subr.mxu0 0.0
        %6522 = vmatpush2.msra.mxu0 0.0
        %6523 = vmatprep.subr.mxu0 0.0
        %6524 = vmatpush2.msra.mxu0 0.0
        %6525 = vmatprep.mubr.f32.mxu0 0.0
        %6526 = vmatmul.mubr.f32.gmra.mxu0 %v6459
        %v6527 = vpop.f32.mrf.mxu0
        %v6528 = vadd.f32 0.0, %v6527
        %v6529 = vpop.f32.mrf.mxu0
        %6530 = vdwg.mxu0
        %v6531 = vld [vmem:[%s1865] sm:$0xff]
        %v6533 = vsel %vm983, %v6528, 0
        %6535 = vmatprep.subr.mxu0 0.0
        %6536 = vmatpush1.msra.mxu0 0.0
        %6537 = vmatprep.subr.mxu0 0.0
        %6538 = vmatpush1.msra.mxu0 0.0
        %6539 = vmatprep.subr.mxu0 0.0
        %6540 = vmatpush1.msra.mxu0 0.0
        %6541 = vmatprep.subr.mxu0 0.0
        %6542 = vmatpush1.msra.mxu0 0.0
        %6543 = vmatprep.subr.mxu0 0.0
        %6544 = vmatpush1.msra.mxu0 0.0
        %6545 = vmatprep.subr.mxu0 0.0
        %6546 = vmatpush1.msra.mxu0 0.0
        %6547 = vmatprep.subr.mxu0 0.0
        %6548 = vmatpush1.msra.mxu0 0.0
        %6549 = vmatprep.subr.mxu0 0.0
        %6550 = vmatpush1.msra.mxu0 0.0
        %6551 = vmatprep.subr.mxu0 0.0
        %6552 = vmatpush1.msra.mxu0 0.0
        %6553 = vmatprep.subr.mxu0 0.0
        %6554 = vmatpush1.msra.mxu0 0.0
        %6555 = vmatprep.subr.mxu0 0.0
        %6556 = vmatpush1.msra.mxu0 0.0
        %6557 = vmatprep.subr.mxu0 0.0
        %6558 = vmatpush1.msra.mxu0 0.0
        %6559 = vmatprep.subr.mxu0 0.0
        %6560 = vmatpush1.msra.mxu0 0.0
        %6561 = vmatprep.subr.mxu0 0.0
        %6562 = vmatpush1.msra.mxu0 0.0
        %6563 = vmatprep.subr.mxu0 0.0
        %6564 = vmatpush1.msra.mxu0 0.0
        %6565 = vmatprep.subr.mxu0 0.0
        %6566 = vmatpush1.msra.mxu0 %v6531
        %6567 = vmatprep.subr.mxu0 0.0
        %6568 = vmatpush2.msra.mxu0 0.0
        %6569 = vmatprep.subr.mxu0 0.0
        %6570 = vmatpush2.msra.mxu0 0.0
        %6571 = vmatprep.subr.mxu0 0.0
        %6572 = vmatpush2.msra.mxu0 0.0
        %6573 = vmatprep.subr.mxu0 0.0
        %6574 = vmatpush2.msra.mxu0 0.0
        %6575 = vmatprep.subr.mxu0 0.0
        %6576 = vmatpush2.msra.mxu0 0.0
        %6577 = vmatprep.subr.mxu0 0.0
        %6578 = vmatpush2.msra.mxu0 0.0
        %6579 = vmatprep.subr.mxu0 0.0
        %6580 = vmatpush2.msra.mxu0 0.0
        %6581 = vmatprep.subr.mxu0 0.0
        %6582 = vmatpush2.msra.mxu0 0.0
        %6583 = vmatprep.subr.mxu0 0.0
        %6584 = vmatpush2.msra.mxu0 0.0
        %6585 = vmatprep.subr.mxu0 0.0
        %6586 = vmatpush2.msra.mxu0 0.0
        %6587 = vmatprep.subr.mxu0 0.0
        %6588 = vmatpush2.msra.mxu0 0.0
        %6589 = vmatprep.subr.mxu0 0.0
        %6590 = vmatpush2.msra.mxu0 0.0
        %6591 = vmatprep.subr.mxu0 0.0
        %6592 = vmatpush2.msra.mxu0 0.0
        %6593 = vmatprep.subr.mxu0 0.0
        %6594 = vmatpush2.msra.mxu0 0.0
        %6595 = vmatprep.subr.mxu0 0.0
        %6596 = vmatpush2.msra.mxu0 0.0
        %6597 = vmatprep.subr.mxu0 0.0
        %6598 = vmatpush2.msra.mxu0 0.0
        %6599 = vmatprep.mubr.f32.mxu0 0.0
        %6600 = vmatmul.mubr.f32.gmra.mxu0 %v6533
        %v6601 = vpop.f32.mrf.mxu0
        %v6602 = vadd.f32 0.0, %v6601
        %v6603 = vpop.f32.mrf.mxu0
        %6604 = vdwg.mxu0
        %v6605 = vadd.f32 %v6365, %v6602
        %v6606 = vld [vmem:[%s5] sm:$0x1]
        %v6608 = vlaneseq
        %v6609 = vshrl.u32 %v6608, 7
        %v6610 = vsub.s32 0, %v6609
        %v6611 = vrot.slane %v6606, %v6610
        %v6613 = vadd.f32 %v6605, %v6611
        %v6614 = vadd.f32 %v5552, %v6613
        %v6615 = vmul.f32 %v6614, %v6614
        %v6616 = vsel %vm799, %v6615, 0.0
        %6617 = vadd.xlane.f32.xlu0 %v6616
        %v6618 = vpop.xlane.xlu0 %6617
        %v6619 = vmul.f32 %v6618, %v888
        %v6620 = vadd.f32 %v6619, 1.1920929e-07
        %v6621 = vrsqrt.pop %v6620
        %v6622 = vmul.f32 %v6614, %v6621
        %v6623 = vld [vmem:[#allocation13] sm:$0xff]
        %v6624 = vld [vmem:[#allocation13 + $0x8] sm:$0xff]
        %v6625 = vld [vmem:[#allocation13 + $0x10] sm:$0xff]
        %v6626 = vld [vmem:[#allocation13 + $0x18] sm:$0xff]
        %v6627 = vld [vmem:[%s7] sm:$0x1]
        %v6629 = vlaneseq
        %v6630 = vshrl.u32 %v6629, 7
        %v6631 = vsub.s32 0, %v6630
        %v6632 = vrot.slane %v6627, %v6631
        %v6635 = vsel %vm799, %v6622, 0
        %6637 = vmatprep.subr.mxu0 0.0
        %6638 = vmatpush1.msra.mxu0 0.0
        %6639 = vmatprep.subr.mxu0 0.0
        %6640 = vmatpush1.msra.mxu0 0.0
        %6641 = vmatprep.subr.mxu0 0.0
        %6642 = vmatpush1.msra.mxu0 0.0
        %6643 = vmatprep.subr.mxu0 0.0
        %6644 = vmatpush1.msra.mxu0 0.0
        %6645 = vmatprep.subr.mxu0 0.0
        %6646 = vmatpush1.msra.mxu0 0.0
        %6647 = vmatprep.subr.mxu0 0.0
        %6648 = vmatpush1.msra.mxu0 0.0
        %6649 = vmatprep.subr.mxu0 0.0
        %6650 = vmatpush1.msra.mxu0 0.0
        %6651 = vmatprep.subr.mxu0 0.0
        %6652 = vmatpush1.msra.mxu0 0.0
        %6653 = vmatprep.subr.mxu0 0.0
        %6654 = vmatpush1.msra.mxu0 0.0
        %6655 = vmatprep.subr.mxu0 0.0
        %6656 = vmatpush1.msra.mxu0 0.0
        %6657 = vmatprep.subr.mxu0 0.0
        %6658 = vmatpush1.msra.mxu0 0.0
        %6659 = vmatprep.subr.mxu0 0.0
        %6660 = vmatpush1.msra.mxu0 0.0
        %6661 = vmatprep.subr.mxu0 0.0
        %6662 = vmatpush1.msra.mxu0 %v6626
        %6663 = vmatprep.subr.mxu0 0.0
        %6664 = vmatpush1.msra.mxu0 %v6625
        %6665 = vmatprep.subr.mxu0 0.0
        %6666 = vmatpush1.msra.mxu0 %v6624
        %6667 = vmatprep.subr.mxu0 0.0
        %6668 = vmatpush1.msra.mxu0 %v6623
        %6669 = vmatprep.subr.mxu0 0.0
        %6670 = vmatpush2.msra.mxu0 0.0
        %6671 = vmatprep.subr.mxu0 0.0
        %6672 = vmatpush2.msra.mxu0 0.0
        %6673 = vmatprep.subr.mxu0 0.0
        %6674 = vmatpush2.msra.mxu0 0.0
        %6675 = vmatprep.subr.mxu0 0.0
        %6676 = vmatpush2.msra.mxu0 0.0
        %6677 = vmatprep.subr.mxu0 0.0
        %6678 = vmatpush2.msra.mxu0 0.0
        %6679 = vmatprep.subr.mxu0 0.0
        %6680 = vmatpush2.msra.mxu0 0.0
        %6681 = vmatprep.subr.mxu0 0.0
        %6682 = vmatpush2.msra.mxu0 0.0
        %6683 = vmatprep.subr.mxu0 0.0
        %6684 = vmatpush2.msra.mxu0 0.0
        %6685 = vmatprep.subr.mxu0 0.0
        %6686 = vmatpush2.msra.mxu0 0.0
        %6687 = vmatprep.subr.mxu0 0.0
        %6688 = vmatpush2.msra.mxu0 0.0
        %6689 = vmatprep.subr.mxu0 0.0
        %6690 = vmatpush2.msra.mxu0 0.0
        %6691 = vmatprep.subr.mxu0 0.0
        %6692 = vmatpush2.msra.mxu0 0.0
        %6693 = vmatprep.subr.mxu0 0.0
        %6694 = vmatpush2.msra.mxu0 0.0
        %6695 = vmatprep.subr.mxu0 0.0
        %6696 = vmatpush2.msra.mxu0 0.0
        %6697 = vmatprep.subr.mxu0 0.0
        %6698 = vmatpush2.msra.mxu0 0.0
        %6699 = vmatprep.subr.mxu0 0.0
        %6700 = vmatpush2.msra.mxu0 0.0
        %6701 = vmatprep.mubr.f32.mxu0 0.0
        %6702 = vmatmul.mubr.f32.gmra.mxu0 %v6635
        %v6703 = vpop.f32.mrf.mxu0
        %v6704 = vadd.f32 %v6632, %v6703
        %v6705 = vpop.f32.mrf.mxu0
        %6706 = vdwg.mxu0
        %6707 = vst.msk [vmem:[#allocation3] sm:$0xff] %vm799, %v6704
        %v6708 = vld [vmem:[#allocation3] sm:$0xff]
        %v6709 = vld [vmem:[#allocation4] sm:$0xff]
        %v6710 = vld [vmem:[#allocation4 + $0x8] sm:$0xff]
        %v6712 = vsel %vm983, %v6708, 0
        %v6715 = vsel %vm983, %v6709, 0
        %v6718 = vsel %vm983, %v6710, 0
        %6720 = vmatprep.subr.mxu0 0.0
        %6721 = vmatpush1.xpose.msra.mxu0 0.0
        %6722 = vmatprep.subr.mxu0 0.0
        %6723 = vmatpush1.xpose.msra.mxu0 0.0
        %6724 = vmatprep.subr.mxu0 0.0
        %6725 = vmatpush1.xpose.msra.mxu0 0.0
        %6726 = vmatprep.subr.mxu0 0.0
        %6727 = vmatpush1.xpose.msra.mxu0 0.0
        %6728 = vmatprep.subr.mxu0 0.0
        %6729 = vmatpush1.xpose.msra.mxu0 0.0
        %6730 = vmatprep.subr.mxu0 0.0
        %6731 = vmatpush1.xpose.msra.mxu0 0.0
        %6732 = vmatprep.subr.mxu0 0.0
        %6733 = vmatpush1.xpose.msra.mxu0 0.0
        %6734 = vmatprep.subr.mxu0 0.0
        %6735 = vmatpush1.xpose.msra.mxu0 0.0
        %6736 = vmatprep.subr.mxu0 0.0
        %6737 = vmatpush1.xpose.msra.mxu0 0.0
        %6738 = vmatprep.subr.mxu0 0.0
        %6739 = vmatpush1.xpose.msra.mxu0 0.0
        %6740 = vmatprep.subr.mxu0 0.0
        %6741 = vmatpush1.xpose.msra.mxu0 0.0
        %6742 = vmatprep.subr.mxu0 0.0
        %6743 = vmatpush1.xpose.msra.mxu0 0.0
        %6744 = vmatprep.subr.mxu0 0.0
        %6745 = vmatpush1.xpose.msra.mxu0 0.0
        %6746 = vmatprep.subr.mxu0 0.0
        %6747 = vmatpush1.xpose.msra.mxu0 0.0
        %6748 = vmatprep.subr.mxu0 0.0
        %6749 = vmatpush1.xpose.msra.mxu0 %v6718
        %6750 = vmatprep.subr.mxu0 0.0
        %6751 = vmatpush1.xpose.msra.mxu0 %v6715
        %6752 = vmatprep.subr.mxu0 0.0
        %6753 = vmatpush2.xpose.msra.mxu0 0.0
        %6754 = vmatprep.subr.mxu0 0.0
        %6755 = vmatpush2.xpose.msra.mxu0 0.0
        %6756 = vmatprep.subr.mxu0 0.0
        %6757 = vmatpush2.xpose.msra.mxu0 0.0
        %6758 = vmatprep.subr.mxu0 0.0
        %6759 = vmatpush2.xpose.msra.mxu0 0.0
        %6760 = vmatprep.subr.mxu0 0.0
        %6761 = vmatpush2.xpose.msra.mxu0 0.0
        %6762 = vmatprep.subr.mxu0 0.0
        %6763 = vmatpush2.xpose.msra.mxu0 0.0
        %6764 = vmatprep.subr.mxu0 0.0
        %6765 = vmatpush2.xpose.msra.mxu0 0.0
        %6766 = vmatprep.subr.mxu0 0.0
        %6767 = vmatpush2.xpose.msra.mxu0 0.0
        %6768 = vmatprep.subr.mxu0 0.0
        %6769 = vmatpush2.xpose.msra.mxu0 0.0
        %6770 = vmatprep.subr.mxu0 0.0
        %6771 = vmatpush2.xpose.msra.mxu0 0.0
        %6772 = vmatprep.subr.mxu0 0.0
        %6773 = vmatpush2.xpose.msra.mxu0 0.0
        %6774 = vmatprep.subr.mxu0 0.0
        %6775 = vmatpush2.xpose.msra.mxu0 0.0
        %6776 = vmatprep.subr.mxu0 0.0
        %6777 = vmatpush2.xpose.msra.mxu0 0.0
        %6778 = vmatprep.subr.mxu0 0.0
        %6779 = vmatpush2.xpose.msra.mxu0 0.0
        %6780 = vmatprep.subr.mxu0 0.0
        %6781 = vmatpush2.xpose.msra.mxu0 0.0
        %6782 = vmatprep.subr.mxu0 0.0
        %6783 = vmatpush2.xpose.msra.mxu0 0.0
        %6784 = vmatprep.mubr.f32.mxu0 0.0
        %6785 = vmatmul.mubr.f32.gmra.mxu0 %v6712
        %v6786 = vpop.f32.mrf.mxu0
        %v6787 = vadd.f32 0.0, %v6786
        %v6788 = vpop.f32.mrf.mxu0
        %6789 = vdwg.mxu0
        %v6790 = vsel %vm2125, %v6787, -inf
        %6791 = vmax.xlane.f32.xlu0 %v6790
        %v6792 = vpop.xlane.xlu0 %6791
        %v6793 = vsub.f32 %v6787, %v6792
        %v6794 = vmul.f32 %v6793, 1.442695
        %v6795 = vpow.pop %v6794
        %v6796 = vsel %vm2125, %v6795, 0.0
        %6797 = vadd.xlane.f32.xlu0 %v6796
        %v6798 = vpop.xlane.xlu0 %6797
        %v6799 = vrcp.pop %v6798
        %v6800 = vmul.f32 %v6795, %v6799
        %6801 = vrot.lane.b32.xlu0 %v6709, 96
        %v6802 = vpop.permute.xlu0 %6801
        %6803 = vrot.lane.b32.xlu0 %v6710, 96
        %v6804 = vpop.permute.xlu0 %6803
        %v6808 = vsel %vm2125, %v6800, 0
        %6810 = vmatprep.subr.mxu0 0.0
        %6811 = vmatpush1.msra.mxu0 0.0
        %6812 = vmatprep.subr.mxu0 0.0
        %6813 = vmatpush1.msra.mxu0 0.0
        %6814 = vmatprep.subr.mxu0 0.0
        %6815 = vmatpush1.msra.mxu0 0.0
        %6816 = vmatprep.subr.mxu0 0.0
        %6817 = vmatpush1.msra.mxu0 0.0
        %6818 = vmatprep.subr.mxu0 0.0
        %6819 = vmatpush1.msra.mxu0 0.0
        %6820 = vmatprep.subr.mxu0 0.0
        %6821 = vmatpush1.msra.mxu0 0.0
        %6822 = vmatprep.subr.mxu0 0.0
        %6823 = vmatpush1.msra.mxu0 0.0
        %6824 = vmatprep.subr.mxu0 0.0
        %6825 = vmatpush1.msra.mxu0 0.0
        %6826 = vmatprep.subr.mxu0 0.0
        %6827 = vmatpush1.msra.mxu0 0.0
        %6828 = vmatprep.subr.mxu0 0.0
        %6829 = vmatpush1.msra.mxu0 0.0
        %6830 = vmatprep.subr.mxu0 0.0
        %6831 = vmatpush1.msra.mxu0 0.0
        %6832 = vmatprep.subr.mxu0 0.0
        %6833 = vmatpush1.msra.mxu0 0.0
        %6834 = vmatprep.subr.mxu0 0.0
        %6835 = vmatpush1.msra.mxu0 0.0
        %6836 = vmatprep.subr.mxu0 0.0
        %6837 = vmatpush1.msra.mxu0 0.0
        %6838 = vmatprep.subr.mxu0 0.0
        %6839 = vmatpush1.msra.mxu0 %v6804
        %6840 = vmatprep.subr.mxu0 0.0
        %6841 = vmatpush1.msra.mxu0 %v6802
        %6842 = vmatprep.subr.mxu0 0.0
        %6843 = vmatpush2.msra.mxu0 0.0
        %6844 = vmatprep.subr.mxu0 0.0
        %6845 = vmatpush2.msra.mxu0 0.0
        %6846 = vmatprep.subr.mxu0 0.0
        %6847 = vmatpush2.msra.mxu0 0.0
        %6848 = vmatprep.subr.mxu0 0.0
        %6849 = vmatpush2.msra.mxu0 0.0
        %6850 = vmatprep.subr.mxu0 0.0
        %6851 = vmatpush2.msra.mxu0 0.0
        %6852 = vmatprep.subr.mxu0 0.0
        %6853 = vmatpush2.msra.mxu0 0.0
        %6854 = vmatprep.subr.mxu0 0.0
        %6855 = vmatpush2.msra.mxu0 0.0
        %6856 = vmatprep.subr.mxu0 0.0
        %6857 = vmatpush2.msra.mxu0 0.0
        %6858 = vmatprep.subr.mxu0 0.0
        %6859 = vmatpush2.msra.mxu0 0.0
        %6860 = vmatprep.subr.mxu0 0.0
        %6861 = vmatpush2.msra.mxu0 0.0
        %6862 = vmatprep.subr.mxu0 0.0
        %6863 = vmatpush2.msra.mxu0 0.0
        %6864 = vmatprep.subr.mxu0 0.0
        %6865 = vmatpush2.msra.mxu0 0.0
        %6866 = vmatprep.subr.mxu0 0.0
        %6867 = vmatpush2.msra.mxu0 0.0
        %6868 = vmatprep.subr.mxu0 0.0
        %6869 = vmatpush2.msra.mxu0 0.0
        %6870 = vmatprep.subr.mxu0 0.0
        %6871 = vmatpush2.msra.mxu0 0.0
        %6872 = vmatprep.subr.mxu0 0.0
        %6873 = vmatpush2.msra.mxu0 0.0
        %6874 = vmatprep.mubr.f32.mxu0 0.0
        %6875 = vmatmul.mubr.f32.gmra.mxu0 %v6808
        %v6876 = vpop.f32.mrf.mxu0
        %v6877 = vadd.f32 0.0, %v6876
        %v6878 = vpop.f32.mrf.mxu0
        %6879 = vdwg.mxu0
        %v6880 = vld [vmem:[#allocation16] sm:$0xff]
        %6881 = vrot.lane.b32.xlu0 %v6708, 120
        %v6882 = vpop.permute.xlu0 %6881
        %6883 = vrot.lane.b32.xlu0 %v6709, 120
        %v6884 = vpop.permute.xlu0 %6883
        %6885 = vrot.lane.b32.xlu0 %v6710, 120
        %v6886 = vpop.permute.xlu0 %6885
        %v6887 = vsel %vm983, %v6882, 0
        %v6889 = vsel %vm983, %v6884, 0
        %v6891 = vsel %vm983, %v6886, 0
        %6893 = vmatprep.subr.mxu0 0.0
        %6894 = vmatpush1.xpose.msra.mxu0 0.0
        %6895 = vmatprep.subr.mxu0 0.0
        %6896 = vmatpush1.xpose.msra.mxu0 0.0
        %6897 = vmatprep.subr.mxu0 0.0
        %6898 = vmatpush1.xpose.msra.mxu0 0.0
        %6899 = vmatprep.subr.mxu0 0.0
        %6900 = vmatpush1.xpose.msra.mxu0 0.0
        %6901 = vmatprep.subr.mxu0 0.0
        %6902 = vmatpush1.xpose.msra.mxu0 0.0
        %6903 = vmatprep.subr.mxu0 0.0
        %6904 = vmatpush1.xpose.msra.mxu0 0.0
        %6905 = vmatprep.subr.mxu0 0.0
        %6906 = vmatpush1.xpose.msra.mxu0 0.0
        %6907 = vmatprep.subr.mxu0 0.0
        %6908 = vmatpush1.xpose.msra.mxu0 0.0
        %6909 = vmatprep.subr.mxu0 0.0
        %6910 = vmatpush1.xpose.msra.mxu0 0.0
        %6911 = vmatprep.subr.mxu0 0.0
        %6912 = vmatpush1.xpose.msra.mxu0 0.0
        %6913 = vmatprep.subr.mxu0 0.0
        %6914 = vmatpush1.xpose.msra.mxu0 0.0
        %6915 = vmatprep.subr.mxu0 0.0
        %6916 = vmatpush1.xpose.msra.mxu0 0.0
        %6917 = vmatprep.subr.mxu0 0.0
        %6918 = vmatpush1.xpose.msra.mxu0 0.0
        %6919 = vmatprep.subr.mxu0 0.0
        %6920 = vmatpush1.xpose.msra.mxu0 0.0
        %6921 = vmatprep.subr.mxu0 0.0
        %6922 = vmatpush1.xpose.msra.mxu0 %v6891
        %6923 = vmatprep.subr.mxu0 0.0
        %6924 = vmatpush1.xpose.msra.mxu0 %v6889
        %6925 = vmatprep.subr.mxu0 0.0
        %6926 = vmatpush2.xpose.msra.mxu0 0.0
        %6927 = vmatprep.subr.mxu0 0.0
        %6928 = vmatpush2.xpose.msra.mxu0 0.0
        %6929 = vmatprep.subr.mxu0 0.0
        %6930 = vmatpush2.xpose.msra.mxu0 0.0
        %6931 = vmatprep.subr.mxu0 0.0
        %6932 = vmatpush2.xpose.msra.mxu0 0.0
        %6933 = vmatprep.subr.mxu0 0.0
        %6934 = vmatpush2.xpose.msra.mxu0 0.0
        %6935 = vmatprep.subr.mxu0 0.0
        %6936 = vmatpush2.xpose.msra.mxu0 0.0
        %6937 = vmatprep.subr.mxu0 0.0
        %6938 = vmatpush2.xpose.msra.mxu0 0.0
        %6939 = vmatprep.subr.mxu0 0.0
        %6940 = vmatpush2.xpose.msra.mxu0 0.0
        %6941 = vmatprep.subr.mxu0 0.0
        %6942 = vmatpush2.xpose.msra.mxu0 0.0
        %6943 = vmatprep.subr.mxu0 0.0
        %6944 = vmatpush2.xpose.msra.mxu0 0.0
        %6945 = vmatprep.subr.mxu0 0.0
        %6946 = vmatpush2.xpose.msra.mxu0 0.0
        %6947 = vmatprep.subr.mxu0 0.0
        %6948 = vmatpush2.xpose.msra.mxu0 0.0
        %6949 = vmatprep.subr.mxu0 0.0
        %6950 = vmatpush2.xpose.msra.mxu0 0.0
        %6951 = vmatprep.subr.mxu0 0.0
        %6952 = vmatpush2.xpose.msra.mxu0 0.0
        %6953 = vmatprep.subr.mxu0 0.0
        %6954 = vmatpush2.xpose.msra.mxu0 0.0
        %6955 = vmatprep.subr.mxu0 0.0
        %6956 = vmatpush2.xpose.msra.mxu0 0.0
        %6957 = vmatprep.mubr.f32.mxu0 0.0
        %6958 = vmatmul.mubr.f32.gmra.mxu0 %v6887
        %v6959 = vpop.f32.mrf.mxu0
        %v6960 = vadd.f32 0.0, %v6959
        %v6961 = vpop.f32.mrf.mxu0
        %6962 = vdwg.mxu0
        %v6963 = vsel %vm2125, %v6960, -inf
        %6964 = vmax.xlane.f32.xlu0 %v6963
        %v6965 = vpop.xlane.xlu0 %6964
        %v6966 = vsub.f32 %v6960, %v6965
        %v6967 = vmul.f32 %v6966, 1.442695
        %v6968 = vpow.pop %v6967
        %v6969 = vsel %vm2125, %v6968, 0.0
        %6970 = vadd.xlane.f32.xlu0 %v6969
        %v6971 = vpop.xlane.xlu0 %6970
        %v6972 = vrcp.pop %v6971
        %v6973 = vmul.f32 %v6968, %v6972
        %6974 = vrot.lane.b32.xlu0 %v6709, 88
        %v6975 = vpop.permute.xlu0 %6974
        %6976 = vrot.lane.b32.xlu0 %v6710, 88
        %v6977 = vpop.permute.xlu0 %6976
        %v6981 = vsel %vm2125, %v6973, 0
        %6983 = vmatprep.subr.mxu0 0.0
        %6984 = vmatpush1.msra.mxu0 0.0
        %6985 = vmatprep.subr.mxu0 0.0
        %6986 = vmatpush1.msra.mxu0 0.0
        %6987 = vmatprep.subr.mxu0 0.0
        %6988 = vmatpush1.msra.mxu0 0.0
        %6989 = vmatprep.subr.mxu0 0.0
        %6990 = vmatpush1.msra.mxu0 0.0
        %6991 = vmatprep.subr.mxu0 0.0
        %6992 = vmatpush1.msra.mxu0 0.0
        %6993 = vmatprep.subr.mxu0 0.0
        %6994 = vmatpush1.msra.mxu0 0.0
        %6995 = vmatprep.subr.mxu0 0.0
        %6996 = vmatpush1.msra.mxu0 0.0
        %6997 = vmatprep.subr.mxu0 0.0
        %6998 = vmatpush1.msra.mxu0 0.0
        %6999 = vmatprep.subr.mxu0 0.0
        %7000 = vmatpush1.msra.mxu0 0.0
        %7001 = vmatprep.subr.mxu0 0.0
        %7002 = vmatpush1.msra.mxu0 0.0
        %7003 = vmatprep.subr.mxu0 0.0
        %7004 = vmatpush1.msra.mxu0 0.0
        %7005 = vmatprep.subr.mxu0 0.0
        %7006 = vmatpush1.msra.mxu0 0.0
        %7007 = vmatprep.subr.mxu0 0.0
        %7008 = vmatpush1.msra.mxu0 0.0
        %7009 = vmatprep.subr.mxu0 0.0
        %7010 = vmatpush1.msra.mxu0 0.0
        %7011 = vmatprep.subr.mxu0 0.0
        %7012 = vmatpush1.msra.mxu0 %v6977
        %7013 = vmatprep.subr.mxu0 0.0
        %7014 = vmatpush1.msra.mxu0 %v6975
        %7015 = vmatprep.subr.mxu0 0.0
        %7016 = vmatpush2.msra.mxu0 0.0
        %7017 = vmatprep.subr.mxu0 0.0
        %7018 = vmatpush2.msra.mxu0 0.0
        %7019 = vmatprep.subr.mxu0 0.0
        %7020 = vmatpush2.msra.mxu0 0.0
        %7021 = vmatprep.subr.mxu0 0.0
        %7022 = vmatpush2.msra.mxu0 0.0
        %7023 = vmatprep.subr.mxu0 0.0
        %7024 = vmatpush2.msra.mxu0 0.0
        %7025 = vmatprep.subr.mxu0 0.0
        %7026 = vmatpush2.msra.mxu0 0.0
        %7027 = vmatprep.subr.mxu0 0.0
        %7028 = vmatpush2.msra.mxu0 0.0
        %7029 = vmatprep.subr.mxu0 0.0
        %7030 = vmatpush2.msra.mxu0 0.0
        %7031 = vmatprep.subr.mxu0 0.0
        %7032 = vmatpush2.msra.mxu0 0.0
        %7033 = vmatprep.subr.mxu0 0.0
        %7034 = vmatpush2.msra.mxu0 0.0
        %7035 = vmatprep.subr.mxu0 0.0
        %7036 = vmatpush2.msra.mxu0 0.0
        %7037 = vmatprep.subr.mxu0 0.0
        %7038 = vmatpush2.msra.mxu0 0.0
        %7039 = vmatprep.subr.mxu0 0.0
        %7040 = vmatpush2.msra.mxu0 0.0
        %7041 = vmatprep.subr.mxu0 0.0
        %7042 = vmatpush2.msra.mxu0 0.0
        %7043 = vmatprep.subr.mxu0 0.0
        %7044 = vmatpush2.msra.mxu0 0.0
        %7045 = vmatprep.subr.mxu0 0.0
        %7046 = vmatpush2.msra.mxu0 0.0
        %7047 = vmatprep.mubr.f32.mxu0 0.0
        %7048 = vmatmul.mubr.f32.gmra.mxu0 %v6981
        %v7049 = vpop.f32.mrf.mxu0
        %v7050 = vadd.f32 0.0, %v7049
        %v7051 = vpop.f32.mrf.mxu0
        %7052 = vdwg.mxu0
        %v7053 = vld [vmem:[%s2389] sm:$0xff]
        %v7055 = vsel %vm983, %v7050, 0
        %7057 = vmatprep.subr.mxu0 0.0
        %7058 = vmatpush1.msra.mxu0 0.0
        %7059 = vmatprep.subr.mxu0 0.0
        %7060 = vmatpush1.msra.mxu0 0.0
        %7061 = vmatprep.subr.mxu0 0.0
        %7062 = vmatpush1.msra.mxu0 0.0
        %7063 = vmatprep.subr.mxu0 0.0
        %7064 = vmatpush1.msra.mxu0 0.0
        %7065 = vmatprep.subr.mxu0 0.0
        %7066 = vmatpush1.msra.mxu0 0.0
        %7067 = vmatprep.subr.mxu0 0.0
        %7068 = vmatpush1.msra.mxu0 0.0
        %7069 = vmatprep.subr.mxu0 0.0
        %7070 = vmatpush1.msra.mxu0 0.0
        %7071 = vmatprep.subr.mxu0 0.0
        %7072 = vmatpush1.msra.mxu0 0.0
        %7073 = vmatprep.subr.mxu0 0.0
        %7074 = vmatpush1.msra.mxu0 0.0
        %7075 = vmatprep.subr.mxu0 0.0
        %7076 = vmatpush1.msra.mxu0 0.0
        %7077 = vmatprep.subr.mxu0 0.0
        %7078 = vmatpush1.msra.mxu0 0.0
        %7079 = vmatprep.subr.mxu0 0.0
        %7080 = vmatpush1.msra.mxu0 0.0
        %7081 = vmatprep.subr.mxu0 0.0
        %7082 = vmatpush1.msra.mxu0 0.0
        %7083 = vmatprep.subr.mxu0 0.0
        %7084 = vmatpush1.msra.mxu0 0.0
        %7085 = vmatprep.subr.mxu0 0.0
        %7086 = vmatpush1.msra.mxu0 0.0
        %7087 = vmatprep.subr.mxu0 0.0
        %7088 = vmatpush1.msra.mxu0 %v7053
        %7089 = vmatprep.subr.mxu0 0.0
        %7090 = vmatpush2.msra.mxu0 0.0
        %7091 = vmatprep.subr.mxu0 0.0
        %7092 = vmatpush2.msra.mxu0 0.0
        %7093 = vmatprep.subr.mxu0 0.0
        %7094 = vmatpush2.msra.mxu0 0.0
        %7095 = vmatprep.subr.mxu0 0.0
        %7096 = vmatpush2.msra.mxu0 0.0
        %7097 = vmatprep.subr.mxu0 0.0
        %7098 = vmatpush2.msra.mxu0 0.0
        %7099 = vmatprep.subr.mxu0 0.0
        %7100 = vmatpush2.msra.mxu0 0.0
        %7101 = vmatprep.subr.mxu0 0.0
        %7102 = vmatpush2.msra.mxu0 0.0
        %7103 = vmatprep.subr.mxu0 0.0
        %7104 = vmatpush2.msra.mxu0 0.0
        %7105 = vmatprep.subr.mxu0 0.0
        %7106 = vmatpush2.msra.mxu0 0.0
        %7107 = vmatprep.subr.mxu0 0.0
        %7108 = vmatpush2.msra.mxu0 0.0
        %7109 = vmatprep.subr.mxu0 0.0
        %7110 = vmatpush2.msra.mxu0 0.0
        %7111 = vmatprep.subr.mxu0 0.0
        %7112 = vmatpush2.msra.mxu0 0.0
        %7113 = vmatprep.subr.mxu0 0.0
        %7114 = vmatpush2.msra.mxu0 0.0
        %7115 = vmatprep.subr.mxu0 0.0
        %7116 = vmatpush2.msra.mxu0 0.0
        %7117 = vmatprep.subr.mxu0 0.0
        %7118 = vmatpush2.msra.mxu0 0.0
        %7119 = vmatprep.subr.mxu0 0.0
        %7120 = vmatpush2.msra.mxu0 0.0
        %7121 = vmatprep.mubr.f32.mxu0 0.0
        %7122 = vmatmul.mubr.f32.gmra.mxu0 %v7055
        %v7123 = vpop.f32.mrf.mxu0
        %v7124 = vadd.f32 0.0, %v7123
        %v7125 = vpop.f32.mrf.mxu0
        %7126 = vdwg.mxu0
        %v7128 = vsel %vm983, %v6877, 0
        %7130 = vmatprep.subr.mxu0 0.0
        %7131 = vmatpush1.msra.mxu0 0.0
        %7132 = vmatprep.subr.mxu0 0.0
        %7133 = vmatpush1.msra.mxu0 0.0
        %7134 = vmatprep.subr.mxu0 0.0
        %7135 = vmatpush1.msra.mxu0 0.0
        %7136 = vmatprep.subr.mxu0 0.0
        %7137 = vmatpush1.msra.mxu0 0.0
        %7138 = vmatprep.subr.mxu0 0.0
        %7139 = vmatpush1.msra.mxu0 0.0
        %7140 = vmatprep.subr.mxu0 0.0
        %7141 = vmatpush1.msra.mxu0 0.0
        %7142 = vmatprep.subr.mxu0 0.0
        %7143 = vmatpush1.msra.mxu0 0.0
        %7144 = vmatprep.subr.mxu0 0.0
        %7145 = vmatpush1.msra.mxu0 0.0
        %7146 = vmatprep.subr.mxu0 0.0
        %7147 = vmatpush1.msra.mxu0 0.0
        %7148 = vmatprep.subr.mxu0 0.0
        %7149 = vmatpush1.msra.mxu0 0.0
        %7150 = vmatprep.subr.mxu0 0.0
        %7151 = vmatpush1.msra.mxu0 0.0
        %7152 = vmatprep.subr.mxu0 0.0
        %7153 = vmatpush1.msra.mxu0 0.0
        %7154 = vmatprep.subr.mxu0 0.0
        %7155 = vmatpush1.msra.mxu0 0.0
        %7156 = vmatprep.subr.mxu0 0.0
        %7157 = vmatpush1.msra.mxu0 0.0
        %7158 = vmatprep.subr.mxu0 0.0
        %7159 = vmatpush1.msra.mxu0 0.0
        %7160 = vmatprep.subr.mxu0 0.0
        %7161 = vmatpush1.msra.mxu0 %v6880
        %7162 = vmatprep.subr.mxu0 0.0
        %7163 = vmatpush2.msra.mxu0 0.0
        %7164 = vmatprep.subr.mxu0 0.0
        %7165 = vmatpush2.msra.mxu0 0.0
        %7166 = vmatprep.subr.mxu0 0.0
        %7167 = vmatpush2.msra.mxu0 0.0
        %7168 = vmatprep.subr.mxu0 0.0
        %7169 = vmatpush2.msra.mxu0 0.0
        %7170 = vmatprep.subr.mxu0 0.0
        %7171 = vmatpush2.msra.mxu0 0.0
        %7172 = vmatprep.subr.mxu0 0.0
        %7173 = vmatpush2.msra.mxu0 0.0
        %7174 = vmatprep.subr.mxu0 0.0
        %7175 = vmatpush2.msra.mxu0 0.0
        %7176 = vmatprep.subr.mxu0 0.0
        %7177 = vmatpush2.msra.mxu0 0.0
        %7178 = vmatprep.subr.mxu0 0.0
        %7179 = vmatpush2.msra.mxu0 0.0
        %7180 = vmatprep.subr.mxu0 0.0
        %7181 = vmatpush2.msra.mxu0 0.0
        %7182 = vmatprep.subr.mxu0 0.0
        %7183 = vmatpush2.msra.mxu0 0.0
        %7184 = vmatprep.subr.mxu0 0.0
        %7185 = vmatpush2.msra.mxu0 0.0
        %7186 = vmatprep.subr.mxu0 0.0
        %7187 = vmatpush2.msra.mxu0 0.0
        %7188 = vmatprep.subr.mxu0 0.0
        %7189 = vmatpush2.msra.mxu0 0.0
        %7190 = vmatprep.subr.mxu0 0.0
        %7191 = vmatpush2.msra.mxu0 0.0
        %7192 = vmatprep.subr.mxu0 0.0
        %7193 = vmatpush2.msra.mxu0 0.0
        %7194 = vmatprep.mubr.f32.mxu0 0.0
        %7195 = vmatmul.mubr.f32.gmra.mxu0 %v7128
        %v7196 = vpop.f32.mrf.mxu0
        %v7197 = vadd.f32 %v7124, %v7196
        %v7198 = vpop.f32.mrf.mxu0
        %7199 = vdwg.mxu0
        %7200 = vrot.lane.b32.xlu0 %v6708, 112
        %v7201 = vpop.permute.xlu0 %7200
        %7202 = vrot.lane.b32.xlu0 %v6709, 112
        %v7203 = vpop.permute.xlu0 %7202
        %7204 = vrot.lane.b32.xlu0 %v6710, 112
        %v7205 = vpop.permute.xlu0 %7204
        %v7206 = vsel %vm983, %v7201, 0
        %v7208 = vsel %vm983, %v7203, 0
        %v7210 = vsel %vm983, %v7205, 0
        %7212 = vmatprep.subr.mxu0 0.0
        %7213 = vmatpush1.xpose.msra.mxu0 0.0
        %7214 = vmatprep.subr.mxu0 0.0
        %7215 = vmatpush1.xpose.msra.mxu0 0.0
        %7216 = vmatprep.subr.mxu0 0.0
        %7217 = vmatpush1.xpose.msra.mxu0 0.0
        %7218 = vmatprep.subr.mxu0 0.0
        %7219 = vmatpush1.xpose.msra.mxu0 0.0
        %7220 = vmatprep.subr.mxu0 0.0
        %7221 = vmatpush1.xpose.msra.mxu0 0.0
        %7222 = vmatprep.subr.mxu0 0.0
        %7223 = vmatpush1.xpose.msra.mxu0 0.0
        %7224 = vmatprep.subr.mxu0 0.0
        %7225 = vmatpush1.xpose.msra.mxu0 0.0
        %7226 = vmatprep.subr.mxu0 0.0
        %7227 = vmatpush1.xpose.msra.mxu0 0.0
        %7228 = vmatprep.subr.mxu0 0.0
        %7229 = vmatpush1.xpose.msra.mxu0 0.0
        %7230 = vmatprep.subr.mxu0 0.0
        %7231 = vmatpush1.xpose.msra.mxu0 0.0
        %7232 = vmatprep.subr.mxu0 0.0
        %7233 = vmatpush1.xpose.msra.mxu0 0.0
        %7234 = vmatprep.subr.mxu0 0.0
        %7235 = vmatpush1.xpose.msra.mxu0 0.0
        %7236 = vmatprep.subr.mxu0 0.0
        %7237 = vmatpush1.xpose.msra.mxu0 0.0
        %7238 = vmatprep.subr.mxu0 0.0
        %7239 = vmatpush1.xpose.msra.mxu0 0.0
        %7240 = vmatprep.subr.mxu0 0.0
        %7241 = vmatpush1.xpose.msra.mxu0 %v7210
        %7242 = vmatprep.subr.mxu0 0.0
        %7243 = vmatpush1.xpose.msra.mxu0 %v7208
        %7244 = vmatprep.subr.mxu0 0.0
        %7245 = vmatpush2.xpose.msra.mxu0 0.0
        %7246 = vmatprep.subr.mxu0 0.0
        %7247 = vmatpush2.xpose.msra.mxu0 0.0
        %7248 = vmatprep.subr.mxu0 0.0
        %7249 = vmatpush2.xpose.msra.mxu0 0.0
        %7250 = vmatprep.subr.mxu0 0.0
        %7251 = vmatpush2.xpose.msra.mxu0 0.0
        %7252 = vmatprep.subr.mxu0 0.0
        %7253 = vmatpush2.xpose.msra.mxu0 0.0
        %7254 = vmatprep.subr.mxu0 0.0
        %7255 = vmatpush2.xpose.msra.mxu0 0.0
        %7256 = vmatprep.subr.mxu0 0.0
        %7257 = vmatpush2.xpose.msra.mxu0 0.0
        %7258 = vmatprep.subr.mxu0 0.0
        %7259 = vmatpush2.xpose.msra.mxu0 0.0
        %7260 = vmatprep.subr.mxu0 0.0
        %7261 = vmatpush2.xpose.msra.mxu0 0.0
        %7262 = vmatprep.subr.mxu0 0.0
        %7263 = vmatpush2.xpose.msra.mxu0 0.0
        %7264 = vmatprep.subr.mxu0 0.0
        %7265 = vmatpush2.xpose.msra.mxu0 0.0
        %7266 = vmatprep.subr.mxu0 0.0
        %7267 = vmatpush2.xpose.msra.mxu0 0.0
        %7268 = vmatprep.subr.mxu0 0.0
        %7269 = vmatpush2.xpose.msra.mxu0 0.0
        %7270 = vmatprep.subr.mxu0 0.0
        %7271 = vmatpush2.xpose.msra.mxu0 0.0
        %7272 = vmatprep.subr.mxu0 0.0
        %7273 = vmatpush2.xpose.msra.mxu0 0.0
        %7274 = vmatprep.subr.mxu0 0.0
        %7275 = vmatpush2.xpose.msra.mxu0 0.0
        %7276 = vmatprep.mubr.f32.mxu0 0.0
        %7277 = vmatmul.mubr.f32.gmra.mxu0 %v7206
        %v7278 = vpop.f32.mrf.mxu0
        %v7279 = vadd.f32 0.0, %v7278
        %v7280 = vpop.f32.mrf.mxu0
        %7281 = vdwg.mxu0
        %v7282 = vsel %vm2125, %v7279, -inf
        %7283 = vmax.xlane.f32.xlu0 %v7282
        %v7284 = vpop.xlane.xlu0 %7283
        %v7285 = vsub.f32 %v7279, %v7284
        %v7286 = vmul.f32 %v7285, 1.442695
        %v7287 = vpow.pop %v7286
        %v7288 = vsel %vm2125, %v7287, 0.0
        %7289 = vadd.xlane.f32.xlu0 %v7288
        %v7290 = vpop.xlane.xlu0 %7289
        %v7291 = vrcp.pop %v7290
        %v7292 = vmul.f32 %v7287, %v7291
        %7293 = vrot.lane.b32.xlu0 %v6709, 80
        %v7294 = vpop.permute.xlu0 %7293
        %7295 = vrot.lane.b32.xlu0 %v6710, 80
        %v7296 = vpop.permute.xlu0 %7295
        %v7300 = vsel %vm2125, %v7292, 0
        %7302 = vmatprep.subr.mxu0 0.0
        %7303 = vmatpush1.msra.mxu0 0.0
        %7304 = vmatprep.subr.mxu0 0.0
        %7305 = vmatpush1.msra.mxu0 0.0
        %7306 = vmatprep.subr.mxu0 0.0
        %7307 = vmatpush1.msra.mxu0 0.0
        %7308 = vmatprep.subr.mxu0 0.0
        %7309 = vmatpush1.msra.mxu0 0.0
        %7310 = vmatprep.subr.mxu0 0.0
        %7311 = vmatpush1.msra.mxu0 0.0
        %7312 = vmatprep.subr.mxu0 0.0
        %7313 = vmatpush1.msra.mxu0 0.0
        %7314 = vmatprep.subr.mxu0 0.0
        %7315 = vmatpush1.msra.mxu0 0.0
        %7316 = vmatprep.subr.mxu0 0.0
        %7317 = vmatpush1.msra.mxu0 0.0
        %7318 = vmatprep.subr.mxu0 0.0
        %7319 = vmatpush1.msra.mxu0 0.0
        %7320 = vmatprep.subr.mxu0 0.0
        %7321 = vmatpush1.msra.mxu0 0.0
        %7322 = vmatprep.subr.mxu0 0.0
        %7323 = vmatpush1.msra.mxu0 0.0
        %7324 = vmatprep.subr.mxu0 0.0
        %7325 = vmatpush1.msra.mxu0 0.0
        %7326 = vmatprep.subr.mxu0 0.0
        %7327 = vmatpush1.msra.mxu0 0.0
        %7328 = vmatprep.subr.mxu0 0.0
        %7329 = vmatpush1.msra.mxu0 0.0
        %7330 = vmatprep.subr.mxu0 0.0
        %7331 = vmatpush1.msra.mxu0 %v7296
        %7332 = vmatprep.subr.mxu0 0.0
        %7333 = vmatpush1.msra.mxu0 %v7294
        %7334 = vmatprep.subr.mxu0 0.0
        %7335 = vmatpush2.msra.mxu0 0.0
        %7336 = vmatprep.subr.mxu0 0.0
        %7337 = vmatpush2.msra.mxu0 0.0
        %7338 = vmatprep.subr.mxu0 0.0
        %7339 = vmatpush2.msra.mxu0 0.0
        %7340 = vmatprep.subr.mxu0 0.0
        %7341 = vmatpush2.msra.mxu0 0.0
        %7342 = vmatprep.subr.mxu0 0.0
        %7343 = vmatpush2.msra.mxu0 0.0
        %7344 = vmatprep.subr.mxu0 0.0
        %7345 = vmatpush2.msra.mxu0 0.0
        %7346 = vmatprep.subr.mxu0 0.0
        %7347 = vmatpush2.msra.mxu0 0.0
        %7348 = vmatprep.subr.mxu0 0.0
        %7349 = vmatpush2.msra.mxu0 0.0
        %7350 = vmatprep.subr.mxu0 0.0
        %7351 = vmatpush2.msra.mxu0 0.0
        %7352 = vmatprep.subr.mxu0 0.0
        %7353 = vmatpush2.msra.mxu0 0.0
        %7354 = vmatprep.subr.mxu0 0.0
        %7355 = vmatpush2.msra.mxu0 0.0
        %7356 = vmatprep.subr.mxu0 0.0
        %7357 = vmatpush2.msra.mxu0 0.0
        %7358 = vmatprep.subr.mxu0 0.0
        %7359 = vmatpush2.msra.mxu0 0.0
        %7360 = vmatprep.subr.mxu0 0.0
        %7361 = vmatpush2.msra.mxu0 0.0
        %7362 = vmatprep.subr.mxu0 0.0
        %7363 = vmatpush2.msra.mxu0 0.0
        %7364 = vmatprep.subr.mxu0 0.0
        %7365 = vmatpush2.msra.mxu0 0.0
        %7366 = vmatprep.mubr.f32.mxu0 0.0
        %7367 = vmatmul.mubr.f32.gmra.mxu0 %v7300
        %v7368 = vpop.f32.mrf.mxu0
        %v7369 = vadd.f32 0.0, %v7368
        %v7370 = vpop.f32.mrf.mxu0
        %7371 = vdwg.mxu0
        %v7372 = vld [vmem:[%s2709] sm:$0xff]
        %v7374 = vsel %vm983, %v7369, 0
        %7376 = vmatprep.subr.mxu0 0.0
        %7377 = vmatpush1.msra.mxu0 0.0
        %7378 = vmatprep.subr.mxu0 0.0
        %7379 = vmatpush1.msra.mxu0 0.0
        %7380 = vmatprep.subr.mxu0 0.0
        %7381 = vmatpush1.msra.mxu0 0.0
        %7382 = vmatprep.subr.mxu0 0.0
        %7383 = vmatpush1.msra.mxu0 0.0
        %7384 = vmatprep.subr.mxu0 0.0
        %7385 = vmatpush1.msra.mxu0 0.0
        %7386 = vmatprep.subr.mxu0 0.0
        %7387 = vmatpush1.msra.mxu0 0.0
        %7388 = vmatprep.subr.mxu0 0.0
        %7389 = vmatpush1.msra.mxu0 0.0
        %7390 = vmatprep.subr.mxu0 0.0
        %7391 = vmatpush1.msra.mxu0 0.0
        %7392 = vmatprep.subr.mxu0 0.0
        %7393 = vmatpush1.msra.mxu0 0.0
        %7394 = vmatprep.subr.mxu0 0.0
        %7395 = vmatpush1.msra.mxu0 0.0
        %7396 = vmatprep.subr.mxu0 0.0
        %7397 = vmatpush1.msra.mxu0 0.0
        %7398 = vmatprep.subr.mxu0 0.0
        %7399 = vmatpush1.msra.mxu0 0.0
        %7400 = vmatprep.subr.mxu0 0.0
        %7401 = vmatpush1.msra.mxu0 0.0
        %7402 = vmatprep.subr.mxu0 0.0
        %7403 = vmatpush1.msra.mxu0 0.0
        %7404 = vmatprep.subr.mxu0 0.0
        %7405 = vmatpush1.msra.mxu0 0.0
        %7406 = vmatprep.subr.mxu0 0.0
        %7407 = vmatpush1.msra.mxu0 %v7372
        %7408 = vmatprep.subr.mxu0 0.0
        %7409 = vmatpush2.msra.mxu0 0.0
        %7410 = vmatprep.subr.mxu0 0.0
        %7411 = vmatpush2.msra.mxu0 0.0
        %7412 = vmatprep.subr.mxu0 0.0
        %7413 = vmatpush2.msra.mxu0 0.0
        %7414 = vmatprep.subr.mxu0 0.0
        %7415 = vmatpush2.msra.mxu0 0.0
        %7416 = vmatprep.subr.mxu0 0.0
        %7417 = vmatpush2.msra.mxu0 0.0
        %7418 = vmatprep.subr.mxu0 0.0
        %7419 = vmatpush2.msra.mxu0 0.0
        %7420 = vmatprep.subr.mxu0 0.0
        %7421 = vmatpush2.msra.mxu0 0.0
        %7422 = vmatprep.subr.mxu0 0.0
        %7423 = vmatpush2.msra.mxu0 0.0
        %7424 = vmatprep.subr.mxu0 0.0
        %7425 = vmatpush2.msra.mxu0 0.0
        %7426 = vmatprep.subr.mxu0 0.0
        %7427 = vmatpush2.msra.mxu0 0.0
        %7428 = vmatprep.subr.mxu0 0.0
        %7429 = vmatpush2.msra.mxu0 0.0
        %7430 = vmatprep.subr.mxu0 0.0
        %7431 = vmatpush2.msra.mxu0 0.0
        %7432 = vmatprep.subr.mxu0 0.0
        %7433 = vmatpush2.msra.mxu0 0.0
        %7434 = vmatprep.subr.mxu0 0.0
        %7435 = vmatpush2.msra.mxu0 0.0
        %7436 = vmatprep.subr.mxu0 0.0
        %7437 = vmatpush2.msra.mxu0 0.0
        %7438 = vmatprep.subr.mxu0 0.0
        %7439 = vmatpush2.msra.mxu0 0.0
        %7440 = vmatprep.mubr.f32.mxu0 0.0
        %7441 = vmatmul.mubr.f32.gmra.mxu0 %v7374
        %v7442 = vpop.f32.mrf.mxu0
        %v7443 = vadd.f32 0.0, %v7442
        %v7444 = vpop.f32.mrf.mxu0
        %7445 = vdwg.mxu0
        %v7446 = vadd.f32 %v7197, %v7443
        %7447 = vrot.lane.b32.xlu0 %v6708, 104
        %v7448 = vpop.permute.xlu0 %7447
        %7449 = vrot.lane.b32.xlu0 %v6709, 104
        %v7450 = vpop.permute.xlu0 %7449
        %7451 = vrot.lane.b32.xlu0 %v6710, 104
        %v7452 = vpop.permute.xlu0 %7451
        %v7453 = vsel %vm983, %v7448, 0
        %v7455 = vsel %vm983, %v7450, 0
        %v7457 = vsel %vm983, %v7452, 0
        %7459 = vmatprep.subr.mxu0 0.0
        %7460 = vmatpush1.xpose.msra.mxu0 0.0
        %7461 = vmatprep.subr.mxu0 0.0
        %7462 = vmatpush1.xpose.msra.mxu0 0.0
        %7463 = vmatprep.subr.mxu0 0.0
        %7464 = vmatpush1.xpose.msra.mxu0 0.0
        %7465 = vmatprep.subr.mxu0 0.0
        %7466 = vmatpush1.xpose.msra.mxu0 0.0
        %7467 = vmatprep.subr.mxu0 0.0
        %7468 = vmatpush1.xpose.msra.mxu0 0.0
        %7469 = vmatprep.subr.mxu0 0.0
        %7470 = vmatpush1.xpose.msra.mxu0 0.0
        %7471 = vmatprep.subr.mxu0 0.0
        %7472 = vmatpush1.xpose.msra.mxu0 0.0
        %7473 = vmatprep.subr.mxu0 0.0
        %7474 = vmatpush1.xpose.msra.mxu0 0.0
        %7475 = vmatprep.subr.mxu0 0.0
        %7476 = vmatpush1.xpose.msra.mxu0 0.0
        %7477 = vmatprep.subr.mxu0 0.0
        %7478 = vmatpush1.xpose.msra.mxu0 0.0
        %7479 = vmatprep.subr.mxu0 0.0
        %7480 = vmatpush1.xpose.msra.mxu0 0.0
        %7481 = vmatprep.subr.mxu0 0.0
        %7482 = vmatpush1.xpose.msra.mxu0 0.0
        %7483 = vmatprep.subr.mxu0 0.0
        %7484 = vmatpush1.xpose.msra.mxu0 0.0
        %7485 = vmatprep.subr.mxu0 0.0
        %7486 = vmatpush1.xpose.msra.mxu0 0.0
        %7487 = vmatprep.subr.mxu0 0.0
        %7488 = vmatpush1.xpose.msra.mxu0 %v7457
        %7489 = vmatprep.subr.mxu0 0.0
        %7490 = vmatpush1.xpose.msra.mxu0 %v7455
        %7491 = vmatprep.subr.mxu0 0.0
        %7492 = vmatpush2.xpose.msra.mxu0 0.0
        %7493 = vmatprep.subr.mxu0 0.0
        %7494 = vmatpush2.xpose.msra.mxu0 0.0
        %7495 = vmatprep.subr.mxu0 0.0
        %7496 = vmatpush2.xpose.msra.mxu0 0.0
        %7497 = vmatprep.subr.mxu0 0.0
        %7498 = vmatpush2.xpose.msra.mxu0 0.0
        %7499 = vmatprep.subr.mxu0 0.0
        %7500 = vmatpush2.xpose.msra.mxu0 0.0
        %7501 = vmatprep.subr.mxu0 0.0
        %7502 = vmatpush2.xpose.msra.mxu0 0.0
        %7503 = vmatprep.subr.mxu0 0.0
        %7504 = vmatpush2.xpose.msra.mxu0 0.0
        %7505 = vmatprep.subr.mxu0 0.0
        %7506 = vmatpush2.xpose.msra.mxu0 0.0
        %7507 = vmatprep.subr.mxu0 0.0
        %7508 = vmatpush2.xpose.msra.mxu0 0.0
        %7509 = vmatprep.subr.mxu0 0.0
        %7510 = vmatpush2.xpose.msra.mxu0 0.0
        %7511 = vmatprep.subr.mxu0 0.0
        %7512 = vmatpush2.xpose.msra.mxu0 0.0
        %7513 = vmatprep.subr.mxu0 0.0
        %7514 = vmatpush2.xpose.msra.mxu0 0.0
        %7515 = vmatprep.subr.mxu0 0.0
        %7516 = vmatpush2.xpose.msra.mxu0 0.0
        %7517 = vmatprep.subr.mxu0 0.0
        %7518 = vmatpush2.xpose.msra.mxu0 0.0
        %7519 = vmatprep.subr.mxu0 0.0
        %7520 = vmatpush2.xpose.msra.mxu0 0.0
        %7521 = vmatprep.subr.mxu0 0.0
        %7522 = vmatpush2.xpose.msra.mxu0 0.0
        %7523 = vmatprep.mubr.f32.mxu0 0.0
        %7524 = vmatmul.mubr.f32.gmra.mxu0 %v7453
        %v7525 = vpop.f32.mrf.mxu0
        %v7526 = vadd.f32 0.0, %v7525
        %v7527 = vpop.f32.mrf.mxu0
        %7528 = vdwg.mxu0
        %v7529 = vsel %vm2125, %v7526, -inf
        %7530 = vmax.xlane.f32.xlu0 %v7529
        %v7531 = vpop.xlane.xlu0 %7530
        %v7532 = vsub.f32 %v7526, %v7531
        %v7533 = vmul.f32 %v7532, 1.442695
        %v7534 = vpow.pop %v7533
        %v7535 = vsel %vm2125, %v7534, 0.0
        %7536 = vadd.xlane.f32.xlu0 %v7535
        %v7537 = vpop.xlane.xlu0 %7536
        %v7538 = vrcp.pop %v7537
        %v7539 = vmul.f32 %v7534, %v7538
        %7540 = vrot.lane.b32.xlu0 %v6709, 72
        %v7541 = vpop.permute.xlu0 %7540
        %7542 = vrot.lane.b32.xlu0 %v6710, 72
        %v7543 = vpop.permute.xlu0 %7542
        %v7547 = vsel %vm2125, %v7539, 0
        %7549 = vmatprep.subr.mxu0 0.0
        %7550 = vmatpush1.msra.mxu0 0.0
        %7551 = vmatprep.subr.mxu0 0.0
        %7552 = vmatpush1.msra.mxu0 0.0
        %7553 = vmatprep.subr.mxu0 0.0
        %7554 = vmatpush1.msra.mxu0 0.0
        %7555 = vmatprep.subr.mxu0 0.0
        %7556 = vmatpush1.msra.mxu0 0.0
        %7557 = vmatprep.subr.mxu0 0.0
        %7558 = vmatpush1.msra.mxu0 0.0
        %7559 = vmatprep.subr.mxu0 0.0
        %7560 = vmatpush1.msra.mxu0 0.0
        %7561 = vmatprep.subr.mxu0 0.0
        %7562 = vmatpush1.msra.mxu0 0.0
        %7563 = vmatprep.subr.mxu0 0.0
        %7564 = vmatpush1.msra.mxu0 0.0
        %7565 = vmatprep.subr.mxu0 0.0
        %7566 = vmatpush1.msra.mxu0 0.0
        %7567 = vmatprep.subr.mxu0 0.0
        %7568 = vmatpush1.msra.mxu0 0.0
        %7569 = vmatprep.subr.mxu0 0.0
        %7570 = vmatpush1.msra.mxu0 0.0
        %7571 = vmatprep.subr.mxu0 0.0
        %7572 = vmatpush1.msra.mxu0 0.0
        %7573 = vmatprep.subr.mxu0 0.0
        %7574 = vmatpush1.msra.mxu0 0.0
        %7575 = vmatprep.subr.mxu0 0.0
        %7576 = vmatpush1.msra.mxu0 0.0
        %7577 = vmatprep.subr.mxu0 0.0
        %7578 = vmatpush1.msra.mxu0 %v7543
        %7579 = vmatprep.subr.mxu0 0.0
        %7580 = vmatpush1.msra.mxu0 %v7541
        %7581 = vmatprep.subr.mxu0 0.0
        %7582 = vmatpush2.msra.mxu0 0.0
        %7583 = vmatprep.subr.mxu0 0.0
        %7584 = vmatpush2.msra.mxu0 0.0
        %7585 = vmatprep.subr.mxu0 0.0
        %7586 = vmatpush2.msra.mxu0 0.0
        %7587 = vmatprep.subr.mxu0 0.0
        %7588 = vmatpush2.msra.mxu0 0.0
        %7589 = vmatprep.subr.mxu0 0.0
        %7590 = vmatpush2.msra.mxu0 0.0
        %7591 = vmatprep.subr.mxu0 0.0
        %7592 = vmatpush2.msra.mxu0 0.0
        %7593 = vmatprep.subr.mxu0 0.0
        %7594 = vmatpush2.msra.mxu0 0.0
        %7595 = vmatprep.subr.mxu0 0.0
        %7596 = vmatpush2.msra.mxu0 0.0
        %7597 = vmatprep.subr.mxu0 0.0
        %7598 = vmatpush2.msra.mxu0 0.0
        %7599 = vmatprep.subr.mxu0 0.0
        %7600 = vmatpush2.msra.mxu0 0.0
        %7601 = vmatprep.subr.mxu0 0.0
        %7602 = vmatpush2.msra.mxu0 0.0
        %7603 = vmatprep.subr.mxu0 0.0
        %7604 = vmatpush2.msra.mxu0 0.0
        %7605 = vmatprep.subr.mxu0 0.0
        %7606 = vmatpush2.msra.mxu0 0.0
        %7607 = vmatprep.subr.mxu0 0.0
        %7608 = vmatpush2.msra.mxu0 0.0
        %7609 = vmatprep.subr.mxu0 0.0
        %7610 = vmatpush2.msra.mxu0 0.0
        %7611 = vmatprep.subr.mxu0 0.0
        %7612 = vmatpush2.msra.mxu0 0.0
        %7613 = vmatprep.mubr.f32.mxu0 0.0
        %7614 = vmatmul.mubr.f32.gmra.mxu0 %v7547
        %v7615 = vpop.f32.mrf.mxu0
        %v7616 = vadd.f32 0.0, %v7615
        %v7617 = vpop.f32.mrf.mxu0
        %7618 = vdwg.mxu0
        %v7619 = vld [vmem:[%s2957] sm:$0xff]
        %v7621 = vsel %vm983, %v7616, 0
        %7623 = vmatprep.subr.mxu0 0.0
        %7624 = vmatpush1.msra.mxu0 0.0
        %7625 = vmatprep.subr.mxu0 0.0
        %7626 = vmatpush1.msra.mxu0 0.0
        %7627 = vmatprep.subr.mxu0 0.0
        %7628 = vmatpush1.msra.mxu0 0.0
        %7629 = vmatprep.subr.mxu0 0.0
        %7630 = vmatpush1.msra.mxu0 0.0
        %7631 = vmatprep.subr.mxu0 0.0
        %7632 = vmatpush1.msra.mxu0 0.0
        %7633 = vmatprep.subr.mxu0 0.0
        %7634 = vmatpush1.msra.mxu0 0.0
        %7635 = vmatprep.subr.mxu0 0.0
        %7636 = vmatpush1.msra.mxu0 0.0
        %7637 = vmatprep.subr.mxu0 0.0
        %7638 = vmatpush1.msra.mxu0 0.0
        %7639 = vmatprep.subr.mxu0 0.0
        %7640 = vmatpush1.msra.mxu0 0.0
        %7641 = vmatprep.subr.mxu0 0.0
        %7642 = vmatpush1.msra.mxu0 0.0
        %7643 = vmatprep.subr.mxu0 0.0
        %7644 = vmatpush1.msra.mxu0 0.0
        %7645 = vmatprep.subr.mxu0 0.0
        %7646 = vmatpush1.msra.mxu0 0.0
        %7647 = vmatprep.subr.mxu0 0.0
        %7648 = vmatpush1.msra.mxu0 0.0
        %7649 = vmatprep.subr.mxu0 0.0
        %7650 = vmatpush1.msra.mxu0 0.0
        %7651 = vmatprep.subr.mxu0 0.0
        %7652 = vmatpush1.msra.mxu0 0.0
        %7653 = vmatprep.subr.mxu0 0.0
        %7654 = vmatpush1.msra.mxu0 %v7619
        %7655 = vmatprep.subr.mxu0 0.0
        %7656 = vmatpush2.msra.mxu0 0.0
        %7657 = vmatprep.subr.mxu0 0.0
        %7658 = vmatpush2.msra.mxu0 0.0
        %7659 = vmatprep.subr.mxu0 0.0
        %7660 = vmatpush2.msra.mxu0 0.0
        %7661 = vmatprep.subr.mxu0 0.0
        %7662 = vmatpush2.msra.mxu0 0.0
        %7663 = vmatprep.subr.mxu0 0.0
        %7664 = vmatpush2.msra.mxu0 0.0
        %7665 = vmatprep.subr.mxu0 0.0
        %7666 = vmatpush2.msra.mxu0 0.0
        %7667 = vmatprep.subr.mxu0 0.0
        %7668 = vmatpush2.msra.mxu0 0.0
        %7669 = vmatprep.subr.mxu0 0.0
        %7670 = vmatpush2.msra.mxu0 0.0
        %7671 = vmatprep.subr.mxu0 0.0
        %7672 = vmatpush2.msra.mxu0 0.0
        %7673 = vmatprep.subr.mxu0 0.0
        %7674 = vmatpush2.msra.mxu0 0.0
        %7675 = vmatprep.subr.mxu0 0.0
        %7676 = vmatpush2.msra.mxu0 0.0
        %7677 = vmatprep.subr.mxu0 0.0
        %7678 = vmatpush2.msra.mxu0 0.0
        %7679 = vmatprep.subr.mxu0 0.0
        %7680 = vmatpush2.msra.mxu0 0.0
        %7681 = vmatprep.subr.mxu0 0.0
        %7682 = vmatpush2.msra.mxu0 0.0
        %7683 = vmatprep.subr.mxu0 0.0
        %7684 = vmatpush2.msra.mxu0 0.0
        %7685 = vmatprep.subr.mxu0 0.0
        %7686 = vmatpush2.msra.mxu0 0.0
        %7687 = vmatprep.mubr.f32.mxu0 0.0
        %7688 = vmatmul.mubr.f32.gmra.mxu0 %v7621
        %v7689 = vpop.f32.mrf.mxu0
        %v7690 = vadd.f32 0.0, %v7689
        %v7691 = vpop.f32.mrf.mxu0
        %7692 = vdwg.mxu0
        %v7693 = vadd.f32 %v7446, %v7690
        %v7694 = vld [vmem:[%s11] sm:$0x1]
        %v7696 = vlaneseq
        %v7697 = vshrl.u32 %v7696, 7
        %v7698 = vsub.s32 0, %v7697
        %v7699 = vrot.slane %v7694, %v7698
        %v7701 = vadd.f32 %v7693, %v7699
        %v7702 = vadd.f32 %v6614, %v7701
        %v7703 = vmul.f32 %v7702, %v7702
        %v7704 = vsel %vm799, %v7703, 0.0
        %7705 = vadd.xlane.f32.xlu0 %v7704
        %v7706 = vpop.xlane.xlu0 %7705
        %v7707 = vmul.f32 %v7706, %v888
        %v7708 = vadd.f32 %v7707, 1.1920929e-07
        %v7709 = vrsqrt.pop %v7708
        %v7710 = vmul.f32 %v7702, %v7709
        %v7711 = vld [vmem:[#allocation17] sm:$0xff]
        %v7712 = vld [vmem:[#allocation17 + $0x8] sm:$0xff]
        %v7713 = vld [vmem:[#allocation17 + $0x10] sm:$0xff]
        %v7714 = vld [vmem:[#allocation17 + $0x18] sm:$0xff]
        %v7715 = vld [vmem:[%s13] sm:$0x1]
        %v7717 = vlaneseq
        %v7718 = vshrl.u32 %v7717, 7
        %v7719 = vsub.s32 0, %v7718
        %v7720 = vrot.slane %v7715, %v7719
        %v7723 = vsel %vm799, %v7710, 0
        %7725 = vmatprep.subr.mxu0 0.0
        %7726 = vmatpush1.msra.mxu0 0.0
        %7727 = vmatprep.subr.mxu0 0.0
        %7728 = vmatpush1.msra.mxu0 0.0
        %7729 = vmatprep.subr.mxu0 0.0
        %7730 = vmatpush1.msra.mxu0 0.0
        %7731 = vmatprep.subr.mxu0 0.0
        %7732 = vmatpush1.msra.mxu0 0.0
        %7733 = vmatprep.subr.mxu0 0.0
        %7734 = vmatpush1.msra.mxu0 0.0
        %7735 = vmatprep.subr.mxu0 0.0
        %7736 = vmatpush1.msra.mxu0 0.0
        %7737 = vmatprep.subr.mxu0 0.0
        %7738 = vmatpush1.msra.mxu0 0.0
        %7739 = vmatprep.subr.mxu0 0.0
        %7740 = vmatpush1.msra.mxu0 0.0
        %7741 = vmatprep.subr.mxu0 0.0
        %7742 = vmatpush1.msra.mxu0 0.0
        %7743 = vmatprep.subr.mxu0 0.0
        %7744 = vmatpush1.msra.mxu0 0.0
        %7745 = vmatprep.subr.mxu0 0.0
        %7746 = vmatpush1.msra.mxu0 0.0
        %7747 = vmatprep.subr.mxu0 0.0
        %7748 = vmatpush1.msra.mxu0 0.0
        %7749 = vmatprep.subr.mxu0 0.0
        %7750 = vmatpush1.msra.mxu0 %v7714
        %7751 = vmatprep.subr.mxu0 0.0
        %7752 = vmatpush1.msra.mxu0 %v7713
        %7753 = vmatprep.subr.mxu0 0.0
        %7754 = vmatpush1.msra.mxu0 %v7712
        %7755 = vmatprep.subr.mxu0 0.0
        %7756 = vmatpush1.msra.mxu0 %v7711
        %7757 = vmatprep.subr.mxu0 0.0
        %7758 = vmatpush2.msra.mxu0 0.0
        %7759 = vmatprep.subr.mxu0 0.0
        %7760 = vmatpush2.msra.mxu0 0.0
        %7761 = vmatprep.subr.mxu0 0.0
        %7762 = vmatpush2.msra.mxu0 0.0
        %7763 = vmatprep.subr.mxu0 0.0
        %7764 = vmatpush2.msra.mxu0 0.0
        %7765 = vmatprep.subr.mxu0 0.0
        %7766 = vmatpush2.msra.mxu0 0.0
        %7767 = vmatprep.subr.mxu0 0.0
        %7768 = vmatpush2.msra.mxu0 0.0
        %7769 = vmatprep.subr.mxu0 0.0
        %7770 = vmatpush2.msra.mxu0 0.0
        %7771 = vmatprep.subr.mxu0 0.0
        %7772 = vmatpush2.msra.mxu0 0.0
        %7773 = vmatprep.subr.mxu0 0.0
        %7774 = vmatpush2.msra.mxu0 0.0
        %7775 = vmatprep.subr.mxu0 0.0
        %7776 = vmatpush2.msra.mxu0 0.0
        %7777 = vmatprep.subr.mxu0 0.0
        %7778 = vmatpush2.msra.mxu0 0.0
        %7779 = vmatprep.subr.mxu0 0.0
        %7780 = vmatpush2.msra.mxu0 0.0
        %7781 = vmatprep.subr.mxu0 0.0
        %7782 = vmatpush2.msra.mxu0 0.0
        %7783 = vmatprep.subr.mxu0 0.0
        %7784 = vmatpush2.msra.mxu0 0.0
        %7785 = vmatprep.subr.mxu0 0.0
        %7786 = vmatpush2.msra.mxu0 0.0
        %7787 = vmatprep.subr.mxu0 0.0
        %7788 = vmatpush2.msra.mxu0 0.0
        %7789 = vmatprep.mubr.f32.mxu0 0.0
        %7790 = vmatmul.mubr.f32.gmra.mxu0 %v7723
        %v7791 = vpop.f32.mrf.mxu0
        %v7792 = vadd.f32 %v7720, %v7791
        %v7793 = vpop.f32.mrf.mxu0
        %7794 = vdwg.mxu0
        %v7795 = vsub.f32 0.0, %v7792
        %v7796 = vmul.f32 %v7795, 1.442695
        %v7797 = vpow.pop %v7796
        %v7798 = vadd.f32 %v7797, 1.0
        %v7799 = vrcp.pop %v7798
        %v7800 = vmul.f32 1.0, %v7799
        %v7801 = vmul.f32 %v7792, %v7800
        %v7802 = vld [vmem:[#allocation19] sm:$0xff]
        %v7803 = vld [vmem:[#allocation19 + $0x8] sm:$0xff]
        %v7804 = vld [vmem:[#allocation19 + $0x10] sm:$0xff]
        %v7805 = vld [vmem:[#allocation19 + $0x18] sm:$0xff]
        %v7806 = vld [vmem:[%s15] sm:$0x1]
        %v7808 = vlaneseq
        %v7809 = vshrl.u32 %v7808, 7
        %v7810 = vsub.s32 0, %v7809
        %v7811 = vrot.slane %v7806, %v7810
        %7813 = vmatprep.subr.mxu0 0.0
        %7814 = vmatpush1.xpose.msra.mxu0 0.0
        %7815 = vmatprep.subr.mxu0 0.0
        %7816 = vmatpush1.xpose.msra.mxu0 0.0
        %7817 = vmatprep.subr.mxu0 0.0
        %7818 = vmatpush1.xpose.msra.mxu0 0.0
        %7819 = vmatprep.subr.mxu0 0.0
        %7820 = vmatpush1.xpose.msra.mxu0 0.0
        %7821 = vmatprep.subr.mxu0 0.0
        %7822 = vmatpush1.xpose.msra.mxu0 0.0
        %7823 = vmatprep.subr.mxu0 0.0
        %7824 = vmatpush1.xpose.msra.mxu0 0.0
        %7825 = vmatprep.subr.mxu0 0.0
        %7826 = vmatpush1.xpose.msra.mxu0 0.0
        %7827 = vmatprep.subr.mxu0 0.0
        %7828 = vmatpush1.xpose.msra.mxu0 0.0
        %7829 = vmatprep.subr.mxu0 0.0
        %7830 = vmatpush1.xpose.msra.mxu0 0.0
        %7831 = vmatprep.subr.mxu0 0.0
        %7832 = vmatpush1.xpose.msra.mxu0 0.0
        %7833 = vmatprep.subr.mxu0 0.0
        %7834 = vmatpush1.xpose.msra.mxu0 0.0
        %7835 = vmatprep.subr.mxu0 0.0
        %7836 = vmatpush1.xpose.msra.mxu0 0.0
        %7837 = vmatprep.subr.mxu0 0.0
        %7838 = vmatpush1.xpose.msra.mxu0 %v7805
        %7839 = vmatprep.subr.mxu0 0.0
        %7840 = vmatpush1.xpose.msra.mxu0 %v7804
        %7841 = vmatprep.subr.mxu0 0.0
        %7842 = vmatpush1.xpose.msra.mxu0 %v7803
        %7843 = vmatprep.subr.mxu0 0.0
        %7844 = vmatpush1.xpose.msra.mxu0 %v7802
        %7845 = vmatprep.subr.mxu0 0.0
        %7846 = vmatpush2.xpose.msra.mxu0 0.0
        %7847 = vmatprep.subr.mxu0 0.0
        %7848 = vmatpush2.xpose.msra.mxu0 0.0
        %7849 = vmatprep.subr.mxu0 0.0
        %7850 = vmatpush2.xpose.msra.mxu0 0.0
        %7851 = vmatprep.subr.mxu0 0.0
        %7852 = vmatpush2.xpose.msra.mxu0 0.0
        %7853 = vmatprep.subr.mxu0 0.0
        %7854 = vmatpush2.xpose.msra.mxu0 0.0
        %7855 = vmatprep.subr.mxu0 0.0
        %7856 = vmatpush2.xpose.msra.mxu0 0.0
        %7857 = vmatprep.subr.mxu0 0.0
        %7858 = vmatpush2.xpose.msra.mxu0 0.0
        %7859 = vmatprep.subr.mxu0 0.0
        %7860 = vmatpush2.xpose.msra.mxu0 0.0
        %7861 = vmatprep.subr.mxu0 0.0
        %7862 = vmatpush2.xpose.msra.mxu0 0.0
        %7863 = vmatprep.subr.mxu0 0.0
        %7864 = vmatpush2.xpose.msra.mxu0 0.0
        %7865 = vmatprep.subr.mxu0 0.0
        %7866 = vmatpush2.xpose.msra.mxu0 0.0
        %7867 = vmatprep.subr.mxu0 0.0
        %7868 = vmatpush2.xpose.msra.mxu0 0.0
        %7869 = vmatprep.subr.mxu0 0.0
        %7870 = vmatpush2.xpose.msra.mxu0 0.0
        %7871 = vmatprep.subr.mxu0 0.0
        %7872 = vmatpush2.xpose.msra.mxu0 0.0
        %7873 = vmatprep.subr.mxu0 0.0
        %7874 = vmatpush2.xpose.msra.mxu0 0.0
        %7875 = vmatprep.subr.mxu0 0.0
        %7876 = vmatpush2.xpose.msra.mxu0 0.0
        %7877 = vmatprep.mubr.f32.mxu0 0.0
        %7878 = vmatmul.mubr.f32.gmra.mxu0 %v7801
        %v7879 = vpop.f32.mrf.mxu0
        %v7880 = vadd.f32 %v7811, %v7879
        %v7881 = vpop.f32.mrf.mxu0
        %7882 = vdwg.mxu0
        %v7883 = vadd.f32 %v7702, %v7880
        %s7884 = scalar_lea.vmem %s777, 16 [#allocation22]
        %7885 = vst.msk [vmem:[%s7884] sm:$0xff] %vm799, %v7883
        %v7886 = vmul.f32 %v7883, %v7883
        %v7887 = vsel %vm799, %v7886, 0.0
        %7888 = vadd.xlane.f32.xlu0 %v7887
        %v7889 = vpop.xlane.xlu0 %7888
        %v7890 = vmul.f32 %v7889, %v888
        %v7891 = vadd.f32 %v7890, 1.1920929e-07
        %v7892 = vrsqrt.pop %v7891
        %v7893 = vmul.f32 %v7883, %v7892
        %v7894 = vld [vmem:[#allocation20] sm:$0xff]
        %v7895 = vld [vmem:[#allocation20 + $0x8] sm:$0xff]
        %v7896 = vld [vmem:[#allocation20 + $0x10] sm:$0xff]
        %v7897 = vld [vmem:[#allocation20 + $0x18] sm:$0xff]
        %v7898 = vld [vmem:[%s17] sm:$0x1]
        %v7900 = vlaneseq
        %v7901 = vshrl.u32 %v7900, 7
        %v7902 = vsub.s32 0, %v7901
        %v7903 = vrot.slane %v7898, %v7902
        %v7906 = vsel %vm799, %v7893, 0
        %7908 = vmatprep.subr.mxu0 0.0
        %7909 = vmatpush1.msra.mxu0 0.0
        %7910 = vmatprep.subr.mxu0 0.0
        %7911 = vmatpush1.msra.mxu0 0.0
        %7912 = vmatprep.subr.mxu0 0.0
        %7913 = vmatpush1.msra.mxu0 0.0
        %7914 = vmatprep.subr.mxu0 0.0
        %7915 = vmatpush1.msra.mxu0 0.0
        %7916 = vmatprep.subr.mxu0 0.0
        %7917 = vmatpush1.msra.mxu0 0.0
        %7918 = vmatprep.subr.mxu0 0.0
        %7919 = vmatpush1.msra.mxu0 0.0
        %7920 = vmatprep.subr.mxu0 0.0
        %7921 = vmatpush1.msra.mxu0 0.0
        %7922 = vmatprep.subr.mxu0 0.0
        %7923 = vmatpush1.msra.mxu0 0.0
        %7924 = vmatprep.subr.mxu0 0.0
        %7925 = vmatpush1.msra.mxu0 0.0
        %7926 = vmatprep.subr.mxu0 0.0
        %7927 = vmatpush1.msra.mxu0 0.0
        %7928 = vmatprep.subr.mxu0 0.0
        %7929 = vmatpush1.msra.mxu0 0.0
        %7930 = vmatprep.subr.mxu0 0.0
        %7931 = vmatpush1.msra.mxu0 0.0
        %7932 = vmatprep.subr.mxu0 0.0
        %7933 = vmatpush1.msra.mxu0 %v7897
        %7934 = vmatprep.subr.mxu0 0.0
        %7935 = vmatpush1.msra.mxu0 %v7896
        %7936 = vmatprep.subr.mxu0 0.0
        %7937 = vmatpush1.msra.mxu0 %v7895
        %7938 = vmatprep.subr.mxu0 0.0
        %7939 = vmatpush1.msra.mxu0 %v7894
        %7940 = vmatprep.subr.mxu0 0.0
        %7941 = vmatpush2.msra.mxu0 0.0
        %7942 = vmatprep.subr.mxu0 0.0
        %7943 = vmatpush2.msra.mxu0 0.0
        %7944 = vmatprep.subr.mxu0 0.0
        %7945 = vmatpush2.msra.mxu0 0.0
        %7946 = vmatprep.subr.mxu0 0.0
        %7947 = vmatpush2.msra.mxu0 0.0
        %7948 = vmatprep.subr.mxu0 0.0
        %7949 = vmatpush2.msra.mxu0 0.0
        %7950 = vmatprep.subr.mxu0 0.0
        %7951 = vmatpush2.msra.mxu0 0.0
        %7952 = vmatprep.subr.mxu0 0.0
        %7953 = vmatpush2.msra.mxu0 0.0
        %7954 = vmatprep.subr.mxu0 0.0
        %7955 = vmatpush2.msra.mxu0 0.0
        %7956 = vmatprep.subr.mxu0 0.0
        %7957 = vmatpush2.msra.mxu0 0.0
        %7958 = vmatprep.subr.mxu0 0.0
        %7959 = vmatpush2.msra.mxu0 0.0
        %7960 = vmatprep.subr.mxu0 0.0
        %7961 = vmatpush2.msra.mxu0 0.0
        %7962 = vmatprep.subr.mxu0 0.0
        %7963 = vmatpush2.msra.mxu0 0.0
        %7964 = vmatprep.subr.mxu0 0.0
        %7965 = vmatpush2.msra.mxu0 0.0
        %7966 = vmatprep.subr.mxu0 0.0
        %7967 = vmatpush2.msra.mxu0 0.0
        %7968 = vmatprep.subr.mxu0 0.0
        %7969 = vmatpush2.msra.mxu0 0.0
        %7970 = vmatprep.subr.mxu0 0.0
        %7971 = vmatpush2.msra.mxu0 0.0
        %7972 = vmatprep.mubr.f32.mxu0 0.0
        %7973 = vmatmul.mubr.f32.gmra.mxu0 %v7906
        %v7974 = vpop.f32.mrf.mxu0
        %v7975 = vadd.f32 %v7903, %v7974
        %v7976 = vpop.f32.mrf.mxu0
        %7977 = vdwg.mxu0
        %7978 = vst.msk [vmem:[%s784] sm:$0xff] %vm799, %v7975
        %s7979 = sand.u32 %s443, 1
        %s7980 = scalar_lea.sflag [#allocation7], %s7979
        %s7981 = sand.u32 %s443, 1
        %s7982 = smul.addr %s7981, 24
        %s7983 = scalar_lea.vmem [#allocation22], %s7982
        %s7984 = sand.u32 %s469, 1
        %s7985 = scalar_lea.sflag [#allocation24], %s7984
        %s7986 = sand.u32 %s469, 1
        %s7987 = smul.addr %s7986, 8
        %s7988 = scalar_lea.vmem [#allocation23], %s7987
        // Predicated region
        $region133: #{looped_tf_query_generator.1} parent=91 // pred_check
          %p7989 = pneg %p453
        $region134: #{looped_tf_query_generator.1} parent=91 // pred_check_branch
          %7991 = sbr.rel (%p7989) target = $region136
        $region135: #{looped_tf_query_generator.1} parent=91 // pred_region
          %s7993 = ssub.s32 384, 384
          %7994 = vsyncadd %s7980, %s7993
          %s7995 = smul.addr %s47, 3
          %s7996 = smul.addr %s7995, 128
          %s7997 = scalar_lea.hbm %s18, %s7996
          %s7998 = sshll.u32 %s7983, 4
          %s7999 = int_to_ptr.vmem [resolvable:$true] %s7998
          %8004 = dma.vmem_to_hbm [thread:$0]  %s7999, 384, %s7997, %s7980, 128, 128, 8
        $region136: #{looped_tf_query_generator.1} parent=91 // pred_fallthru
          _
        // Predicated region
        $region137: #{looped_tf_query_generator.1} parent=91 // pred_check
          %p8005 = pneg %p479
        $region138: #{looped_tf_query_generator.1} parent=91 // pred_check_branch
          %8007 = sbr.rel (%p8005) target = $region140
        $region139: #{looped_tf_query_generator.1} parent=91 // pred_region
          %s8009 = ssub.s32 128, 128
          %8010 = vsyncadd %s7985, %s8009
          %s8011 = smul.addr %s47, 128
          %s8012 = scalar_lea.hbm %s19, %s8011
          %s8014 = sshll.u32 %s7988, 4
          %s8015 = int_to_ptr.vmem [resolvable:$true] %s8014
          %8017 = dma.vmem_to_hbm [thread:$0]  %s8015, 128, %s8012, %s7985
        $region140: #{looped_tf_query_generator.1} parent=91 // pred_fallthru
          _
      $region92: #{looped_tf_query_generator.1} parent=5 // pred_fallthru
        _
      %p8018 = scmp.le.s32.totalorder 2, %s42
      // Predicated region
      $region141: #{looped_tf_query_generator.1} parent=5 // pred_check
        %p8019 = pneg %p8018
      $region142: #{looped_tf_query_generator.1} parent=5 // pred_check_branch
        %8021 = sbr.rel (%p8019) target = $region144
      $region143: #{looped_tf_query_generator.1} parent=5 // pred_region
        %s8022 = ssub.s32 %s42, 2
        // Predicated region
        $region145: #{looped_tf_query_generator.1} parent=143 // pred_check
          %p8023 = pneg %p459
        $region146: #{looped_tf_query_generator.1} parent=143 // pred_check_branch
          %8025 = sbr.rel (%p8023) target = $region148
        $region147: #{looped_tf_query_generator.1} parent=143 // pred_region
          %s8026 = sand.u32 %s444, 1
          %s8027 = scalar_lea.sflag [#allocation7], %s8026
          %s8028 = sand.u32 %s444, 1
          %s8029 = smul.addr %s8028, 24
          %s8030 = scalar_lea.vmem [#allocation22], %s8029
          %8031 = dma.done %s8027, 384
        $region148: #{looped_tf_query_generator.1} parent=143 // pred_fallthru
          _
        // Predicated region
        $region149: #{looped_tf_query_generator.1} parent=143 // pred_check
          %p8032 = pneg %p485
        $region150: #{looped_tf_query_generator.1} parent=143 // pred_check_branch
          %8034 = sbr.rel (%p8032) target = $region152
        $region151: #{looped_tf_query_generator.1} parent=143 // pred_region
          %s8035 = sand.u32 %s470, 1
          %s8036 = scalar_lea.sflag [#allocation24], %s8035
          %s8037 = sand.u32 %s470, 1
          %s8038 = smul.addr %s8037, 8
          %s8039 = scalar_lea.vmem [#allocation23], %s8038
          %8040 = dma.done %s8036, 128
        $region152: #{looped_tf_query_generator.1} parent=143 // pred_fallthru
          _
      $region144: #{looped_tf_query_generator.1} parent=5 // pred_fallthru
        _
    $region6: #{looped_tf_query_generator.1} parent=1 // loop_footer
      %s46 = sadd.s32 1, %s42
    $region7: #{looped_tf_query_generator.1} parent=1 // loop_footer_branch
      %41 = sbr.rel target = $region3
    $region8: #{looped_tf_query_generator.1} parent=1 // loop_exit
      _
    %8041 = vsyncpa [#allocation6], 1
    %s8042 = scalar_lea.sflag [#allocation6], 1
    %8043 = vsyncpa %s8042, 1
    %8044 = vsyncpa [#allocation9], 1
    %s8045 = scalar_lea.sflag [#allocation9], 1
    %8046 = vsyncpa %s8045, 1
    %8047 = vsyncpa [#allocation12], 1
    %8048 = vsyncpa [#allocation15], 1
    %8049 = vsyncpa [#allocation18], 1
    %8050 = vsyncpa [#allocation21], 1
    %8051 = vsyncpa [#allocation7], 1
    %s8052 = scalar_lea.sflag [#allocation7], 1
    %8053 = vsyncpa %s8052, 1
    %8054 = vsyncpa [#allocation24], 1
    %s8055 = scalar_lea.sflag [#allocation24], 1
    %8056 = vsyncpa %s8055, 1

</llo_original>
